<compile_context>
chip_gen: v6e
topology: v6e:2x2x1
jax: 0.10.0
libtpu: 0.0.40
codegen_flags: <defaults>
</compile_context>

<pallas_src>
import jax
import jax.numpy as jnp
from jax import lax
from jax.experimental import pallas as pl
from jax.experimental.pallas import tpu as pltpu


# (name, num_embeddings, embedding_dim) in the PyTorch module's dict order.
EMBEDDING_SPECS = (
    ("TS_TYP_CD", 5, 3),
    ("IMTT_CD", 8, 4),
    ("ROUTE_ID", 1218, 50),
    ("ROUTE_VAR_ID", 688, 50),
    ("RUN_DIR_CD", 4, 2),
    ("TAG1_TS_PC", 332, 50),
    ("TAG1_TS_NUM", 831, 50),
)
NUM_TABLES = len(EMBEDDING_SPECS)
VOCABS = tuple(s[1] for s in EMBEDDING_SPECS)
DIMS = tuple(s[2] for s in EMBEDDING_SPECS)

_LANE = 128
_SUBLANE = 8


def _round_up(x, m):
    return (x + m - 1) // m * m


# 128-aligned per-table row ranges inside the packed weight.
VOCAB_PADS = tuple(_round_up(v, _LANE) for v in VOCABS)
ROW_OFFSETS_PAD = []
_acc = 0
for _vp in VOCAB_PADS:
    ROW_OFFSETS_PAD.append(_acc)
    _acc += _vp
TOTAL_VOCAB_PAD = _acc  # 3712

# Column offsets for output1 (concat of the 7 embeddings) ...
COL_OFFSETS = []
_acc = 0
for _d in DIMS:
    COL_OFFSETS.append(_acc)
    _acc += _d
# ... plus output2 = the last two embeddings repeated.
DUP_COL_OFFSETS = (_acc, _acc + DIMS[-2])
EMB_OUT_DIM = _acc + DIMS[-2] + DIMS[-1]  # 309


def init_embedding_tables(key):
    """nn.Embedding default init: N(0, 1)."""
    keys = jax.random.split(key, NUM_TABLES)
    return [
        jax.random.normal(k, (v, d), jnp.float32)
        for k, (_, v, d) in zip(keys, EMBEDDING_SPECS)
    ]


def pack_categorical_embedding_params(tables, n_num):
    """Build the packed weight (bf16 hi/lo split) and numeric placement ONCE.

    Each table occupies a disjoint 128-aligned row range and its output-column
    slot(s); the last two tables are written twice to mirror `output2`.
    """
    out_dim = EMB_OUT_DIM + n_num
    out_pad = _round_up(out_dim, _LANE)
    n_num_pad = _round_up(max(n_num, 1), _SUBLANE)

    w = jnp.zeros((TOTAL_VOCAB_PAD, out_pad), jnp.float32)
    for i, t in enumerate(tables):
        r0, c0 = ROW_OFFSETS_PAD[i], COL_OFFSETS[i]
        w = w.at[r0:r0 + VOCABS[i], c0:c0 + DIMS[i]].set(t.astype(jnp.float32))
    for j, i in enumerate((NUM_TABLES - 2, NUM_TABLES - 1)):
        r0, c0 = ROW_OFFSETS_PAD[i], DUP_COL_OFFSETS[j]
        w = w.at[r0:r0 + VOCABS[i], c0:c0 + DIMS[i]].set(
            tables[i].astype(jnp.float32))

    # Exact-ish hi/lo bf16 split: one-hot selection of bf16 rows is exact,
    # hi + lo recombined in f32 matches the f32 weight to <= ~2^-16 relative.
    w_hi = w.astype(jnp.bfloat16)
    w_lo = (w - w_hi.astype(jnp.float32)).astype(jnp.bfloat16)

    p = jnp.zeros((n_num_pad, out_pad), jnp.float32)
    if n_num > 0:
        p = p.at[jnp.arange(n_num), EMB_OUT_DIM + jnp.arange(n_num)].set(1.0)

    return {
        "w_hi": w_hi, "w_lo": w_lo, "p": p,
        "n_num": n_num, "n_num_pad": n_num_pad,
        "out_dim": out_dim, "out_pad": out_pad,
    }


def categorical_embedding_kernel(idx_ref, xnum_ref, whi_ref, wlo_ref,
                                 p_ref, o_ref):
    tb = idx_ref.shape[0]

    # Numeric features land in their output columns via a tiny 0/1 f32 matmul
    # (K = 8) so the final store stays one full unmasked lane-dense block.
    acc = jnp.dot(xnum_ref[...], p_ref[...], preferred_element_type=jnp.float32)

    # Per-table gather-as-matmul: narrow bf16 one-hot over the table's padded
    # vocab slice, accumulated against the table's static 128-aligned row
    # slice of the packed bf16 hi/lo weights.  Padded batch rows carry -1 and
    # never match the iota, so they contribute zero.
    for i in range(NUM_TABLES):  # 7 static iterations
        r0 = ROW_OFFSETS_PAD[i]
        vpad = VOCAB_PADS[i]
        iota = lax.broadcasted_iota(jnp.int32, (tb, vpad), 1)
        oh = (iota == idx_ref[:, i:i + 1]).astype(jnp.bfloat16)
        acc = acc + jnp.dot(oh, whi_ref[pl.ds(r0, vpad), :],
                            preferred_element_type=jnp.float32)
        acc = acc + jnp.dot(oh, wlo_ref[pl.ds(r0, vpad), :],
                            preferred_element_type=jnp.float32)

    o_ref[...] = acc.astype(o_ref.dtype)


def categorical_embedding_forward(x_cat, x_num, packed, *, tile_b=256):
    """x_cat: [B, 7] int indices, x_num: [B, n_num] float numeric features.

    Returns [B, 309 + n_num] = concat(emb_0..emb_6, emb_5, emb_6, x_num),
    matching CategoricalEmbedding.forward.
    """
    B = x_cat.shape[0]
    n_num = packed["n_num"]
    n_num_pad = packed["n_num_pad"]
    out_dim = packed["out_dim"]
    out_pad = packed["out_pad"]

    # Batch tile: sublane-aligned, <= tile_b, and (when B allows it) at least
    # two grid steps so the "parallel" axis can shard across v7x's 2 TCs.
    # (On v6e, tile_b=512 amortizes per-step overhead further if desired.)
    half = _round_up(max(pl.cdiv(B, 2), 1), _SUBLANE)
    tb = min(tile_b, max(half, _SUBLANE))
    b_pad = _round_up(max(B, 1), tb)
    grid = (b_pad // tb,)

    # Local (per-table) indices; padded batch rows get -1 -> all-zero one-hot.
    idx = x_cat.astype(jnp.int32)
    idx = jnp.pad(idx, ((0, b_pad - B), (0, 0)), constant_values=-1)
    xn = jnp.pad(x_num.astype(jnp.float32),
                 ((0, b_pad - B), (0, n_num_pad - n_num)))

    k_total = 2 * TOTAL_VOCAB_PAD + n_num_pad
    flops = 2 * b_pad * out_pad * k_total
    bytes_accessed = (4 * b_pad * (NUM_TABLES + n_num_pad + out_pad)
                      + 2 * 2 * TOTAL_VOCAB_PAD * out_pad
                      + 4 * n_num_pad * out_pad)

    out_padded = pl.pallas_call(
        categorical_embedding_kernel,
        out_shape=jax.ShapeDtypeStruct((b_pad, out_pad), jnp.float32),
        grid_spec=pltpu.PrefetchScalarGridSpec(
            num_scalar_prefetch=0,
            grid=grid,
            in_specs=[
                pl.BlockSpec((tb, NUM_TABLES), lambda i: (i, 0)),       # indices
                pl.BlockSpec((tb, n_num_pad), lambda i: (i, 0)),        # numeric
                pl.BlockSpec((TOTAL_VOCAB_PAD, out_pad),
                             lambda i: (0, 0)),                         # W hi (grid-invariant)
                pl.BlockSpec((TOTAL_VOCAB_PAD, out_pad),
                             lambda i: (0, 0)),                         # W lo (grid-invariant)
                pl.BlockSpec((n_num_pad, out_pad), lambda i: (0, 0)),   # numeric placement
            ],
            out_specs=pl.BlockSpec((tb, out_pad), lambda i: (i, 0)),
        ),
        compiler_params=pltpu.CompilerParams(
            dimension_semantics=("parallel",),
            # Grid-invariant bf16 weights (~2.7 MiB each) + tiles fit easily,
            # but v5e's default 16 MiB scoped limit is tight -> raise it.
            vmem_limit_bytes=48 * 1024 * 1024),
        cost_estimate=pl.CostEstimate(
            flops=flops, transcendentals=0, bytes_accessed=bytes_accessed),
    )(idx, xn, packed["w_hi"], packed["w_lo"], packed["p"])

    return out_padded[:B, :out_dim]


if __name__ == "__main__":
    key = jax.random.PRNGKey(0)
    k_tab, k_idx, k_num = jax.random.split(key, 3)

    batch, n_num = 8, 5
    tables = init_embedding_tables(k_tab)

    idx_keys = jax.random.split(k_idx, NUM_TABLES)
    x_cat = jnp.stack(
        [jax.random.randint(idx_keys[i], (batch,), 0, VOCABS[i], jnp.int32)
         for i in range(NUM_TABLES)], axis=1)                      # [8, 7]
    x_num = jax.random.normal(k_num, (batch, n_num), jnp.float32)  # [8, 5]

    packed = pack_categorical_embedding_params(tables, n_num)      # once, reused
    out = categorical_embedding_forward(x_cat, x_num, packed)
    out = jax.block_until_ready(out)

    # Pure-JAX reference matching the PyTorch forward (f32 tables).
    output1 = [tables[i][x_cat[:, i]] for i in range(NUM_TABLES)]
    output2 = [tables[-2][x_cat[:, -2]], tables[-1][x_cat[:, -1]]]
    ref = jnp.concatenate(output1 + output2 + [x_num], axis=1)

    assert out.shape == ref.shape == (batch, EMB_OUT_DIM + n_num)
    # bf16 hi/lo split reproduces the f32 weights to <= ~2^-16 relative error
    # (worst case ~1.5e-5 * |w|); numeric passthrough is exact.
    assert jnp.allclose(out, ref, atol=1e-5, rtol=1e-4), float(
        jnp.abs(out - ref).max())

    print("KERNEL_OK")
</pallas_src>

<mosaic_0001>
module attributes {stable_mosaic.version = 11 : i64} {
  func.func @categorical_embedding_kernel(%arg0: i32, %arg1: memref<8x7xi32, #tpu.memory_space<vmem>>, %arg2: memref<8x8xf32, #tpu.memory_space<vmem>>, %arg3: memref<3712x384xbf16, #tpu.memory_space<vmem>>, %arg4: memref<3712x384xbf16, #tpu.memory_space<vmem>>, %arg5: memref<8x384xf32, #tpu.memory_space<vmem>>, %arg6: memref<8x384xf32, #tpu.memory_space<vmem>>) attributes {dimension_semantics = [#tpu.dimension_semantics<parallel>], iteration_bounds = array<i64: 1>, scalar_prefetch = 0 : i64, scratch_operands = 0 : i64, tpu.core_type = #tpu.core_type<tc>, window_params = [{transform_indices = @transform_0, window_bounds = array<i64: 8, 7>}, {transform_indices = @transform_1, window_bounds = array<i64: 8, 8>}, {pipeline_mode = #tpu.pipeline_mode<synchronous>, transform_indices = @transform_2, window_bounds = array<i64: 3712, 384>}, {pipeline_mode = #tpu.pipeline_mode<synchronous>, transform_indices = @transform_3, window_bounds = array<i64: 3712, 384>}, {pipeline_mode = #tpu.pipeline_mode<synchronous>, transform_indices = @transform_4, window_bounds = array<i64: 8, 384>}, {transform_indices = @transform_5, window_bounds = array<i64: 8, 384>}]} {
    %c0 = arith.constant 0 : index
    %c0_0 = arith.constant 0 : index
    %0 = vector.load %arg2[%c0, %c0_0] : memref<8x8xf32, #tpu.memory_space<vmem>>, vector<8x8xf32>
    %c0_1 = arith.constant 0 : index
    %c0_2 = arith.constant 0 : index
    %1 = vector.load %arg5[%c0_1, %c0_2] : memref<8x384xf32, #tpu.memory_space<vmem>>, vector<8x384xf32>
    %cst = arith.constant dense<0.000000e+00> : vector<8x384xf32>
    %2 = tpu.matmul %0, %1, %cst {dimension_numbers = #tpu.dot_dimension_numbers<[1], [0], [0], [1], [0, 0, 1, 1], [], []>} : vector<8x8xf32>, vector<8x384xf32>, vector<8x384xf32> -> vector<8x384xf32>
    %3 = tpu.iota {dimensions = array<i32: 1>} : vector<8x128xi32>
    %c0_3 = arith.constant 0 : index
    %c0_4 = arith.constant 0 : index
    %4 = vector.load %arg1[%c0_3, %c0_4] : memref<8x7xi32, #tpu.memory_space<vmem>>, vector<8x1xi32>
    %5 = vector.broadcast %4 : vector<8x1xi32> to vector<8x128xi32>
    %6 = arith.cmpi eq, %3, %5 : vector<8x128xi32>
    %7 = arith.extui %6 : vector<8x128xi1> to vector<8x128xi32>
    %8 = arith.sitofp %7 : vector<8x128xi32> to vector<8x128xf32>
    %9 = arith.truncf %8 : vector<8x128xf32> to vector<8x128xbf16>
    %c0_5 = arith.constant 0 : index
    %c0_6 = arith.constant 0 : index
    %10 = vector.load %arg3[%c0_5, %c0_6] : memref<3712x384xbf16, #tpu.memory_space<vmem>>, vector<128x384xbf16>
    %cst_7 = arith.constant dense<0.000000e+00> : vector<8x384xf32>
    %11 = tpu.matmul %9, %10, %cst_7 {dimension_numbers = #tpu.dot_dimension_numbers<[1], [0], [0], [1], [0, 0, 1, 1], [], []>} : vector<8x128xbf16>, vector<128x384xbf16>, vector<8x384xf32> -> vector<8x384xf32>
    %12 = arith.addf %2, %11 : vector<8x384xf32>
    %c0_8 = arith.constant 0 : index
    %c0_9 = arith.constant 0 : index
    %13 = vector.load %arg4[%c0_8, %c0_9] : memref<3712x384xbf16, #tpu.memory_space<vmem>>, vector<128x384xbf16>
    %cst_10 = arith.constant dense<0.000000e+00> : vector<8x384xf32>
    %14 = tpu.matmul %9, %13, %cst_10 {dimension_numbers = #tpu.dot_dimension_numbers<[1], [0], [0], [1], [0, 0, 1, 1], [], []>} : vector<8x128xbf16>, vector<128x384xbf16>, vector<8x384xf32> -> vector<8x384xf32>
    %15 = arith.addf %12, %14 : vector<8x384xf32>
    %16 = tpu.iota {dimensions = array<i32: 1>} : vector<8x128xi32>
    %c0_11 = arith.constant 0 : index
    %c1 = arith.constant 1 : index
    %17 = vector.load %arg1[%c0_11, %c1] : memref<8x7xi32, #tpu.memory_space<vmem>>, vector<8x1xi32>
    %18 = vector.broadcast %17 : vector<8x1xi32> to vector<8x128xi32>
    %19 = arith.cmpi eq, %16, %18 : vector<8x128xi32>
    %20 = arith.extui %19 : vector<8x128xi1> to vector<8x128xi32>
    %21 = arith.sitofp %20 : vector<8x128xi32> to vector<8x128xf32>
    %22 = arith.truncf %21 : vector<8x128xf32> to vector<8x128xbf16>
    %c128 = arith.constant 128 : index
    %c0_12 = arith.constant 0 : index
    %23 = vector.load %arg3[%c128, %c0_12] : memref<3712x384xbf16, #tpu.memory_space<vmem>>, vector<128x384xbf16>
    %cst_13 = arith.constant dense<0.000000e+00> : vector<8x384xf32>
    %24 = tpu.matmul %22, %23, %cst_13 {dimension_numbers = #tpu.dot_dimension_numbers<[1], [0], [0], [1], [0, 0, 1, 1], [], []>} : vector<8x128xbf16>, vector<128x384xbf16>, vector<8x384xf32> -> vector<8x384xf32>
    %25 = arith.addf %15, %24 : vector<8x384xf32>
    %c128_14 = arith.constant 128 : index
    %c0_15 = arith.constant 0 : index
    %26 = vector.load %arg4[%c128_14, %c0_15] : memref<3712x384xbf16, #tpu.memory_space<vmem>>, vector<128x384xbf16>
    %cst_16 = arith.constant dense<0.000000e+00> : vector<8x384xf32>
    %27 = tpu.matmul %22, %26, %cst_16 {dimension_numbers = #tpu.dot_dimension_numbers<[1], [0], [0], [1], [0, 0, 1, 1], [], []>} : vector<8x128xbf16>, vector<128x384xbf16>, vector<8x384xf32> -> vector<8x384xf32>
    %28 = arith.addf %25, %27 : vector<8x384xf32>
    %29 = tpu.iota {dimensions = array<i32: 1>} : vector<8x1280xi32>
    %c0_17 = arith.constant 0 : index
    %c2 = arith.constant 2 : index
    %30 = vector.load %arg1[%c0_17, %c2] : memref<8x7xi32, #tpu.memory_space<vmem>>, vector<8x1xi32>
    %31 = vector.broadcast %30 : vector<8x1xi32> to vector<8x1280xi32>
    %32 = arith.cmpi eq, %29, %31 : vector<8x1280xi32>
    %33 = arith.extui %32 : vector<8x1280xi1> to vector<8x1280xi32>
    %34 = arith.sitofp %33 : vector<8x1280xi32> to vector<8x1280xf32>
    %35 = arith.truncf %34 : vector<8x1280xf32> to vector<8x1280xbf16>
    %c256 = arith.constant 256 : index
    %c0_18 = arith.constant 0 : index
    %36 = vector.load %arg3[%c256, %c0_18] : memref<3712x384xbf16, #tpu.memory_space<vmem>>, vector<1280x384xbf16>
    %cst_19 = arith.constant dense<0.000000e+00> : vector<8x384xf32>
    %37 = tpu.matmul %35, %36, %cst_19 {dimension_numbers = #tpu.dot_dimension_numbers<[1], [0], [0], [1], [0, 0, 1, 1], [], []>} : vector<8x1280xbf16>, vector<1280x384xbf16>, vector<8x384xf32> -> vector<8x384xf32>
    %38 = arith.addf %28, %37 : vector<8x384xf32>
    %c256_20 = arith.constant 256 : index
    %c0_21 = arith.constant 0 : index
    %39 = vector.load %arg4[%c256_20, %c0_21] : memref<3712x384xbf16, #tpu.memory_space<vmem>>, vector<1280x384xbf16>
    %cst_22 = arith.constant dense<0.000000e+00> : vector<8x384xf32>
    %40 = tpu.matmul %35, %39, %cst_22 {dimension_numbers = #tpu.dot_dimension_numbers<[1], [0], [0], [1], [0, 0, 1, 1], [], []>} : vector<8x1280xbf16>, vector<1280x384xbf16>, vector<8x384xf32> -> vector<8x384xf32>
    %41 = arith.addf %38, %40 : vector<8x384xf32>
    %42 = tpu.iota {dimensions = array<i32: 1>} : vector<8x768xi32>
    %c0_23 = arith.constant 0 : index
    %c3 = arith.constant 3 : index
    %43 = vector.load %arg1[%c0_23, %c3] : memref<8x7xi32, #tpu.memory_space<vmem>>, vector<8x1xi32>
    %44 = vector.broadcast %43 : vector<8x1xi32> to vector<8x768xi32>
    %45 = arith.cmpi eq, %42, %44 : vector<8x768xi32>
    %46 = arith.extui %45 : vector<8x768xi1> to vector<8x768xi32>
    %47 = arith.sitofp %46 : vector<8x768xi32> to vector<8x768xf32>
    %48 = arith.truncf %47 : vector<8x768xf32> to vector<8x768xbf16>
    %c1536 = arith.constant 1536 : index
    %c0_24 = arith.constant 0 : index
    %49 = vector.load %arg3[%c1536, %c0_24] : memref<3712x384xbf16, #tpu.memory_space<vmem>>, vector<768x384xbf16>
    %cst_25 = arith.constant dense<0.000000e+00> : vector<8x384xf32>
    %50 = tpu.matmul %48, %49, %cst_25 {dimension_numbers = #tpu.dot_dimension_numbers<[1], [0], [0], [1], [0, 0, 1, 1], [], []>} : vector<8x768xbf16>, vector<768x384xbf16>, vector<8x384xf32> -> vector<8x384xf32>
    %51 = arith.addf %41, %50 : vector<8x384xf32>
    %c1536_26 = arith.constant 1536 : index
    %c0_27 = arith.constant 0 : index
    %52 = vector.load %arg4[%c1536_26, %c0_27] : memref<3712x384xbf16, #tpu.memory_space<vmem>>, vector<768x384xbf16>
    %cst_28 = arith.constant dense<0.000000e+00> : vector<8x384xf32>
    %53 = tpu.matmul %48, %52, %cst_28 {dimension_numbers = #tpu.dot_dimension_numbers<[1], [0], [0], [1], [0, 0, 1, 1], [], []>} : vector<8x768xbf16>, vector<768x384xbf16>, vector<8x384xf32> -> vector<8x384xf32>
    %54 = arith.addf %51, %53 : vector<8x384xf32>
    %55 = tpu.iota {dimensions = array<i32: 1>} : vector<8x128xi32>
    %c0_29 = arith.constant 0 : index
    %c4 = arith.constant 4 : index
    %56 = vector.load %arg1[%c0_29, %c4] : memref<8x7xi32, #tpu.memory_space<vmem>>, vector<8x1xi32>
    %57 = vector.broadcast %56 : vector<8x1xi32> to vector<8x128xi32>
    %58 = arith.cmpi eq, %55, %57 : vector<8x128xi32>
    %59 = arith.extui %58 : vector<8x128xi1> to vector<8x128xi32>
    %60 = arith.sitofp %59 : vector<8x128xi32> to vector<8x128xf32>
    %61 = arith.truncf %60 : vector<8x128xf32> to vector<8x128xbf16>
    %c2304 = arith.constant 2304 : index
    %c0_30 = arith.constant 0 : index
    %62 = vector.load %arg3[%c2304, %c0_30] : memref<3712x384xbf16, #tpu.memory_space<vmem>>, vector<128x384xbf16>
    %cst_31 = arith.constant dense<0.000000e+00> : vector<8x384xf32>
    %63 = tpu.matmul %61, %62, %cst_31 {dimension_numbers = #tpu.dot_dimension_numbers<[1], [0], [0], [1], [0, 0, 1, 1], [], []>} : vector<8x128xbf16>, vector<128x384xbf16>, vector<8x384xf32> -> vector<8x384xf32>
    %64 = arith.addf %54, %63 : vector<8x384xf32>
    %c2304_32 = arith.constant 2304 : index
    %c0_33 = arith.constant 0 : index
    %65 = vector.load %arg4[%c2304_32, %c0_33] : memref<3712x384xbf16, #tpu.memory_space<vmem>>, vector<128x384xbf16>
    %cst_34 = arith.constant dense<0.000000e+00> : vector<8x384xf32>
    %66 = tpu.matmul %61, %65, %cst_34 {dimension_numbers = #tpu.dot_dimension_numbers<[1], [0], [0], [1], [0, 0, 1, 1], [], []>} : vector<8x128xbf16>, vector<128x384xbf16>, vector<8x384xf32> -> vector<8x384xf32>
    %67 = arith.addf %64, %66 : vector<8x384xf32>
    %68 = tpu.iota {dimensions = array<i32: 1>} : vector<8x384xi32>
    %c0_35 = arith.constant 0 : index
    %c5 = arith.constant 5 : index
    %69 = vector.load %arg1[%c0_35, %c5] : memref<8x7xi32, #tpu.memory_space<vmem>>, vector<8x1xi32>
    %70 = vector.broadcast %69 : vector<8x1xi32> to vector<8x384xi32>
    %71 = arith.cmpi eq, %68, %70 : vector<8x384xi32>
    %72 = arith.extui %71 : vector<8x384xi1> to vector<8x384xi32>
    %73 = arith.sitofp %72 : vector<8x384xi32> to vector<8x384xf32>
    %74 = arith.truncf %73 : vector<8x384xf32> to vector<8x384xbf16>
    %c2432 = arith.constant 2432 : index
    %c0_36 = arith.constant 0 : index
    %75 = vector.load %arg3[%c2432, %c0_36] : memref<3712x384xbf16, #tpu.memory_space<vmem>>, vector<384x384xbf16>
    %cst_37 = arith.constant dense<0.000000e+00> : vector<8x384xf32>
    %76 = tpu.matmul %74, %75, %cst_37 {dimension_numbers = #tpu.dot_dimension_numbers<[1], [0], [0], [1], [0, 0, 1, 1], [], []>} : vector<8x384xbf16>, vector<384x384xbf16>, vector<8x384xf32> -> vector<8x384xf32>
    %77 = arith.addf %67, %76 : vector<8x384xf32>
    %c2432_38 = arith.constant 2432 : index
    %c0_39 = arith.constant 0 : index
    %78 = vector.load %arg4[%c2432_38, %c0_39] : memref<3712x384xbf16, #tpu.memory_space<vmem>>, vector<384x384xbf16>
    %cst_40 = arith.constant dense<0.000000e+00> : vector<8x384xf32>
    %79 = tpu.matmul %74, %78, %cst_40 {dimension_numbers = #tpu.dot_dimension_numbers<[1], [0], [0], [1], [0, 0, 1, 1], [], []>} : vector<8x384xbf16>, vector<384x384xbf16>, vector<8x384xf32> -> vector<8x384xf32>
    %80 = arith.addf %77, %79 : vector<8x384xf32>
    %81 = tpu.iota {dimensions = array<i32: 1>} : vector<8x896xi32>
    %c0_41 = arith.constant 0 : index
    %c6 = arith.constant 6 : index
    %82 = vector.load %arg1[%c0_41, %c6] : memref<8x7xi32, #tpu.memory_space<vmem>>, vector<8x1xi32>
    %83 = vector.broadcast %82 : vector<8x1xi32> to vector<8x896xi32>
    %84 = arith.cmpi eq, %81, %83 : vector<8x896xi32>
    %85 = arith.extui %84 : vector<8x896xi1> to vector<8x896xi32>
    %86 = arith.sitofp %85 : vector<8x896xi32> to vector<8x896xf32>
    %87 = arith.truncf %86 : vector<8x896xf32> to vector<8x896xbf16>
    %c2816 = arith.constant 2816 : index
    %c0_42 = arith.constant 0 : index
    %88 = vector.load %arg3[%c2816, %c0_42] : memref<3712x384xbf16, #tpu.memory_space<vmem>>, vector<896x384xbf16>
    %cst_43 = arith.constant dense<0.000000e+00> : vector<8x384xf32>
    %89 = tpu.matmul %87, %88, %cst_43 {dimension_numbers = #tpu.dot_dimension_numbers<[1], [0], [0], [1], [0, 0, 1, 1], [], []>} : vector<8x896xbf16>, vector<896x384xbf16>, vector<8x384xf32> -> vector<8x384xf32>
    %90 = arith.addf %80, %89 : vector<8x384xf32>
    %c2816_44 = arith.constant 2816 : index
    %c0_45 = arith.constant 0 : index
    %91 = vector.load %arg4[%c2816_44, %c0_45] : memref<3712x384xbf16, #tpu.memory_space<vmem>>, vector<896x384xbf16>
    %cst_46 = arith.constant dense<0.000000e+00> : vector<8x384xf32>
    %92 = tpu.matmul %87, %91, %cst_46 {dimension_numbers = #tpu.dot_dimension_numbers<[1], [0], [0], [1], [0, 0, 1, 1], [], []>} : vector<8x896xbf16>, vector<896x384xbf16>, vector<8x384xf32> -> vector<8x384xf32>
    %93 = arith.addf %90, %92 : vector<8x384xf32>
    %c0_47 = arith.constant 0 : index
    %c0_48 = arith.constant 0 : index
    %94 = vector.load %arg6[%c0_47, %c0_48] : memref<8x384xf32, #tpu.memory_space<vmem>>, vector<8x384xf32>
    tpu.vector_store %arg6[%c0_47, %c0_48], %93 {strides = array<i32>} : memref<8x384xf32, #tpu.memory_space<vmem>>, vector<8x384xf32>,
    return
  }
  func.func @transform_0(%arg0: i32) -> (i32, i32) {
    %c0_i32 = arith.constant 0 : i32
    %c0_i32_0 = arith.constant 0 : i32
    return %arg0, %c0_i32 : i32, i32
  }
  func.func @transform_1(%arg0: i32) -> (i32, i32) {
    %c0_i32 = arith.constant 0 : i32
    %c0_i32_0 = arith.constant 0 : i32
    return %arg0, %c0_i32 : i32, i32
  }
  func.func @transform_2(%arg0: i32) -> (i32, i32) {
    %c0_i32 = arith.constant 0 : i32
    %c0_i32_0 = arith.constant 0 : i32
    %c0_i32_1 = arith.constant 0 : i32
    return %c0_i32, %c0_i32_0 : i32, i32
  }
  func.func @transform_3(%arg0: i32) -> (i32, i32) {
    %c0_i32 = arith.constant 0 : i32
    %c0_i32_0 = arith.constant 0 : i32
    %c0_i32_1 = arith.constant 0 : i32
    return %c0_i32, %c0_i32_0 : i32, i32
  }
  func.func @transform_4(%arg0: i32) -> (i32, i32) {
    %c0_i32 = arith.constant 0 : i32
    %c0_i32_0 = arith.constant 0 : i32
    %c0_i32_1 = arith.constant 0 : i32
    return %c0_i32, %c0_i32_0 : i32, i32
  }
  func.func @transform_5(%arg0: i32) -> (i32, i32) {
    %c0_i32 = arith.constant 0 : i32
    %c0_i32_0 = arith.constant 0 : i32
    return %arg0, %c0_i32 : i32, i32
  }
}

</mosaic_0001>

<llo_original>
// kernel: tpu_custom_call.1
$region0: #{tpu_custom_call.1}
  #allocation0 [shape = 'u32[]', space=smem, size = 0x4, offset = 0x4, fixed_abs, tag = 'smem constant byte address 0x4 - core index']
  #allocation1 [shape = 'u32[144,128]{1,0:T(1,128)}', space=vmem, size = 0x12000, scoped, tag = 'internal scratch']
  %s0 = inlined_call_operand.hbm [shape: s32[8,7], index: 0, kind: input, shape index: {}]
  %s1 = inlined_call_operand.hbm [shape: f32[8,8], index: 1, kind: input, shape index: {}]
  %s2 = inlined_call_operand.hbm [shape: bf16[3712,384], index: 2, kind: input, shape index: {}]
  %s3 = inlined_call_operand.hbm [shape: bf16[3712,384], index: 3, kind: input, shape index: {}]
  %s4 = inlined_call_operand.hbm [shape: f32[8,384], index: 4, kind: input, shape index: {}]
  %s5 = inlined_call_operand.hbm [shape: f32[8,384], index: 5, kind: output, shape index: {}]
  %s6 = sld [smem:[#allocation0]]
  $region50: #{tpu_custom_call.1} parent=0
    _
  %s8 = ssub.s32 1, %s6
  %s9 = scalar_select 0, %s8, %s6
  $region1: #{tpu_custom_call.1} parent=0
    #allocation2 [shape = 'u8[4096]{0}', space=vmem, size = 0x1000, scoped, tag = 'input window, operand 0, single buffered']
    #allocation3 [shape = 's32[1]{0}', space=sflag, size = 0x4, scoped, tag = 'scoped memory for tpu_custom_call.1']
    #allocation4 [shape = 's32[1]{0}', space=sflag, size = 0x4, scoped, tag = 'scoped memory for tpu_custom_call.1']
    #allocation5 [shape = 'u8[4096]{0}', space=vmem, size = 0x1000, scoped, tag = 'input window, operand 1, single buffered']
    #allocation6 [shape = 's32[1]{0}', space=sflag, size = 0x4, scoped, tag = 'scoped memory for tpu_custom_call.1']
    #allocation7 [shape = 'u8[2850816]{0}', space=vmem, size = 0x2b8000, scoped, tag = 'input window, operand 2, single buffered']
    #allocation8 [shape = 'u8[2850816]{0}', space=vmem, size = 0x2b8000, scoped, tag = 'input window, operand 3, single buffered']
    #allocation9 [shape = 's32[1]{0}', space=sflag, size = 0x4, scoped, tag = 'scoped memory for tpu_custom_call.1']
    #allocation10 [shape = 'u8[12288]{0}', space=vmem, size = 0x3000, scoped, tag = 'input window, operand 4, single buffered']
    #allocation11 [shape = 'u8[12288]{0}', space=vmem, size = 0x3000, scoped, tag = 'output window, operand 0, single buffered']
    %10 = vsyncpa [#allocation3], 0
    %11 = vsyncpa [#allocation6], 0
    %12 = vsyncpa [#allocation9], 0
    %13 = vsyncpa [#allocation4], 0
    // Predicated region
    $region2: #{tpu_custom_call.1} parent=1 // pred_check
      _
    $region3: #{tpu_custom_call.1} parent=1 // pred_check_branch
      %15 = sbr.rel (0) target = $region5
    $region4: #{tpu_custom_call.1} parent=1 // pred_region
      %s17 = ssub.s32 128, 128
      %18 = vsyncadd [#allocation3], %s17
      %s20 = sshll.u32 [#allocation2], 4
      %s21 = int_to_ptr.vmem [resolvable:$true] %s20
      %23 = dma.hbm_to_vmem [thread:$0]  %s0, 128, %s21, [#allocation3]
    $region5: #{tpu_custom_call.1} parent=1 // pred_fallthru
      _
    // Predicated region
    $region6: #{tpu_custom_call.1} parent=1 // pred_check
      _
    $region7: #{tpu_custom_call.1} parent=1 // pred_check_branch
      %25 = sbr.rel (0) target = $region9
    $region8: #{tpu_custom_call.1} parent=1 // pred_region
      %s27 = ssub.s32 128, 128
      %28 = vsyncadd [#allocation6], %s27
      %s30 = sshll.u32 [#allocation5], 4
      %s31 = int_to_ptr.vmem [resolvable:$true] %s30
      %33 = dma.hbm_to_vmem [thread:$0]  %s1, 128, %s31, [#allocation6]
    $region9: #{tpu_custom_call.1} parent=1 // pred_fallthru
      _
    // Predicated region
    $region10: #{tpu_custom_call.1} parent=1 // pred_check
      _
    $region11: #{tpu_custom_call.1} parent=1 // pred_check_branch
      %35 = sbr.rel (0) target = $region13
    $region12: #{tpu_custom_call.1} parent=1 // pred_region
      %s37 = ssub.s32 89088, 89088
      %38 = vsyncadd [#allocation6], %s37
      %s39 = sshll.u32 [#allocation7], 4
      %s40 = int_to_ptr.vmem [resolvable:$true] %s39
      %45 = dma.hbm_to_vmem [thread:$0]  %s2, 89088, %s40, [#allocation6], 192, 192, 12
    $region13: #{tpu_custom_call.1} parent=1 // pred_fallthru
      _
    // Predicated region
    $region14: #{tpu_custom_call.1} parent=1 // pred_check
      _
    $region15: #{tpu_custom_call.1} parent=1 // pred_check_branch
      %47 = sbr.rel (0) target = $region17
    $region16: #{tpu_custom_call.1} parent=1 // pred_region
      %s49 = ssub.s32 89088, 89088
      %50 = vsyncadd [#allocation9], %s49
      %s51 = sshll.u32 [#allocation8], 4
      %s52 = int_to_ptr.vmem [resolvable:$true] %s51
      %57 = dma.hbm_to_vmem [thread:$0]  %s3, 89088, %s52, [#allocation9], 192, 192, 12
    $region17: #{tpu_custom_call.1} parent=1 // pred_fallthru
      _
    // Predicated region
    $region18: #{tpu_custom_call.1} parent=1 // pred_check
      _
    $region19: #{tpu_custom_call.1} parent=1 // pred_check_branch
      %59 = sbr.rel (0) target = $region21
    $region20: #{tpu_custom_call.1} parent=1 // pred_region
      %s61 = ssub.s32 384, 384
      %62 = vsyncadd [#allocation9], %s61
      %s64 = sshll.u32 [#allocation10], 4
      %s65 = int_to_ptr.vmem [resolvable:$true] %s64
      %67 = dma.hbm_to_vmem [thread:$0]  %s4, 384, %s65, [#allocation9]
    $region21: #{tpu_custom_call.1} parent=1 // pred_fallthru
      _
    // Predicated region
    $region22: #{tpu_custom_call.1} parent=1 // pred_check
      _
    $region23: #{tpu_custom_call.1} parent=1 // pred_check_branch
      %69 = sbr.rel (0) target = $region25
    $region24: #{tpu_custom_call.1} parent=1 // pred_region
      %70 = dma.done [#allocation3], 128
    $region25: #{tpu_custom_call.1} parent=1 // pred_fallthru
      _
    // Predicated region
    $region26: #{tpu_custom_call.1} parent=1 // pred_check
      _
    $region27: #{tpu_custom_call.1} parent=1 // pred_check_branch
      %72 = sbr.rel (0) target = $region29
    $region28: #{tpu_custom_call.1} parent=1 // pred_region
      %73 = dma.done [#allocation6], 128
    $region29: #{tpu_custom_call.1} parent=1 // pred_fallthru
      _
    // Predicated region
    $region30: #{tpu_custom_call.1} parent=1 // pred_check
      _
    $region31: #{tpu_custom_call.1} parent=1 // pred_check_branch
      %75 = sbr.rel (0) target = $region33
    $region32: #{tpu_custom_call.1} parent=1 // pred_region
      %76 = dma.done [#allocation6], 89088
    $region33: #{tpu_custom_call.1} parent=1 // pred_fallthru
      _
    // Predicated region
    $region34: #{tpu_custom_call.1} parent=1 // pred_check
      _
    $region35: #{tpu_custom_call.1} parent=1 // pred_check_branch
      %78 = sbr.rel (0) target = $region37
    $region36: #{tpu_custom_call.1} parent=1 // pred_region
      %79 = dma.done [#allocation9], 89088
    $region37: #{tpu_custom_call.1} parent=1 // pred_fallthru
      _
    // Predicated region
    $region38: #{tpu_custom_call.1} parent=1 // pred_check
      _
    $region39: #{tpu_custom_call.1} parent=1 // pred_check_branch
      %81 = sbr.rel (0) target = $region41
    $region40: #{tpu_custom_call.1} parent=1 // pred_region
      %82 = dma.done [#allocation9], 384
    $region41: #{tpu_custom_call.1} parent=1 // pred_fallthru
      _
    %v84 = vld [vmem:[#allocation5] sm:$0xff]
    %v85 = vld [vmem:[#allocation10] sm:$0xff]
    %v86 = vld [vmem:[#allocation10 + $0x8] sm:$0xff]
    %v87 = vld [vmem:[#allocation10 + $0x10] sm:$0xff]
    %v88 = vlaneseq
    %v89 = vand.u32 %v88, 127
    %v90 = vld [vmem:[#allocation2] sm:$0xff]
    %91 = vset.pattern.permute.xlu0 0
    %92 = vperm.xlu0 %91, %v90
    %v93 = vpop.permute.xlu0 %92
    %vm94 = vcmp.eq.s32.totalorder %v89, %v93
    %v95 = vsel %vm94, 1, 0
    %v96 = vcvt.s32.f32 %v95
    %v97 = vpack.c.bf16 %v96, %v96
    %v98 = vld [vmem:[#allocation7] sm:$0xff]
    %v99 = vld [vmem:[#allocation7 + $0x8] sm:$0xf]
    %v100 = vld [vmem:[#allocation7 + $0xc] sm:$0xff]
    %v101 = vld [vmem:[#allocation7 + $0x14] sm:$0xf]
    %v102 = vld [vmem:[#allocation7 + $0x18] sm:$0xff]
    %v103 = vld [vmem:[#allocation7 + $0x20] sm:$0xf]
    %v104 = vld [vmem:[#allocation7 + $0x24] sm:$0xff]
    %v105 = vld [vmem:[#allocation7 + $0x2c] sm:$0xf]
    %v106 = vld [vmem:[#allocation7 + $0x30] sm:$0xff]
    %v107 = vld [vmem:[#allocation7 + $0x38] sm:$0xf]
    %v108 = vld [vmem:[#allocation7 + $0x3c] sm:$0xff]
    %v109 = vld [vmem:[#allocation7 + $0x44] sm:$0xf]
    %v110 = vld [vmem:[#allocation7 + $0x48] sm:$0xff]
    %v111 = vld [vmem:[#allocation7 + $0x50] sm:$0xf]
    %v112 = vld [vmem:[#allocation7 + $0x54] sm:$0xff]
    %v113 = vld [vmem:[#allocation7 + $0x5c] sm:$0xf]
    %v114 = vld [vmem:[#allocation7 + $0x60] sm:$0xff]
    %v115 = vld [vmem:[#allocation7 + $0x68] sm:$0xf]
    %v116 = vld [vmem:[#allocation7 + $0x6c] sm:$0xff]
    %v117 = vld [vmem:[#allocation7 + $0x74] sm:$0xf]
    %v118 = vld [vmem:[#allocation7 + $0x78] sm:$0xff]
    %v119 = vld [vmem:[#allocation7 + $0x80] sm:$0xf]
    %v120 = vld [vmem:[#allocation7 + $0x84] sm:$0xff]
    %v121 = vld [vmem:[#allocation7 + $0x8c] sm:$0xf]
    %v122 = vld [vmem:[#allocation7 + $0x90] sm:$0xff]
    %v123 = vld [vmem:[#allocation7 + $0x98] sm:$0xf]
    %v124 = vld [vmem:[#allocation7 + $0x9c] sm:$0xff]
    %v125 = vld [vmem:[#allocation7 + $0xa4] sm:$0xf]
    %v126 = vld [vmem:[#allocation7 + $0xa8] sm:$0xff]
    %v127 = vld [vmem:[#allocation7 + $0xb0] sm:$0xf]
    %v128 = vld [vmem:[#allocation7 + $0xb4] sm:$0xff]
    %v129 = vld [vmem:[#allocation7 + $0xbc] sm:$0xf]
    %v162 = vunpack.c.l.b16 %v98
    %v163 = vunpack.c.h.b16 %v98
    %v164 = vunpack.c.l.b16 %v99
    %v165 = vunpack.c.l.b16 %v100
    %v166 = vunpack.c.h.b16 %v100
    %v167 = vunpack.c.l.b16 %v101
    %v168 = vunpack.c.l.b16 %v102
    %v169 = vunpack.c.h.b16 %v102
    %v170 = vunpack.c.l.b16 %v103
    %v171 = vunpack.c.l.b16 %v104
    %v172 = vunpack.c.h.b16 %v104
    %v173 = vunpack.c.l.b16 %v105
    %v174 = vunpack.c.l.b16 %v106
    %v175 = vunpack.c.h.b16 %v106
    %v176 = vunpack.c.l.b16 %v107
    %v177 = vunpack.c.l.b16 %v108
    %v178 = vunpack.c.h.b16 %v108
    %v179 = vunpack.c.l.b16 %v109
    %v180 = vunpack.c.l.b16 %v110
    %v181 = vunpack.c.h.b16 %v110
    %v182 = vunpack.c.l.b16 %v111
    %v183 = vunpack.c.l.b16 %v112
    %v184 = vunpack.c.h.b16 %v112
    %v185 = vunpack.c.l.b16 %v113
    %v186 = vunpack.c.l.b16 %v114
    %v187 = vunpack.c.h.b16 %v114
    %v188 = vunpack.c.l.b16 %v115
    %v189 = vunpack.c.l.b16 %v116
    %v190 = vunpack.c.h.b16 %v116
    %v191 = vunpack.c.l.b16 %v117
    %v192 = vunpack.c.l.b16 %v118
    %v193 = vunpack.c.h.b16 %v118
    %v194 = vunpack.c.l.b16 %v119
    %v195 = vunpack.c.l.b16 %v120
    %v196 = vunpack.c.h.b16 %v120
    %v197 = vunpack.c.l.b16 %v121
    %v198 = vunpack.c.l.b16 %v122
    %v199 = vunpack.c.h.b16 %v122
    %v200 = vunpack.c.l.b16 %v123
    %v201 = vunpack.c.l.b16 %v124
    %v202 = vunpack.c.h.b16 %v124
    %v203 = vunpack.c.l.b16 %v125
    %v204 = vunpack.c.l.b16 %v126
    %v205 = vunpack.c.h.b16 %v126
    %v206 = vunpack.c.l.b16 %v127
    %v207 = vunpack.c.l.b16 %v128
    %v208 = vunpack.c.h.b16 %v128
    %v209 = vunpack.c.l.b16 %v129
    %v210 = vpack.c.b16 %v165, %v162
    %v211 = vpack.c.b16 %v166, %v163
    %v212 = vpack.c.b16 %v167, %v164
    %v213 = vpack.c.b16 %v171, %v168
    %v214 = vpack.c.b16 %v172, %v169
    %v215 = vpack.c.b16 %v173, %v170
    %v216 = vpack.c.b16 %v177, %v174
    %v217 = vpack.c.b16 %v178, %v175
    %v218 = vpack.c.b16 %v179, %v176
    %v219 = vpack.c.b16 %v183, %v180
    %v220 = vpack.c.b16 %v184, %v181
    %v221 = vpack.c.b16 %v185, %v182
    %v222 = vpack.c.b16 %v189, %v186
    %v223 = vpack.c.b16 %v190, %v187
    %v224 = vpack.c.b16 %v191, %v188
    %v225 = vpack.c.b16 %v195, %v192
    %v226 = vpack.c.b16 %v196, %v193
    %v227 = vpack.c.b16 %v197, %v194
    %v228 = vpack.c.b16 %v201, %v198
    %v229 = vpack.c.b16 %v202, %v199
    %v230 = vpack.c.b16 %v203, %v200
    %v231 = vpack.c.b16 %v207, %v204
    %v232 = vpack.c.b16 %v208, %v205
    %v233 = vpack.c.b16 %v209, %v206
    %258 = vmatprep.subr.bf16.mxu0 %v232
    %259 = vmatpush1.bf16.msra.mxu0 %v231
    %260 = vmatprep.subr.bf16.mxu0 %v229
    %261 = vmatpush1.bf16.msra.mxu0 %v228
    %262 = vmatprep.subr.bf16.mxu0 %v226
    %263 = vmatpush1.bf16.msra.mxu0 %v225
    %264 = vmatprep.subr.bf16.mxu0 %v223
    %265 = vmatpush1.bf16.msra.mxu0 %v222
    %266 = vmatprep.subr.bf16.mxu0 %v220
    %267 = vmatpush1.bf16.msra.mxu0 %v219
    %268 = vmatprep.subr.bf16.mxu0 %v217
    %269 = vmatpush1.bf16.msra.mxu0 %v216
    %270 = vmatprep.subr.bf16.mxu0 %v214
    %271 = vmatpush1.bf16.msra.mxu0 %v213
    %272 = vmatprep.subr.bf16.mxu0 %v211
    %273 = vmatpush1.bf16.msra.mxu0 %v210
    %274 = vmatprep.subr.bf16.mxu0 0
    %275 = vmatpush2.bf16.msra.mxu0 0
    %276 = vmatprep.subr.bf16.mxu0 0
    %277 = vmatpush2.bf16.msra.mxu0 0
    %278 = vmatprep.subr.bf16.mxu0 0
    %279 = vmatpush2.bf16.msra.mxu0 0
    %280 = vmatprep.subr.bf16.mxu0 0
    %281 = vmatpush2.bf16.msra.mxu0 0
    %282 = vmatprep.subr.bf16.mxu0 0
    %283 = vmatpush2.bf16.msra.mxu0 0
    %284 = vmatprep.subr.bf16.mxu0 0
    %285 = vmatpush2.bf16.msra.mxu0 0
    %286 = vmatprep.subr.bf16.mxu0 0
    %287 = vmatpush2.bf16.msra.mxu0 0
    %288 = vmatprep.subr.bf16.mxu0 0
    %289 = vmatpush2.bf16.msra.mxu0 0
    %290 = vmatprep.mubr.bf16.mxu0 0
    %291 = vmatmul.mubr.bf16.gmra.mxu0 %v97
    %v292 = vpop.f32.mrf.mxu0
    %v293 = vadd.f32 0.0, %v292
    %v294 = vpop.f32.mrf.mxu0
    %v295 = vadd.f32 0.0, %v294
    %v296 = vpop.f32.mrf.mxu0
    %v297 = vpop.f32.mrf.mxu0
    %298 = vdwg.mxu0
    %299 = vmatprep.subr.bf16.mxu0 0
    %300 = vmatpush1.bf16.msra.mxu0 %v233
    %301 = vmatprep.subr.bf16.mxu0 0
    %302 = vmatpush1.bf16.msra.mxu0 %v230
    %303 = vmatprep.subr.bf16.mxu0 0
    %304 = vmatpush1.bf16.msra.mxu0 %v227
    %305 = vmatprep.subr.bf16.mxu0 0
    %306 = vmatpush1.bf16.msra.mxu0 %v224
    %307 = vmatprep.subr.bf16.mxu0 0
    %308 = vmatpush1.bf16.msra.mxu0 %v221
    %309 = vmatprep.subr.bf16.mxu0 0
    %310 = vmatpush1.bf16.msra.mxu0 %v218
    %311 = vmatprep.subr.bf16.mxu0 0
    %312 = vmatpush1.bf16.msra.mxu0 %v215
    %313 = vmatprep.subr.bf16.mxu0 0
    %314 = vmatpush1.bf16.msra.mxu0 %v212
    %315 = vmatprep.subr.bf16.mxu0 0
    %316 = vmatpush2.bf16.msra.mxu0 0
    %317 = vmatprep.subr.bf16.mxu0 0
    %318 = vmatpush2.bf16.msra.mxu0 0
    %319 = vmatprep.subr.bf16.mxu0 0
    %320 = vmatpush2.bf16.msra.mxu0 0
    %321 = vmatprep.subr.bf16.mxu0 0
    %322 = vmatpush2.bf16.msra.mxu0 0
    %323 = vmatprep.subr.bf16.mxu0 0
    %324 = vmatpush2.bf16.msra.mxu0 0
    %325 = vmatprep.subr.bf16.mxu0 0
    %326 = vmatpush2.bf16.msra.mxu0 0
    %327 = vmatprep.subr.bf16.mxu0 0
    %328 = vmatpush2.bf16.msra.mxu0 0
    %329 = vmatprep.subr.bf16.mxu0 0
    %330 = vmatpush2.bf16.msra.mxu0 0
    %331 = vmatprep.mubr.bf16.mxu0 0
    %332 = vmatmul.mubr.bf16.gmra.mxu0 %v97
    %v333 = vpop.f32.mrf.mxu0
    %v334 = vadd.f32 0.0, %v333
    %v335 = vpop.f32.mrf.mxu0
    %v336 = vpop.f32.mrf.mxu0
    %v337 = vpop.f32.mrf.mxu0
    %338 = vdwg.mxu0
    %vm339 = vcmask 64512
    %v341 = vsel %vm339, %v84, 0
    %343 = vmatprep.subr.mxu0 0.0
    %344 = vmatpush1.msra.mxu0 0.0
    %345 = vmatprep.subr.mxu0 0.0
    %346 = vmatpush1.msra.mxu0 0.0
    %347 = vmatprep.subr.mxu0 0.0
    %348 = vmatpush1.msra.mxu0 0.0
    %349 = vmatprep.subr.mxu0 0.0
    %350 = vmatpush1.msra.mxu0 0.0
    %351 = vmatprep.subr.mxu0 0.0
    %352 = vmatpush1.msra.mxu0 0.0
    %353 = vmatprep.subr.mxu0 0.0
    %354 = vmatpush1.msra.mxu0 0.0
    %355 = vmatprep.subr.mxu0 0.0
    %356 = vmatpush1.msra.mxu0 0.0
    %357 = vmatprep.subr.mxu0 0.0
    %358 = vmatpush1.msra.mxu0 0.0
    %359 = vmatprep.subr.mxu0 0.0
    %360 = vmatpush1.msra.mxu0 0.0
    %361 = vmatprep.subr.mxu0 0.0
    %362 = vmatpush1.msra.mxu0 0.0
    %363 = vmatprep.subr.mxu0 0.0
    %364 = vmatpush1.msra.mxu0 0.0
    %365 = vmatprep.subr.mxu0 0.0
    %366 = vmatpush1.msra.mxu0 0.0
    %367 = vmatprep.subr.mxu0 0.0
    %368 = vmatpush1.msra.mxu0 0.0
    %369 = vmatprep.subr.mxu0 0.0
    %370 = vmatpush1.msra.mxu0 0.0
    %371 = vmatprep.subr.mxu0 0.0
    %372 = vmatpush1.msra.mxu0 0.0
    %373 = vmatprep.subr.mxu0 %v86
    %374 = vmatpush1.msra.mxu0 %v85
    %375 = vmatprep.subr.mxu0 0.0
    %376 = vmatpush2.msra.mxu0 0.0
    %377 = vmatprep.subr.mxu0 0.0
    %378 = vmatpush2.msra.mxu0 0.0
    %379 = vmatprep.subr.mxu0 0.0
    %380 = vmatpush2.msra.mxu0 0.0
    %381 = vmatprep.subr.mxu0 0.0
    %382 = vmatpush2.msra.mxu0 0.0
    %383 = vmatprep.subr.mxu0 0.0
    %384 = vmatpush2.msra.mxu0 0.0
    %385 = vmatprep.subr.mxu0 0.0
    %386 = vmatpush2.msra.mxu0 0.0
    %387 = vmatprep.subr.mxu0 0.0
    %388 = vmatpush2.msra.mxu0 0.0
    %389 = vmatprep.subr.mxu0 0.0
    %390 = vmatpush2.msra.mxu0 0.0
    %391 = vmatprep.subr.mxu0 0.0
    %392 = vmatpush2.msra.mxu0 0.0
    %393 = vmatprep.subr.mxu0 0.0
    %394 = vmatpush2.msra.mxu0 0.0
    %395 = vmatprep.subr.mxu0 0.0
    %396 = vmatpush2.msra.mxu0 0.0
    %397 = vmatprep.subr.mxu0 0.0
    %398 = vmatpush2.msra.mxu0 0.0
    %399 = vmatprep.subr.mxu0 0.0
    %400 = vmatpush2.msra.mxu0 0.0
    %401 = vmatprep.subr.mxu0 0.0
    %402 = vmatpush2.msra.mxu0 0.0
    %403 = vmatprep.subr.mxu0 0.0
    %404 = vmatpush2.msra.mxu0 0.0
    %405 = vmatprep.subr.mxu0 0.0
    %406 = vmatpush2.msra.mxu0 0.0
    %407 = vmatprep.mubr.f32.mxu0 0.0
    %408 = vmatmul.mubr.f32.gmra.mxu0 %v341
    %v409 = vpop.f32.mrf.mxu0
    %v410 = vadd.f32 %v293, %v409
    %v411 = vpop.f32.mrf.mxu0
    %v412 = vadd.f32 %v295, %v411
    %413 = vdwg.mxu0
    %414 = vmatprep.subr.mxu0 0.0
    %415 = vmatpush1.msra.mxu0 0.0
    %416 = vmatprep.subr.mxu0 0.0
    %417 = vmatpush1.msra.mxu0 0.0
    %418 = vmatprep.subr.mxu0 0.0
    %419 = vmatpush1.msra.mxu0 0.0
    %420 = vmatprep.subr.mxu0 0.0
    %421 = vmatpush1.msra.mxu0 0.0
    %422 = vmatprep.subr.mxu0 0.0
    %423 = vmatpush1.msra.mxu0 0.0
    %424 = vmatprep.subr.mxu0 0.0
    %425 = vmatpush1.msra.mxu0 0.0
    %426 = vmatprep.subr.mxu0 0.0
    %427 = vmatpush1.msra.mxu0 0.0
    %428 = vmatprep.subr.mxu0 0.0
    %429 = vmatpush1.msra.mxu0 0.0
    %430 = vmatprep.subr.mxu0 0.0
    %431 = vmatpush1.msra.mxu0 0.0
    %432 = vmatprep.subr.mxu0 0.0
    %433 = vmatpush1.msra.mxu0 0.0
    %434 = vmatprep.subr.mxu0 0.0
    %435 = vmatpush1.msra.mxu0 0.0
    %436 = vmatprep.subr.mxu0 0.0
    %437 = vmatpush1.msra.mxu0 0.0
    %438 = vmatprep.subr.mxu0 0.0
    %439 = vmatpush1.msra.mxu0 0.0
    %440 = vmatprep.subr.mxu0 0.0
    %441 = vmatpush1.msra.mxu0 0.0
    %442 = vmatprep.subr.mxu0 0.0
    %443 = vmatpush1.msra.mxu0 0.0
    %444 = vmatprep.subr.mxu0 0.0
    %445 = vmatpush1.msra.mxu0 %v87
    %446 = vmatprep.subr.mxu0 0.0
    %447 = vmatpush2.msra.mxu0 0.0
    %448 = vmatprep.subr.mxu0 0.0
    %449 = vmatpush2.msra.mxu0 0.0
    %450 = vmatprep.subr.mxu0 0.0
    %451 = vmatpush2.msra.mxu0 0.0
    %452 = vmatprep.subr.mxu0 0.0
    %453 = vmatpush2.msra.mxu0 0.0
    %454 = vmatprep.subr.mxu0 0.0
    %455 = vmatpush2.msra.mxu0 0.0
    %456 = vmatprep.subr.mxu0 0.0
    %457 = vmatpush2.msra.mxu0 0.0
    %458 = vmatprep.subr.mxu0 0.0
    %459 = vmatpush2.msra.mxu0 0.0
    %460 = vmatprep.subr.mxu0 0.0
    %461 = vmatpush2.msra.mxu0 0.0
    %462 = vmatprep.subr.mxu0 0.0
    %463 = vmatpush2.msra.mxu0 0.0
    %464 = vmatprep.subr.mxu0 0.0
    %465 = vmatpush2.msra.mxu0 0.0
    %466 = vmatprep.subr.mxu0 0.0
    %467 = vmatpush2.msra.mxu0 0.0
    %468 = vmatprep.subr.mxu0 0.0
    %469 = vmatpush2.msra.mxu0 0.0
    %470 = vmatprep.subr.mxu0 0.0
    %471 = vmatpush2.msra.mxu0 0.0
    %472 = vmatprep.subr.mxu0 0.0
    %473 = vmatpush2.msra.mxu0 0.0
    %474 = vmatprep.subr.mxu0 0.0
    %475 = vmatpush2.msra.mxu0 0.0
    %476 = vmatprep.subr.mxu0 0.0
    %477 = vmatpush2.msra.mxu0 0.0
    %478 = vmatprep.mubr.f32.mxu0 0.0
    %479 = vmatmul.mubr.f32.gmra.mxu0 %v341
    %v480 = vpop.f32.mrf.mxu0
    %v481 = vadd.f32 %v334, %v480
    %v482 = vpop.f32.mrf.mxu0
    %483 = vdwg.mxu0
    %v484 = vld [vmem:[#allocation8] sm:$0xff]
    %v485 = vld [vmem:[#allocation8 + $0x8] sm:$0xf]
    %v486 = vld [vmem:[#allocation8 + $0xc] sm:$0xff]
    %v487 = vld [vmem:[#allocation8 + $0x14] sm:$0xf]
    %v488 = vld [vmem:[#allocation8 + $0x18] sm:$0xff]
    %v489 = vld [vmem:[#allocation8 + $0x20] sm:$0xf]
    %v490 = vld [vmem:[#allocation8 + $0x24] sm:$0xff]
    %v491 = vld [vmem:[#allocation8 + $0x2c] sm:$0xf]
    %v492 = vld [vmem:[#allocation8 + $0x30] sm:$0xff]
    %v493 = vld [vmem:[#allocation8 + $0x38] sm:$0xf]
    %v494 = vld [vmem:[#allocation8 + $0x3c] sm:$0xff]
    %v495 = vld [vmem:[#allocation8 + $0x44] sm:$0xf]
    %v496 = vld [vmem:[#allocation8 + $0x48] sm:$0xff]
    %v497 = vld [vmem:[#allocation8 + $0x50] sm:$0xf]
    %v498 = vld [vmem:[#allocation8 + $0x54] sm:$0xff]
    %v499 = vld [vmem:[#allocation8 + $0x5c] sm:$0xf]
    %v500 = vld [vmem:[#allocation8 + $0x60] sm:$0xff]
    %v501 = vld [vmem:[#allocation8 + $0x68] sm:$0xf]
    %v502 = vld [vmem:[#allocation8 + $0x6c] sm:$0xff]
    %v503 = vld [vmem:[#allocation8 + $0x74] sm:$0xf]
    %v504 = vld [vmem:[#allocation8 + $0x78] sm:$0xff]
    %v505 = vld [vmem:[#allocation8 + $0x80] sm:$0xf]
    %v506 = vld [vmem:[#allocation8 + $0x84] sm:$0xff]
    %v507 = vld [vmem:[#allocation8 + $0x8c] sm:$0xf]
    %v508 = vld [vmem:[#allocation8 + $0x90] sm:$0xff]
    %v509 = vld [vmem:[#allocation8 + $0x98] sm:$0xf]
    %v510 = vld [vmem:[#allocation8 + $0x9c] sm:$0xff]
    %v511 = vld [vmem:[#allocation8 + $0xa4] sm:$0xf]
    %v512 = vld [vmem:[#allocation8 + $0xa8] sm:$0xff]
    %v513 = vld [vmem:[#allocation8 + $0xb0] sm:$0xf]
    %v514 = vld [vmem:[#allocation8 + $0xb4] sm:$0xff]
    %v515 = vld [vmem:[#allocation8 + $0xbc] sm:$0xf]
    %v548 = vunpack.c.l.b16 %v484
    %v549 = vunpack.c.h.b16 %v484
    %v550 = vunpack.c.l.b16 %v485
    %v551 = vunpack.c.l.b16 %v486
    %v552 = vunpack.c.h.b16 %v486
    %v553 = vunpack.c.l.b16 %v487
    %v554 = vunpack.c.l.b16 %v488
    %v555 = vunpack.c.h.b16 %v488
    %v556 = vunpack.c.l.b16 %v489
    %v557 = vunpack.c.l.b16 %v490
    %v558 = vunpack.c.h.b16 %v490
    %v559 = vunpack.c.l.b16 %v491
    %v560 = vunpack.c.l.b16 %v492
    %v561 = vunpack.c.h.b16 %v492
    %v562 = vunpack.c.l.b16 %v493
    %v563 = vunpack.c.l.b16 %v494
    %v564 = vunpack.c.h.b16 %v494
    %v565 = vunpack.c.l.b16 %v495
    %v566 = vunpack.c.l.b16 %v496
    %v567 = vunpack.c.h.b16 %v496
    %v568 = vunpack.c.l.b16 %v497
    %v569 = vunpack.c.l.b16 %v498
    %v570 = vunpack.c.h.b16 %v498
    %v571 = vunpack.c.l.b16 %v499
    %v572 = vunpack.c.l.b16 %v500
    %v573 = vunpack.c.h.b16 %v500
    %v574 = vunpack.c.l.b16 %v501
    %v575 = vunpack.c.l.b16 %v502
    %v576 = vunpack.c.h.b16 %v502
    %v577 = vunpack.c.l.b16 %v503
    %v578 = vunpack.c.l.b16 %v504
    %v579 = vunpack.c.h.b16 %v504
    %v580 = vunpack.c.l.b16 %v505
    %v581 = vunpack.c.l.b16 %v506
    %v582 = vunpack.c.h.b16 %v506
    %v583 = vunpack.c.l.b16 %v507
    %v584 = vunpack.c.l.b16 %v508
    %v585 = vunpack.c.h.b16 %v508
    %v586 = vunpack.c.l.b16 %v509
    %v587 = vunpack.c.l.b16 %v510
    %v588 = vunpack.c.h.b16 %v510
    %v589 = vunpack.c.l.b16 %v511
    %v590 = vunpack.c.l.b16 %v512
    %v591 = vunpack.c.h.b16 %v512
    %v592 = vunpack.c.l.b16 %v513
    %v593 = vunpack.c.l.b16 %v514
    %v594 = vunpack.c.h.b16 %v514
    %v595 = vunpack.c.l.b16 %v515
    %v596 = vpack.c.b16 %v551, %v548
    %v597 = vpack.c.b16 %v552, %v549
    %v598 = vpack.c.b16 %v553, %v550
    %v599 = vpack.c.b16 %v557, %v554
    %v600 = vpack.c.b16 %v558, %v555
    %v601 = vpack.c.b16 %v559, %v556
    %v602 = vpack.c.b16 %v563, %v560
    %v603 = vpack.c.b16 %v564, %v561
    %v604 = vpack.c.b16 %v565, %v562
    %v605 = vpack.c.b16 %v569, %v566
    %v606 = vpack.c.b16 %v570, %v567
    %v607 = vpack.c.b16 %v571, %v568
    %v608 = vpack.c.b16 %v575, %v572
    %v609 = vpack.c.b16 %v576, %v573
    %v610 = vpack.c.b16 %v577, %v574
    %v611 = vpack.c.b16 %v581, %v578
    %v612 = vpack.c.b16 %v582, %v579
    %v613 = vpack.c.b16 %v583, %v580
    %v614 = vpack.c.b16 %v587, %v584
    %v615 = vpack.c.b16 %v588, %v585
    %v616 = vpack.c.b16 %v589, %v586
    %v617 = vpack.c.b16 %v593, %v590
    %v618 = vpack.c.b16 %v594, %v591
    %v619 = vpack.c.b16 %v595, %v592
    %644 = vmatprep.subr.bf16.mxu0 %v618
    %645 = vmatpush1.bf16.msra.mxu0 %v617
    %646 = vmatprep.subr.bf16.mxu0 %v615
    %647 = vmatpush1.bf16.msra.mxu0 %v614
    %648 = vmatprep.subr.bf16.mxu0 %v612
    %649 = vmatpush1.bf16.msra.mxu0 %v611
    %650 = vmatprep.subr.bf16.mxu0 %v609
    %651 = vmatpush1.bf16.msra.mxu0 %v608
    %652 = vmatprep.subr.bf16.mxu0 %v606
    %653 = vmatpush1.bf16.msra.mxu0 %v605
    %654 = vmatprep.subr.bf16.mxu0 %v603
    %655 = vmatpush1.bf16.msra.mxu0 %v602
    %656 = vmatprep.subr.bf16.mxu0 %v600
    %657 = vmatpush1.bf16.msra.mxu0 %v599
    %658 = vmatprep.subr.bf16.mxu0 %v597
    %659 = vmatpush1.bf16.msra.mxu0 %v596
    %660 = vmatprep.subr.bf16.mxu0 0
    %661 = vmatpush2.bf16.msra.mxu0 0
    %662 = vmatprep.subr.bf16.mxu0 0
    %663 = vmatpush2.bf16.msra.mxu0 0
    %664 = vmatprep.subr.bf16.mxu0 0
    %665 = vmatpush2.bf16.msra.mxu0 0
    %666 = vmatprep.subr.bf16.mxu0 0
    %667 = vmatpush2.bf16.msra.mxu0 0
    %668 = vmatprep.subr.bf16.mxu0 0
    %669 = vmatpush2.bf16.msra.mxu0 0
    %670 = vmatprep.subr.bf16.mxu0 0
    %671 = vmatpush2.bf16.msra.mxu0 0
    %672 = vmatprep.subr.bf16.mxu0 0
    %673 = vmatpush2.bf16.msra.mxu0 0
    %674 = vmatprep.subr.bf16.mxu0 0
    %675 = vmatpush2.bf16.msra.mxu0 0
    %676 = vmatprep.mubr.bf16.mxu0 0
    %677 = vmatmul.mubr.bf16.gmra.mxu0 %v97
    %v678 = vpop.f32.mrf.mxu0
    %v679 = vadd.f32 0.0, %v678
    %v680 = vpop.f32.mrf.mxu0
    %v681 = vadd.f32 0.0, %v680
    %v682 = vpop.f32.mrf.mxu0
    %v683 = vpop.f32.mrf.mxu0
    %684 = vdwg.mxu0
    %685 = vmatprep.subr.bf16.mxu0 0
    %686 = vmatpush1.bf16.msra.mxu0 %v619
    %687 = vmatprep.subr.bf16.mxu0 0
    %688 = vmatpush1.bf16.msra.mxu0 %v616
    %689 = vmatprep.subr.bf16.mxu0 0
    %690 = vmatpush1.bf16.msra.mxu0 %v613
    %691 = vmatprep.subr.bf16.mxu0 0
    %692 = vmatpush1.bf16.msra.mxu0 %v610
    %693 = vmatprep.subr.bf16.mxu0 0
    %694 = vmatpush1.bf16.msra.mxu0 %v607
    %695 = vmatprep.subr.bf16.mxu0 0
    %696 = vmatpush1.bf16.msra.mxu0 %v604
    %697 = vmatprep.subr.bf16.mxu0 0
    %698 = vmatpush1.bf16.msra.mxu0 %v601
    %699 = vmatprep.subr.bf16.mxu0 0
    %700 = vmatpush1.bf16.msra.mxu0 %v598
    %701 = vmatprep.subr.bf16.mxu0 0
    %702 = vmatpush2.bf16.msra.mxu0 0
    %703 = vmatprep.subr.bf16.mxu0 0
    %704 = vmatpush2.bf16.msra.mxu0 0
    %705 = vmatprep.subr.bf16.mxu0 0
    %706 = vmatpush2.bf16.msra.mxu0 0
    %707 = vmatprep.subr.bf16.mxu0 0
    %708 = vmatpush2.bf16.msra.mxu0 0
    %709 = vmatprep.subr.bf16.mxu0 0
    %710 = vmatpush2.bf16.msra.mxu0 0
    %711 = vmatprep.subr.bf16.mxu0 0
    %712 = vmatpush2.bf16.msra.mxu0 0
    %713 = vmatprep.subr.bf16.mxu0 0
    %714 = vmatpush2.bf16.msra.mxu0 0
    %715 = vmatprep.subr.bf16.mxu0 0
    %716 = vmatpush2.bf16.msra.mxu0 0
    %717 = vmatprep.mubr.bf16.mxu0 0
    %718 = vmatmul.mubr.bf16.gmra.mxu0 %v97
    %v719 = vpop.f32.mrf.mxu0
    %v720 = vadd.f32 0.0, %v719
    %v721 = vpop.f32.mrf.mxu0
    %v722 = vpop.f32.mrf.mxu0
    %v723 = vpop.f32.mrf.mxu0
    %724 = vdwg.mxu0
    %v725 = vadd.f32 %v410, %v679
    %v726 = vadd.f32 %v412, %v681
    %v727 = vadd.f32 %v481, %v720
    %728 = vset.pattern.permute.xlu0 1
    %729 = vperm.xlu0 %728, %v90
    %v730 = vpop.permute.xlu0 %729
    %vm731 = vcmp.eq.s32.totalorder %v89, %v730
    %v732 = vsel %vm731, 1, 0
    %v733 = vcvt.s32.f32 %v732
    %v734 = vpack.c.bf16 %v733, %v733
    %v735 = vld [vmem:[#allocation7 + $0xc0] sm:$0xff]
    %v736 = vld [vmem:[#allocation7 + $0xc8] sm:$0xf]
    %v737 = vld [vmem:[#allocation7 + $0xcc] sm:$0xff]
    %v738 = vld [vmem:[#allocation7 + $0xd4] sm:$0xf]
    %v739 = vld [vmem:[#allocation7 + $0xd8] sm:$0xff]
    %v740 = vld [vmem:[#allocation7 + $0xe0] sm:$0xf]
    %v741 = vld [vmem:[#allocation7 + $0xe4] sm:$0xff]
    %v742 = vld [vmem:[#allocation7 + $0xec] sm:$0xf]
    %v743 = vld [vmem:[#allocation7 + $0xf0] sm:$0xff]
    %v744 = vld [vmem:[#allocation7 + $0xf8] sm:$0xf]
    %v745 = vld [vmem:[#allocation7 + $0xfc] sm:$0xff]
    %v746 = vld [vmem:[#allocation7 + $0x104] sm:$0xf]
    %v747 = vld [vmem:[#allocation7 + $0x108] sm:$0xff]
    %v748 = vld [vmem:[#allocation7 + $0x110] sm:$0xf]
    %v749 = vld [vmem:[#allocation7 + $0x114] sm:$0xff]
    %v750 = vld [vmem:[#allocation7 + $0x11c] sm:$0xf]
    %v751 = vld [vmem:[#allocation7 + $0x120] sm:$0xff]
    %v752 = vld [vmem:[#allocation7 + $0x128] sm:$0xf]
    %v753 = vld [vmem:[#allocation7 + $0x12c] sm:$0xff]
    %v754 = vld [vmem:[#allocation7 + $0x134] sm:$0xf]
    %v755 = vld [vmem:[#allocation7 + $0x138] sm:$0xff]
    %v756 = vld [vmem:[#allocation7 + $0x140] sm:$0xf]
    %v757 = vld [vmem:[#allocation7 + $0x144] sm:$0xff]
    %v758 = vld [vmem:[#allocation7 + $0x14c] sm:$0xf]
    %v759 = vld [vmem:[#allocation7 + $0x150] sm:$0xff]
    %v760 = vld [vmem:[#allocation7 + $0x158] sm:$0xf]
    %v761 = vld [vmem:[#allocation7 + $0x15c] sm:$0xff]
    %v762 = vld [vmem:[#allocation7 + $0x164] sm:$0xf]
    %v763 = vld [vmem:[#allocation7 + $0x168] sm:$0xff]
    %v764 = vld [vmem:[#allocation7 + $0x170] sm:$0xf]
    %v765 = vld [vmem:[#allocation7 + $0x174] sm:$0xff]
    %v766 = vld [vmem:[#allocation7 + $0x17c] sm:$0xf]
    %v799 = vunpack.c.l.b16 %v735
    %v800 = vunpack.c.h.b16 %v735
    %v801 = vunpack.c.l.b16 %v736
    %v802 = vunpack.c.l.b16 %v737
    %v803 = vunpack.c.h.b16 %v737
    %v804 = vunpack.c.l.b16 %v738
    %v805 = vunpack.c.l.b16 %v739
    %v806 = vunpack.c.h.b16 %v739
    %v807 = vunpack.c.l.b16 %v740
    %v808 = vunpack.c.l.b16 %v741
    %v809 = vunpack.c.h.b16 %v741
    %v810 = vunpack.c.l.b16 %v742
    %v811 = vunpack.c.l.b16 %v743
    %v812 = vunpack.c.h.b16 %v743
    %v813 = vunpack.c.l.b16 %v744
    %v814 = vunpack.c.l.b16 %v745
    %v815 = vunpack.c.h.b16 %v745
    %v816 = vunpack.c.l.b16 %v746
    %v817 = vunpack.c.l.b16 %v747
    %v818 = vunpack.c.h.b16 %v747
    %v819 = vunpack.c.l.b16 %v748
    %v820 = vunpack.c.l.b16 %v749
    %v821 = vunpack.c.h.b16 %v749
    %v822 = vunpack.c.l.b16 %v750
    %v823 = vunpack.c.l.b16 %v751
    %v824 = vunpack.c.h.b16 %v751
    %v825 = vunpack.c.l.b16 %v752
    %v826 = vunpack.c.l.b16 %v753
    %v827 = vunpack.c.h.b16 %v753
    %v828 = vunpack.c.l.b16 %v754
    %v829 = vunpack.c.l.b16 %v755
    %v830 = vunpack.c.h.b16 %v755
    %v831 = vunpack.c.l.b16 %v756
    %v832 = vunpack.c.l.b16 %v757
    %v833 = vunpack.c.h.b16 %v757
    %v834 = vunpack.c.l.b16 %v758
    %v835 = vunpack.c.l.b16 %v759
    %v836 = vunpack.c.h.b16 %v759
    %v837 = vunpack.c.l.b16 %v760
    %v838 = vunpack.c.l.b16 %v761
    %v839 = vunpack.c.h.b16 %v761
    %v840 = vunpack.c.l.b16 %v762
    %v841 = vunpack.c.l.b16 %v763
    %v842 = vunpack.c.h.b16 %v763
    %v843 = vunpack.c.l.b16 %v764
    %v844 = vunpack.c.l.b16 %v765
    %v845 = vunpack.c.h.b16 %v765
    %v846 = vunpack.c.l.b16 %v766
    %v847 = vpack.c.b16 %v802, %v799
    %v848 = vpack.c.b16 %v803, %v800
    %v849 = vpack.c.b16 %v804, %v801
    %v850 = vpack.c.b16 %v808, %v805
    %v851 = vpack.c.b16 %v809, %v806
    %v852 = vpack.c.b16 %v810, %v807
    %v853 = vpack.c.b16 %v814, %v811
    %v854 = vpack.c.b16 %v815, %v812
    %v855 = vpack.c.b16 %v816, %v813
    %v856 = vpack.c.b16 %v820, %v817
    %v857 = vpack.c.b16 %v821, %v818
    %v858 = vpack.c.b16 %v822, %v819
    %v859 = vpack.c.b16 %v826, %v823
    %v860 = vpack.c.b16 %v827, %v824
    %v861 = vpack.c.b16 %v828, %v825
    %v862 = vpack.c.b16 %v832, %v829
    %v863 = vpack.c.b16 %v833, %v830
    %v864 = vpack.c.b16 %v834, %v831
    %v865 = vpack.c.b16 %v838, %v835
    %v866 = vpack.c.b16 %v839, %v836
    %v867 = vpack.c.b16 %v840, %v837
    %v868 = vpack.c.b16 %v844, %v841
    %v869 = vpack.c.b16 %v845, %v842
    %v870 = vpack.c.b16 %v846, %v843
    %895 = vmatprep.subr.bf16.mxu0 %v869
    %896 = vmatpush1.bf16.msra.mxu0 %v868
    %897 = vmatprep.subr.bf16.mxu0 %v866
    %898 = vmatpush1.bf16.msra.mxu0 %v865
    %899 = vmatprep.subr.bf16.mxu0 %v863
    %900 = vmatpush1.bf16.msra.mxu0 %v862
    %901 = vmatprep.subr.bf16.mxu0 %v860
    %902 = vmatpush1.bf16.msra.mxu0 %v859
    %903 = vmatprep.subr.bf16.mxu0 %v857
    %904 = vmatpush1.bf16.msra.mxu0 %v856
    %905 = vmatprep.subr.bf16.mxu0 %v854
    %906 = vmatpush1.bf16.msra.mxu0 %v853
    %907 = vmatprep.subr.bf16.mxu0 %v851
    %908 = vmatpush1.bf16.msra.mxu0 %v850
    %909 = vmatprep.subr.bf16.mxu0 %v848
    %910 = vmatpush1.bf16.msra.mxu0 %v847
    %911 = vmatprep.subr.bf16.mxu0 0
    %912 = vmatpush2.bf16.msra.mxu0 0
    %913 = vmatprep.subr.bf16.mxu0 0
    %914 = vmatpush2.bf16.msra.mxu0 0
    %915 = vmatprep.subr.bf16.mxu0 0
    %916 = vmatpush2.bf16.msra.mxu0 0
    %917 = vmatprep.subr.bf16.mxu0 0
    %918 = vmatpush2.bf16.msra.mxu0 0
    %919 = vmatprep.subr.bf16.mxu0 0
    %920 = vmatpush2.bf16.msra.mxu0 0
    %921 = vmatprep.subr.bf16.mxu0 0
    %922 = vmatpush2.bf16.msra.mxu0 0
    %923 = vmatprep.subr.bf16.mxu0 0
    %924 = vmatpush2.bf16.msra.mxu0 0
    %925 = vmatprep.subr.bf16.mxu0 0
    %926 = vmatpush2.bf16.msra.mxu0 0
    %927 = vmatprep.mubr.bf16.mxu0 0
    %928 = vmatmul.mubr.bf16.gmra.mxu0 %v734
    %v929 = vpop.f32.mrf.mxu0
    %v930 = vadd.f32 0.0, %v929
    %v931 = vpop.f32.mrf.mxu0
    %v932 = vadd.f32 0.0, %v931
    %v933 = vpop.f32.mrf.mxu0
    %v934 = vpop.f32.mrf.mxu0
    %935 = vdwg.mxu0
    %936 = vmatprep.subr.bf16.mxu0 0
    %937 = vmatpush1.bf16.msra.mxu0 %v870
    %938 = vmatprep.subr.bf16.mxu0 0
    %939 = vmatpush1.bf16.msra.mxu0 %v867
    %940 = vmatprep.subr.bf16.mxu0 0
    %941 = vmatpush1.bf16.msra.mxu0 %v864
    %942 = vmatprep.subr.bf16.mxu0 0
    %943 = vmatpush1.bf16.msra.mxu0 %v861
    %944 = vmatprep.subr.bf16.mxu0 0
    %945 = vmatpush1.bf16.msra.mxu0 %v858
    %946 = vmatprep.subr.bf16.mxu0 0
    %947 = vmatpush1.bf16.msra.mxu0 %v855
    %948 = vmatprep.subr.bf16.mxu0 0
    %949 = vmatpush1.bf16.msra.mxu0 %v852
    %950 = vmatprep.subr.bf16.mxu0 0
    %951 = vmatpush1.bf16.msra.mxu0 %v849
    %952 = vmatprep.subr.bf16.mxu0 0
    %953 = vmatpush2.bf16.msra.mxu0 0
    %954 = vmatprep.subr.bf16.mxu0 0
    %955 = vmatpush2.bf16.msra.mxu0 0
    %956 = vmatprep.subr.bf16.mxu0 0
    %957 = vmatpush2.bf16.msra.mxu0 0
    %958 = vmatprep.subr.bf16.mxu0 0
    %959 = vmatpush2.bf16.msra.mxu0 0
    %960 = vmatprep.subr.bf16.mxu0 0
    %961 = vmatpush2.bf16.msra.mxu0 0
    %962 = vmatprep.subr.bf16.mxu0 0
    %963 = vmatpush2.bf16.msra.mxu0 0
    %964 = vmatprep.subr.bf16.mxu0 0
    %965 = vmatpush2.bf16.msra.mxu0 0
    %966 = vmatprep.subr.bf16.mxu0 0
    %967 = vmatpush2.bf16.msra.mxu0 0
    %968 = vmatprep.mubr.bf16.mxu0 0
    %969 = vmatmul.mubr.bf16.gmra.mxu0 %v734
    %v970 = vpop.f32.mrf.mxu0
    %v971 = vadd.f32 0.0, %v970
    %v972 = vpop.f32.mrf.mxu0
    %v973 = vpop.f32.mrf.mxu0
    %v974 = vpop.f32.mrf.mxu0
    %975 = vdwg.mxu0
    %v976 = vadd.f32 %v725, %v930
    %v977 = vadd.f32 %v726, %v932
    %v978 = vadd.f32 %v727, %v971
    %v979 = vld [vmem:[#allocation8 + $0xc0] sm:$0xff]
    %v980 = vld [vmem:[#allocation8 + $0xc8] sm:$0xf]
    %v981 = vld [vmem:[#allocation8 + $0xcc] sm:$0xff]
    %v982 = vld [vmem:[#allocation8 + $0xd4] sm:$0xf]
    %v983 = vld [vmem:[#allocation8 + $0xd8] sm:$0xff]
    %v984 = vld [vmem:[#allocation8 + $0xe0] sm:$0xf]
    %v985 = vld [vmem:[#allocation8 + $0xe4] sm:$0xff]
    %v986 = vld [vmem:[#allocation8 + $0xec] sm:$0xf]
    %v987 = vld [vmem:[#allocation8 + $0xf0] sm:$0xff]
    %v988 = vld [vmem:[#allocation8 + $0xf8] sm:$0xf]
    %v989 = vld [vmem:[#allocation8 + $0xfc] sm:$0xff]
    %v990 = vld [vmem:[#allocation8 + $0x104] sm:$0xf]
    %v991 = vld [vmem:[#allocation8 + $0x108] sm:$0xff]
    %v992 = vld [vmem:[#allocation8 + $0x110] sm:$0xf]
    %v993 = vld [vmem:[#allocation8 + $0x114] sm:$0xff]
    %v994 = vld [vmem:[#allocation8 + $0x11c] sm:$0xf]
    %v995 = vld [vmem:[#allocation8 + $0x120] sm:$0xff]
    %v996 = vld [vmem:[#allocation8 + $0x128] sm:$0xf]
    %v997 = vld [vmem:[#allocation8 + $0x12c] sm:$0xff]
    %v998 = vld [vmem:[#allocation8 + $0x134] sm:$0xf]
    %v999 = vld [vmem:[#allocation8 + $0x138] sm:$0xff]
    %v1000 = vld [vmem:[#allocation8 + $0x140] sm:$0xf]
    %v1001 = vld [vmem:[#allocation8 + $0x144] sm:$0xff]
    %v1002 = vld [vmem:[#allocation8 + $0x14c] sm:$0xf]
    %v1003 = vld [vmem:[#allocation8 + $0x150] sm:$0xff]
    %v1004 = vld [vmem:[#allocation8 + $0x158] sm:$0xf]
    %v1005 = vld [vmem:[#allocation8 + $0x15c] sm:$0xff]
    %v1006 = vld [vmem:[#allocation8 + $0x164] sm:$0xf]
    %v1007 = vld [vmem:[#allocation8 + $0x168] sm:$0xff]
    %v1008 = vld [vmem:[#allocation8 + $0x170] sm:$0xf]
    %v1009 = vld [vmem:[#allocation8 + $0x174] sm:$0xff]
    %v1010 = vld [vmem:[#allocation8 + $0x17c] sm:$0xf]
    %v1043 = vunpack.c.l.b16 %v979
    %v1044 = vunpack.c.h.b16 %v979
    %v1045 = vunpack.c.l.b16 %v980
    %v1046 = vunpack.c.l.b16 %v981
    %v1047 = vunpack.c.h.b16 %v981
    %v1048 = vunpack.c.l.b16 %v982
    %v1049 = vunpack.c.l.b16 %v983
    %v1050 = vunpack.c.h.b16 %v983
    %v1051 = vunpack.c.l.b16 %v984
    %v1052 = vunpack.c.l.b16 %v985
    %v1053 = vunpack.c.h.b16 %v985
    %v1054 = vunpack.c.l.b16 %v986
    %v1055 = vunpack.c.l.b16 %v987
    %v1056 = vunpack.c.h.b16 %v987
    %v1057 = vunpack.c.l.b16 %v988
    %v1058 = vunpack.c.l.b16 %v989
    %v1059 = vunpack.c.h.b16 %v989
    %v1060 = vunpack.c.l.b16 %v990
    %v1061 = vunpack.c.l.b16 %v991
    %v1062 = vunpack.c.h.b16 %v991
    %v1063 = vunpack.c.l.b16 %v992
    %v1064 = vunpack.c.l.b16 %v993
    %v1065 = vunpack.c.h.b16 %v993
    %v1066 = vunpack.c.l.b16 %v994
    %v1067 = vunpack.c.l.b16 %v995
    %v1068 = vunpack.c.h.b16 %v995
    %v1069 = vunpack.c.l.b16 %v996
    %v1070 = vunpack.c.l.b16 %v997
    %v1071 = vunpack.c.h.b16 %v997
    %v1072 = vunpack.c.l.b16 %v998
    %v1073 = vunpack.c.l.b16 %v999
    %v1074 = vunpack.c.h.b16 %v999
    %v1075 = vunpack.c.l.b16 %v1000
    %v1076 = vunpack.c.l.b16 %v1001
    %v1077 = vunpack.c.h.b16 %v1001
    %v1078 = vunpack.c.l.b16 %v1002
    %v1079 = vunpack.c.l.b16 %v1003
    %v1080 = vunpack.c.h.b16 %v1003
    %v1081 = vunpack.c.l.b16 %v1004
    %v1082 = vunpack.c.l.b16 %v1005
    %v1083 = vunpack.c.h.b16 %v1005
    %v1084 = vunpack.c.l.b16 %v1006
    %v1085 = vunpack.c.l.b16 %v1007
    %v1086 = vunpack.c.h.b16 %v1007
    %v1087 = vunpack.c.l.b16 %v1008
    %v1088 = vunpack.c.l.b16 %v1009
    %v1089 = vunpack.c.h.b16 %v1009
    %v1090 = vunpack.c.l.b16 %v1010
    %v1091 = vpack.c.b16 %v1046, %v1043
    %v1092 = vpack.c.b16 %v1047, %v1044
    %v1093 = vpack.c.b16 %v1048, %v1045
    %v1094 = vpack.c.b16 %v1052, %v1049
    %v1095 = vpack.c.b16 %v1053, %v1050
    %v1096 = vpack.c.b16 %v1054, %v1051
    %v1097 = vpack.c.b16 %v1058, %v1055
    %v1098 = vpack.c.b16 %v1059, %v1056
    %v1099 = vpack.c.b16 %v1060, %v1057
    %v1100 = vpack.c.b16 %v1064, %v1061
    %v1101 = vpack.c.b16 %v1065, %v1062
    %v1102 = vpack.c.b16 %v1066, %v1063
    %v1103 = vpack.c.b16 %v1070, %v1067
    %v1104 = vpack.c.b16 %v1071, %v1068
    %v1105 = vpack.c.b16 %v1072, %v1069
    %v1106 = vpack.c.b16 %v1076, %v1073
    %v1107 = vpack.c.b16 %v1077, %v1074
    %v1108 = vpack.c.b16 %v1078, %v1075
    %v1109 = vpack.c.b16 %v1082, %v1079
    %v1110 = vpack.c.b16 %v1083, %v1080
    %v1111 = vpack.c.b16 %v1084, %v1081
    %v1112 = vpack.c.b16 %v1088, %v1085
    %v1113 = vpack.c.b16 %v1089, %v1086
    %v1114 = vpack.c.b16 %v1090, %v1087
    %1139 = vmatprep.subr.bf16.mxu0 %v1113
    %1140 = vmatpush1.bf16.msra.mxu0 %v1112
    %1141 = vmatprep.subr.bf16.mxu0 %v1110
    %1142 = vmatpush1.bf16.msra.mxu0 %v1109
    %1143 = vmatprep.subr.bf16.mxu0 %v1107
    %1144 = vmatpush1.bf16.msra.mxu0 %v1106
    %1145 = vmatprep.subr.bf16.mxu0 %v1104
    %1146 = vmatpush1.bf16.msra.mxu0 %v1103
    %1147 = vmatprep.subr.bf16.mxu0 %v1101
    %1148 = vmatpush1.bf16.msra.mxu0 %v1100
    %1149 = vmatprep.subr.bf16.mxu0 %v1098
    %1150 = vmatpush1.bf16.msra.mxu0 %v1097
    %1151 = vmatprep.subr.bf16.mxu0 %v1095
    %1152 = vmatpush1.bf16.msra.mxu0 %v1094
    %1153 = vmatprep.subr.bf16.mxu0 %v1092
    %1154 = vmatpush1.bf16.msra.mxu0 %v1091
    %1155 = vmatprep.subr.bf16.mxu0 0
    %1156 = vmatpush2.bf16.msra.mxu0 0
    %1157 = vmatprep.subr.bf16.mxu0 0
    %1158 = vmatpush2.bf16.msra.mxu0 0
    %1159 = vmatprep.subr.bf16.mxu0 0
    %1160 = vmatpush2.bf16.msra.mxu0 0
    %1161 = vmatprep.subr.bf16.mxu0 0
    %1162 = vmatpush2.bf16.msra.mxu0 0
    %1163 = vmatprep.subr.bf16.mxu0 0
    %1164 = vmatpush2.bf16.msra.mxu0 0
    %1165 = vmatprep.subr.bf16.mxu0 0
    %1166 = vmatpush2.bf16.msra.mxu0 0
    %1167 = vmatprep.subr.bf16.mxu0 0
    %1168 = vmatpush2.bf16.msra.mxu0 0
    %1169 = vmatprep.subr.bf16.mxu0 0
    %1170 = vmatpush2.bf16.msra.mxu0 0
    %1171 = vmatprep.mubr.bf16.mxu0 0
    %1172 = vmatmul.mubr.bf16.gmra.mxu0 %v734
    %v1173 = vpop.f32.mrf.mxu0
    %v1174 = vadd.f32 0.0, %v1173
    %v1175 = vpop.f32.mrf.mxu0
    %v1176 = vadd.f32 0.0, %v1175
    %v1177 = vpop.f32.mrf.mxu0
    %v1178 = vpop.f32.mrf.mxu0
    %1179 = vdwg.mxu0
    %1180 = vmatprep.subr.bf16.mxu0 0
    %1181 = vmatpush1.bf16.msra.mxu0 %v1114
    %1182 = vmatprep.subr.bf16.mxu0 0
    %1183 = vmatpush1.bf16.msra.mxu0 %v1111
    %1184 = vmatprep.subr.bf16.mxu0 0
    %1185 = vmatpush1.bf16.msra.mxu0 %v1108
    %1186 = vmatprep.subr.bf16.mxu0 0
    %1187 = vmatpush1.bf16.msra.mxu0 %v1105
    %1188 = vmatprep.subr.bf16.mxu0 0
    %1189 = vmatpush1.bf16.msra.mxu0 %v1102
    %1190 = vmatprep.subr.bf16.mxu0 0
    %1191 = vmatpush1.bf16.msra.mxu0 %v1099
    %1192 = vmatprep.subr.bf16.mxu0 0
    %1193 = vmatpush1.bf16.msra.mxu0 %v1096
    %1194 = vmatprep.subr.bf16.mxu0 0
    %1195 = vmatpush1.bf16.msra.mxu0 %v1093
    %1196 = vmatprep.subr.bf16.mxu0 0
    %1197 = vmatpush2.bf16.msra.mxu0 0
    %1198 = vmatprep.subr.bf16.mxu0 0
    %1199 = vmatpush2.bf16.msra.mxu0 0
    %1200 = vmatprep.subr.bf16.mxu0 0
    %1201 = vmatpush2.bf16.msra.mxu0 0
    %1202 = vmatprep.subr.bf16.mxu0 0
    %1203 = vmatpush2.bf16.msra.mxu0 0
    %1204 = vmatprep.subr.bf16.mxu0 0
    %1205 = vmatpush2.bf16.msra.mxu0 0
    %1206 = vmatprep.subr.bf16.mxu0 0
    %1207 = vmatpush2.bf16.msra.mxu0 0
    %1208 = vmatprep.subr.bf16.mxu0 0
    %1209 = vmatpush2.bf16.msra.mxu0 0
    %1210 = vmatprep.subr.bf16.mxu0 0
    %1211 = vmatpush2.bf16.msra.mxu0 0
    %1212 = vmatprep.mubr.bf16.mxu0 0
    %1213 = vmatmul.mubr.bf16.gmra.mxu0 %v734
    %v1214 = vpop.f32.mrf.mxu0
    %v1215 = vadd.f32 0.0, %v1214
    %v1216 = vpop.f32.mrf.mxu0
    %v1217 = vpop.f32.mrf.mxu0
    %v1218 = vpop.f32.mrf.mxu0
    %1219 = vdwg.mxu0
    %v1220 = vadd.f32 %v976, %v1174
    %v1221 = vadd.f32 %v977, %v1176
    %v1222 = vadd.f32 %v978, %v1215
    %v1223 = vadd.s32 %v89, 128
    %v1224 = vadd.s32 %v89, 256
    %v1225 = vadd.s32 %v89, 384
    %v1226 = vadd.s32 %v89, 512
    %v1227 = vadd.s32 %v89, 640
    %v1228 = vadd.s32 %v89, 768
    %v1229 = vadd.s32 %v89, 896
    %v1230 = vadd.s32 %v89, 1024
    %v1231 = vadd.s32 %v89, 1152
    %1232 = vset.pattern.permute.xlu0 2
    %1233 = vperm.xlu0 %1232, %v90
    %v1234 = vpop.permute.xlu0 %1233
    %vm1235 = vcmp.eq.s32.totalorder %v89, %v1234
    %vm1236 = vcmp.eq.s32.totalorder %v1223, %v1234
    %vm1237 = vcmp.eq.s32.totalorder %v1224, %v1234
    %vm1238 = vcmp.eq.s32.totalorder %v1225, %v1234
    %vm1239 = vcmp.eq.s32.totalorder %v1226, %v1234
    %vm1240 = vcmp.eq.s32.totalorder %v1227, %v1234
    %vm1241 = vcmp.eq.s32.totalorder %v1228, %v1234
    %vm1242 = vcmp.eq.s32.totalorder %v1229, %v1234
    %vm1243 = vcmp.eq.s32.totalorder %v1230, %v1234
    %vm1244 = vcmp.eq.s32.totalorder %v1231, %v1234
    %v1245 = vsel %vm1235, 1, 0
    %v1246 = vsel %vm1236, 1, 0
    %v1247 = vsel %vm1237, 1, 0
    %v1248 = vsel %vm1238, 1, 0
    %v1249 = vsel %vm1239, 1, 0
    %v1250 = vsel %vm1240, 1, 0
    %v1251 = vsel %vm1241, 1, 0
    %v1252 = vsel %vm1242, 1, 0
    %v1253 = vsel %vm1243, 1, 0
    %v1254 = vsel %vm1244, 1, 0
    %v1255 = vcvt.s32.f32 %v1245
    %v1256 = vcvt.s32.f32 %v1246
    %v1257 = vcvt.s32.f32 %v1247
    %v1258 = vcvt.s32.f32 %v1248
    %v1259 = vcvt.s32.f32 %v1249
    %v1260 = vcvt.s32.f32 %v1250
    %v1261 = vcvt.s32.f32 %v1251
    %v1262 = vcvt.s32.f32 %v1252
    %v1263 = vcvt.s32.f32 %v1253
    %v1264 = vcvt.s32.f32 %v1254
    %v1265 = vpack.c.bf16 %v1255, %v1255
    %v1266 = vpack.c.bf16 %v1256, %v1256
    %v1267 = vpack.c.bf16 %v1257, %v1257
    %v1268 = vpack.c.bf16 %v1258, %v1258
    %v1269 = vpack.c.bf16 %v1259, %v1259
    %v1270 = vpack.c.bf16 %v1260, %v1260
    %v1271 = vpack.c.bf16 %v1261, %v1261
    %v1272 = vpack.c.bf16 %v1262, %v1262
    %v1273 = vpack.c.bf16 %v1263, %v1263
    %v1274 = vpack.c.bf16 %v1264, %v1264
    %v1275 = vld [vmem:[#allocation7 + $0x180] sm:$0xff]
    %v1276 = vld [vmem:[#allocation7 + $0x188] sm:$0xf]
    %v1277 = vld [vmem:[#allocation7 + $0x18c] sm:$0xff]
    %v1278 = vld [vmem:[#allocation7 + $0x194] sm:$0xf]
    %v1279 = vld [vmem:[#allocation7 + $0x198] sm:$0xff]
    %v1280 = vld [vmem:[#allocation7 + $0x1a0] sm:$0xf]
    %v1281 = vld [vmem:[#allocation7 + $0x1a4] sm:$0xff]
    %v1282 = vld [vmem:[#allocation7 + $0x1ac] sm:$0xf]
    %v1283 = vld [vmem:[#allocation7 + $0x1b0] sm:$0xff]
    %v1284 = vld [vmem:[#allocation7 + $0x1b8] sm:$0xf]
    %v1285 = vld [vmem:[#allocation7 + $0x1bc] sm:$0xff]
    %v1286 = vld [vmem:[#allocation7 + $0x1c4] sm:$0xf]
    %v1287 = vld [vmem:[#allocation7 + $0x1c8] sm:$0xff]
    %v1288 = vld [vmem:[#allocation7 + $0x1d0] sm:$0xf]
    %v1289 = vld [vmem:[#allocation7 + $0x1d4] sm:$0xff]
    %v1290 = vld [vmem:[#allocation7 + $0x1dc] sm:$0xf]
    %v1291 = vld [vmem:[#allocation7 + $0x1e0] sm:$0xff]
    %v1292 = vld [vmem:[#allocation7 + $0x1e8] sm:$0xf]
    %v1293 = vld [vmem:[#allocation7 + $0x1ec] sm:$0xff]
    %v1294 = vld [vmem:[#allocation7 + $0x1f4] sm:$0xf]
    %v1295 = vld [vmem:[#allocation7 + $0x1f8] sm:$0xff]
    %v1296 = vld [vmem:[#allocation7 + $0x200] sm:$0xf]
    %v1297 = vld [vmem:[#allocation7 + $0x204] sm:$0xff]
    %v1298 = vld [vmem:[#allocation7 + $0x20c] sm:$0xf]
    %v1299 = vld [vmem:[#allocation7 + $0x210] sm:$0xff]
    %v1300 = vld [vmem:[#allocation7 + $0x218] sm:$0xf]
    %v1301 = vld [vmem:[#allocation7 + $0x21c] sm:$0xff]
    %v1302 = vld [vmem:[#allocation7 + $0x224] sm:$0xf]
    %v1303 = vld [vmem:[#allocation7 + $0x228] sm:$0xff]
    %v1304 = vld [vmem:[#allocation7 + $0x230] sm:$0xf]
    %v1305 = vld [vmem:[#allocation7 + $0x234] sm:$0xff]
    %v1306 = vld [vmem:[#allocation7 + $0x23c] sm:$0xf]
    %v1307 = vld [vmem:[#allocation7 + $0x240] sm:$0xff]
    %v1308 = vld [vmem:[#allocation7 + $0x248] sm:$0xf]
    %v1309 = vld [vmem:[#allocation7 + $0x24c] sm:$0xff]
    %v1310 = vld [vmem:[#allocation7 + $0x254] sm:$0xf]
    %v1311 = vld [vmem:[#allocation7 + $0x258] sm:$0xff]
    %v1312 = vld [vmem:[#allocation7 + $0x260] sm:$0xf]
    %v1313 = vld [vmem:[#allocation7 + $0x264] sm:$0xff]
    %v1314 = vld [vmem:[#allocation7 + $0x26c] sm:$0xf]
    %v1315 = vld [vmem:[#allocation7 + $0x270] sm:$0xff]
    %v1316 = vld [vmem:[#allocation7 + $0x278] sm:$0xf]
    %v1317 = vld [vmem:[#allocation7 + $0x27c] sm:$0xff]
    %v1318 = vld [vmem:[#allocation7 + $0x284] sm:$0xf]
    %v1319 = vld [vmem:[#allocation7 + $0x288] sm:$0xff]
    %v1320 = vld [vmem:[#allocation7 + $0x290] sm:$0xf]
    %v1321 = vld [vmem:[#allocation7 + $0x294] sm:$0xff]
    %v1322 = vld [vmem:[#allocation7 + $0x29c] sm:$0xf]
    %v1323 = vld [vmem:[#allocation7 + $0x2a0] sm:$0xff]
    %v1324 = vld [vmem:[#allocation7 + $0x2a8] sm:$0xf]
    %v1325 = vld [vmem:[#allocation7 + $0x2ac] sm:$0xff]
    %v1326 = vld [vmem:[#allocation7 + $0x2b4] sm:$0xf]
    %v1327 = vld [vmem:[#allocation7 + $0x2b8] sm:$0xff]
    %v1328 = vld [vmem:[#allocation7 + $0x2c0] sm:$0xf]
    %v1329 = vld [vmem:[#allocation7 + $0x2c4] sm:$0xff]
    %v1330 = vld [vmem:[#allocation7 + $0x2cc] sm:$0xf]
    %v1331 = vld [vmem:[#allocation7 + $0x2d0] sm:$0xff]
    %v1332 = vld [vmem:[#allocation7 + $0x2d8] sm:$0xf]
    %v1333 = vld [vmem:[#allocation7 + $0x2dc] sm:$0xff]
    %v1334 = vld [vmem:[#allocation7 + $0x2e4] sm:$0xf]
    %v1335 = vld [vmem:[#allocation7 + $0x2e8] sm:$0xff]
    %v1336 = vld [vmem:[#allocation7 + $0x2f0] sm:$0xf]
    %v1337 = vld [vmem:[#allocation7 + $0x2f4] sm:$0xff]
    %v1338 = vld [vmem:[#allocation7 + $0x2fc] sm:$0xf]
    %v1339 = vld [vmem:[#allocation7 + $0x300] sm:$0xff]
    %v1340 = vld [vmem:[#allocation7 + $0x308] sm:$0xf]
    %v1341 = vld [vmem:[#allocation7 + $0x30c] sm:$0xff]
    %v1342 = vld [vmem:[#allocation7 + $0x314] sm:$0xf]
    %v1343 = vld [vmem:[#allocation7 + $0x318] sm:$0xff]
    %v1344 = vld [vmem:[#allocation7 + $0x320] sm:$0xf]
    %v1345 = vld [vmem:[#allocation7 + $0x324] sm:$0xff]
    %v1346 = vld [vmem:[#allocation7 + $0x32c] sm:$0xf]
    %v1347 = vld [vmem:[#allocation7 + $0x330] sm:$0xff]
    %v1348 = vld [vmem:[#allocation7 + $0x338] sm:$0xf]
    %v1349 = vld [vmem:[#allocation7 + $0x33c] sm:$0xff]
    %v1350 = vld [vmem:[#allocation7 + $0x344] sm:$0xf]
    %v1351 = vld [vmem:[#allocation7 + $0x348] sm:$0xff]
    %v1352 = vld [vmem:[#allocation7 + $0x350] sm:$0xf]
    %v1353 = vld [vmem:[#allocation7 + $0x354] sm:$0xff]
    %v1354 = vld [vmem:[#allocation7 + $0x35c] sm:$0xf]
    %v1355 = vld [vmem:[#allocation7 + $0x360] sm:$0xff]
    %v1356 = vld [vmem:[#allocation7 + $0x368] sm:$0xf]
    %v1357 = vld [vmem:[#allocation7 + $0x36c] sm:$0xff]
    %v1358 = vld [vmem:[#allocation7 + $0x374] sm:$0xf]
    %v1359 = vld [vmem:[#allocation7 + $0x378] sm:$0xff]
    %v1360 = vld [vmem:[#allocation7 + $0x380] sm:$0xf]
    %v1361 = vld [vmem:[#allocation7 + $0x384] sm:$0xff]
    %v1362 = vld [vmem:[#allocation7 + $0x38c] sm:$0xf]
    %v1363 = vld [vmem:[#allocation7 + $0x390] sm:$0xff]
    %v1364 = vld [vmem:[#allocation7 + $0x398] sm:$0xf]
    %v1365 = vld [vmem:[#allocation7 + $0x39c] sm:$0xff]
    %v1366 = vld [vmem:[#allocation7 + $0x3a4] sm:$0xf]
    %v1367 = vld [vmem:[#allocation7 + $0x3a8] sm:$0xff]
    %v1368 = vld [vmem:[#allocation7 + $0x3b0] sm:$0xf]
    %v1369 = vld [vmem:[#allocation7 + $0x3b4] sm:$0xff]
    %v1370 = vld [vmem:[#allocation7 + $0x3bc] sm:$0xf]
    %v1371 = vld [vmem:[#allocation7 + $0x3c0] sm:$0xff]
    %v1372 = vld [vmem:[#allocation7 + $0x3c8] sm:$0xf]
    %v1373 = vld [vmem:[#allocation7 + $0x3cc] sm:$0xff]
    %v1374 = vld [vmem:[#allocation7 + $0x3d4] sm:$0xf]
    %v1375 = vld [vmem:[#allocation7 + $0x3d8] sm:$0xff]
    %v1376 = vld [vmem:[#allocation7 + $0x3e0] sm:$0xf]
    %v1377 = vld [vmem:[#allocation7 + $0x3e4] sm:$0xff]
    %v1378 = vld [vmem:[#allocation7 + $0x3ec] sm:$0xf]
    %v1379 = vld [vmem:[#allocation7 + $0x3f0] sm:$0xff]
    %v1380 = vld [vmem:[#allocation7 + $0x3f8] sm:$0xf]
    %v1381 = vld [vmem:[#allocation7 + $0x3fc] sm:$0xff]
    %v1382 = vld [vmem:[#allocation7 + $0x404] sm:$0xf]
    %v1383 = vld [vmem:[#allocation7 + $0x408] sm:$0xff]
    %v1384 = vld [vmem:[#allocation7 + $0x410] sm:$0xf]
    %v1385 = vld [vmem:[#allocation7 + $0x414] sm:$0xff]
    %v1386 = vld [vmem:[#allocation7 + $0x41c] sm:$0xf]
    %v1387 = vld [vmem:[#allocation7 + $0x420] sm:$0xff]
    %v1388 = vld [vmem:[#allocation7 + $0x428] sm:$0xf]
    %v1389 = vld [vmem:[#allocation7 + $0x42c] sm:$0xff]
    %v1390 = vld [vmem:[#allocation7 + $0x434] sm:$0xf]
    %v1391 = vld [vmem:[#allocation7 + $0x438] sm:$0xff]
    %v1392 = vld [vmem:[#allocation7 + $0x440] sm:$0xf]
    %v1393 = vld [vmem:[#allocation7 + $0x444] sm:$0xff]
    %v1394 = vld [vmem:[#allocation7 + $0x44c] sm:$0xf]
    %v1395 = vld [vmem:[#allocation7 + $0x450] sm:$0xff]
    %v1396 = vld [vmem:[#allocation7 + $0x458] sm:$0xf]
    %v1397 = vld [vmem:[#allocation7 + $0x45c] sm:$0xff]
    %v1398 = vld [vmem:[#allocation7 + $0x464] sm:$0xf]
    %v1399 = vld [vmem:[#allocation7 + $0x468] sm:$0xff]
    %v1400 = vld [vmem:[#allocation7 + $0x470] sm:$0xf]
    %v1401 = vld [vmem:[#allocation7 + $0x474] sm:$0xff]
    %v1402 = vld [vmem:[#allocation7 + $0x47c] sm:$0xf]
    %v1403 = vld [vmem:[#allocation7 + $0x480] sm:$0xff]
    %v1404 = vld [vmem:[#allocation7 + $0x488] sm:$0xf]
    %v1405 = vld [vmem:[#allocation7 + $0x48c] sm:$0xff]
    %v1406 = vld [vmem:[#allocation7 + $0x494] sm:$0xf]
    %v1407 = vld [vmem:[#allocation7 + $0x498] sm:$0xff]
    %v1408 = vld [vmem:[#allocation7 + $0x4a0] sm:$0xf]
    %v1409 = vld [vmem:[#allocation7 + $0x4a4] sm:$0xff]
    %v1410 = vld [vmem:[#allocation7 + $0x4ac] sm:$0xf]
    %v1411 = vld [vmem:[#allocation7 + $0x4b0] sm:$0xff]
    %v1412 = vld [vmem:[#allocation7 + $0x4b8] sm:$0xf]
    %v1413 = vld [vmem:[#allocation7 + $0x4bc] sm:$0xff]
    %v1414 = vld [vmem:[#allocation7 + $0x4c4] sm:$0xf]
    %v1415 = vld [vmem:[#allocation7 + $0x4c8] sm:$0xff]
    %v1416 = vld [vmem:[#allocation7 + $0x4d0] sm:$0xf]
    %v1417 = vld [vmem:[#allocation7 + $0x4d4] sm:$0xff]
    %v1418 = vld [vmem:[#allocation7 + $0x4dc] sm:$0xf]
    %v1419 = vld [vmem:[#allocation7 + $0x4e0] sm:$0xff]
    %v1420 = vld [vmem:[#allocation7 + $0x4e8] sm:$0xf]
    %v1421 = vld [vmem:[#allocation7 + $0x4ec] sm:$0xff]
    %v1422 = vld [vmem:[#allocation7 + $0x4f4] sm:$0xf]
    %v1423 = vld [vmem:[#allocation7 + $0x4f8] sm:$0xff]
    %v1424 = vld [vmem:[#allocation7 + $0x500] sm:$0xf]
    %v1425 = vld [vmem:[#allocation7 + $0x504] sm:$0xff]
    %v1426 = vld [vmem:[#allocation7 + $0x50c] sm:$0xf]
    %v1427 = vld [vmem:[#allocation7 + $0x510] sm:$0xff]
    %v1428 = vld [vmem:[#allocation7 + $0x518] sm:$0xf]
    %v1429 = vld [vmem:[#allocation7 + $0x51c] sm:$0xff]
    %v1430 = vld [vmem:[#allocation7 + $0x524] sm:$0xf]
    %v1431 = vld [vmem:[#allocation7 + $0x528] sm:$0xff]
    %v1432 = vld [vmem:[#allocation7 + $0x530] sm:$0xf]
    %v1433 = vld [vmem:[#allocation7 + $0x534] sm:$0xff]
    %v1434 = vld [vmem:[#allocation7 + $0x53c] sm:$0xf]
    %v1435 = vld [vmem:[#allocation7 + $0x540] sm:$0xff]
    %v1436 = vld [vmem:[#allocation7 + $0x548] sm:$0xf]
    %v1437 = vld [vmem:[#allocation7 + $0x54c] sm:$0xff]
    %v1438 = vld [vmem:[#allocation7 + $0x554] sm:$0xf]
    %v1439 = vld [vmem:[#allocation7 + $0x558] sm:$0xff]
    %v1440 = vld [vmem:[#allocation7 + $0x560] sm:$0xf]
    %v1441 = vld [vmem:[#allocation7 + $0x564] sm:$0xff]
    %v1442 = vld [vmem:[#allocation7 + $0x56c] sm:$0xf]
    %v1443 = vld [vmem:[#allocation7 + $0x570] sm:$0xff]
    %v1444 = vld [vmem:[#allocation7 + $0x578] sm:$0xf]
    %v1445 = vld [vmem:[#allocation7 + $0x57c] sm:$0xff]
    %v1446 = vld [vmem:[#allocation7 + $0x584] sm:$0xf]
    %v1447 = vld [vmem:[#allocation7 + $0x588] sm:$0xff]
    %v1448 = vld [vmem:[#allocation7 + $0x590] sm:$0xf]
    %v1449 = vld [vmem:[#allocation7 + $0x594] sm:$0xff]
    %v1450 = vld [vmem:[#allocation7 + $0x59c] sm:$0xf]
    %v1451 = vld [vmem:[#allocation7 + $0x5a0] sm:$0xff]
    %v1452 = vld [vmem:[#allocation7 + $0x5a8] sm:$0xf]
    %v1453 = vld [vmem:[#allocation7 + $0x5ac] sm:$0xff]
    %v1454 = vld [vmem:[#allocation7 + $0x5b4] sm:$0xf]
    %v1455 = vld [vmem:[#allocation7 + $0x5b8] sm:$0xff]
    %v1456 = vld [vmem:[#allocation7 + $0x5c0] sm:$0xf]
    %v1457 = vld [vmem:[#allocation7 + $0x5c4] sm:$0xff]
    %v1458 = vld [vmem:[#allocation7 + $0x5cc] sm:$0xf]
    %v1459 = vld [vmem:[#allocation7 + $0x5d0] sm:$0xff]
    %v1460 = vld [vmem:[#allocation7 + $0x5d8] sm:$0xf]
    %v1461 = vld [vmem:[#allocation7 + $0x5dc] sm:$0xff]
    %v1462 = vld [vmem:[#allocation7 + $0x5e4] sm:$0xf]
    %v1463 = vld [vmem:[#allocation7 + $0x5e8] sm:$0xff]
    %v1464 = vld [vmem:[#allocation7 + $0x5f0] sm:$0xf]
    %v1465 = vld [vmem:[#allocation7 + $0x5f4] sm:$0xff]
    %v1466 = vld [vmem:[#allocation7 + $0x5fc] sm:$0xf]
    %v1467 = vld [vmem:[#allocation7 + $0x600] sm:$0xff]
    %v1468 = vld [vmem:[#allocation7 + $0x608] sm:$0xf]
    %v1469 = vld [vmem:[#allocation7 + $0x60c] sm:$0xff]
    %v1470 = vld [vmem:[#allocation7 + $0x614] sm:$0xf]
    %v1471 = vld [vmem:[#allocation7 + $0x618] sm:$0xff]
    %v1472 = vld [vmem:[#allocation7 + $0x620] sm:$0xf]
    %v1473 = vld [vmem:[#allocation7 + $0x624] sm:$0xff]
    %v1474 = vld [vmem:[#allocation7 + $0x62c] sm:$0xf]
    %v1475 = vld [vmem:[#allocation7 + $0x630] sm:$0xff]
    %v1476 = vld [vmem:[#allocation7 + $0x638] sm:$0xf]
    %v1477 = vld [vmem:[#allocation7 + $0x63c] sm:$0xff]
    %v1478 = vld [vmem:[#allocation7 + $0x644] sm:$0xf]
    %v1479 = vld [vmem:[#allocation7 + $0x648] sm:$0xff]
    %v1480 = vld [vmem:[#allocation7 + $0x650] sm:$0xf]
    %v1481 = vld [vmem:[#allocation7 + $0x654] sm:$0xff]
    %v1482 = vld [vmem:[#allocation7 + $0x65c] sm:$0xf]
    %v1483 = vld [vmem:[#allocation7 + $0x660] sm:$0xff]
    %v1484 = vld [vmem:[#allocation7 + $0x668] sm:$0xf]
    %v1485 = vld [vmem:[#allocation7 + $0x66c] sm:$0xff]
    %v1486 = vld [vmem:[#allocation7 + $0x674] sm:$0xf]
    %v1487 = vld [vmem:[#allocation7 + $0x678] sm:$0xff]
    %v1488 = vld [vmem:[#allocation7 + $0x680] sm:$0xf]
    %v1489 = vld [vmem:[#allocation7 + $0x684] sm:$0xff]
    %v1490 = vld [vmem:[#allocation7 + $0x68c] sm:$0xf]
    %v1491 = vld [vmem:[#allocation7 + $0x690] sm:$0xff]
    %v1492 = vld [vmem:[#allocation7 + $0x698] sm:$0xf]
    %v1493 = vld [vmem:[#allocation7 + $0x69c] sm:$0xff]
    %v1494 = vld [vmem:[#allocation7 + $0x6a4] sm:$0xf]
    %v1495 = vld [vmem:[#allocation7 + $0x6a8] sm:$0xff]
    %v1496 = vld [vmem:[#allocation7 + $0x6b0] sm:$0xf]
    %v1497 = vld [vmem:[#allocation7 + $0x6b4] sm:$0xff]
    %v1498 = vld [vmem:[#allocation7 + $0x6bc] sm:$0xf]
    %v1499 = vld [vmem:[#allocation7 + $0x6c0] sm:$0xff]
    %v1500 = vld [vmem:[#allocation7 + $0x6c8] sm:$0xf]
    %v1501 = vld [vmem:[#allocation7 + $0x6cc] sm:$0xff]
    %v1502 = vld [vmem:[#allocation7 + $0x6d4] sm:$0xf]
    %v1503 = vld [vmem:[#allocation7 + $0x6d8] sm:$0xff]
    %v1504 = vld [vmem:[#allocation7 + $0x6e0] sm:$0xf]
    %v1505 = vld [vmem:[#allocation7 + $0x6e4] sm:$0xff]
    %v1506 = vld [vmem:[#allocation7 + $0x6ec] sm:$0xf]
    %v1507 = vld [vmem:[#allocation7 + $0x6f0] sm:$0xff]
    %v1508 = vld [vmem:[#allocation7 + $0x6f8] sm:$0xf]
    %v1509 = vld [vmem:[#allocation7 + $0x6fc] sm:$0xff]
    %v1510 = vld [vmem:[#allocation7 + $0x704] sm:$0xf]
    %v1511 = vld [vmem:[#allocation7 + $0x708] sm:$0xff]
    %v1512 = vld [vmem:[#allocation7 + $0x710] sm:$0xf]
    %v1513 = vld [vmem:[#allocation7 + $0x714] sm:$0xff]
    %v1514 = vld [vmem:[#allocation7 + $0x71c] sm:$0xf]
    %v1515 = vld [vmem:[#allocation7 + $0x720] sm:$0xff]
    %v1516 = vld [vmem:[#allocation7 + $0x728] sm:$0xf]
    %v1517 = vld [vmem:[#allocation7 + $0x72c] sm:$0xff]
    %v1518 = vld [vmem:[#allocation7 + $0x734] sm:$0xf]
    %v1519 = vld [vmem:[#allocation7 + $0x738] sm:$0xff]
    %v1520 = vld [vmem:[#allocation7 + $0x740] sm:$0xf]
    %v1521 = vld [vmem:[#allocation7 + $0x744] sm:$0xff]
    %v1522 = vld [vmem:[#allocation7 + $0x74c] sm:$0xf]
    %v1523 = vld [vmem:[#allocation7 + $0x750] sm:$0xff]
    %v1524 = vld [vmem:[#allocation7 + $0x758] sm:$0xf]
    %v1525 = vld [vmem:[#allocation7 + $0x75c] sm:$0xff]
    %v1526 = vld [vmem:[#allocation7 + $0x764] sm:$0xf]
    %v1527 = vld [vmem:[#allocation7 + $0x768] sm:$0xff]
    %v1528 = vld [vmem:[#allocation7 + $0x770] sm:$0xf]
    %v1529 = vld [vmem:[#allocation7 + $0x774] sm:$0xff]
    %v1530 = vld [vmem:[#allocation7 + $0x77c] sm:$0xf]
    %v1531 = vld [vmem:[#allocation7 + $0x780] sm:$0xff]
    %v1532 = vld [vmem:[#allocation7 + $0x788] sm:$0xf]
    %v1533 = vld [vmem:[#allocation7 + $0x78c] sm:$0xff]
    %v1534 = vld [vmem:[#allocation7 + $0x794] sm:$0xf]
    %v1535 = vld [vmem:[#allocation7 + $0x798] sm:$0xff]
    %v1536 = vld [vmem:[#allocation7 + $0x7a0] sm:$0xf]
    %v1537 = vld [vmem:[#allocation7 + $0x7a4] sm:$0xff]
    %v1538 = vld [vmem:[#allocation7 + $0x7ac] sm:$0xf]
    %v1539 = vld [vmem:[#allocation7 + $0x7b0] sm:$0xff]
    %v1540 = vld [vmem:[#allocation7 + $0x7b8] sm:$0xf]
    %v1541 = vld [vmem:[#allocation7 + $0x7bc] sm:$0xff]
    %v1542 = vld [vmem:[#allocation7 + $0x7c4] sm:$0xf]
    %v1543 = vld [vmem:[#allocation7 + $0x7c8] sm:$0xff]
    %v1544 = vld [vmem:[#allocation7 + $0x7d0] sm:$0xf]
    %v1545 = vld [vmem:[#allocation7 + $0x7d4] sm:$0xff]
    %v1546 = vld [vmem:[#allocation7 + $0x7dc] sm:$0xf]
    %v1547 = vld [vmem:[#allocation7 + $0x7e0] sm:$0xff]
    %v1548 = vld [vmem:[#allocation7 + $0x7e8] sm:$0xf]
    %v1549 = vld [vmem:[#allocation7 + $0x7ec] sm:$0xff]
    %v1550 = vld [vmem:[#allocation7 + $0x7f4] sm:$0xf]
    %v1551 = vld [vmem:[#allocation7 + $0x7f8] sm:$0xff]
    %v1552 = vld [vmem:[#allocation7 + $0x800] sm:$0xf]
    %v1553 = vld [vmem:[#allocation7 + $0x804] sm:$0xff]
    %v1554 = vld [vmem:[#allocation7 + $0x80c] sm:$0xf]
    %v1555 = vld [vmem:[#allocation7 + $0x810] sm:$0xff]
    %v1556 = vld [vmem:[#allocation7 + $0x818] sm:$0xf]
    %v1557 = vld [vmem:[#allocation7 + $0x81c] sm:$0xff]
    %v1558 = vld [vmem:[#allocation7 + $0x824] sm:$0xf]
    %v1559 = vld [vmem:[#allocation7 + $0x828] sm:$0xff]
    %v1560 = vld [vmem:[#allocation7 + $0x830] sm:$0xf]
    %v1561 = vld [vmem:[#allocation7 + $0x834] sm:$0xff]
    %v1562 = vld [vmem:[#allocation7 + $0x83c] sm:$0xf]
    %v1563 = vld [vmem:[#allocation7 + $0x840] sm:$0xff]
    %v1564 = vld [vmem:[#allocation7 + $0x848] sm:$0xf]
    %v1565 = vld [vmem:[#allocation7 + $0x84c] sm:$0xff]
    %v1566 = vld [vmem:[#allocation7 + $0x854] sm:$0xf]
    %v1567 = vld [vmem:[#allocation7 + $0x858] sm:$0xff]
    %v1568 = vld [vmem:[#allocation7 + $0x860] sm:$0xf]
    %v1569 = vld [vmem:[#allocation7 + $0x864] sm:$0xff]
    %v1570 = vld [vmem:[#allocation7 + $0x86c] sm:$0xf]
    %v1571 = vld [vmem:[#allocation7 + $0x870] sm:$0xff]
    %v1572 = vld [vmem:[#allocation7 + $0x878] sm:$0xf]
    %v1573 = vld [vmem:[#allocation7 + $0x87c] sm:$0xff]
    %v1574 = vld [vmem:[#allocation7 + $0x884] sm:$0xf]
    %v1575 = vld [vmem:[#allocation7 + $0x888] sm:$0xff]
    %v1576 = vld [vmem:[#allocation7 + $0x890] sm:$0xf]
    %v1577 = vld [vmem:[#allocation7 + $0x894] sm:$0xff]
    %v1578 = vld [vmem:[#allocation7 + $0x89c] sm:$0xf]
    %v1579 = vld [vmem:[#allocation7 + $0x8a0] sm:$0xff]
    %v1580 = vld [vmem:[#allocation7 + $0x8a8] sm:$0xf]
    %v1581 = vld [vmem:[#allocation7 + $0x8ac] sm:$0xff]
    %v1582 = vld [vmem:[#allocation7 + $0x8b4] sm:$0xf]
    %v1583 = vld [vmem:[#allocation7 + $0x8b8] sm:$0xff]
    %v1584 = vld [vmem:[#allocation7 + $0x8c0] sm:$0xf]
    %v1585 = vld [vmem:[#allocation7 + $0x8c4] sm:$0xff]
    %v1586 = vld [vmem:[#allocation7 + $0x8cc] sm:$0xf]
    %v1587 = vld [vmem:[#allocation7 + $0x8d0] sm:$0xff]
    %v1588 = vld [vmem:[#allocation7 + $0x8d8] sm:$0xf]
    %v1589 = vld [vmem:[#allocation7 + $0x8dc] sm:$0xff]
    %v1590 = vld [vmem:[#allocation7 + $0x8e4] sm:$0xf]
    %v1591 = vld [vmem:[#allocation7 + $0x8e8] sm:$0xff]
    %v1592 = vld [vmem:[#allocation7 + $0x8f0] sm:$0xf]
    %v1593 = vld [vmem:[#allocation7 + $0x8f4] sm:$0xff]
    %v1594 = vld [vmem:[#allocation7 + $0x8fc] sm:$0xf]
    %v1915 = vunpack.c.l.b16 %v1275
    %v1916 = vunpack.c.h.b16 %v1275
    %v1917 = vunpack.c.l.b16 %v1276
    %v1918 = vunpack.c.l.b16 %v1277
    %v1919 = vunpack.c.h.b16 %v1277
    %v1920 = vunpack.c.l.b16 %v1278
    %v1921 = vunpack.c.l.b16 %v1279
    %v1922 = vunpack.c.h.b16 %v1279
    %v1923 = vunpack.c.l.b16 %v1280
    %v1924 = vunpack.c.l.b16 %v1281
    %v1925 = vunpack.c.h.b16 %v1281
    %v1926 = vunpack.c.l.b16 %v1282
    %v1927 = vunpack.c.l.b16 %v1283
    %v1928 = vunpack.c.h.b16 %v1283
    %v1929 = vunpack.c.l.b16 %v1284
    %v1930 = vunpack.c.l.b16 %v1285
    %v1931 = vunpack.c.h.b16 %v1285
    %v1932 = vunpack.c.l.b16 %v1286
    %v1933 = vunpack.c.l.b16 %v1287
    %v1934 = vunpack.c.h.b16 %v1287
    %v1935 = vunpack.c.l.b16 %v1288
    %v1936 = vunpack.c.l.b16 %v1289
    %v1937 = vunpack.c.h.b16 %v1289
    %v1938 = vunpack.c.l.b16 %v1290
    %v1939 = vunpack.c.l.b16 %v1291
    %v1940 = vunpack.c.h.b16 %v1291
    %v1941 = vunpack.c.l.b16 %v1292
    %v1942 = vunpack.c.l.b16 %v1293
    %v1943 = vunpack.c.h.b16 %v1293
    %v1944 = vunpack.c.l.b16 %v1294
    %v1945 = vunpack.c.l.b16 %v1295
    %v1946 = vunpack.c.h.b16 %v1295
    %v1947 = vunpack.c.l.b16 %v1296
    %v1948 = vunpack.c.l.b16 %v1297
    %v1949 = vunpack.c.h.b16 %v1297
    %v1950 = vunpack.c.l.b16 %v1298
    %v1951 = vunpack.c.l.b16 %v1299
    %v1952 = vunpack.c.h.b16 %v1299
    %v1953 = vunpack.c.l.b16 %v1300
    %v1954 = vunpack.c.l.b16 %v1301
    %v1955 = vunpack.c.h.b16 %v1301
    %v1956 = vunpack.c.l.b16 %v1302
    %v1957 = vunpack.c.l.b16 %v1303
    %v1958 = vunpack.c.h.b16 %v1303
    %v1959 = vunpack.c.l.b16 %v1304
    %v1960 = vunpack.c.l.b16 %v1305
    %v1961 = vunpack.c.h.b16 %v1305
    %v1962 = vunpack.c.l.b16 %v1306
    %v1963 = vunpack.c.l.b16 %v1307
    %v1964 = vunpack.c.h.b16 %v1307
    %v1965 = vunpack.c.l.b16 %v1308
    %v1966 = vunpack.c.l.b16 %v1309
    %v1967 = vunpack.c.h.b16 %v1309
    %v1968 = vunpack.c.l.b16 %v1310
    %v1969 = vunpack.c.l.b16 %v1311
    %v1970 = vunpack.c.h.b16 %v1311
    %v1971 = vunpack.c.l.b16 %v1312
    %v1972 = vunpack.c.l.b16 %v1313
    %v1973 = vunpack.c.h.b16 %v1313
    %v1974 = vunpack.c.l.b16 %v1314
    %v1975 = vunpack.c.l.b16 %v1315
    %v1976 = vunpack.c.h.b16 %v1315
    %v1977 = vunpack.c.l.b16 %v1316
    %v1978 = vunpack.c.l.b16 %v1317
    %v1979 = vunpack.c.h.b16 %v1317
    %v1980 = vunpack.c.l.b16 %v1318
    %v1981 = vunpack.c.l.b16 %v1319
    %v1982 = vunpack.c.h.b16 %v1319
    %v1983 = vunpack.c.l.b16 %v1320
    %v1984 = vunpack.c.l.b16 %v1321
    %v1985 = vunpack.c.h.b16 %v1321
    %v1986 = vunpack.c.l.b16 %v1322
    %v1987 = vunpack.c.l.b16 %v1323
    %v1988 = vunpack.c.h.b16 %v1323
    %v1989 = vunpack.c.l.b16 %v1324
    %v1990 = vunpack.c.l.b16 %v1325
    %v1991 = vunpack.c.h.b16 %v1325
    %v1992 = vunpack.c.l.b16 %v1326
    %v1993 = vunpack.c.l.b16 %v1327
    %v1994 = vunpack.c.h.b16 %v1327
    %v1995 = vunpack.c.l.b16 %v1328
    %v1996 = vunpack.c.l.b16 %v1329
    %v1997 = vunpack.c.h.b16 %v1329
    %v1998 = vunpack.c.l.b16 %v1330
    %v1999 = vunpack.c.l.b16 %v1331
    %v2000 = vunpack.c.h.b16 %v1331
    %v2001 = vunpack.c.l.b16 %v1332
    %v2002 = vunpack.c.l.b16 %v1333
    %v2003 = vunpack.c.h.b16 %v1333
    %v2004 = vunpack.c.l.b16 %v1334
    %v2005 = vunpack.c.l.b16 %v1335
    %v2006 = vunpack.c.h.b16 %v1335
    %v2007 = vunpack.c.l.b16 %v1336
    %v2008 = vunpack.c.l.b16 %v1337
    %v2009 = vunpack.c.h.b16 %v1337
    %v2010 = vunpack.c.l.b16 %v1338
    %v2011 = vunpack.c.l.b16 %v1339
    %v2012 = vunpack.c.h.b16 %v1339
    %v2013 = vunpack.c.l.b16 %v1340
    %v2014 = vunpack.c.l.b16 %v1341
    %v2015 = vunpack.c.h.b16 %v1341
    %v2016 = vunpack.c.l.b16 %v1342
    %v2017 = vunpack.c.l.b16 %v1343
    %v2018 = vunpack.c.h.b16 %v1343
    %v2019 = vunpack.c.l.b16 %v1344
    %v2020 = vunpack.c.l.b16 %v1345
    %v2021 = vunpack.c.h.b16 %v1345
    %v2022 = vunpack.c.l.b16 %v1346
    %v2023 = vunpack.c.l.b16 %v1347
    %v2024 = vunpack.c.h.b16 %v1347
    %v2025 = vunpack.c.l.b16 %v1348
    %v2026 = vunpack.c.l.b16 %v1349
    %v2027 = vunpack.c.h.b16 %v1349
    %v2028 = vunpack.c.l.b16 %v1350
    %v2029 = vunpack.c.l.b16 %v1351
    %v2030 = vunpack.c.h.b16 %v1351
    %v2031 = vunpack.c.l.b16 %v1352
    %v2032 = vunpack.c.l.b16 %v1353
    %v2033 = vunpack.c.h.b16 %v1353
    %v2034 = vunpack.c.l.b16 %v1354
    %v2035 = vunpack.c.l.b16 %v1355
    %v2036 = vunpack.c.h.b16 %v1355
    %v2037 = vunpack.c.l.b16 %v1356
    %v2038 = vunpack.c.l.b16 %v1357
    %v2039 = vunpack.c.h.b16 %v1357
    %v2040 = vunpack.c.l.b16 %v1358
    %v2041 = vunpack.c.l.b16 %v1359
    %v2042 = vunpack.c.h.b16 %v1359
    %v2043 = vunpack.c.l.b16 %v1360
    %v2044 = vunpack.c.l.b16 %v1361
    %v2045 = vunpack.c.h.b16 %v1361
    %v2046 = vunpack.c.l.b16 %v1362
    %v2047 = vunpack.c.l.b16 %v1363
    %v2048 = vunpack.c.h.b16 %v1363
    %v2049 = vunpack.c.l.b16 %v1364
    %v2050 = vunpack.c.l.b16 %v1365
    %v2051 = vunpack.c.h.b16 %v1365
    %v2052 = vunpack.c.l.b16 %v1366
    %v2053 = vunpack.c.l.b16 %v1367
    %v2054 = vunpack.c.h.b16 %v1367
    %v2055 = vunpack.c.l.b16 %v1368
    %v2056 = vunpack.c.l.b16 %v1369
    %v2057 = vunpack.c.h.b16 %v1369
    %v2058 = vunpack.c.l.b16 %v1370
    %v2059 = vunpack.c.l.b16 %v1371
    %v2060 = vunpack.c.h.b16 %v1371
    %v2061 = vunpack.c.l.b16 %v1372
    %v2062 = vunpack.c.l.b16 %v1373
    %v2063 = vunpack.c.h.b16 %v1373
    %v2064 = vunpack.c.l.b16 %v1374
    %v2065 = vunpack.c.l.b16 %v1375
    %v2066 = vunpack.c.h.b16 %v1375
    %v2067 = vunpack.c.l.b16 %v1376
    %v2068 = vunpack.c.l.b16 %v1377
    %v2069 = vunpack.c.h.b16 %v1377
    %v2070 = vunpack.c.l.b16 %v1378
    %v2071 = vunpack.c.l.b16 %v1379
    %v2072 = vunpack.c.h.b16 %v1379
    %v2073 = vunpack.c.l.b16 %v1380
    %v2074 = vunpack.c.l.b16 %v1381
    %v2075 = vunpack.c.h.b16 %v1381
    %v2076 = vunpack.c.l.b16 %v1382
    %v2077 = vunpack.c.l.b16 %v1383
    %v2078 = vunpack.c.h.b16 %v1383
    %v2079 = vunpack.c.l.b16 %v1384
    %v2080 = vunpack.c.l.b16 %v1385
    %v2081 = vunpack.c.h.b16 %v1385
    %v2082 = vunpack.c.l.b16 %v1386
    %v2083 = vunpack.c.l.b16 %v1387
    %v2084 = vunpack.c.h.b16 %v1387
    %v2085 = vunpack.c.l.b16 %v1388
    %v2086 = vunpack.c.l.b16 %v1389
    %v2087 = vunpack.c.h.b16 %v1389
    %v2088 = vunpack.c.l.b16 %v1390
    %v2089 = vunpack.c.l.b16 %v1391
    %v2090 = vunpack.c.h.b16 %v1391
    %v2091 = vunpack.c.l.b16 %v1392
    %v2092 = vunpack.c.l.b16 %v1393
    %v2093 = vunpack.c.h.b16 %v1393
    %v2094 = vunpack.c.l.b16 %v1394
    %v2095 = vunpack.c.l.b16 %v1395
    %v2096 = vunpack.c.h.b16 %v1395
    %v2097 = vunpack.c.l.b16 %v1396
    %v2098 = vunpack.c.l.b16 %v1397
    %v2099 = vunpack.c.h.b16 %v1397
    %v2100 = vunpack.c.l.b16 %v1398
    %v2101 = vunpack.c.l.b16 %v1399
    %v2102 = vunpack.c.h.b16 %v1399
    %v2103 = vunpack.c.l.b16 %v1400
    %v2104 = vunpack.c.l.b16 %v1401
    %v2105 = vunpack.c.h.b16 %v1401
    %v2106 = vunpack.c.l.b16 %v1402
    %v2107 = vunpack.c.l.b16 %v1403
    %v2108 = vunpack.c.h.b16 %v1403
    %v2109 = vunpack.c.l.b16 %v1404
    %v2110 = vunpack.c.l.b16 %v1405
    %v2111 = vunpack.c.h.b16 %v1405
    %v2112 = vunpack.c.l.b16 %v1406
    %v2113 = vunpack.c.l.b16 %v1407
    %v2114 = vunpack.c.h.b16 %v1407
    %v2115 = vunpack.c.l.b16 %v1408
    %v2116 = vunpack.c.l.b16 %v1409
    %v2117 = vunpack.c.h.b16 %v1409
    %v2118 = vunpack.c.l.b16 %v1410
    %v2119 = vunpack.c.l.b16 %v1411
    %v2120 = vunpack.c.h.b16 %v1411
    %v2121 = vunpack.c.l.b16 %v1412
    %v2122 = vunpack.c.l.b16 %v1413
    %v2123 = vunpack.c.h.b16 %v1413
    %v2124 = vunpack.c.l.b16 %v1414
    %v2125 = vunpack.c.l.b16 %v1415
    %v2126 = vunpack.c.h.b16 %v1415
    %v2127 = vunpack.c.l.b16 %v1416
    %v2128 = vunpack.c.l.b16 %v1417
    %v2129 = vunpack.c.h.b16 %v1417
    %v2130 = vunpack.c.l.b16 %v1418
    %v2131 = vunpack.c.l.b16 %v1419
    %v2132 = vunpack.c.h.b16 %v1419
    %v2133 = vunpack.c.l.b16 %v1420
    %v2134 = vunpack.c.l.b16 %v1421
    %v2135 = vunpack.c.h.b16 %v1421
    %v2136 = vunpack.c.l.b16 %v1422
    %v2137 = vunpack.c.l.b16 %v1423
    %v2138 = vunpack.c.h.b16 %v1423
    %v2139 = vunpack.c.l.b16 %v1424
    %v2140 = vunpack.c.l.b16 %v1425
    %v2141 = vunpack.c.h.b16 %v1425
    %v2142 = vunpack.c.l.b16 %v1426
    %v2143 = vunpack.c.l.b16 %v1427
    %v2144 = vunpack.c.h.b16 %v1427
    %v2145 = vunpack.c.l.b16 %v1428
    %v2146 = vunpack.c.l.b16 %v1429
    %v2147 = vunpack.c.h.b16 %v1429
    %v2148 = vunpack.c.l.b16 %v1430
    %v2149 = vunpack.c.l.b16 %v1431
    %v2150 = vunpack.c.h.b16 %v1431
    %v2151 = vunpack.c.l.b16 %v1432
    %v2152 = vunpack.c.l.b16 %v1433
    %v2153 = vunpack.c.h.b16 %v1433
    %v2154 = vunpack.c.l.b16 %v1434
    %v2155 = vunpack.c.l.b16 %v1435
    %v2156 = vunpack.c.h.b16 %v1435
    %v2157 = vunpack.c.l.b16 %v1436
    %v2158 = vunpack.c.l.b16 %v1437
    %v2159 = vunpack.c.h.b16 %v1437
    %v2160 = vunpack.c.l.b16 %v1438
    %v2161 = vunpack.c.l.b16 %v1439
    %v2162 = vunpack.c.h.b16 %v1439
    %v2163 = vunpack.c.l.b16 %v1440
    %v2164 = vunpack.c.l.b16 %v1441
    %v2165 = vunpack.c.h.b16 %v1441
    %v2166 = vunpack.c.l.b16 %v1442
    %v2167 = vunpack.c.l.b16 %v1443
    %v2168 = vunpack.c.h.b16 %v1443
    %v2169 = vunpack.c.l.b16 %v1444
    %v2170 = vunpack.c.l.b16 %v1445
    %v2171 = vunpack.c.h.b16 %v1445
    %v2172 = vunpack.c.l.b16 %v1446
    %v2173 = vunpack.c.l.b16 %v1447
    %v2174 = vunpack.c.h.b16 %v1447
    %v2175 = vunpack.c.l.b16 %v1448
    %v2176 = vunpack.c.l.b16 %v1449
    %v2177 = vunpack.c.h.b16 %v1449
    %v2178 = vunpack.c.l.b16 %v1450
    %v2179 = vunpack.c.l.b16 %v1451
    %v2180 = vunpack.c.h.b16 %v1451
    %v2181 = vunpack.c.l.b16 %v1452
    %v2182 = vunpack.c.l.b16 %v1453
    %v2183 = vunpack.c.h.b16 %v1453
    %v2184 = vunpack.c.l.b16 %v1454
    %v2185 = vunpack.c.l.b16 %v1455
    %v2186 = vunpack.c.h.b16 %v1455
    %v2187 = vunpack.c.l.b16 %v1456
    %v2188 = vunpack.c.l.b16 %v1457
    %v2189 = vunpack.c.h.b16 %v1457
    %v2190 = vunpack.c.l.b16 %v1458
    %v2191 = vunpack.c.l.b16 %v1459
    %v2192 = vunpack.c.h.b16 %v1459
    %v2193 = vunpack.c.l.b16 %v1460
    %v2194 = vunpack.c.l.b16 %v1461
    %v2195 = vunpack.c.h.b16 %v1461
    %v2196 = vunpack.c.l.b16 %v1462
    %v2197 = vunpack.c.l.b16 %v1463
    %v2198 = vunpack.c.h.b16 %v1463
    %v2199 = vunpack.c.l.b16 %v1464
    %v2200 = vunpack.c.l.b16 %v1465
    %v2201 = vunpack.c.h.b16 %v1465
    %v2202 = vunpack.c.l.b16 %v1466
    %v2203 = vunpack.c.l.b16 %v1467
    %v2204 = vunpack.c.h.b16 %v1467
    %v2205 = vunpack.c.l.b16 %v1468
    %v2206 = vunpack.c.l.b16 %v1469
    %v2207 = vunpack.c.h.b16 %v1469
    %v2208 = vunpack.c.l.b16 %v1470
    %v2209 = vunpack.c.l.b16 %v1471
    %v2210 = vunpack.c.h.b16 %v1471
    %v2211 = vunpack.c.l.b16 %v1472
    %v2212 = vunpack.c.l.b16 %v1473
    %v2213 = vunpack.c.h.b16 %v1473
    %v2214 = vunpack.c.l.b16 %v1474
    %v2215 = vunpack.c.l.b16 %v1475
    %v2216 = vunpack.c.h.b16 %v1475
    %v2217 = vunpack.c.l.b16 %v1476
    %v2218 = vunpack.c.l.b16 %v1477
    %v2219 = vunpack.c.h.b16 %v1477
    %v2220 = vunpack.c.l.b16 %v1478
    %v2221 = vunpack.c.l.b16 %v1479
    %v2222 = vunpack.c.h.b16 %v1479
    %v2223 = vunpack.c.l.b16 %v1480
    %v2224 = vunpack.c.l.b16 %v1481
    %v2225 = vunpack.c.h.b16 %v1481
    %v2226 = vunpack.c.l.b16 %v1482
    %v2227 = vunpack.c.l.b16 %v1483
    %v2228 = vunpack.c.h.b16 %v1483
    %v2229 = vunpack.c.l.b16 %v1484
    %v2230 = vunpack.c.l.b16 %v1485
    %v2231 = vunpack.c.h.b16 %v1485
    %v2232 = vunpack.c.l.b16 %v1486
    %v2233 = vunpack.c.l.b16 %v1487
    %v2234 = vunpack.c.h.b16 %v1487
    %v2235 = vunpack.c.l.b16 %v1488
    %v2236 = vunpack.c.l.b16 %v1489
    %v2237 = vunpack.c.h.b16 %v1489
    %v2238 = vunpack.c.l.b16 %v1490
    %v2239 = vunpack.c.l.b16 %v1491
    %v2240 = vunpack.c.h.b16 %v1491
    %v2241 = vunpack.c.l.b16 %v1492
    %v2242 = vunpack.c.l.b16 %v1493
    %v2243 = vunpack.c.h.b16 %v1493
    %v2244 = vunpack.c.l.b16 %v1494
    %v2245 = vunpack.c.l.b16 %v1495
    %v2246 = vunpack.c.h.b16 %v1495
    %v2247 = vunpack.c.l.b16 %v1496
    %v2248 = vunpack.c.l.b16 %v1497
    %v2249 = vunpack.c.h.b16 %v1497
    %v2250 = vunpack.c.l.b16 %v1498
    %v2251 = vunpack.c.l.b16 %v1499
    %v2252 = vunpack.c.h.b16 %v1499
    %v2253 = vunpack.c.l.b16 %v1500
    %v2254 = vunpack.c.l.b16 %v1501
    %v2255 = vunpack.c.h.b16 %v1501
    %v2256 = vunpack.c.l.b16 %v1502
    %v2257 = vunpack.c.l.b16 %v1503
    %v2258 = vunpack.c.h.b16 %v1503
    %v2259 = vunpack.c.l.b16 %v1504
    %v2260 = vunpack.c.l.b16 %v1505
    %v2261 = vunpack.c.h.b16 %v1505
    %v2262 = vunpack.c.l.b16 %v1506
    %v2263 = vunpack.c.l.b16 %v1507
    %v2264 = vunpack.c.h.b16 %v1507
    %v2265 = vunpack.c.l.b16 %v1508
    %v2266 = vunpack.c.l.b16 %v1509
    %v2267 = vunpack.c.h.b16 %v1509
    %v2268 = vunpack.c.l.b16 %v1510
    %v2269 = vunpack.c.l.b16 %v1511
    %v2270 = vunpack.c.h.b16 %v1511
    %v2271 = vunpack.c.l.b16 %v1512
    %v2272 = vunpack.c.l.b16 %v1513
    %v2273 = vunpack.c.h.b16 %v1513
    %v2274 = vunpack.c.l.b16 %v1514
    %v2275 = vunpack.c.l.b16 %v1515
    %v2276 = vunpack.c.h.b16 %v1515
    %v2277 = vunpack.c.l.b16 %v1516
    %v2278 = vunpack.c.l.b16 %v1517
    %v2279 = vunpack.c.h.b16 %v1517
    %v2280 = vunpack.c.l.b16 %v1518
    %v2281 = vunpack.c.l.b16 %v1519
    %v2282 = vunpack.c.h.b16 %v1519
    %v2283 = vunpack.c.l.b16 %v1520
    %v2284 = vunpack.c.l.b16 %v1521
    %v2285 = vunpack.c.h.b16 %v1521
    %v2286 = vunpack.c.l.b16 %v1522
    %v2287 = vunpack.c.l.b16 %v1523
    %v2288 = vunpack.c.h.b16 %v1523
    %v2289 = vunpack.c.l.b16 %v1524
    %v2290 = vunpack.c.l.b16 %v1525
    %v2291 = vunpack.c.h.b16 %v1525
    %v2292 = vunpack.c.l.b16 %v1526
    %v2293 = vunpack.c.l.b16 %v1527
    %v2294 = vunpack.c.h.b16 %v1527
    %v2295 = vunpack.c.l.b16 %v1528
    %v2296 = vunpack.c.l.b16 %v1529
    %v2297 = vunpack.c.h.b16 %v1529
    %v2298 = vunpack.c.l.b16 %v1530
    %v2299 = vunpack.c.l.b16 %v1531
    %v2300 = vunpack.c.h.b16 %v1531
    %v2301 = vunpack.c.l.b16 %v1532
    %v2302 = vunpack.c.l.b16 %v1533
    %v2303 = vunpack.c.h.b16 %v1533
    %v2304 = vunpack.c.l.b16 %v1534
    %v2305 = vunpack.c.l.b16 %v1535
    %v2306 = vunpack.c.h.b16 %v1535
    %v2307 = vunpack.c.l.b16 %v1536
    %v2308 = vunpack.c.l.b16 %v1537
    %v2309 = vunpack.c.h.b16 %v1537
    %v2310 = vunpack.c.l.b16 %v1538
    %v2311 = vunpack.c.l.b16 %v1539
    %v2312 = vunpack.c.h.b16 %v1539
    %v2313 = vunpack.c.l.b16 %v1540
    %v2314 = vunpack.c.l.b16 %v1541
    %v2315 = vunpack.c.h.b16 %v1541
    %v2316 = vunpack.c.l.b16 %v1542
    %v2317 = vunpack.c.l.b16 %v1543
    %v2318 = vunpack.c.h.b16 %v1543
    %v2319 = vunpack.c.l.b16 %v1544
    %v2320 = vunpack.c.l.b16 %v1545
    %v2321 = vunpack.c.h.b16 %v1545
    %v2322 = vunpack.c.l.b16 %v1546
    %v2323 = vunpack.c.l.b16 %v1547
    %v2324 = vunpack.c.h.b16 %v1547
    %v2325 = vunpack.c.l.b16 %v1548
    %v2326 = vunpack.c.l.b16 %v1549
    %v2327 = vunpack.c.h.b16 %v1549
    %v2328 = vunpack.c.l.b16 %v1550
    %v2329 = vunpack.c.l.b16 %v1551
    %v2330 = vunpack.c.h.b16 %v1551
    %v2331 = vunpack.c.l.b16 %v1552
    %v2332 = vunpack.c.l.b16 %v1553
    %v2333 = vunpack.c.h.b16 %v1553
    %v2334 = vunpack.c.l.b16 %v1554
    %v2335 = vunpack.c.l.b16 %v1555
    %v2336 = vunpack.c.h.b16 %v1555
    %v2337 = vunpack.c.l.b16 %v1556
    %v2338 = vunpack.c.l.b16 %v1557
    %v2339 = vunpack.c.h.b16 %v1557
    %v2340 = vunpack.c.l.b16 %v1558
    %v2341 = vunpack.c.l.b16 %v1559
    %v2342 = vunpack.c.h.b16 %v1559
    %v2343 = vunpack.c.l.b16 %v1560
    %v2344 = vunpack.c.l.b16 %v1561
    %v2345 = vunpack.c.h.b16 %v1561
    %v2346 = vunpack.c.l.b16 %v1562
    %v2347 = vunpack.c.l.b16 %v1563
    %v2348 = vunpack.c.h.b16 %v1563
    %v2349 = vunpack.c.l.b16 %v1564
    %v2350 = vunpack.c.l.b16 %v1565
    %v2351 = vunpack.c.h.b16 %v1565
    %v2352 = vunpack.c.l.b16 %v1566
    %v2353 = vunpack.c.l.b16 %v1567
    %v2354 = vunpack.c.h.b16 %v1567
    %v2355 = vunpack.c.l.b16 %v1568
    %v2356 = vunpack.c.l.b16 %v1569
    %v2357 = vunpack.c.h.b16 %v1569
    %v2358 = vunpack.c.l.b16 %v1570
    %v2359 = vunpack.c.l.b16 %v1571
    %v2360 = vunpack.c.h.b16 %v1571
    %v2361 = vunpack.c.l.b16 %v1572
    %v2362 = vunpack.c.l.b16 %v1573
    %v2363 = vunpack.c.h.b16 %v1573
    %v2364 = vunpack.c.l.b16 %v1574
    %v2365 = vunpack.c.l.b16 %v1575
    %v2366 = vunpack.c.h.b16 %v1575
    %v2367 = vunpack.c.l.b16 %v1576
    %v2368 = vunpack.c.l.b16 %v1577
    %v2369 = vunpack.c.h.b16 %v1577
    %v2370 = vunpack.c.l.b16 %v1578
    %v2371 = vunpack.c.l.b16 %v1579
    %v2372 = vunpack.c.h.b16 %v1579
    %v2373 = vunpack.c.l.b16 %v1580
    %v2374 = vunpack.c.l.b16 %v1581
    %v2375 = vunpack.c.h.b16 %v1581
    %v2376 = vunpack.c.l.b16 %v1582
    %v2377 = vunpack.c.l.b16 %v1583
    %v2378 = vunpack.c.h.b16 %v1583
    %v2379 = vunpack.c.l.b16 %v1584
    %v2380 = vunpack.c.l.b16 %v1585
    %v2381 = vunpack.c.h.b16 %v1585
    %v2382 = vunpack.c.l.b16 %v1586
    %v2383 = vunpack.c.l.b16 %v1587
    %v2384 = vunpack.c.h.b16 %v1587
    %v2385 = vunpack.c.l.b16 %v1588
    %v2386 = vunpack.c.l.b16 %v1589
    %v2387 = vunpack.c.h.b16 %v1589
    %v2388 = vunpack.c.l.b16 %v1590
    %v2389 = vunpack.c.l.b16 %v1591
    %v2390 = vunpack.c.h.b16 %v1591
    %v2391 = vunpack.c.l.b16 %v1592
    %v2392 = vunpack.c.l.b16 %v1593
    %v2393 = vunpack.c.h.b16 %v1593
    %v2394 = vunpack.c.l.b16 %v1594
    %v2395 = vpack.c.b16 %v1918, %v1915
    %v2396 = vpack.c.b16 %v1919, %v1916
    %v2397 = vpack.c.b16 %v1920, %v1917
    %v2398 = vpack.c.b16 %v1924, %v1921
    %v2399 = vpack.c.b16 %v1925, %v1922
    %v2400 = vpack.c.b16 %v1926, %v1923
    %v2401 = vpack.c.b16 %v1930, %v1927
    %v2402 = vpack.c.b16 %v1931, %v1928
    %v2403 = vpack.c.b16 %v1932, %v1929
    %v2404 = vpack.c.b16 %v1936, %v1933
    %v2405 = vpack.c.b16 %v1937, %v1934
    %v2406 = vpack.c.b16 %v1938, %v1935
    %v2407 = vpack.c.b16 %v1942, %v1939
    %v2408 = vpack.c.b16 %v1943, %v1940
    %v2409 = vpack.c.b16 %v1944, %v1941
    %v2410 = vpack.c.b16 %v1948, %v1945
    %v2411 = vpack.c.b16 %v1949, %v1946
    %v2412 = vpack.c.b16 %v1950, %v1947
    %v2413 = vpack.c.b16 %v1954, %v1951
    %v2414 = vpack.c.b16 %v1955, %v1952
    %v2415 = vpack.c.b16 %v1956, %v1953
    %v2416 = vpack.c.b16 %v1960, %v1957
    %v2417 = vpack.c.b16 %v1961, %v1958
    %v2418 = vpack.c.b16 %v1962, %v1959
    %v2419 = vpack.c.b16 %v1966, %v1963
    %v2420 = vpack.c.b16 %v1967, %v1964
    %v2421 = vpack.c.b16 %v1968, %v1965
    %v2422 = vpack.c.b16 %v1972, %v1969
    %v2423 = vpack.c.b16 %v1973, %v1970
    %v2424 = vpack.c.b16 %v1974, %v1971
    %v2425 = vpack.c.b16 %v1978, %v1975
    %v2426 = vpack.c.b16 %v1979, %v1976
    %v2427 = vpack.c.b16 %v1980, %v1977
    %v2428 = vpack.c.b16 %v1984, %v1981
    %v2429 = vpack.c.b16 %v1985, %v1982
    %v2430 = vpack.c.b16 %v1986, %v1983
    %v2431 = vpack.c.b16 %v1990, %v1987
    %v2432 = vpack.c.b16 %v1991, %v1988
    %v2433 = vpack.c.b16 %v1992, %v1989
    %v2434 = vpack.c.b16 %v1996, %v1993
    %v2435 = vpack.c.b16 %v1997, %v1994
    %v2436 = vpack.c.b16 %v1998, %v1995
    %v2437 = vpack.c.b16 %v2002, %v1999
    %v2438 = vpack.c.b16 %v2003, %v2000
    %v2439 = vpack.c.b16 %v2004, %v2001
    %v2440 = vpack.c.b16 %v2008, %v2005
    %v2441 = vpack.c.b16 %v2009, %v2006
    %v2442 = vpack.c.b16 %v2010, %v2007
    %v2443 = vpack.c.b16 %v2014, %v2011
    %v2444 = vpack.c.b16 %v2015, %v2012
    %v2445 = vpack.c.b16 %v2016, %v2013
    %v2446 = vpack.c.b16 %v2020, %v2017
    %v2447 = vpack.c.b16 %v2021, %v2018
    %v2448 = vpack.c.b16 %v2022, %v2019
    %v2449 = vpack.c.b16 %v2026, %v2023
    %v2450 = vpack.c.b16 %v2027, %v2024
    %v2451 = vpack.c.b16 %v2028, %v2025
    %v2452 = vpack.c.b16 %v2032, %v2029
    %v2453 = vpack.c.b16 %v2033, %v2030
    %v2454 = vpack.c.b16 %v2034, %v2031
    %v2455 = vpack.c.b16 %v2038, %v2035
    %v2456 = vpack.c.b16 %v2039, %v2036
    %v2457 = vpack.c.b16 %v2040, %v2037
    %v2458 = vpack.c.b16 %v2044, %v2041
    %v2459 = vpack.c.b16 %v2045, %v2042
    %v2460 = vpack.c.b16 %v2046, %v2043
    %v2461 = vpack.c.b16 %v2050, %v2047
    %v2462 = vpack.c.b16 %v2051, %v2048
    %v2463 = vpack.c.b16 %v2052, %v2049
    %v2464 = vpack.c.b16 %v2056, %v2053
    %v2465 = vpack.c.b16 %v2057, %v2054
    %v2466 = vpack.c.b16 %v2058, %v2055
    %v2467 = vpack.c.b16 %v2062, %v2059
    %v2468 = vpack.c.b16 %v2063, %v2060
    %v2469 = vpack.c.b16 %v2064, %v2061
    %v2470 = vpack.c.b16 %v2068, %v2065
    %v2471 = vpack.c.b16 %v2069, %v2066
    %v2472 = vpack.c.b16 %v2070, %v2067
    %v2473 = vpack.c.b16 %v2074, %v2071
    %v2474 = vpack.c.b16 %v2075, %v2072
    %v2475 = vpack.c.b16 %v2076, %v2073
    %v2476 = vpack.c.b16 %v2080, %v2077
    %v2477 = vpack.c.b16 %v2081, %v2078
    %v2478 = vpack.c.b16 %v2082, %v2079
    %v2479 = vpack.c.b16 %v2086, %v2083
    %v2480 = vpack.c.b16 %v2087, %v2084
    %v2481 = vpack.c.b16 %v2088, %v2085
    %v2482 = vpack.c.b16 %v2092, %v2089
    %v2483 = vpack.c.b16 %v2093, %v2090
    %v2484 = vpack.c.b16 %v2094, %v2091
    %v2485 = vpack.c.b16 %v2098, %v2095
    %v2486 = vpack.c.b16 %v2099, %v2096
    %v2487 = vpack.c.b16 %v2100, %v2097
    %v2488 = vpack.c.b16 %v2104, %v2101
    %v2489 = vpack.c.b16 %v2105, %v2102
    %v2490 = vpack.c.b16 %v2106, %v2103
    %v2491 = vpack.c.b16 %v2110, %v2107
    %v2492 = vpack.c.b16 %v2111, %v2108
    %v2493 = vpack.c.b16 %v2112, %v2109
    %v2494 = vpack.c.b16 %v2116, %v2113
    %v2495 = vpack.c.b16 %v2117, %v2114
    %v2496 = vpack.c.b16 %v2118, %v2115
    %v2497 = vpack.c.b16 %v2122, %v2119
    %v2498 = vpack.c.b16 %v2123, %v2120
    %v2499 = vpack.c.b16 %v2124, %v2121
    %v2500 = vpack.c.b16 %v2128, %v2125
    %v2501 = vpack.c.b16 %v2129, %v2126
    %v2502 = vpack.c.b16 %v2130, %v2127
    %v2503 = vpack.c.b16 %v2134, %v2131
    %v2504 = vpack.c.b16 %v2135, %v2132
    %v2505 = vpack.c.b16 %v2136, %v2133
    %v2506 = vpack.c.b16 %v2140, %v2137
    %v2507 = vpack.c.b16 %v2141, %v2138
    %v2508 = vpack.c.b16 %v2142, %v2139
    %v2509 = vpack.c.b16 %v2146, %v2143
    %v2510 = vpack.c.b16 %v2147, %v2144
    %v2511 = vpack.c.b16 %v2148, %v2145
    %v2512 = vpack.c.b16 %v2152, %v2149
    %v2513 = vpack.c.b16 %v2153, %v2150
    %v2514 = vpack.c.b16 %v2154, %v2151
    %v2515 = vpack.c.b16 %v2158, %v2155
    %v2516 = vpack.c.b16 %v2159, %v2156
    %v2517 = vpack.c.b16 %v2160, %v2157
    %v2518 = vpack.c.b16 %v2164, %v2161
    %v2519 = vpack.c.b16 %v2165, %v2162
    %v2520 = vpack.c.b16 %v2166, %v2163
    %v2521 = vpack.c.b16 %v2170, %v2167
    %v2522 = vpack.c.b16 %v2171, %v2168
    %v2523 = vpack.c.b16 %v2172, %v2169
    %v2524 = vpack.c.b16 %v2176, %v2173
    %v2525 = vpack.c.b16 %v2177, %v2174
    %v2526 = vpack.c.b16 %v2178, %v2175
    %v2527 = vpack.c.b16 %v2182, %v2179
    %v2528 = vpack.c.b16 %v2183, %v2180
    %v2529 = vpack.c.b16 %v2184, %v2181
    %v2530 = vpack.c.b16 %v2188, %v2185
    %v2531 = vpack.c.b16 %v2189, %v2186
    %v2532 = vpack.c.b16 %v2190, %v2187
    %v2533 = vpack.c.b16 %v2194, %v2191
    %v2534 = vpack.c.b16 %v2195, %v2192
    %v2535 = vpack.c.b16 %v2196, %v2193
    %v2536 = vpack.c.b16 %v2200, %v2197
    %v2537 = vpack.c.b16 %v2201, %v2198
    %v2538 = vpack.c.b16 %v2202, %v2199
    %v2539 = vpack.c.b16 %v2206, %v2203
    %v2540 = vpack.c.b16 %v2207, %v2204
    %v2541 = vpack.c.b16 %v2208, %v2205
    %v2542 = vpack.c.b16 %v2212, %v2209
    %v2543 = vpack.c.b16 %v2213, %v2210
    %v2544 = vpack.c.b16 %v2214, %v2211
    %v2545 = vpack.c.b16 %v2218, %v2215
    %v2546 = vpack.c.b16 %v2219, %v2216
    %v2547 = vpack.c.b16 %v2220, %v2217
    %v2548 = vpack.c.b16 %v2224, %v2221
    %v2549 = vpack.c.b16 %v2225, %v2222
    %v2550 = vpack.c.b16 %v2226, %v2223
    %v2551 = vpack.c.b16 %v2230, %v2227
    %v2552 = vpack.c.b16 %v2231, %v2228
    %v2553 = vpack.c.b16 %v2232, %v2229
    %v2554 = vpack.c.b16 %v2236, %v2233
    %v2555 = vpack.c.b16 %v2237, %v2234
    %v2556 = vpack.c.b16 %v2238, %v2235
    %v2557 = vpack.c.b16 %v2242, %v2239
    %v2558 = vpack.c.b16 %v2243, %v2240
    %v2559 = vpack.c.b16 %v2244, %v2241
    %v2560 = vpack.c.b16 %v2248, %v2245
    %v2561 = vpack.c.b16 %v2249, %v2246
    %v2562 = vpack.c.b16 %v2250, %v2247
    %v2563 = vpack.c.b16 %v2254, %v2251
    %v2564 = vpack.c.b16 %v2255, %v2252
    %v2565 = vpack.c.b16 %v2256, %v2253
    %v2566 = vpack.c.b16 %v2260, %v2257
    %v2567 = vpack.c.b16 %v2261, %v2258
    %v2568 = vpack.c.b16 %v2262, %v2259
    %v2569 = vpack.c.b16 %v2266, %v2263
    %v2570 = vpack.c.b16 %v2267, %v2264
    %v2571 = vpack.c.b16 %v2268, %v2265
    %v2572 = vpack.c.b16 %v2272, %v2269
    %v2573 = vpack.c.b16 %v2273, %v2270
    %v2574 = vpack.c.b16 %v2274, %v2271
    %v2575 = vpack.c.b16 %v2278, %v2275
    %v2576 = vpack.c.b16 %v2279, %v2276
    %v2577 = vpack.c.b16 %v2280, %v2277
    %v2578 = vpack.c.b16 %v2284, %v2281
    %v2579 = vpack.c.b16 %v2285, %v2282
    %v2580 = vpack.c.b16 %v2286, %v2283
    %v2581 = vpack.c.b16 %v2290, %v2287
    %v2582 = vpack.c.b16 %v2291, %v2288
    %v2583 = vpack.c.b16 %v2292, %v2289
    %v2584 = vpack.c.b16 %v2296, %v2293
    %v2585 = vpack.c.b16 %v2297, %v2294
    %v2586 = vpack.c.b16 %v2298, %v2295
    %v2587 = vpack.c.b16 %v2302, %v2299
    %v2588 = vpack.c.b16 %v2303, %v2300
    %v2589 = vpack.c.b16 %v2304, %v2301
    %v2590 = vpack.c.b16 %v2308, %v2305
    %v2591 = vpack.c.b16 %v2309, %v2306
    %v2592 = vpack.c.b16 %v2310, %v2307
    %v2593 = vpack.c.b16 %v2314, %v2311
    %v2594 = vpack.c.b16 %v2315, %v2312
    %v2595 = vpack.c.b16 %v2316, %v2313
    %v2596 = vpack.c.b16 %v2320, %v2317
    %v2597 = vpack.c.b16 %v2321, %v2318
    %v2598 = vpack.c.b16 %v2322, %v2319
    %v2599 = vpack.c.b16 %v2326, %v2323
    %v2600 = vpack.c.b16 %v2327, %v2324
    %v2601 = vpack.c.b16 %v2328, %v2325
    %v2602 = vpack.c.b16 %v2332, %v2329
    %v2603 = vpack.c.b16 %v2333, %v2330
    %v2604 = vpack.c.b16 %v2334, %v2331
    %v2605 = vpack.c.b16 %v2338, %v2335
    %v2606 = vpack.c.b16 %v2339, %v2336
    %v2607 = vpack.c.b16 %v2340, %v2337
    %v2608 = vpack.c.b16 %v2344, %v2341
    %v2609 = vpack.c.b16 %v2345, %v2342
    %v2610 = vpack.c.b16 %v2346, %v2343
    %v2611 = vpack.c.b16 %v2350, %v2347
    %v2612 = vpack.c.b16 %v2351, %v2348
    %v2613 = vpack.c.b16 %v2352, %v2349
    %v2614 = vpack.c.b16 %v2356, %v2353
    %v2615 = vpack.c.b16 %v2357, %v2354
    %v2616 = vpack.c.b16 %v2358, %v2355
    %v2617 = vpack.c.b16 %v2362, %v2359
    %v2618 = vpack.c.b16 %v2363, %v2360
    %v2619 = vpack.c.b16 %v2364, %v2361
    %v2620 = vpack.c.b16 %v2368, %v2365
    %v2621 = vpack.c.b16 %v2369, %v2366
    %v2622 = vpack.c.b16 %v2370, %v2367
    %v2623 = vpack.c.b16 %v2374, %v2371
    %v2624 = vpack.c.b16 %v2375, %v2372
    %v2625 = vpack.c.b16 %v2376, %v2373
    %v2626 = vpack.c.b16 %v2380, %v2377
    %v2627 = vpack.c.b16 %v2381, %v2378
    %v2628 = vpack.c.b16 %v2382, %v2379
    %v2629 = vpack.c.b16 %v2386, %v2383
    %v2630 = vpack.c.b16 %v2387, %v2384
    %v2631 = vpack.c.b16 %v2388, %v2385
    %v2632 = vpack.c.b16 %v2392, %v2389
    %v2633 = vpack.c.b16 %v2393, %v2390
    %v2634 = vpack.c.b16 %v2394, %v2391
    %2875 = vmatprep.subr.bf16.mxu0 %v2417
    %2876 = vmatpush1.bf16.msra.mxu0 %v2416
    %2877 = vmatprep.subr.bf16.mxu0 %v2414
    %2878 = vmatpush1.bf16.msra.mxu0 %v2413
    %2879 = vmatprep.subr.bf16.mxu0 %v2411
    %2880 = vmatpush1.bf16.msra.mxu0 %v2410
    %2881 = vmatprep.subr.bf16.mxu0 %v2408
    %2882 = vmatpush1.bf16.msra.mxu0 %v2407
    %2883 = vmatprep.subr.bf16.mxu0 %v2405
    %2884 = vmatpush1.bf16.msra.mxu0 %v2404
    %2885 = vmatprep.subr.bf16.mxu0 %v2402
    %2886 = vmatpush1.bf16.msra.mxu0 %v2401
    %2887 = vmatprep.subr.bf16.mxu0 %v2399
    %2888 = vmatpush1.bf16.msra.mxu0 %v2398
    %2889 = vmatprep.subr.bf16.mxu0 %v2396
    %2890 = vmatpush1.bf16.msra.mxu0 %v2395
    %2891 = vmatprep.subr.bf16.mxu0 %v2441
    %2892 = vmatpush2.bf16.msra.mxu0 %v2440
    %2893 = vmatprep.subr.bf16.mxu0 %v2438
    %2894 = vmatpush2.bf16.msra.mxu0 %v2437
    %2895 = vmatprep.subr.bf16.mxu0 %v2435
    %2896 = vmatpush2.bf16.msra.mxu0 %v2434
    %2897 = vmatprep.subr.bf16.mxu0 %v2432
    %2898 = vmatpush2.bf16.msra.mxu0 %v2431
    %2899 = vmatprep.subr.bf16.mxu0 %v2429
    %2900 = vmatpush2.bf16.msra.mxu0 %v2428
    %2901 = vmatprep.subr.bf16.mxu0 %v2426
    %2902 = vmatpush2.bf16.msra.mxu0 %v2425
    %2903 = vmatprep.subr.bf16.mxu0 %v2423
    %2904 = vmatpush2.bf16.msra.mxu0 %v2422
    %2905 = vmatprep.subr.bf16.mxu0 %v2420
    %2906 = vmatpush2.bf16.msra.mxu0 %v2419
    %2907 = vmatprep.mubr.bf16.mxu0 %v1266
    %2908 = vmatmul.mubr.bf16.gmra.mxu0 %v1265
    %v2909 = vpop.f32.mrf.mxu0
    %v2910 = vadd.f32 0.0, %v2909
    %v2911 = vpop.f32.mrf.mxu0
    %v2912 = vadd.f32 0.0, %v2911
    %v2913 = vpop.f32.mrf.mxu0
    %v2914 = vpop.f32.mrf.mxu0
    %2915 = vdwg.mxu0
    %2916 = vmatprep.subr.bf16.mxu0 %v2465
    %2917 = vmatpush1.bf16.msra.mxu0 %v2464
    %2918 = vmatprep.subr.bf16.mxu0 %v2462
    %2919 = vmatpush1.bf16.msra.mxu0 %v2461
    %2920 = vmatprep.subr.bf16.mxu0 %v2459
    %2921 = vmatpush1.bf16.msra.mxu0 %v2458
    %2922 = vmatprep.subr.bf16.mxu0 %v2456
    %2923 = vmatpush1.bf16.msra.mxu0 %v2455
    %2924 = vmatprep.subr.bf16.mxu0 %v2453
    %2925 = vmatpush1.bf16.msra.mxu0 %v2452
    %2926 = vmatprep.subr.bf16.mxu0 %v2450
    %2927 = vmatpush1.bf16.msra.mxu0 %v2449
    %2928 = vmatprep.subr.bf16.mxu0 %v2447
    %2929 = vmatpush1.bf16.msra.mxu0 %v2446
    %2930 = vmatprep.subr.bf16.mxu0 %v2444
    %2931 = vmatpush1.bf16.msra.mxu0 %v2443
    %2932 = vmatprep.subr.bf16.mxu0 %v2489
    %2933 = vmatpush2.bf16.msra.mxu0 %v2488
    %2934 = vmatprep.subr.bf16.mxu0 %v2486
    %2935 = vmatpush2.bf16.msra.mxu0 %v2485
    %2936 = vmatprep.subr.bf16.mxu0 %v2483
    %2937 = vmatpush2.bf16.msra.mxu0 %v2482
    %2938 = vmatprep.subr.bf16.mxu0 %v2480
    %2939 = vmatpush2.bf16.msra.mxu0 %v2479
    %2940 = vmatprep.subr.bf16.mxu0 %v2477
    %2941 = vmatpush2.bf16.msra.mxu0 %v2476
    %2942 = vmatprep.subr.bf16.mxu0 %v2474
    %2943 = vmatpush2.bf16.msra.mxu0 %v2473
    %2944 = vmatprep.subr.bf16.mxu0 %v2471
    %2945 = vmatpush2.bf16.msra.mxu0 %v2470
    %2946 = vmatprep.subr.bf16.mxu0 %v2468
    %2947 = vmatpush2.bf16.msra.mxu0 %v2467
    %2948 = vmatprep.mubr.bf16.mxu0 %v1268
    %2949 = vmatmul.mubr.bf16.gmra.mxu0 %v1267
    %v2950 = vpop.f32.mrf.mxu0
    %v2951 = vadd.f32 %v2910, %v2950
    %v2952 = vpop.f32.mrf.mxu0
    %v2953 = vadd.f32 %v2912, %v2952
    %v2954 = vpop.f32.mrf.mxu0
    %v2955 = vpop.f32.mrf.mxu0
    %2956 = vdwg.mxu0
    %2957 = vmatprep.subr.bf16.mxu0 %v2513
    %2958 = vmatpush1.bf16.msra.mxu0 %v2512
    %2959 = vmatprep.subr.bf16.mxu0 %v2510
    %2960 = vmatpush1.bf16.msra.mxu0 %v2509
    %2961 = vmatprep.subr.bf16.mxu0 %v2507
    %2962 = vmatpush1.bf16.msra.mxu0 %v2506
    %2963 = vmatprep.subr.bf16.mxu0 %v2504
    %2964 = vmatpush1.bf16.msra.mxu0 %v2503
    %2965 = vmatprep.subr.bf16.mxu0 %v2501
    %2966 = vmatpush1.bf16.msra.mxu0 %v2500
    %2967 = vmatprep.subr.bf16.mxu0 %v2498
    %2968 = vmatpush1.bf16.msra.mxu0 %v2497
    %2969 = vmatprep.subr.bf16.mxu0 %v2495
    %2970 = vmatpush1.bf16.msra.mxu0 %v2494
    %2971 = vmatprep.subr.bf16.mxu0 %v2492
    %2972 = vmatpush1.bf16.msra.mxu0 %v2491
    %2973 = vmatprep.subr.bf16.mxu0 %v2537
    %2974 = vmatpush2.bf16.msra.mxu0 %v2536
    %2975 = vmatprep.subr.bf16.mxu0 %v2534
    %2976 = vmatpush2.bf16.msra.mxu0 %v2533
    %2977 = vmatprep.subr.bf16.mxu0 %v2531
    %2978 = vmatpush2.bf16.msra.mxu0 %v2530
    %2979 = vmatprep.subr.bf16.mxu0 %v2528
    %2980 = vmatpush2.bf16.msra.mxu0 %v2527
    %2981 = vmatprep.subr.bf16.mxu0 %v2525
    %2982 = vmatpush2.bf16.msra.mxu0 %v2524
    %2983 = vmatprep.subr.bf16.mxu0 %v2522
    %2984 = vmatpush2.bf16.msra.mxu0 %v2521
    %2985 = vmatprep.subr.bf16.mxu0 %v2519
    %2986 = vmatpush2.bf16.msra.mxu0 %v2518
    %2987 = vmatprep.subr.bf16.mxu0 %v2516
    %2988 = vmatpush2.bf16.msra.mxu0 %v2515
    %2989 = vmatprep.mubr.bf16.mxu0 %v1270
    %2990 = vmatmul.mubr.bf16.gmra.mxu0 %v1269
    %v2991 = vpop.f32.mrf.mxu0
    %v2992 = vadd.f32 %v2951, %v2991
    %v2993 = vpop.f32.mrf.mxu0
    %v2994 = vadd.f32 %v2953, %v2993
    %v2995 = vpop.f32.mrf.mxu0
    %v2996 = vpop.f32.mrf.mxu0
    %2997 = vdwg.mxu0
    %2998 = vmatprep.subr.bf16.mxu0 %v2561
    %2999 = vmatpush1.bf16.msra.mxu0 %v2560
    %3000 = vmatprep.subr.bf16.mxu0 %v2558
    %3001 = vmatpush1.bf16.msra.mxu0 %v2557
    %3002 = vmatprep.subr.bf16.mxu0 %v2555
    %3003 = vmatpush1.bf16.msra.mxu0 %v2554
    %3004 = vmatprep.subr.bf16.mxu0 %v2552
    %3005 = vmatpush1.bf16.msra.mxu0 %v2551
    %3006 = vmatprep.subr.bf16.mxu0 %v2549
    %3007 = vmatpush1.bf16.msra.mxu0 %v2548
    %3008 = vmatprep.subr.bf16.mxu0 %v2546
    %3009 = vmatpush1.bf16.msra.mxu0 %v2545
    %3010 = vmatprep.subr.bf16.mxu0 %v2543
    %3011 = vmatpush1.bf16.msra.mxu0 %v2542
    %3012 = vmatprep.subr.bf16.mxu0 %v2540
    %3013 = vmatpush1.bf16.msra.mxu0 %v2539
    %3014 = vmatprep.subr.bf16.mxu0 %v2585
    %3015 = vmatpush2.bf16.msra.mxu0 %v2584
    %3016 = vmatprep.subr.bf16.mxu0 %v2582
    %3017 = vmatpush2.bf16.msra.mxu0 %v2581
    %3018 = vmatprep.subr.bf16.mxu0 %v2579
    %3019 = vmatpush2.bf16.msra.mxu0 %v2578
    %3020 = vmatprep.subr.bf16.mxu0 %v2576
    %3021 = vmatpush2.bf16.msra.mxu0 %v2575
    %3022 = vmatprep.subr.bf16.mxu0 %v2573
    %3023 = vmatpush2.bf16.msra.mxu0 %v2572
    %3024 = vmatprep.subr.bf16.mxu0 %v2570
    %3025 = vmatpush2.bf16.msra.mxu0 %v2569
    %3026 = vmatprep.subr.bf16.mxu0 %v2567
    %3027 = vmatpush2.bf16.msra.mxu0 %v2566
    %3028 = vmatprep.subr.bf16.mxu0 %v2564
    %3029 = vmatpush2.bf16.msra.mxu0 %v2563
    %3030 = vmatprep.mubr.bf16.mxu0 %v1272
    %3031 = vmatmul.mubr.bf16.gmra.mxu0 %v1271
    %v3032 = vpop.f32.mrf.mxu0
    %v3033 = vadd.f32 %v2992, %v3032
    %v3034 = vpop.f32.mrf.mxu0
    %v3035 = vadd.f32 %v2994, %v3034
    %v3036 = vpop.f32.mrf.mxu0
    %v3037 = vpop.f32.mrf.mxu0
    %3038 = vdwg.mxu0
    %3039 = vmatprep.subr.bf16.mxu0 %v2609
    %3040 = vmatpush1.bf16.msra.mxu0 %v2608
    %3041 = vmatprep.subr.bf16.mxu0 %v2606
    %3042 = vmatpush1.bf16.msra.mxu0 %v2605
    %3043 = vmatprep.subr.bf16.mxu0 %v2603
    %3044 = vmatpush1.bf16.msra.mxu0 %v2602
    %3045 = vmatprep.subr.bf16.mxu0 %v2600
    %3046 = vmatpush1.bf16.msra.mxu0 %v2599
    %3047 = vmatprep.subr.bf16.mxu0 %v2597
    %3048 = vmatpush1.bf16.msra.mxu0 %v2596
    %3049 = vmatprep.subr.bf16.mxu0 %v2594
    %3050 = vmatpush1.bf16.msra.mxu0 %v2593
    %3051 = vmatprep.subr.bf16.mxu0 %v2591
    %3052 = vmatpush1.bf16.msra.mxu0 %v2590
    %3053 = vmatprep.subr.bf16.mxu0 %v2588
    %3054 = vmatpush1.bf16.msra.mxu0 %v2587
    %3055 = vmatprep.subr.bf16.mxu0 %v2633
    %3056 = vmatpush2.bf16.msra.mxu0 %v2632
    %3057 = vmatprep.subr.bf16.mxu0 %v2630
    %3058 = vmatpush2.bf16.msra.mxu0 %v2629
    %3059 = vmatprep.subr.bf16.mxu0 %v2627
    %3060 = vmatpush2.bf16.msra.mxu0 %v2626
    %3061 = vmatprep.subr.bf16.mxu0 %v2624
    %3062 = vmatpush2.bf16.msra.mxu0 %v2623
    %3063 = vmatprep.subr.bf16.mxu0 %v2621
    %3064 = vmatpush2.bf16.msra.mxu0 %v2620
    %3065 = vmatprep.subr.bf16.mxu0 %v2618
    %3066 = vmatpush2.bf16.msra.mxu0 %v2617
    %3067 = vmatprep.subr.bf16.mxu0 %v2615
    %3068 = vmatpush2.bf16.msra.mxu0 %v2614
    %3069 = vmatprep.subr.bf16.mxu0 %v2612
    %3070 = vmatpush2.bf16.msra.mxu0 %v2611
    %3071 = vmatprep.mubr.bf16.mxu0 %v1274
    %3072 = vmatmul.mubr.bf16.gmra.mxu0 %v1273
    %v3073 = vpop.f32.mrf.mxu0
    %v3074 = vadd.f32 %v3033, %v3073
    %v3075 = vpop.f32.mrf.mxu0
    %v3076 = vadd.f32 %v3035, %v3075
    %v3077 = vpop.f32.mrf.mxu0
    %v3078 = vpop.f32.mrf.mxu0
    %3079 = vdwg.mxu0
    %3080 = vmatprep.subr.bf16.mxu0 0
    %3081 = vmatpush1.bf16.msra.mxu0 %v2418
    %3082 = vmatprep.subr.bf16.mxu0 0
    %3083 = vmatpush1.bf16.msra.mxu0 %v2415
    %3084 = vmatprep.subr.bf16.mxu0 0
    %3085 = vmatpush1.bf16.msra.mxu0 %v2412
    %3086 = vmatprep.subr.bf16.mxu0 0
    %3087 = vmatpush1.bf16.msra.mxu0 %v2409
    %3088 = vmatprep.subr.bf16.mxu0 0
    %3089 = vmatpush1.bf16.msra.mxu0 %v2406
    %3090 = vmatprep.subr.bf16.mxu0 0
    %3091 = vmatpush1.bf16.msra.mxu0 %v2403
    %3092 = vmatprep.subr.bf16.mxu0 0
    %3093 = vmatpush1.bf16.msra.mxu0 %v2400
    %3094 = vmatprep.subr.bf16.mxu0 0
    %3095 = vmatpush1.bf16.msra.mxu0 %v2397
    %3096 = vmatprep.subr.bf16.mxu0 0
    %3097 = vmatpush2.bf16.msra.mxu0 %v2442
    %3098 = vmatprep.subr.bf16.mxu0 0
    %3099 = vmatpush2.bf16.msra.mxu0 %v2439
    %3100 = vmatprep.subr.bf16.mxu0 0
    %3101 = vmatpush2.bf16.msra.mxu0 %v2436
    %3102 = vmatprep.subr.bf16.mxu0 0
    %3103 = vmatpush2.bf16.msra.mxu0 %v2433
    %3104 = vmatprep.subr.bf16.mxu0 0
    %3105 = vmatpush2.bf16.msra.mxu0 %v2430
    %3106 = vmatprep.subr.bf16.mxu0 0
    %3107 = vmatpush2.bf16.msra.mxu0 %v2427
    %3108 = vmatprep.subr.bf16.mxu0 0
    %3109 = vmatpush2.bf16.msra.mxu0 %v2424
    %3110 = vmatprep.subr.bf16.mxu0 0
    %3111 = vmatpush2.bf16.msra.mxu0 %v2421
    %3112 = vmatprep.mubr.bf16.mxu0 %v1266
    %3113 = vmatmul.mubr.bf16.gmra.mxu0 %v1265
    %v3114 = vpop.f32.mrf.mxu0
    %v3115 = vadd.f32 0.0, %v3114
    %v3116 = vpop.f32.mrf.mxu0
    %v3117 = vpop.f32.mrf.mxu0
    %v3118 = vpop.f32.mrf.mxu0
    %3119 = vdwg.mxu0
    %3120 = vmatprep.subr.bf16.mxu0 0
    %3121 = vmatpush1.bf16.msra.mxu0 %v2466
    %3122 = vmatprep.subr.bf16.mxu0 0
    %3123 = vmatpush1.bf16.msra.mxu0 %v2463
    %3124 = vmatprep.subr.bf16.mxu0 0
    %3125 = vmatpush1.bf16.msra.mxu0 %v2460
    %3126 = vmatprep.subr.bf16.mxu0 0
    %3127 = vmatpush1.bf16.msra.mxu0 %v2457
    %3128 = vmatprep.subr.bf16.mxu0 0
    %3129 = vmatpush1.bf16.msra.mxu0 %v2454
    %3130 = vmatprep.subr.bf16.mxu0 0
    %3131 = vmatpush1.bf16.msra.mxu0 %v2451
    %3132 = vmatprep.subr.bf16.mxu0 0
    %3133 = vmatpush1.bf16.msra.mxu0 %v2448
    %3134 = vmatprep.subr.bf16.mxu0 0
    %3135 = vmatpush1.bf16.msra.mxu0 %v2445
    %3136 = vmatprep.subr.bf16.mxu0 0
    %3137 = vmatpush2.bf16.msra.mxu0 %v2490
    %3138 = vmatprep.subr.bf16.mxu0 0
    %3139 = vmatpush2.bf16.msra.mxu0 %v2487
    %3140 = vmatprep.subr.bf16.mxu0 0
    %3141 = vmatpush2.bf16.msra.mxu0 %v2484
    %3142 = vmatprep.subr.bf16.mxu0 0
    %3143 = vmatpush2.bf16.msra.mxu0 %v2481
    %3144 = vmatprep.subr.bf16.mxu0 0
    %3145 = vmatpush2.bf16.msra.mxu0 %v2478
    %3146 = vmatprep.subr.bf16.mxu0 0
    %3147 = vmatpush2.bf16.msra.mxu0 %v2475
    %3148 = vmatprep.subr.bf16.mxu0 0
    %3149 = vmatpush2.bf16.msra.mxu0 %v2472
    %3150 = vmatprep.subr.bf16.mxu0 0
    %3151 = vmatpush2.bf16.msra.mxu0 %v2469
    %3152 = vmatprep.mubr.bf16.mxu0 %v1268
    %3153 = vmatmul.mubr.bf16.gmra.mxu0 %v1267
    %v3154 = vpop.f32.mrf.mxu0
    %v3155 = vadd.f32 %v3115, %v3154
    %v3156 = vpop.f32.mrf.mxu0
    %v3157 = vpop.f32.mrf.mxu0
    %v3158 = vpop.f32.mrf.mxu0
    %3159 = vdwg.mxu0
    %3160 = vmatprep.subr.bf16.mxu0 0
    %3161 = vmatpush1.bf16.msra.mxu0 %v2514
    %3162 = vmatprep.subr.bf16.mxu0 0
    %3163 = vmatpush1.bf16.msra.mxu0 %v2511
    %3164 = vmatprep.subr.bf16.mxu0 0
    %3165 = vmatpush1.bf16.msra.mxu0 %v2508
    %3166 = vmatprep.subr.bf16.mxu0 0
    %3167 = vmatpush1.bf16.msra.mxu0 %v2505
    %3168 = vmatprep.subr.bf16.mxu0 0
    %3169 = vmatpush1.bf16.msra.mxu0 %v2502
    %3170 = vmatprep.subr.bf16.mxu0 0
    %3171 = vmatpush1.bf16.msra.mxu0 %v2499
    %3172 = vmatprep.subr.bf16.mxu0 0
    %3173 = vmatpush1.bf16.msra.mxu0 %v2496
    %3174 = vmatprep.subr.bf16.mxu0 0
    %3175 = vmatpush1.bf16.msra.mxu0 %v2493
    %3176 = vmatprep.subr.bf16.mxu0 0
    %3177 = vmatpush2.bf16.msra.mxu0 %v2538
    %3178 = vmatprep.subr.bf16.mxu0 0
    %3179 = vmatpush2.bf16.msra.mxu0 %v2535
    %3180 = vmatprep.subr.bf16.mxu0 0
    %3181 = vmatpush2.bf16.msra.mxu0 %v2532
    %3182 = vmatprep.subr.bf16.mxu0 0
    %3183 = vmatpush2.bf16.msra.mxu0 %v2529
    %3184 = vmatprep.subr.bf16.mxu0 0
    %3185 = vmatpush2.bf16.msra.mxu0 %v2526
    %3186 = vmatprep.subr.bf16.mxu0 0
    %3187 = vmatpush2.bf16.msra.mxu0 %v2523
    %3188 = vmatprep.subr.bf16.mxu0 0
    %3189 = vmatpush2.bf16.msra.mxu0 %v2520
    %3190 = vmatprep.subr.bf16.mxu0 0
    %3191 = vmatpush2.bf16.msra.mxu0 %v2517
    %3192 = vmatprep.mubr.bf16.mxu0 %v1270
    %3193 = vmatmul.mubr.bf16.gmra.mxu0 %v1269
    %v3194 = vpop.f32.mrf.mxu0
    %v3195 = vadd.f32 %v3155, %v3194
    %v3196 = vpop.f32.mrf.mxu0
    %v3197 = vpop.f32.mrf.mxu0
    %v3198 = vpop.f32.mrf.mxu0
    %3199 = vdwg.mxu0
    %3200 = vmatprep.subr.bf16.mxu0 0
    %3201 = vmatpush1.bf16.msra.mxu0 %v2562
    %3202 = vmatprep.subr.bf16.mxu0 0
    %3203 = vmatpush1.bf16.msra.mxu0 %v2559
    %3204 = vmatprep.subr.bf16.mxu0 0
    %3205 = vmatpush1.bf16.msra.mxu0 %v2556
    %3206 = vmatprep.subr.bf16.mxu0 0
    %3207 = vmatpush1.bf16.msra.mxu0 %v2553
    %3208 = vmatprep.subr.bf16.mxu0 0
    %3209 = vmatpush1.bf16.msra.mxu0 %v2550
    %3210 = vmatprep.subr.bf16.mxu0 0
    %3211 = vmatpush1.bf16.msra.mxu0 %v2547
    %3212 = vmatprep.subr.bf16.mxu0 0
    %3213 = vmatpush1.bf16.msra.mxu0 %v2544
    %3214 = vmatprep.subr.bf16.mxu0 0
    %3215 = vmatpush1.bf16.msra.mxu0 %v2541
    %3216 = vmatprep.subr.bf16.mxu0 0
    %3217 = vmatpush2.bf16.msra.mxu0 %v2586
    %3218 = vmatprep.subr.bf16.mxu0 0
    %3219 = vmatpush2.bf16.msra.mxu0 %v2583
    %3220 = vmatprep.subr.bf16.mxu0 0
    %3221 = vmatpush2.bf16.msra.mxu0 %v2580
    %3222 = vmatprep.subr.bf16.mxu0 0
    %3223 = vmatpush2.bf16.msra.mxu0 %v2577
    %3224 = vmatprep.subr.bf16.mxu0 0
    %3225 = vmatpush2.bf16.msra.mxu0 %v2574
    %3226 = vmatprep.subr.bf16.mxu0 0
    %3227 = vmatpush2.bf16.msra.mxu0 %v2571
    %3228 = vmatprep.subr.bf16.mxu0 0
    %3229 = vmatpush2.bf16.msra.mxu0 %v2568
    %3230 = vmatprep.subr.bf16.mxu0 0
    %3231 = vmatpush2.bf16.msra.mxu0 %v2565
    %3232 = vmatprep.mubr.bf16.mxu0 %v1272
    %3233 = vmatmul.mubr.bf16.gmra.mxu0 %v1271
    %v3234 = vpop.f32.mrf.mxu0
    %v3235 = vadd.f32 %v3195, %v3234
    %v3236 = vpop.f32.mrf.mxu0
    %v3237 = vpop.f32.mrf.mxu0
    %v3238 = vpop.f32.mrf.mxu0
    %3239 = vdwg.mxu0
    %3240 = vmatprep.subr.bf16.mxu0 0
    %3241 = vmatpush1.bf16.msra.mxu0 %v2610
    %3242 = vmatprep.subr.bf16.mxu0 0
    %3243 = vmatpush1.bf16.msra.mxu0 %v2607
    %3244 = vmatprep.subr.bf16.mxu0 0
    %3245 = vmatpush1.bf16.msra.mxu0 %v2604
    %3246 = vmatprep.subr.bf16.mxu0 0
    %3247 = vmatpush1.bf16.msra.mxu0 %v2601
    %3248 = vmatprep.subr.bf16.mxu0 0
    %3249 = vmatpush1.bf16.msra.mxu0 %v2598
    %3250 = vmatprep.subr.bf16.mxu0 0
    %3251 = vmatpush1.bf16.msra.mxu0 %v2595
    %3252 = vmatprep.subr.bf16.mxu0 0
    %3253 = vmatpush1.bf16.msra.mxu0 %v2592
    %3254 = vmatprep.subr.bf16.mxu0 0
    %3255 = vmatpush1.bf16.msra.mxu0 %v2589
    %3256 = vmatprep.subr.bf16.mxu0 0
    %3257 = vmatpush2.bf16.msra.mxu0 %v2634
    %3258 = vmatprep.subr.bf16.mxu0 0
    %3259 = vmatpush2.bf16.msra.mxu0 %v2631
    %3260 = vmatprep.subr.bf16.mxu0 0
    %3261 = vmatpush2.bf16.msra.mxu0 %v2628
    %3262 = vmatprep.subr.bf16.mxu0 0
    %3263 = vmatpush2.bf16.msra.mxu0 %v2625
    %3264 = vmatprep.subr.bf16.mxu0 0
    %3265 = vmatpush2.bf16.msra.mxu0 %v2622
    %3266 = vmatprep.subr.bf16.mxu0 0
    %3267 = vmatpush2.bf16.msra.mxu0 %v2619
    %3268 = vmatprep.subr.bf16.mxu0 0
    %3269 = vmatpush2.bf16.msra.mxu0 %v2616
    %3270 = vmatprep.subr.bf16.mxu0 0
    %3271 = vmatpush2.bf16.msra.mxu0 %v2613
    %3272 = vmatprep.mubr.bf16.mxu0 %v1274
    %3273 = vmatmul.mubr.bf16.gmra.mxu0 %v1273
    %v3274 = vpop.f32.mrf.mxu0
    %v3275 = vadd.f32 %v3235, %v3274
    %v3276 = vpop.f32.mrf.mxu0
    %v3277 = vpop.f32.mrf.mxu0
    %v3278 = vpop.f32.mrf.mxu0
    %3279 = vdwg.mxu0
    %v3280 = vadd.f32 %v1220, %v3074
    %v3281 = vadd.f32 %v1221, %v3076
    %v3282 = vadd.f32 %v1222, %v3275
    %v3283 = vld [vmem:[#allocation8 + $0x180] sm:$0xff]
    %v3284 = vld [vmem:[#allocation8 + $0x188] sm:$0xf]
    %v3285 = vld [vmem:[#allocation8 + $0x18c] sm:$0xff]
    %v3286 = vld [vmem:[#allocation8 + $0x194] sm:$0xf]
    %v3287 = vld [vmem:[#allocation8 + $0x198] sm:$0xff]
    %v3288 = vld [vmem:[#allocation8 + $0x1a0] sm:$0xf]
    %v3289 = vld [vmem:[#allocation8 + $0x1a4] sm:$0xff]
    %v3290 = vld [vmem:[#allocation8 + $0x1ac] sm:$0xf]
    %v3291 = vld [vmem:[#allocation8 + $0x1b0] sm:$0xff]
    %v3292 = vld [vmem:[#allocation8 + $0x1b8] sm:$0xf]
    %v3293 = vld [vmem:[#allocation8 + $0x1bc] sm:$0xff]
    %v3294 = vld [vmem:[#allocation8 + $0x1c4] sm:$0xf]
    %v3295 = vld [vmem:[#allocation8 + $0x1c8] sm:$0xff]
    %v3296 = vld [vmem:[#allocation8 + $0x1d0] sm:$0xf]
    %v3297 = vld [vmem:[#allocation8 + $0x1d4] sm:$0xff]
    %v3298 = vld [vmem:[#allocation8 + $0x1dc] sm:$0xf]
    %v3299 = vld [vmem:[#allocation8 + $0x1e0] sm:$0xff]
    %v3300 = vld [vmem:[#allocation8 + $0x1e8] sm:$0xf]
    %v3301 = vld [vmem:[#allocation8 + $0x1ec] sm:$0xff]
    %v3302 = vld [vmem:[#allocation8 + $0x1f4] sm:$0xf]
    %v3303 = vld [vmem:[#allocation8 + $0x1f8] sm:$0xff]
    %v3304 = vld [vmem:[#allocation8 + $0x200] sm:$0xf]
    %v3305 = vld [vmem:[#allocation8 + $0x204] sm:$0xff]
    %v3306 = vld [vmem:[#allocation8 + $0x20c] sm:$0xf]
    %v3307 = vld [vmem:[#allocation8 + $0x210] sm:$0xff]
    %v3308 = vld [vmem:[#allocation8 + $0x218] sm:$0xf]
    %v3309 = vld [vmem:[#allocation8 + $0x21c] sm:$0xff]
    %v3310 = vld [vmem:[#allocation8 + $0x224] sm:$0xf]
    %v3311 = vld [vmem:[#allocation8 + $0x228] sm:$0xff]
    %v3312 = vld [vmem:[#allocation8 + $0x230] sm:$0xf]
    %v3313 = vld [vmem:[#allocation8 + $0x234] sm:$0xff]
    %v3314 = vld [vmem:[#allocation8 + $0x23c] sm:$0xf]
    %v3315 = vld [vmem:[#allocation8 + $0x240] sm:$0xff]
    %v3316 = vld [vmem:[#allocation8 + $0x248] sm:$0xf]
    %v3317 = vld [vmem:[#allocation8 + $0x24c] sm:$0xff]
    %v3318 = vld [vmem:[#allocation8 + $0x254] sm:$0xf]
    %v3319 = vld [vmem:[#allocation8 + $0x258] sm:$0xff]
    %v3320 = vld [vmem:[#allocation8 + $0x260] sm:$0xf]
    %v3321 = vld [vmem:[#allocation8 + $0x264] sm:$0xff]
    %v3322 = vld [vmem:[#allocation8 + $0x26c] sm:$0xf]
    %v3323 = vld [vmem:[#allocation8 + $0x270] sm:$0xff]
    %v3324 = vld [vmem:[#allocation8 + $0x278] sm:$0xf]
    %v3325 = vld [vmem:[#allocation8 + $0x27c] sm:$0xff]
    %v3326 = vld [vmem:[#allocation8 + $0x284] sm:$0xf]
    %v3327 = vld [vmem:[#allocation8 + $0x288] sm:$0xff]
    %v3328 = vld [vmem:[#allocation8 + $0x290] sm:$0xf]
    %v3329 = vld [vmem:[#allocation8 + $0x294] sm:$0xff]
    %v3330 = vld [vmem:[#allocation8 + $0x29c] sm:$0xf]
    %v3331 = vld [vmem:[#allocation8 + $0x2a0] sm:$0xff]
    %v3332 = vld [vmem:[#allocation8 + $0x2a8] sm:$0xf]
    %v3333 = vld [vmem:[#allocation8 + $0x2ac] sm:$0xff]
    %v3334 = vld [vmem:[#allocation8 + $0x2b4] sm:$0xf]
    %v3335 = vld [vmem:[#allocation8 + $0x2b8] sm:$0xff]
    %v3336 = vld [vmem:[#allocation8 + $0x2c0] sm:$0xf]
    %v3337 = vld [vmem:[#allocation8 + $0x2c4] sm:$0xff]
    %v3338 = vld [vmem:[#allocation8 + $0x2cc] sm:$0xf]
    %v3339 = vld [vmem:[#allocation8 + $0x2d0] sm:$0xff]
    %v3340 = vld [vmem:[#allocation8 + $0x2d8] sm:$0xf]
    %v3341 = vld [vmem:[#allocation8 + $0x2dc] sm:$0xff]
    %v3342 = vld [vmem:[#allocation8 + $0x2e4] sm:$0xf]
    %v3343 = vld [vmem:[#allocation8 + $0x2e8] sm:$0xff]
    %v3344 = vld [vmem:[#allocation8 + $0x2f0] sm:$0xf]
    %v3345 = vld [vmem:[#allocation8 + $0x2f4] sm:$0xff]
    %v3346 = vld [vmem:[#allocation8 + $0x2fc] sm:$0xf]
    %v3347 = vld [vmem:[#allocation8 + $0x300] sm:$0xff]
    %v3348 = vld [vmem:[#allocation8 + $0x308] sm:$0xf]
    %v3349 = vld [vmem:[#allocation8 + $0x30c] sm:$0xff]
    %v3350 = vld [vmem:[#allocation8 + $0x314] sm:$0xf]
    %v3351 = vld [vmem:[#allocation8 + $0x318] sm:$0xff]
    %v3352 = vld [vmem:[#allocation8 + $0x320] sm:$0xf]
    %v3353 = vld [vmem:[#allocation8 + $0x324] sm:$0xff]
    %v3354 = vld [vmem:[#allocation8 + $0x32c] sm:$0xf]
    %v3355 = vld [vmem:[#allocation8 + $0x330] sm:$0xff]
    %v3356 = vld [vmem:[#allocation8 + $0x338] sm:$0xf]
    %v3357 = vld [vmem:[#allocation8 + $0x33c] sm:$0xff]
    %v3358 = vld [vmem:[#allocation8 + $0x344] sm:$0xf]
    %v3359 = vld [vmem:[#allocation8 + $0x348] sm:$0xff]
    %v3360 = vld [vmem:[#allocation8 + $0x350] sm:$0xf]
    %v3361 = vld [vmem:[#allocation8 + $0x354] sm:$0xff]
    %v3362 = vld [vmem:[#allocation8 + $0x35c] sm:$0xf]
    %v3363 = vld [vmem:[#allocation8 + $0x360] sm:$0xff]
    %v3364 = vld [vmem:[#allocation8 + $0x368] sm:$0xf]
    %v3365 = vld [vmem:[#allocation8 + $0x36c] sm:$0xff]
    %v3366 = vld [vmem:[#allocation8 + $0x374] sm:$0xf]
    %v3367 = vld [vmem:[#allocation8 + $0x378] sm:$0xff]
    %v3368 = vld [vmem:[#allocation8 + $0x380] sm:$0xf]
    %v3369 = vld [vmem:[#allocation8 + $0x384] sm:$0xff]
    %v3370 = vld [vmem:[#allocation8 + $0x38c] sm:$0xf]
    %v3371 = vld [vmem:[#allocation8 + $0x390] sm:$0xff]
    %v3372 = vld [vmem:[#allocation8 + $0x398] sm:$0xf]
    %v3373 = vld [vmem:[#allocation8 + $0x39c] sm:$0xff]
    %v3374 = vld [vmem:[#allocation8 + $0x3a4] sm:$0xf]
    %v3375 = vld [vmem:[#allocation8 + $0x3a8] sm:$0xff]
    %v3376 = vld [vmem:[#allocation8 + $0x3b0] sm:$0xf]
    %v3377 = vld [vmem:[#allocation8 + $0x3b4] sm:$0xff]
    %v3378 = vld [vmem:[#allocation8 + $0x3bc] sm:$0xf]
    %v3379 = vld [vmem:[#allocation8 + $0x3c0] sm:$0xff]
    %v3380 = vld [vmem:[#allocation8 + $0x3c8] sm:$0xf]
    %v3381 = vld [vmem:[#allocation8 + $0x3cc] sm:$0xff]
    %v3382 = vld [vmem:[#allocation8 + $0x3d4] sm:$0xf]
    %v3383 = vld [vmem:[#allocation8 + $0x3d8] sm:$0xff]
    %v3384 = vld [vmem:[#allocation8 + $0x3e0] sm:$0xf]
    %v3385 = vld [vmem:[#allocation8 + $0x3e4] sm:$0xff]
    %v3386 = vld [vmem:[#allocation8 + $0x3ec] sm:$0xf]
    %v3387 = vld [vmem:[#allocation8 + $0x3f0] sm:$0xff]
    %v3388 = vld [vmem:[#allocation8 + $0x3f8] sm:$0xf]
    %v3389 = vld [vmem:[#allocation8 + $0x3fc] sm:$0xff]
    %v3390 = vld [vmem:[#allocation8 + $0x404] sm:$0xf]
    %v3391 = vld [vmem:[#allocation8 + $0x408] sm:$0xff]
    %v3392 = vld [vmem:[#allocation8 + $0x410] sm:$0xf]
    %v3393 = vld [vmem:[#allocation8 + $0x414] sm:$0xff]
    %v3394 = vld [vmem:[#allocation8 + $0x41c] sm:$0xf]
    %v3395 = vld [vmem:[#allocation8 + $0x420] sm:$0xff]
    %v3396 = vld [vmem:[#allocation8 + $0x428] sm:$0xf]
    %v3397 = vld [vmem:[#allocation8 + $0x42c] sm:$0xff]
    %v3398 = vld [vmem:[#allocation8 + $0x434] sm:$0xf]
    %v3399 = vld [vmem:[#allocation8 + $0x438] sm:$0xff]
    %v3400 = vld [vmem:[#allocation8 + $0x440] sm:$0xf]
    %v3401 = vld [vmem:[#allocation8 + $0x444] sm:$0xff]
    %v3402 = vld [vmem:[#allocation8 + $0x44c] sm:$0xf]
    %v3403 = vld [vmem:[#allocation8 + $0x450] sm:$0xff]
    %v3404 = vld [vmem:[#allocation8 + $0x458] sm:$0xf]
    %v3405 = vld [vmem:[#allocation8 + $0x45c] sm:$0xff]
    %v3406 = vld [vmem:[#allocation8 + $0x464] sm:$0xf]
    %v3407 = vld [vmem:[#allocation8 + $0x468] sm:$0xff]
    %v3408 = vld [vmem:[#allocation8 + $0x470] sm:$0xf]
    %v3409 = vld [vmem:[#allocation8 + $0x474] sm:$0xff]
    %v3410 = vld [vmem:[#allocation8 + $0x47c] sm:$0xf]
    %v3411 = vld [vmem:[#allocation8 + $0x480] sm:$0xff]
    %v3412 = vld [vmem:[#allocation8 + $0x488] sm:$0xf]
    %v3413 = vld [vmem:[#allocation8 + $0x48c] sm:$0xff]
    %v3414 = vld [vmem:[#allocation8 + $0x494] sm:$0xf]
    %v3415 = vld [vmem:[#allocation8 + $0x498] sm:$0xff]
    %v3416 = vld [vmem:[#allocation8 + $0x4a0] sm:$0xf]
    %v3417 = vld [vmem:[#allocation8 + $0x4a4] sm:$0xff]
    %v3418 = vld [vmem:[#allocation8 + $0x4ac] sm:$0xf]
    %v3419 = vld [vmem:[#allocation8 + $0x4b0] sm:$0xff]
    %v3420 = vld [vmem:[#allocation8 + $0x4b8] sm:$0xf]
    %v3421 = vld [vmem:[#allocation8 + $0x4bc] sm:$0xff]
    %v3422 = vld [vmem:[#allocation8 + $0x4c4] sm:$0xf]
    %v3423 = vld [vmem:[#allocation8 + $0x4c8] sm:$0xff]
    %v3424 = vld [vmem:[#allocation8 + $0x4d0] sm:$0xf]
    %v3425 = vld [vmem:[#allocation8 + $0x4d4] sm:$0xff]
    %v3426 = vld [vmem:[#allocation8 + $0x4dc] sm:$0xf]
    %v3427 = vld [vmem:[#allocation8 + $0x4e0] sm:$0xff]
    %v3428 = vld [vmem:[#allocation8 + $0x4e8] sm:$0xf]
    %v3429 = vld [vmem:[#allocation8 + $0x4ec] sm:$0xff]
    %v3430 = vld [vmem:[#allocation8 + $0x4f4] sm:$0xf]
    %v3431 = vld [vmem:[#allocation8 + $0x4f8] sm:$0xff]
    %v3432 = vld [vmem:[#allocation8 + $0x500] sm:$0xf]
    %v3433 = vld [vmem:[#allocation8 + $0x504] sm:$0xff]
    %v3434 = vld [vmem:[#allocation8 + $0x50c] sm:$0xf]
    %v3435 = vld [vmem:[#allocation8 + $0x510] sm:$0xff]
    %v3436 = vld [vmem:[#allocation8 + $0x518] sm:$0xf]
    %v3437 = vld [vmem:[#allocation8 + $0x51c] sm:$0xff]
    %v3438 = vld [vmem:[#allocation8 + $0x524] sm:$0xf]
    %v3439 = vld [vmem:[#allocation8 + $0x528] sm:$0xff]
    %v3440 = vld [vmem:[#allocation8 + $0x530] sm:$0xf]
    %v3441 = vld [vmem:[#allocation8 + $0x534] sm:$0xff]
    %v3442 = vld [vmem:[#allocation8 + $0x53c] sm:$0xf]
    %v3443 = vld [vmem:[#allocation8 + $0x540] sm:$0xff]
    %v3444 = vld [vmem:[#allocation8 + $0x548] sm:$0xf]
    %v3445 = vld [vmem:[#allocation8 + $0x54c] sm:$0xff]
    %v3446 = vld [vmem:[#allocation8 + $0x554] sm:$0xf]
    %v3447 = vld [vmem:[#allocation8 + $0x558] sm:$0xff]
    %v3448 = vld [vmem:[#allocation8 + $0x560] sm:$0xf]
    %v3449 = vld [vmem:[#allocation8 + $0x564] sm:$0xff]
    %v3450 = vld [vmem:[#allocation8 + $0x56c] sm:$0xf]
    %v3451 = vld [vmem:[#allocation8 + $0x570] sm:$0xff]
    %v3452 = vld [vmem:[#allocation8 + $0x578] sm:$0xf]
    %v3453 = vld [vmem:[#allocation8 + $0x57c] sm:$0xff]
    %v3454 = vld [vmem:[#allocation8 + $0x584] sm:$0xf]
    %v3455 = vld [vmem:[#allocation8 + $0x588] sm:$0xff]
    %v3456 = vld [vmem:[#allocation8 + $0x590] sm:$0xf]
    %v3457 = vld [vmem:[#allocation8 + $0x594] sm:$0xff]
    %v3458 = vld [vmem:[#allocation8 + $0x59c] sm:$0xf]
    %v3459 = vld [vmem:[#allocation8 + $0x5a0] sm:$0xff]
    %v3460 = vld [vmem:[#allocation8 + $0x5a8] sm:$0xf]
    %v3461 = vld [vmem:[#allocation8 + $0x5ac] sm:$0xff]
    %v3462 = vld [vmem:[#allocation8 + $0x5b4] sm:$0xf]
    %v3463 = vld [vmem:[#allocation8 + $0x5b8] sm:$0xff]
    %v3464 = vld [vmem:[#allocation8 + $0x5c0] sm:$0xf]
    %v3465 = vld [vmem:[#allocation8 + $0x5c4] sm:$0xff]
    %v3466 = vld [vmem:[#allocation8 + $0x5cc] sm:$0xf]
    %v3467 = vld [vmem:[#allocation8 + $0x5d0] sm:$0xff]
    %v3468 = vld [vmem:[#allocation8 + $0x5d8] sm:$0xf]
    %v3469 = vld [vmem:[#allocation8 + $0x5dc] sm:$0xff]
    %v3470 = vld [vmem:[#allocation8 + $0x5e4] sm:$0xf]
    %v3471 = vld [vmem:[#allocation8 + $0x5e8] sm:$0xff]
    %v3472 = vld [vmem:[#allocation8 + $0x5f0] sm:$0xf]
    %v3473 = vld [vmem:[#allocation8 + $0x5f4] sm:$0xff]
    %v3474 = vld [vmem:[#allocation8 + $0x5fc] sm:$0xf]
    %v3475 = vld [vmem:[#allocation8 + $0x600] sm:$0xff]
    %v3476 = vld [vmem:[#allocation8 + $0x608] sm:$0xf]
    %v3477 = vld [vmem:[#allocation8 + $0x60c] sm:$0xff]
    %v3478 = vld [vmem:[#allocation8 + $0x614] sm:$0xf]
    %v3479 = vld [vmem:[#allocation8 + $0x618] sm:$0xff]
    %v3480 = vld [vmem:[#allocation8 + $0x620] sm:$0xf]
    %v3481 = vld [vmem:[#allocation8 + $0x624] sm:$0xff]
    %v3482 = vld [vmem:[#allocation8 + $0x62c] sm:$0xf]
    %v3483 = vld [vmem:[#allocation8 + $0x630] sm:$0xff]
    %v3484 = vld [vmem:[#allocation8 + $0x638] sm:$0xf]
    %v3485 = vld [vmem:[#allocation8 + $0x63c] sm:$0xff]
    %v3486 = vld [vmem:[#allocation8 + $0x644] sm:$0xf]
    %v3487 = vld [vmem:[#allocation8 + $0x648] sm:$0xff]
    %v3488 = vld [vmem:[#allocation8 + $0x650] sm:$0xf]
    %v3489 = vld [vmem:[#allocation8 + $0x654] sm:$0xff]
    %v3490 = vld [vmem:[#allocation8 + $0x65c] sm:$0xf]
    %v3491 = vld [vmem:[#allocation8 + $0x660] sm:$0xff]
    %v3492 = vld [vmem:[#allocation8 + $0x668] sm:$0xf]
    %v3493 = vld [vmem:[#allocation8 + $0x66c] sm:$0xff]
    %v3494 = vld [vmem:[#allocation8 + $0x674] sm:$0xf]
    %v3495 = vld [vmem:[#allocation8 + $0x678] sm:$0xff]
    %v3496 = vld [vmem:[#allocation8 + $0x680] sm:$0xf]
    %v3497 = vld [vmem:[#allocation8 + $0x684] sm:$0xff]
    %v3498 = vld [vmem:[#allocation8 + $0x68c] sm:$0xf]
    %v3499 = vld [vmem:[#allocation8 + $0x690] sm:$0xff]
    %v3500 = vld [vmem:[#allocation8 + $0x698] sm:$0xf]
    %v3501 = vld [vmem:[#allocation8 + $0x69c] sm:$0xff]
    %v3502 = vld [vmem:[#allocation8 + $0x6a4] sm:$0xf]
    %v3503 = vld [vmem:[#allocation8 + $0x6a8] sm:$0xff]
    %v3504 = vld [vmem:[#allocation8 + $0x6b0] sm:$0xf]
    %v3505 = vld [vmem:[#allocation8 + $0x6b4] sm:$0xff]
    %v3506 = vld [vmem:[#allocation8 + $0x6bc] sm:$0xf]
    %v3507 = vld [vmem:[#allocation8 + $0x6c0] sm:$0xff]
    %v3508 = vld [vmem:[#allocation8 + $0x6c8] sm:$0xf]
    %v3509 = vld [vmem:[#allocation8 + $0x6cc] sm:$0xff]
    %v3510 = vld [vmem:[#allocation8 + $0x6d4] sm:$0xf]
    %v3511 = vld [vmem:[#allocation8 + $0x6d8] sm:$0xff]
    %v3512 = vld [vmem:[#allocation8 + $0x6e0] sm:$0xf]
    %v3513 = vld [vmem:[#allocation8 + $0x6e4] sm:$0xff]
    %v3514 = vld [vmem:[#allocation8 + $0x6ec] sm:$0xf]
    %v3515 = vld [vmem:[#allocation8 + $0x6f0] sm:$0xff]
    %v3516 = vld [vmem:[#allocation8 + $0x6f8] sm:$0xf]
    %v3517 = vld [vmem:[#allocation8 + $0x6fc] sm:$0xff]
    %v3518 = vld [vmem:[#allocation8 + $0x704] sm:$0xf]
    %v3519 = vld [vmem:[#allocation8 + $0x708] sm:$0xff]
    %v3520 = vld [vmem:[#allocation8 + $0x710] sm:$0xf]
    %v3521 = vld [vmem:[#allocation8 + $0x714] sm:$0xff]
    %v3522 = vld [vmem:[#allocation8 + $0x71c] sm:$0xf]
    %v3523 = vld [vmem:[#allocation8 + $0x720] sm:$0xff]
    %v3524 = vld [vmem:[#allocation8 + $0x728] sm:$0xf]
    %v3525 = vld [vmem:[#allocation8 + $0x72c] sm:$0xff]
    %v3526 = vld [vmem:[#allocation8 + $0x734] sm:$0xf]
    %v3527 = vld [vmem:[#allocation8 + $0x738] sm:$0xff]
    %v3528 = vld [vmem:[#allocation8 + $0x740] sm:$0xf]
    %v3529 = vld [vmem:[#allocation8 + $0x744] sm:$0xff]
    %v3530 = vld [vmem:[#allocation8 + $0x74c] sm:$0xf]
    %v3531 = vld [vmem:[#allocation8 + $0x750] sm:$0xff]
    %v3532 = vld [vmem:[#allocation8 + $0x758] sm:$0xf]
    %v3533 = vld [vmem:[#allocation8 + $0x75c] sm:$0xff]
    %v3534 = vld [vmem:[#allocation8 + $0x764] sm:$0xf]
    %v3535 = vld [vmem:[#allocation8 + $0x768] sm:$0xff]
    %v3536 = vld [vmem:[#allocation8 + $0x770] sm:$0xf]
    %v3537 = vld [vmem:[#allocation8 + $0x774] sm:$0xff]
    %v3538 = vld [vmem:[#allocation8 + $0x77c] sm:$0xf]
    %v3539 = vld [vmem:[#allocation8 + $0x780] sm:$0xff]
    %v3540 = vld [vmem:[#allocation8 + $0x788] sm:$0xf]
    %v3541 = vld [vmem:[#allocation8 + $0x78c] sm:$0xff]
    %v3542 = vld [vmem:[#allocation8 + $0x794] sm:$0xf]
    %v3543 = vld [vmem:[#allocation8 + $0x798] sm:$0xff]
    %v3544 = vld [vmem:[#allocation8 + $0x7a0] sm:$0xf]
    %v3545 = vld [vmem:[#allocation8 + $0x7a4] sm:$0xff]
    %v3546 = vld [vmem:[#allocation8 + $0x7ac] sm:$0xf]
    %v3547 = vld [vmem:[#allocation8 + $0x7b0] sm:$0xff]
    %v3548 = vld [vmem:[#allocation8 + $0x7b8] sm:$0xf]
    %v3549 = vld [vmem:[#allocation8 + $0x7bc] sm:$0xff]
    %v3550 = vld [vmem:[#allocation8 + $0x7c4] sm:$0xf]
    %v3551 = vld [vmem:[#allocation8 + $0x7c8] sm:$0xff]
    %v3552 = vld [vmem:[#allocation8 + $0x7d0] sm:$0xf]
    %v3553 = vld [vmem:[#allocation8 + $0x7d4] sm:$0xff]
    %v3554 = vld [vmem:[#allocation8 + $0x7dc] sm:$0xf]
    %v3555 = vld [vmem:[#allocation8 + $0x7e0] sm:$0xff]
    %v3556 = vld [vmem:[#allocation8 + $0x7e8] sm:$0xf]
    %v3557 = vld [vmem:[#allocation8 + $0x7ec] sm:$0xff]
    %v3558 = vld [vmem:[#allocation8 + $0x7f4] sm:$0xf]
    %v3559 = vld [vmem:[#allocation8 + $0x7f8] sm:$0xff]
    %v3560 = vld [vmem:[#allocation8 + $0x800] sm:$0xf]
    %v3561 = vld [vmem:[#allocation8 + $0x804] sm:$0xff]
    %v3562 = vld [vmem:[#allocation8 + $0x80c] sm:$0xf]
    %v3563 = vld [vmem:[#allocation8 + $0x810] sm:$0xff]
    %v3564 = vld [vmem:[#allocation8 + $0x818] sm:$0xf]
    %v3565 = vld [vmem:[#allocation8 + $0x81c] sm:$0xff]
    %v3566 = vld [vmem:[#allocation8 + $0x824] sm:$0xf]
    %v3567 = vld [vmem:[#allocation8 + $0x828] sm:$0xff]
    %v3568 = vld [vmem:[#allocation8 + $0x830] sm:$0xf]
    %v3569 = vld [vmem:[#allocation8 + $0x834] sm:$0xff]
    %v3570 = vld [vmem:[#allocation8 + $0x83c] sm:$0xf]
    %v3571 = vld [vmem:[#allocation8 + $0x840] sm:$0xff]
    %v3572 = vld [vmem:[#allocation8 + $0x848] sm:$0xf]
    %v3573 = vld [vmem:[#allocation8 + $0x84c] sm:$0xff]
    %v3574 = vld [vmem:[#allocation8 + $0x854] sm:$0xf]
    %v3575 = vld [vmem:[#allocation8 + $0x858] sm:$0xff]
    %v3576 = vld [vmem:[#allocation8 + $0x860] sm:$0xf]
    %v3577 = vld [vmem:[#allocation8 + $0x864] sm:$0xff]
    %v3578 = vld [vmem:[#allocation8 + $0x86c] sm:$0xf]
    %v3579 = vld [vmem:[#allocation8 + $0x870] sm:$0xff]
    %v3580 = vld [vmem:[#allocation8 + $0x878] sm:$0xf]
    %v3581 = vld [vmem:[#allocation8 + $0x87c] sm:$0xff]
    %v3582 = vld [vmem:[#allocation8 + $0x884] sm:$0xf]
    %v3583 = vld [vmem:[#allocation8 + $0x888] sm:$0xff]
    %v3584 = vld [vmem:[#allocation8 + $0x890] sm:$0xf]
    %v3585 = vld [vmem:[#allocation8 + $0x894] sm:$0xff]
    %v3586 = vld [vmem:[#allocation8 + $0x89c] sm:$0xf]
    %v3587 = vld [vmem:[#allocation8 + $0x8a0] sm:$0xff]
    %v3588 = vld [vmem:[#allocation8 + $0x8a8] sm:$0xf]
    %v3589 = vld [vmem:[#allocation8 + $0x8ac] sm:$0xff]
    %v3590 = vld [vmem:[#allocation8 + $0x8b4] sm:$0xf]
    %v3591 = vld [vmem:[#allocation8 + $0x8b8] sm:$0xff]
    %v3592 = vld [vmem:[#allocation8 + $0x8c0] sm:$0xf]
    %v3593 = vld [vmem:[#allocation8 + $0x8c4] sm:$0xff]
    %v3594 = vld [vmem:[#allocation8 + $0x8cc] sm:$0xf]
    %v3595 = vld [vmem:[#allocation8 + $0x8d0] sm:$0xff]
    %v3596 = vld [vmem:[#allocation8 + $0x8d8] sm:$0xf]
    %v3597 = vld [vmem:[#allocation8 + $0x8dc] sm:$0xff]
    %v3598 = vld [vmem:[#allocation8 + $0x8e4] sm:$0xf]
    %v3599 = vld [vmem:[#allocation8 + $0x8e8] sm:$0xff]
    %v3600 = vld [vmem:[#allocation8 + $0x8f0] sm:$0xf]
    %v3601 = vld [vmem:[#allocation8 + $0x8f4] sm:$0xff]
    %v3602 = vld [vmem:[#allocation8 + $0x8fc] sm:$0xf]
    %v3923 = vunpack.c.l.b16 %v3283
    %v3924 = vunpack.c.h.b16 %v3283
    %v3925 = vunpack.c.l.b16 %v3284
    %v3926 = vunpack.c.l.b16 %v3285
    %v3927 = vunpack.c.h.b16 %v3285
    %v3928 = vunpack.c.l.b16 %v3286
    %v3929 = vunpack.c.l.b16 %v3287
    %v3930 = vunpack.c.h.b16 %v3287
    %v3931 = vunpack.c.l.b16 %v3288
    %v3932 = vunpack.c.l.b16 %v3289
    %v3933 = vunpack.c.h.b16 %v3289
    %v3934 = vunpack.c.l.b16 %v3290
    %v3935 = vunpack.c.l.b16 %v3291
    %v3936 = vunpack.c.h.b16 %v3291
    %v3937 = vunpack.c.l.b16 %v3292
    %v3938 = vunpack.c.l.b16 %v3293
    %v3939 = vunpack.c.h.b16 %v3293
    %v3940 = vunpack.c.l.b16 %v3294
    %v3941 = vunpack.c.l.b16 %v3295
    %v3942 = vunpack.c.h.b16 %v3295
    %v3943 = vunpack.c.l.b16 %v3296
    %v3944 = vunpack.c.l.b16 %v3297
    %v3945 = vunpack.c.h.b16 %v3297
    %v3946 = vunpack.c.l.b16 %v3298
    %v3947 = vunpack.c.l.b16 %v3299
    %v3948 = vunpack.c.h.b16 %v3299
    %v3949 = vunpack.c.l.b16 %v3300
    %v3950 = vunpack.c.l.b16 %v3301
    %v3951 = vunpack.c.h.b16 %v3301
    %v3952 = vunpack.c.l.b16 %v3302
    %v3953 = vunpack.c.l.b16 %v3303
    %v3954 = vunpack.c.h.b16 %v3303
    %v3955 = vunpack.c.l.b16 %v3304
    %v3956 = vunpack.c.l.b16 %v3305
    %v3957 = vunpack.c.h.b16 %v3305
    %v3958 = vunpack.c.l.b16 %v3306
    %v3959 = vunpack.c.l.b16 %v3307
    %v3960 = vunpack.c.h.b16 %v3307
    %v3961 = vunpack.c.l.b16 %v3308
    %v3962 = vunpack.c.l.b16 %v3309
    %v3963 = vunpack.c.h.b16 %v3309
    %v3964 = vunpack.c.l.b16 %v3310
    %v3965 = vunpack.c.l.b16 %v3311
    %v3966 = vunpack.c.h.b16 %v3311
    %v3967 = vunpack.c.l.b16 %v3312
    %v3968 = vunpack.c.l.b16 %v3313
    %v3969 = vunpack.c.h.b16 %v3313
    %v3970 = vunpack.c.l.b16 %v3314
    %v3971 = vunpack.c.l.b16 %v3315
    %v3972 = vunpack.c.h.b16 %v3315
    %v3973 = vunpack.c.l.b16 %v3316
    %v3974 = vunpack.c.l.b16 %v3317
    %v3975 = vunpack.c.h.b16 %v3317
    %v3976 = vunpack.c.l.b16 %v3318
    %v3977 = vunpack.c.l.b16 %v3319
    %v3978 = vunpack.c.h.b16 %v3319
    %v3979 = vunpack.c.l.b16 %v3320
    %v3980 = vunpack.c.l.b16 %v3321
    %v3981 = vunpack.c.h.b16 %v3321
    %v3982 = vunpack.c.l.b16 %v3322
    %v3983 = vunpack.c.l.b16 %v3323
    %v3984 = vunpack.c.h.b16 %v3323
    %v3985 = vunpack.c.l.b16 %v3324
    %v3986 = vunpack.c.l.b16 %v3325
    %v3987 = vunpack.c.h.b16 %v3325
    %v3988 = vunpack.c.l.b16 %v3326
    %v3989 = vunpack.c.l.b16 %v3327
    %v3990 = vunpack.c.h.b16 %v3327
    %v3991 = vunpack.c.l.b16 %v3328
    %v3992 = vunpack.c.l.b16 %v3329
    %v3993 = vunpack.c.h.b16 %v3329
    %v3994 = vunpack.c.l.b16 %v3330
    %v3995 = vunpack.c.l.b16 %v3331
    %v3996 = vunpack.c.h.b16 %v3331
    %v3997 = vunpack.c.l.b16 %v3332
    %v3998 = vunpack.c.l.b16 %v3333
    %v3999 = vunpack.c.h.b16 %v3333
    %v4000 = vunpack.c.l.b16 %v3334
    %v4001 = vunpack.c.l.b16 %v3335
    %v4002 = vunpack.c.h.b16 %v3335
    %v4003 = vunpack.c.l.b16 %v3336
    %v4004 = vunpack.c.l.b16 %v3337
    %v4005 = vunpack.c.h.b16 %v3337
    %v4006 = vunpack.c.l.b16 %v3338
    %v4007 = vunpack.c.l.b16 %v3339
    %v4008 = vunpack.c.h.b16 %v3339
    %v4009 = vunpack.c.l.b16 %v3340
    %v4010 = vunpack.c.l.b16 %v3341
    %v4011 = vunpack.c.h.b16 %v3341
    %v4012 = vunpack.c.l.b16 %v3342
    %v4013 = vunpack.c.l.b16 %v3343
    %v4014 = vunpack.c.h.b16 %v3343
    %v4015 = vunpack.c.l.b16 %v3344
    %v4016 = vunpack.c.l.b16 %v3345
    %v4017 = vunpack.c.h.b16 %v3345
    %v4018 = vunpack.c.l.b16 %v3346
    %v4019 = vunpack.c.l.b16 %v3347
    %v4020 = vunpack.c.h.b16 %v3347
    %v4021 = vunpack.c.l.b16 %v3348
    %v4022 = vunpack.c.l.b16 %v3349
    %v4023 = vunpack.c.h.b16 %v3349
    %v4024 = vunpack.c.l.b16 %v3350
    %v4025 = vunpack.c.l.b16 %v3351
    %v4026 = vunpack.c.h.b16 %v3351
    %v4027 = vunpack.c.l.b16 %v3352
    %v4028 = vunpack.c.l.b16 %v3353
    %v4029 = vunpack.c.h.b16 %v3353
    %v4030 = vunpack.c.l.b16 %v3354
    %v4031 = vunpack.c.l.b16 %v3355
    %v4032 = vunpack.c.h.b16 %v3355
    %v4033 = vunpack.c.l.b16 %v3356
    %v4034 = vunpack.c.l.b16 %v3357
    %v4035 = vunpack.c.h.b16 %v3357
    %v4036 = vunpack.c.l.b16 %v3358
    %v4037 = vunpack.c.l.b16 %v3359
    %v4038 = vunpack.c.h.b16 %v3359
    %v4039 = vunpack.c.l.b16 %v3360
    %v4040 = vunpack.c.l.b16 %v3361
    %v4041 = vunpack.c.h.b16 %v3361
    %v4042 = vunpack.c.l.b16 %v3362
    %v4043 = vunpack.c.l.b16 %v3363
    %v4044 = vunpack.c.h.b16 %v3363
    %v4045 = vunpack.c.l.b16 %v3364
    %v4046 = vunpack.c.l.b16 %v3365
    %v4047 = vunpack.c.h.b16 %v3365
    %v4048 = vunpack.c.l.b16 %v3366
    %v4049 = vunpack.c.l.b16 %v3367
    %v4050 = vunpack.c.h.b16 %v3367
    %v4051 = vunpack.c.l.b16 %v3368
    %v4052 = vunpack.c.l.b16 %v3369
    %v4053 = vunpack.c.h.b16 %v3369
    %v4054 = vunpack.c.l.b16 %v3370
    %v4055 = vunpack.c.l.b16 %v3371
    %v4056 = vunpack.c.h.b16 %v3371
    %v4057 = vunpack.c.l.b16 %v3372
    %v4058 = vunpack.c.l.b16 %v3373
    %v4059 = vunpack.c.h.b16 %v3373
    %v4060 = vunpack.c.l.b16 %v3374
    %v4061 = vunpack.c.l.b16 %v3375
    %v4062 = vunpack.c.h.b16 %v3375
    %v4063 = vunpack.c.l.b16 %v3376
    %v4064 = vunpack.c.l.b16 %v3377
    %v4065 = vunpack.c.h.b16 %v3377
    %v4066 = vunpack.c.l.b16 %v3378
    %v4067 = vunpack.c.l.b16 %v3379
    %v4068 = vunpack.c.h.b16 %v3379
    %v4069 = vunpack.c.l.b16 %v3380
    %v4070 = vunpack.c.l.b16 %v3381
    %v4071 = vunpack.c.h.b16 %v3381
    %v4072 = vunpack.c.l.b16 %v3382
    %v4073 = vunpack.c.l.b16 %v3383
    %v4074 = vunpack.c.h.b16 %v3383
    %v4075 = vunpack.c.l.b16 %v3384
    %v4076 = vunpack.c.l.b16 %v3385
    %v4077 = vunpack.c.h.b16 %v3385
    %v4078 = vunpack.c.l.b16 %v3386
    %v4079 = vunpack.c.l.b16 %v3387
    %v4080 = vunpack.c.h.b16 %v3387
    %v4081 = vunpack.c.l.b16 %v3388
    %v4082 = vunpack.c.l.b16 %v3389
    %v4083 = vunpack.c.h.b16 %v3389
    %v4084 = vunpack.c.l.b16 %v3390
    %v4085 = vunpack.c.l.b16 %v3391
    %v4086 = vunpack.c.h.b16 %v3391
    %v4087 = vunpack.c.l.b16 %v3392
    %v4088 = vunpack.c.l.b16 %v3393
    %v4089 = vunpack.c.h.b16 %v3393
    %v4090 = vunpack.c.l.b16 %v3394
    %v4091 = vunpack.c.l.b16 %v3395
    %v4092 = vunpack.c.h.b16 %v3395
    %v4093 = vunpack.c.l.b16 %v3396
    %v4094 = vunpack.c.l.b16 %v3397
    %v4095 = vunpack.c.h.b16 %v3397
    %v4096 = vunpack.c.l.b16 %v3398
    %v4097 = vunpack.c.l.b16 %v3399
    %v4098 = vunpack.c.h.b16 %v3399
    %v4099 = vunpack.c.l.b16 %v3400
    %v4100 = vunpack.c.l.b16 %v3401
    %v4101 = vunpack.c.h.b16 %v3401
    %v4102 = vunpack.c.l.b16 %v3402
    %v4103 = vunpack.c.l.b16 %v3403
    %v4104 = vunpack.c.h.b16 %v3403
    %v4105 = vunpack.c.l.b16 %v3404
    %v4106 = vunpack.c.l.b16 %v3405
    %v4107 = vunpack.c.h.b16 %v3405
    %v4108 = vunpack.c.l.b16 %v3406
    %v4109 = vunpack.c.l.b16 %v3407
    %v4110 = vunpack.c.h.b16 %v3407
    %v4111 = vunpack.c.l.b16 %v3408
    %v4112 = vunpack.c.l.b16 %v3409
    %v4113 = vunpack.c.h.b16 %v3409
    %v4114 = vunpack.c.l.b16 %v3410
    %v4115 = vunpack.c.l.b16 %v3411
    %v4116 = vunpack.c.h.b16 %v3411
    %v4117 = vunpack.c.l.b16 %v3412
    %v4118 = vunpack.c.l.b16 %v3413
    %v4119 = vunpack.c.h.b16 %v3413
    %v4120 = vunpack.c.l.b16 %v3414
    %v4121 = vunpack.c.l.b16 %v3415
    %v4122 = vunpack.c.h.b16 %v3415
    %v4123 = vunpack.c.l.b16 %v3416
    %v4124 = vunpack.c.l.b16 %v3417
    %v4125 = vunpack.c.h.b16 %v3417
    %v4126 = vunpack.c.l.b16 %v3418
    %v4127 = vunpack.c.l.b16 %v3419
    %v4128 = vunpack.c.h.b16 %v3419
    %v4129 = vunpack.c.l.b16 %v3420
    %v4130 = vunpack.c.l.b16 %v3421
    %v4131 = vunpack.c.h.b16 %v3421
    %v4132 = vunpack.c.l.b16 %v3422
    %v4133 = vunpack.c.l.b16 %v3423
    %v4134 = vunpack.c.h.b16 %v3423
    %v4135 = vunpack.c.l.b16 %v3424
    %v4136 = vunpack.c.l.b16 %v3425
    %v4137 = vunpack.c.h.b16 %v3425
    %v4138 = vunpack.c.l.b16 %v3426
    %v4139 = vunpack.c.l.b16 %v3427
    %v4140 = vunpack.c.h.b16 %v3427
    %v4141 = vunpack.c.l.b16 %v3428
    %v4142 = vunpack.c.l.b16 %v3429
    %v4143 = vunpack.c.h.b16 %v3429
    %v4144 = vunpack.c.l.b16 %v3430
    %v4145 = vunpack.c.l.b16 %v3431
    %v4146 = vunpack.c.h.b16 %v3431
    %v4147 = vunpack.c.l.b16 %v3432
    %v4148 = vunpack.c.l.b16 %v3433
    %v4149 = vunpack.c.h.b16 %v3433
    %v4150 = vunpack.c.l.b16 %v3434
    %v4151 = vunpack.c.l.b16 %v3435
    %v4152 = vunpack.c.h.b16 %v3435
    %v4153 = vunpack.c.l.b16 %v3436
    %v4154 = vunpack.c.l.b16 %v3437
    %v4155 = vunpack.c.h.b16 %v3437
    %v4156 = vunpack.c.l.b16 %v3438
    %v4157 = vunpack.c.l.b16 %v3439
    %v4158 = vunpack.c.h.b16 %v3439
    %v4159 = vunpack.c.l.b16 %v3440
    %v4160 = vunpack.c.l.b16 %v3441
    %v4161 = vunpack.c.h.b16 %v3441
    %v4162 = vunpack.c.l.b16 %v3442
    %v4163 = vunpack.c.l.b16 %v3443
    %v4164 = vunpack.c.h.b16 %v3443
    %v4165 = vunpack.c.l.b16 %v3444
    %v4166 = vunpack.c.l.b16 %v3445
    %v4167 = vunpack.c.h.b16 %v3445
    %v4168 = vunpack.c.l.b16 %v3446
    %v4169 = vunpack.c.l.b16 %v3447
    %v4170 = vunpack.c.h.b16 %v3447
    %v4171 = vunpack.c.l.b16 %v3448
    %v4172 = vunpack.c.l.b16 %v3449
    %v4173 = vunpack.c.h.b16 %v3449
    %v4174 = vunpack.c.l.b16 %v3450
    %v4175 = vunpack.c.l.b16 %v3451
    %v4176 = vunpack.c.h.b16 %v3451
    %v4177 = vunpack.c.l.b16 %v3452
    %v4178 = vunpack.c.l.b16 %v3453
    %v4179 = vunpack.c.h.b16 %v3453
    %v4180 = vunpack.c.l.b16 %v3454
    %v4181 = vunpack.c.l.b16 %v3455
    %v4182 = vunpack.c.h.b16 %v3455
    %v4183 = vunpack.c.l.b16 %v3456
    %v4184 = vunpack.c.l.b16 %v3457
    %v4185 = vunpack.c.h.b16 %v3457
    %v4186 = vunpack.c.l.b16 %v3458
    %v4187 = vunpack.c.l.b16 %v3459
    %v4188 = vunpack.c.h.b16 %v3459
    %v4189 = vunpack.c.l.b16 %v3460
    %v4190 = vunpack.c.l.b16 %v3461
    %v4191 = vunpack.c.h.b16 %v3461
    %v4192 = vunpack.c.l.b16 %v3462
    %v4193 = vunpack.c.l.b16 %v3463
    %v4194 = vunpack.c.h.b16 %v3463
    %v4195 = vunpack.c.l.b16 %v3464
    %v4196 = vunpack.c.l.b16 %v3465
    %v4197 = vunpack.c.h.b16 %v3465
    %v4198 = vunpack.c.l.b16 %v3466
    %v4199 = vunpack.c.l.b16 %v3467
    %v4200 = vunpack.c.h.b16 %v3467
    %v4201 = vunpack.c.l.b16 %v3468
    %v4202 = vunpack.c.l.b16 %v3469
    %v4203 = vunpack.c.h.b16 %v3469
    %v4204 = vunpack.c.l.b16 %v3470
    %v4205 = vunpack.c.l.b16 %v3471
    %v4206 = vunpack.c.h.b16 %v3471
    %v4207 = vunpack.c.l.b16 %v3472
    %v4208 = vunpack.c.l.b16 %v3473
    %v4209 = vunpack.c.h.b16 %v3473
    %v4210 = vunpack.c.l.b16 %v3474
    %v4211 = vunpack.c.l.b16 %v3475
    %v4212 = vunpack.c.h.b16 %v3475
    %v4213 = vunpack.c.l.b16 %v3476
    %v4214 = vunpack.c.l.b16 %v3477
    %v4215 = vunpack.c.h.b16 %v3477
    %v4216 = vunpack.c.l.b16 %v3478
    %v4217 = vunpack.c.l.b16 %v3479
    %v4218 = vunpack.c.h.b16 %v3479
    %v4219 = vunpack.c.l.b16 %v3480
    %v4220 = vunpack.c.l.b16 %v3481
    %v4221 = vunpack.c.h.b16 %v3481
    %v4222 = vunpack.c.l.b16 %v3482
    %v4223 = vunpack.c.l.b16 %v3483
    %v4224 = vunpack.c.h.b16 %v3483
    %v4225 = vunpack.c.l.b16 %v3484
    %v4226 = vunpack.c.l.b16 %v3485
    %v4227 = vunpack.c.h.b16 %v3485
    %v4228 = vunpack.c.l.b16 %v3486
    %v4229 = vunpack.c.l.b16 %v3487
    %v4230 = vunpack.c.h.b16 %v3487
    %v4231 = vunpack.c.l.b16 %v3488
    %v4232 = vunpack.c.l.b16 %v3489
    %v4233 = vunpack.c.h.b16 %v3489
    %v4234 = vunpack.c.l.b16 %v3490
    %v4235 = vunpack.c.l.b16 %v3491
    %v4236 = vunpack.c.h.b16 %v3491
    %v4237 = vunpack.c.l.b16 %v3492
    %v4238 = vunpack.c.l.b16 %v3493
    %v4239 = vunpack.c.h.b16 %v3493
    %v4240 = vunpack.c.l.b16 %v3494
    %v4241 = vunpack.c.l.b16 %v3495
    %v4242 = vunpack.c.h.b16 %v3495
    %v4243 = vunpack.c.l.b16 %v3496
    %v4244 = vunpack.c.l.b16 %v3497
    %v4245 = vunpack.c.h.b16 %v3497
    %v4246 = vunpack.c.l.b16 %v3498
    %v4247 = vunpack.c.l.b16 %v3499
    %v4248 = vunpack.c.h.b16 %v3499
    %v4249 = vunpack.c.l.b16 %v3500
    %v4250 = vunpack.c.l.b16 %v3501
    %v4251 = vunpack.c.h.b16 %v3501
    %v4252 = vunpack.c.l.b16 %v3502
    %v4253 = vunpack.c.l.b16 %v3503
    %v4254 = vunpack.c.h.b16 %v3503
    %v4255 = vunpack.c.l.b16 %v3504
    %v4256 = vunpack.c.l.b16 %v3505
    %v4257 = vunpack.c.h.b16 %v3505
    %v4258 = vunpack.c.l.b16 %v3506
    %v4259 = vunpack.c.l.b16 %v3507
    %v4260 = vunpack.c.h.b16 %v3507
    %v4261 = vunpack.c.l.b16 %v3508
    %v4262 = vunpack.c.l.b16 %v3509
    %v4263 = vunpack.c.h.b16 %v3509
    %v4264 = vunpack.c.l.b16 %v3510
    %v4265 = vunpack.c.l.b16 %v3511
    %v4266 = vunpack.c.h.b16 %v3511
    %v4267 = vunpack.c.l.b16 %v3512
    %v4268 = vunpack.c.l.b16 %v3513
    %v4269 = vunpack.c.h.b16 %v3513
    %v4270 = vunpack.c.l.b16 %v3514
    %v4271 = vunpack.c.l.b16 %v3515
    %v4272 = vunpack.c.h.b16 %v3515
    %v4273 = vunpack.c.l.b16 %v3516
    %v4274 = vunpack.c.l.b16 %v3517
    %v4275 = vunpack.c.h.b16 %v3517
    %v4276 = vunpack.c.l.b16 %v3518
    %v4277 = vunpack.c.l.b16 %v3519
    %v4278 = vunpack.c.h.b16 %v3519
    %v4279 = vunpack.c.l.b16 %v3520
    %v4280 = vunpack.c.l.b16 %v3521
    %v4281 = vunpack.c.h.b16 %v3521
    %v4282 = vunpack.c.l.b16 %v3522
    %v4283 = vunpack.c.l.b16 %v3523
    %v4284 = vunpack.c.h.b16 %v3523
    %v4285 = vunpack.c.l.b16 %v3524
    %v4286 = vunpack.c.l.b16 %v3525
    %v4287 = vunpack.c.h.b16 %v3525
    %v4288 = vunpack.c.l.b16 %v3526
    %v4289 = vunpack.c.l.b16 %v3527
    %v4290 = vunpack.c.h.b16 %v3527
    %v4291 = vunpack.c.l.b16 %v3528
    %v4292 = vunpack.c.l.b16 %v3529
    %v4293 = vunpack.c.h.b16 %v3529
    %v4294 = vunpack.c.l.b16 %v3530
    %v4295 = vunpack.c.l.b16 %v3531
    %v4296 = vunpack.c.h.b16 %v3531
    %v4297 = vunpack.c.l.b16 %v3532
    %v4298 = vunpack.c.l.b16 %v3533
    %v4299 = vunpack.c.h.b16 %v3533
    %v4300 = vunpack.c.l.b16 %v3534
    %v4301 = vunpack.c.l.b16 %v3535
    %v4302 = vunpack.c.h.b16 %v3535
    %v4303 = vunpack.c.l.b16 %v3536
    %v4304 = vunpack.c.l.b16 %v3537
    %v4305 = vunpack.c.h.b16 %v3537
    %v4306 = vunpack.c.l.b16 %v3538
    %v4307 = vunpack.c.l.b16 %v3539
    %v4308 = vunpack.c.h.b16 %v3539
    %v4309 = vunpack.c.l.b16 %v3540
    %v4310 = vunpack.c.l.b16 %v3541
    %v4311 = vunpack.c.h.b16 %v3541
    %v4312 = vunpack.c.l.b16 %v3542
    %v4313 = vunpack.c.l.b16 %v3543
    %v4314 = vunpack.c.h.b16 %v3543
    %v4315 = vunpack.c.l.b16 %v3544
    %v4316 = vunpack.c.l.b16 %v3545
    %v4317 = vunpack.c.h.b16 %v3545
    %v4318 = vunpack.c.l.b16 %v3546
    %v4319 = vunpack.c.l.b16 %v3547
    %v4320 = vunpack.c.h.b16 %v3547
    %v4321 = vunpack.c.l.b16 %v3548
    %v4322 = vunpack.c.l.b16 %v3549
    %v4323 = vunpack.c.h.b16 %v3549
    %v4324 = vunpack.c.l.b16 %v3550
    %v4325 = vunpack.c.l.b16 %v3551
    %v4326 = vunpack.c.h.b16 %v3551
    %v4327 = vunpack.c.l.b16 %v3552
    %v4328 = vunpack.c.l.b16 %v3553
    %v4329 = vunpack.c.h.b16 %v3553
    %v4330 = vunpack.c.l.b16 %v3554
    %v4331 = vunpack.c.l.b16 %v3555
    %v4332 = vunpack.c.h.b16 %v3555
    %v4333 = vunpack.c.l.b16 %v3556
    %v4334 = vunpack.c.l.b16 %v3557
    %v4335 = vunpack.c.h.b16 %v3557
    %v4336 = vunpack.c.l.b16 %v3558
    %v4337 = vunpack.c.l.b16 %v3559
    %v4338 = vunpack.c.h.b16 %v3559
    %v4339 = vunpack.c.l.b16 %v3560
    %v4340 = vunpack.c.l.b16 %v3561
    %v4341 = vunpack.c.h.b16 %v3561
    %v4342 = vunpack.c.l.b16 %v3562
    %v4343 = vunpack.c.l.b16 %v3563
    %v4344 = vunpack.c.h.b16 %v3563
    %v4345 = vunpack.c.l.b16 %v3564
    %v4346 = vunpack.c.l.b16 %v3565
    %v4347 = vunpack.c.h.b16 %v3565
    %v4348 = vunpack.c.l.b16 %v3566
    %v4349 = vunpack.c.l.b16 %v3567
    %v4350 = vunpack.c.h.b16 %v3567
    %v4351 = vunpack.c.l.b16 %v3568
    %v4352 = vunpack.c.l.b16 %v3569
    %v4353 = vunpack.c.h.b16 %v3569
    %v4354 = vunpack.c.l.b16 %v3570
    %v4355 = vunpack.c.l.b16 %v3571
    %v4356 = vunpack.c.h.b16 %v3571
    %v4357 = vunpack.c.l.b16 %v3572
    %v4358 = vunpack.c.l.b16 %v3573
    %v4359 = vunpack.c.h.b16 %v3573
    %v4360 = vunpack.c.l.b16 %v3574
    %v4361 = vunpack.c.l.b16 %v3575
    %v4362 = vunpack.c.h.b16 %v3575
    %v4363 = vunpack.c.l.b16 %v3576
    %v4364 = vunpack.c.l.b16 %v3577
    %v4365 = vunpack.c.h.b16 %v3577
    %v4366 = vunpack.c.l.b16 %v3578
    %v4367 = vunpack.c.l.b16 %v3579
    %v4368 = vunpack.c.h.b16 %v3579
    %v4369 = vunpack.c.l.b16 %v3580
    %v4370 = vunpack.c.l.b16 %v3581
    %v4371 = vunpack.c.h.b16 %v3581
    %v4372 = vunpack.c.l.b16 %v3582
    %v4373 = vunpack.c.l.b16 %v3583
    %v4374 = vunpack.c.h.b16 %v3583
    %v4375 = vunpack.c.l.b16 %v3584
    %v4376 = vunpack.c.l.b16 %v3585
    %v4377 = vunpack.c.h.b16 %v3585
    %v4378 = vunpack.c.l.b16 %v3586
    %v4379 = vunpack.c.l.b16 %v3587
    %v4380 = vunpack.c.h.b16 %v3587
    %v4381 = vunpack.c.l.b16 %v3588
    %v4382 = vunpack.c.l.b16 %v3589
    %v4383 = vunpack.c.h.b16 %v3589
    %v4384 = vunpack.c.l.b16 %v3590
    %v4385 = vunpack.c.l.b16 %v3591
    %v4386 = vunpack.c.h.b16 %v3591
    %v4387 = vunpack.c.l.b16 %v3592
    %v4388 = vunpack.c.l.b16 %v3593
    %v4389 = vunpack.c.h.b16 %v3593
    %v4390 = vunpack.c.l.b16 %v3594
    %v4391 = vunpack.c.l.b16 %v3595
    %v4392 = vunpack.c.h.b16 %v3595
    %v4393 = vunpack.c.l.b16 %v3596
    %v4394 = vunpack.c.l.b16 %v3597
    %v4395 = vunpack.c.h.b16 %v3597
    %v4396 = vunpack.c.l.b16 %v3598
    %v4397 = vunpack.c.l.b16 %v3599
    %v4398 = vunpack.c.h.b16 %v3599
    %v4399 = vunpack.c.l.b16 %v3600
    %v4400 = vunpack.c.l.b16 %v3601
    %v4401 = vunpack.c.h.b16 %v3601
    %v4402 = vunpack.c.l.b16 %v3602
    %v4403 = vpack.c.b16 %v3926, %v3923
    %v4404 = vpack.c.b16 %v3927, %v3924
    %v4405 = vpack.c.b16 %v3928, %v3925
    %v4406 = vpack.c.b16 %v3932, %v3929
    %v4407 = vpack.c.b16 %v3933, %v3930
    %v4408 = vpack.c.b16 %v3934, %v3931
    %v4409 = vpack.c.b16 %v3938, %v3935
    %v4410 = vpack.c.b16 %v3939, %v3936
    %v4411 = vpack.c.b16 %v3940, %v3937
    %v4412 = vpack.c.b16 %v3944, %v3941
    %v4413 = vpack.c.b16 %v3945, %v3942
    %v4414 = vpack.c.b16 %v3946, %v3943
    %v4415 = vpack.c.b16 %v3950, %v3947
    %v4416 = vpack.c.b16 %v3951, %v3948
    %v4417 = vpack.c.b16 %v3952, %v3949
    %v4418 = vpack.c.b16 %v3956, %v3953
    %v4419 = vpack.c.b16 %v3957, %v3954
    %v4420 = vpack.c.b16 %v3958, %v3955
    %v4421 = vpack.c.b16 %v3962, %v3959
    %v4422 = vpack.c.b16 %v3963, %v3960
    %v4423 = vpack.c.b16 %v3964, %v3961
    %v4424 = vpack.c.b16 %v3968, %v3965
    %v4425 = vpack.c.b16 %v3969, %v3966
    %v4426 = vpack.c.b16 %v3970, %v3967
    %v4427 = vpack.c.b16 %v3974, %v3971
    %v4428 = vpack.c.b16 %v3975, %v3972
    %v4429 = vpack.c.b16 %v3976, %v3973
    %v4430 = vpack.c.b16 %v3980, %v3977
    %v4431 = vpack.c.b16 %v3981, %v3978
    %v4432 = vpack.c.b16 %v3982, %v3979
    %v4433 = vpack.c.b16 %v3986, %v3983
    %v4434 = vpack.c.b16 %v3987, %v3984
    %v4435 = vpack.c.b16 %v3988, %v3985
    %v4436 = vpack.c.b16 %v3992, %v3989
    %v4437 = vpack.c.b16 %v3993, %v3990
    %v4438 = vpack.c.b16 %v3994, %v3991
    %v4439 = vpack.c.b16 %v3998, %v3995
    %v4440 = vpack.c.b16 %v3999, %v3996
    %v4441 = vpack.c.b16 %v4000, %v3997
    %v4442 = vpack.c.b16 %v4004, %v4001
    %v4443 = vpack.c.b16 %v4005, %v4002
    %v4444 = vpack.c.b16 %v4006, %v4003
    %v4445 = vpack.c.b16 %v4010, %v4007
    %v4446 = vpack.c.b16 %v4011, %v4008
    %v4447 = vpack.c.b16 %v4012, %v4009
    %v4448 = vpack.c.b16 %v4016, %v4013
    %v4449 = vpack.c.b16 %v4017, %v4014
    %v4450 = vpack.c.b16 %v4018, %v4015
    %v4451 = vpack.c.b16 %v4022, %v4019
    %v4452 = vpack.c.b16 %v4023, %v4020
    %v4453 = vpack.c.b16 %v4024, %v4021
    %v4454 = vpack.c.b16 %v4028, %v4025
    %v4455 = vpack.c.b16 %v4029, %v4026
    %v4456 = vpack.c.b16 %v4030, %v4027
    %v4457 = vpack.c.b16 %v4034, %v4031
    %v4458 = vpack.c.b16 %v4035, %v4032
    %v4459 = vpack.c.b16 %v4036, %v4033
    %v4460 = vpack.c.b16 %v4040, %v4037
    %v4461 = vpack.c.b16 %v4041, %v4038
    %v4462 = vpack.c.b16 %v4042, %v4039
    %v4463 = vpack.c.b16 %v4046, %v4043
    %v4464 = vpack.c.b16 %v4047, %v4044
    %v4465 = vpack.c.b16 %v4048, %v4045
    %v4466 = vpack.c.b16 %v4052, %v4049
    %v4467 = vpack.c.b16 %v4053, %v4050
    %v4468 = vpack.c.b16 %v4054, %v4051
    %v4469 = vpack.c.b16 %v4058, %v4055
    %v4470 = vpack.c.b16 %v4059, %v4056
    %v4471 = vpack.c.b16 %v4060, %v4057
    %v4472 = vpack.c.b16 %v4064, %v4061
    %v4473 = vpack.c.b16 %v4065, %v4062
    %v4474 = vpack.c.b16 %v4066, %v4063
    %v4475 = vpack.c.b16 %v4070, %v4067
    %v4476 = vpack.c.b16 %v4071, %v4068
    %v4477 = vpack.c.b16 %v4072, %v4069
    %v4478 = vpack.c.b16 %v4076, %v4073
    %v4479 = vpack.c.b16 %v4077, %v4074
    %v4480 = vpack.c.b16 %v4078, %v4075
    %v4481 = vpack.c.b16 %v4082, %v4079
    %v4482 = vpack.c.b16 %v4083, %v4080
    %v4483 = vpack.c.b16 %v4084, %v4081
    %v4484 = vpack.c.b16 %v4088, %v4085
    %v4485 = vpack.c.b16 %v4089, %v4086
    %v4486 = vpack.c.b16 %v4090, %v4087
    %v4487 = vpack.c.b16 %v4094, %v4091
    %v4488 = vpack.c.b16 %v4095, %v4092
    %v4489 = vpack.c.b16 %v4096, %v4093
    %v4490 = vpack.c.b16 %v4100, %v4097
    %v4491 = vpack.c.b16 %v4101, %v4098
    %v4492 = vpack.c.b16 %v4102, %v4099
    %v4493 = vpack.c.b16 %v4106, %v4103
    %v4494 = vpack.c.b16 %v4107, %v4104
    %v4495 = vpack.c.b16 %v4108, %v4105
    %v4496 = vpack.c.b16 %v4112, %v4109
    %v4497 = vpack.c.b16 %v4113, %v4110
    %v4498 = vpack.c.b16 %v4114, %v4111
    %v4499 = vpack.c.b16 %v4118, %v4115
    %v4500 = vpack.c.b16 %v4119, %v4116
    %v4501 = vpack.c.b16 %v4120, %v4117
    %v4502 = vpack.c.b16 %v4124, %v4121
    %v4503 = vpack.c.b16 %v4125, %v4122
    %v4504 = vpack.c.b16 %v4126, %v4123
    %v4505 = vpack.c.b16 %v4130, %v4127
    %v4506 = vpack.c.b16 %v4131, %v4128
    %v4507 = vpack.c.b16 %v4132, %v4129
    %v4508 = vpack.c.b16 %v4136, %v4133
    %v4509 = vpack.c.b16 %v4137, %v4134
    %v4510 = vpack.c.b16 %v4138, %v4135
    %v4511 = vpack.c.b16 %v4142, %v4139
    %v4512 = vpack.c.b16 %v4143, %v4140
    %v4513 = vpack.c.b16 %v4144, %v4141
    %v4514 = vpack.c.b16 %v4148, %v4145
    %v4515 = vpack.c.b16 %v4149, %v4146
    %v4516 = vpack.c.b16 %v4150, %v4147
    %v4517 = vpack.c.b16 %v4154, %v4151
    %v4518 = vpack.c.b16 %v4155, %v4152
    %v4519 = vpack.c.b16 %v4156, %v4153
    %v4520 = vpack.c.b16 %v4160, %v4157
    %v4521 = vpack.c.b16 %v4161, %v4158
    %v4522 = vpack.c.b16 %v4162, %v4159
    %v4523 = vpack.c.b16 %v4166, %v4163
    %v4524 = vpack.c.b16 %v4167, %v4164
    %v4525 = vpack.c.b16 %v4168, %v4165
    %v4526 = vpack.c.b16 %v4172, %v4169
    %v4527 = vpack.c.b16 %v4173, %v4170
    %v4528 = vpack.c.b16 %v4174, %v4171
    %v4529 = vpack.c.b16 %v4178, %v4175
    %v4530 = vpack.c.b16 %v4179, %v4176
    %v4531 = vpack.c.b16 %v4180, %v4177
    %v4532 = vpack.c.b16 %v4184, %v4181
    %v4533 = vpack.c.b16 %v4185, %v4182
    %v4534 = vpack.c.b16 %v4186, %v4183
    %v4535 = vpack.c.b16 %v4190, %v4187
    %v4536 = vpack.c.b16 %v4191, %v4188
    %v4537 = vpack.c.b16 %v4192, %v4189
    %v4538 = vpack.c.b16 %v4196, %v4193
    %v4539 = vpack.c.b16 %v4197, %v4194
    %v4540 = vpack.c.b16 %v4198, %v4195
    %v4541 = vpack.c.b16 %v4202, %v4199
    %v4542 = vpack.c.b16 %v4203, %v4200
    %v4543 = vpack.c.b16 %v4204, %v4201
    %v4544 = vpack.c.b16 %v4208, %v4205
    %v4545 = vpack.c.b16 %v4209, %v4206
    %v4546 = vpack.c.b16 %v4210, %v4207
    %v4547 = vpack.c.b16 %v4214, %v4211
    %v4548 = vpack.c.b16 %v4215, %v4212
    %v4549 = vpack.c.b16 %v4216, %v4213
    %v4550 = vpack.c.b16 %v4220, %v4217
    %v4551 = vpack.c.b16 %v4221, %v4218
    %v4552 = vpack.c.b16 %v4222, %v4219
    %v4553 = vpack.c.b16 %v4226, %v4223
    %v4554 = vpack.c.b16 %v4227, %v4224
    %v4555 = vpack.c.b16 %v4228, %v4225
    %v4556 = vpack.c.b16 %v4232, %v4229
    %v4557 = vpack.c.b16 %v4233, %v4230
    %v4558 = vpack.c.b16 %v4234, %v4231
    %v4559 = vpack.c.b16 %v4238, %v4235
    %v4560 = vpack.c.b16 %v4239, %v4236
    %v4561 = vpack.c.b16 %v4240, %v4237
    %v4562 = vpack.c.b16 %v4244, %v4241
    %v4563 = vpack.c.b16 %v4245, %v4242
    %v4564 = vpack.c.b16 %v4246, %v4243
    %v4565 = vpack.c.b16 %v4250, %v4247
    %v4566 = vpack.c.b16 %v4251, %v4248
    %v4567 = vpack.c.b16 %v4252, %v4249
    %v4568 = vpack.c.b16 %v4256, %v4253
    %v4569 = vpack.c.b16 %v4257, %v4254
    %v4570 = vpack.c.b16 %v4258, %v4255
    %v4571 = vpack.c.b16 %v4262, %v4259
    %v4572 = vpack.c.b16 %v4263, %v4260
    %v4573 = vpack.c.b16 %v4264, %v4261
    %v4574 = vpack.c.b16 %v4268, %v4265
    %v4575 = vpack.c.b16 %v4269, %v4266
    %v4576 = vpack.c.b16 %v4270, %v4267
    %v4577 = vpack.c.b16 %v4274, %v4271
    %v4578 = vpack.c.b16 %v4275, %v4272
    %v4579 = vpack.c.b16 %v4276, %v4273
    %v4580 = vpack.c.b16 %v4280, %v4277
    %v4581 = vpack.c.b16 %v4281, %v4278
    %v4582 = vpack.c.b16 %v4282, %v4279
    %v4583 = vpack.c.b16 %v4286, %v4283
    %v4584 = vpack.c.b16 %v4287, %v4284
    %v4585 = vpack.c.b16 %v4288, %v4285
    %v4586 = vpack.c.b16 %v4292, %v4289
    %v4587 = vpack.c.b16 %v4293, %v4290
    %v4588 = vpack.c.b16 %v4294, %v4291
    %v4589 = vpack.c.b16 %v4298, %v4295
    %v4590 = vpack.c.b16 %v4299, %v4296
    %v4591 = vpack.c.b16 %v4300, %v4297
    %v4592 = vpack.c.b16 %v4304, %v4301
    %v4593 = vpack.c.b16 %v4305, %v4302
    %v4594 = vpack.c.b16 %v4306, %v4303
    %v4595 = vpack.c.b16 %v4310, %v4307
    %v4596 = vpack.c.b16 %v4311, %v4308
    %v4597 = vpack.c.b16 %v4312, %v4309
    %v4598 = vpack.c.b16 %v4316, %v4313
    %v4599 = vpack.c.b16 %v4317, %v4314
    %v4600 = vpack.c.b16 %v4318, %v4315
    %v4601 = vpack.c.b16 %v4322, %v4319
    %v4602 = vpack.c.b16 %v4323, %v4320
    %v4603 = vpack.c.b16 %v4324, %v4321
    %v4604 = vpack.c.b16 %v4328, %v4325
    %v4605 = vpack.c.b16 %v4329, %v4326
    %v4606 = vpack.c.b16 %v4330, %v4327
    %v4607 = vpack.c.b16 %v4334, %v4331
    %v4608 = vpack.c.b16 %v4335, %v4332
    %v4609 = vpack.c.b16 %v4336, %v4333
    %v4610 = vpack.c.b16 %v4340, %v4337
    %v4611 = vpack.c.b16 %v4341, %v4338
    %v4612 = vpack.c.b16 %v4342, %v4339
    %v4613 = vpack.c.b16 %v4346, %v4343
    %v4614 = vpack.c.b16 %v4347, %v4344
    %v4615 = vpack.c.b16 %v4348, %v4345
    %v4616 = vpack.c.b16 %v4352, %v4349
    %v4617 = vpack.c.b16 %v4353, %v4350
    %v4618 = vpack.c.b16 %v4354, %v4351
    %v4619 = vpack.c.b16 %v4358, %v4355
    %v4620 = vpack.c.b16 %v4359, %v4356
    %v4621 = vpack.c.b16 %v4360, %v4357
    %v4622 = vpack.c.b16 %v4364, %v4361
    %v4623 = vpack.c.b16 %v4365, %v4362
    %v4624 = vpack.c.b16 %v4366, %v4363
    %v4625 = vpack.c.b16 %v4370, %v4367
    %v4626 = vpack.c.b16 %v4371, %v4368
    %v4627 = vpack.c.b16 %v4372, %v4369
    %v4628 = vpack.c.b16 %v4376, %v4373
    %v4629 = vpack.c.b16 %v4377, %v4374
    %v4630 = vpack.c.b16 %v4378, %v4375
    %v4631 = vpack.c.b16 %v4382, %v4379
    %v4632 = vpack.c.b16 %v4383, %v4380
    %v4633 = vpack.c.b16 %v4384, %v4381
    %v4634 = vpack.c.b16 %v4388, %v4385
    %v4635 = vpack.c.b16 %v4389, %v4386
    %v4636 = vpack.c.b16 %v4390, %v4387
    %v4637 = vpack.c.b16 %v4394, %v4391
    %v4638 = vpack.c.b16 %v4395, %v4392
    %v4639 = vpack.c.b16 %v4396, %v4393
    %v4640 = vpack.c.b16 %v4400, %v4397
    %v4641 = vpack.c.b16 %v4401, %v4398
    %v4642 = vpack.c.b16 %v4402, %v4399
    %4883 = vmatprep.subr.bf16.mxu0 %v4425
    %4884 = vmatpush1.bf16.msra.mxu0 %v4424
    %4885 = vmatprep.subr.bf16.mxu0 %v4422
    %4886 = vmatpush1.bf16.msra.mxu0 %v4421
    %4887 = vmatprep.subr.bf16.mxu0 %v4419
    %4888 = vmatpush1.bf16.msra.mxu0 %v4418
    %4889 = vmatprep.subr.bf16.mxu0 %v4416
    %4890 = vmatpush1.bf16.msra.mxu0 %v4415
    %4891 = vmatprep.subr.bf16.mxu0 %v4413
    %4892 = vmatpush1.bf16.msra.mxu0 %v4412
    %4893 = vmatprep.subr.bf16.mxu0 %v4410
    %4894 = vmatpush1.bf16.msra.mxu0 %v4409
    %4895 = vmatprep.subr.bf16.mxu0 %v4407
    %4896 = vmatpush1.bf16.msra.mxu0 %v4406
    %4897 = vmatprep.subr.bf16.mxu0 %v4404
    %4898 = vmatpush1.bf16.msra.mxu0 %v4403
    %4899 = vmatprep.subr.bf16.mxu0 %v4449
    %4900 = vmatpush2.bf16.msra.mxu0 %v4448
    %4901 = vmatprep.subr.bf16.mxu0 %v4446
    %4902 = vmatpush2.bf16.msra.mxu0 %v4445
    %4903 = vmatprep.subr.bf16.mxu0 %v4443
    %4904 = vmatpush2.bf16.msra.mxu0 %v4442
    %4905 = vmatprep.subr.bf16.mxu0 %v4440
    %4906 = vmatpush2.bf16.msra.mxu0 %v4439
    %4907 = vmatprep.subr.bf16.mxu0 %v4437
    %4908 = vmatpush2.bf16.msra.mxu0 %v4436
    %4909 = vmatprep.subr.bf16.mxu0 %v4434
    %4910 = vmatpush2.bf16.msra.mxu0 %v4433
    %4911 = vmatprep.subr.bf16.mxu0 %v4431
    %4912 = vmatpush2.bf16.msra.mxu0 %v4430
    %4913 = vmatprep.subr.bf16.mxu0 %v4428
    %4914 = vmatpush2.bf16.msra.mxu0 %v4427
    %4915 = vmatprep.mubr.bf16.mxu0 %v1266
    %4916 = vmatmul.mubr.bf16.gmra.mxu0 %v1265
    %v4917 = vpop.f32.mrf.mxu0
    %v4918 = vadd.f32 0.0, %v4917
    %v4919 = vpop.f32.mrf.mxu0
    %v4920 = vadd.f32 0.0, %v4919
    %v4921 = vpop.f32.mrf.mxu0
    %v4922 = vpop.f32.mrf.mxu0
    %4923 = vdwg.mxu0
    %4924 = vmatprep.subr.bf16.mxu0 %v4473
    %4925 = vmatpush1.bf16.msra.mxu0 %v4472
    %4926 = vmatprep.subr.bf16.mxu0 %v4470
    %4927 = vmatpush1.bf16.msra.mxu0 %v4469
    %4928 = vmatprep.subr.bf16.mxu0 %v4467
    %4929 = vmatpush1.bf16.msra.mxu0 %v4466
    %4930 = vmatprep.subr.bf16.mxu0 %v4464
    %4931 = vmatpush1.bf16.msra.mxu0 %v4463
    %4932 = vmatprep.subr.bf16.mxu0 %v4461
    %4933 = vmatpush1.bf16.msra.mxu0 %v4460
    %4934 = vmatprep.subr.bf16.mxu0 %v4458
    %4935 = vmatpush1.bf16.msra.mxu0 %v4457
    %4936 = vmatprep.subr.bf16.mxu0 %v4455
    %4937 = vmatpush1.bf16.msra.mxu0 %v4454
    %4938 = vmatprep.subr.bf16.mxu0 %v4452
    %4939 = vmatpush1.bf16.msra.mxu0 %v4451
    %4940 = vmatprep.subr.bf16.mxu0 %v4497
    %4941 = vmatpush2.bf16.msra.mxu0 %v4496
    %4942 = vmatprep.subr.bf16.mxu0 %v4494
    %4943 = vmatpush2.bf16.msra.mxu0 %v4493
    %4944 = vmatprep.subr.bf16.mxu0 %v4491
    %4945 = vmatpush2.bf16.msra.mxu0 %v4490
    %4946 = vmatprep.subr.bf16.mxu0 %v4488
    %4947 = vmatpush2.bf16.msra.mxu0 %v4487
    %4948 = vmatprep.subr.bf16.mxu0 %v4485
    %4949 = vmatpush2.bf16.msra.mxu0 %v4484
    %4950 = vmatprep.subr.bf16.mxu0 %v4482
    %4951 = vmatpush2.bf16.msra.mxu0 %v4481
    %4952 = vmatprep.subr.bf16.mxu0 %v4479
    %4953 = vmatpush2.bf16.msra.mxu0 %v4478
    %4954 = vmatprep.subr.bf16.mxu0 %v4476
    %4955 = vmatpush2.bf16.msra.mxu0 %v4475
    %4956 = vmatprep.mubr.bf16.mxu0 %v1268
    %4957 = vmatmul.mubr.bf16.gmra.mxu0 %v1267
    %v4958 = vpop.f32.mrf.mxu0
    %v4959 = vadd.f32 %v4918, %v4958
    %v4960 = vpop.f32.mrf.mxu0
    %v4961 = vadd.f32 %v4920, %v4960
    %v4962 = vpop.f32.mrf.mxu0
    %v4963 = vpop.f32.mrf.mxu0
    %4964 = vdwg.mxu0
    %4965 = vmatprep.subr.bf16.mxu0 %v4521
    %4966 = vmatpush1.bf16.msra.mxu0 %v4520
    %4967 = vmatprep.subr.bf16.mxu0 %v4518
    %4968 = vmatpush1.bf16.msra.mxu0 %v4517
    %4969 = vmatprep.subr.bf16.mxu0 %v4515
    %4970 = vmatpush1.bf16.msra.mxu0 %v4514
    %4971 = vmatprep.subr.bf16.mxu0 %v4512
    %4972 = vmatpush1.bf16.msra.mxu0 %v4511
    %4973 = vmatprep.subr.bf16.mxu0 %v4509
    %4974 = vmatpush1.bf16.msra.mxu0 %v4508
    %4975 = vmatprep.subr.bf16.mxu0 %v4506
    %4976 = vmatpush1.bf16.msra.mxu0 %v4505
    %4977 = vmatprep.subr.bf16.mxu0 %v4503
    %4978 = vmatpush1.bf16.msra.mxu0 %v4502
    %4979 = vmatprep.subr.bf16.mxu0 %v4500
    %4980 = vmatpush1.bf16.msra.mxu0 %v4499
    %4981 = vmatprep.subr.bf16.mxu0 %v4545
    %4982 = vmatpush2.bf16.msra.mxu0 %v4544
    %4983 = vmatprep.subr.bf16.mxu0 %v4542
    %4984 = vmatpush2.bf16.msra.mxu0 %v4541
    %4985 = vmatprep.subr.bf16.mxu0 %v4539
    %4986 = vmatpush2.bf16.msra.mxu0 %v4538
    %4987 = vmatprep.subr.bf16.mxu0 %v4536
    %4988 = vmatpush2.bf16.msra.mxu0 %v4535
    %4989 = vmatprep.subr.bf16.mxu0 %v4533
    %4990 = vmatpush2.bf16.msra.mxu0 %v4532
    %4991 = vmatprep.subr.bf16.mxu0 %v4530
    %4992 = vmatpush2.bf16.msra.mxu0 %v4529
    %4993 = vmatprep.subr.bf16.mxu0 %v4527
    %4994 = vmatpush2.bf16.msra.mxu0 %v4526
    %4995 = vmatprep.subr.bf16.mxu0 %v4524
    %4996 = vmatpush2.bf16.msra.mxu0 %v4523
    %4997 = vmatprep.mubr.bf16.mxu0 %v1270
    %4998 = vmatmul.mubr.bf16.gmra.mxu0 %v1269
    %v4999 = vpop.f32.mrf.mxu0
    %v5000 = vadd.f32 %v4959, %v4999
    %v5001 = vpop.f32.mrf.mxu0
    %v5002 = vadd.f32 %v4961, %v5001
    %v5003 = vpop.f32.mrf.mxu0
    %v5004 = vpop.f32.mrf.mxu0
    %5005 = vdwg.mxu0
    %5006 = vmatprep.subr.bf16.mxu0 %v4569
    %5007 = vmatpush1.bf16.msra.mxu0 %v4568
    %5008 = vmatprep.subr.bf16.mxu0 %v4566
    %5009 = vmatpush1.bf16.msra.mxu0 %v4565
    %5010 = vmatprep.subr.bf16.mxu0 %v4563
    %5011 = vmatpush1.bf16.msra.mxu0 %v4562
    %5012 = vmatprep.subr.bf16.mxu0 %v4560
    %5013 = vmatpush1.bf16.msra.mxu0 %v4559
    %5014 = vmatprep.subr.bf16.mxu0 %v4557
    %5015 = vmatpush1.bf16.msra.mxu0 %v4556
    %5016 = vmatprep.subr.bf16.mxu0 %v4554
    %5017 = vmatpush1.bf16.msra.mxu0 %v4553
    %5018 = vmatprep.subr.bf16.mxu0 %v4551
    %5019 = vmatpush1.bf16.msra.mxu0 %v4550
    %5020 = vmatprep.subr.bf16.mxu0 %v4548
    %5021 = vmatpush1.bf16.msra.mxu0 %v4547
    %5022 = vmatprep.subr.bf16.mxu0 %v4593
    %5023 = vmatpush2.bf16.msra.mxu0 %v4592
    %5024 = vmatprep.subr.bf16.mxu0 %v4590
    %5025 = vmatpush2.bf16.msra.mxu0 %v4589
    %5026 = vmatprep.subr.bf16.mxu0 %v4587
    %5027 = vmatpush2.bf16.msra.mxu0 %v4586
    %5028 = vmatprep.subr.bf16.mxu0 %v4584
    %5029 = vmatpush2.bf16.msra.mxu0 %v4583
    %5030 = vmatprep.subr.bf16.mxu0 %v4581
    %5031 = vmatpush2.bf16.msra.mxu0 %v4580
    %5032 = vmatprep.subr.bf16.mxu0 %v4578
    %5033 = vmatpush2.bf16.msra.mxu0 %v4577
    %5034 = vmatprep.subr.bf16.mxu0 %v4575
    %5035 = vmatpush2.bf16.msra.mxu0 %v4574
    %5036 = vmatprep.subr.bf16.mxu0 %v4572
    %5037 = vmatpush2.bf16.msra.mxu0 %v4571
    %5038 = vmatprep.mubr.bf16.mxu0 %v1272
    %5039 = vmatmul.mubr.bf16.gmra.mxu0 %v1271
    %v5040 = vpop.f32.mrf.mxu0
    %v5041 = vadd.f32 %v5000, %v5040
    %v5042 = vpop.f32.mrf.mxu0
    %v5043 = vadd.f32 %v5002, %v5042
    %v5044 = vpop.f32.mrf.mxu0
    %v5045 = vpop.f32.mrf.mxu0
    %5046 = vdwg.mxu0
    %5047 = vmatprep.subr.bf16.mxu0 %v4617
    %5048 = vmatpush1.bf16.msra.mxu0 %v4616
    %5049 = vmatprep.subr.bf16.mxu0 %v4614
    %5050 = vmatpush1.bf16.msra.mxu0 %v4613
    %5051 = vmatprep.subr.bf16.mxu0 %v4611
    %5052 = vmatpush1.bf16.msra.mxu0 %v4610
    %5053 = vmatprep.subr.bf16.mxu0 %v4608
    %5054 = vmatpush1.bf16.msra.mxu0 %v4607
    %5055 = vmatprep.subr.bf16.mxu0 %v4605
    %5056 = vmatpush1.bf16.msra.mxu0 %v4604
    %5057 = vmatprep.subr.bf16.mxu0 %v4602
    %5058 = vmatpush1.bf16.msra.mxu0 %v4601
    %5059 = vmatprep.subr.bf16.mxu0 %v4599
    %5060 = vmatpush1.bf16.msra.mxu0 %v4598
    %5061 = vmatprep.subr.bf16.mxu0 %v4596
    %5062 = vmatpush1.bf16.msra.mxu0 %v4595
    %5063 = vmatprep.subr.bf16.mxu0 %v4641
    %5064 = vmatpush2.bf16.msra.mxu0 %v4640
    %5065 = vmatprep.subr.bf16.mxu0 %v4638
    %5066 = vmatpush2.bf16.msra.mxu0 %v4637
    %5067 = vmatprep.subr.bf16.mxu0 %v4635
    %5068 = vmatpush2.bf16.msra.mxu0 %v4634
    %5069 = vmatprep.subr.bf16.mxu0 %v4632
    %5070 = vmatpush2.bf16.msra.mxu0 %v4631
    %5071 = vmatprep.subr.bf16.mxu0 %v4629
    %5072 = vmatpush2.bf16.msra.mxu0 %v4628
    %5073 = vmatprep.subr.bf16.mxu0 %v4626
    %5074 = vmatpush2.bf16.msra.mxu0 %v4625
    %5075 = vmatprep.subr.bf16.mxu0 %v4623
    %5076 = vmatpush2.bf16.msra.mxu0 %v4622
    %5077 = vmatprep.subr.bf16.mxu0 %v4620
    %5078 = vmatpush2.bf16.msra.mxu0 %v4619
    %5079 = vmatprep.mubr.bf16.mxu0 %v1274
    %5080 = vmatmul.mubr.bf16.gmra.mxu0 %v1273
    %v5081 = vpop.f32.mrf.mxu0
    %v5082 = vadd.f32 %v5041, %v5081
    %v5083 = vpop.f32.mrf.mxu0
    %v5084 = vadd.f32 %v5043, %v5083
    %v5085 = vpop.f32.mrf.mxu0
    %v5086 = vpop.f32.mrf.mxu0
    %5087 = vdwg.mxu0
    %5088 = vmatprep.subr.bf16.mxu0 0
    %5089 = vmatpush1.bf16.msra.mxu0 %v4426
    %5090 = vmatprep.subr.bf16.mxu0 0
    %5091 = vmatpush1.bf16.msra.mxu0 %v4423
    %5092 = vmatprep.subr.bf16.mxu0 0
    %5093 = vmatpush1.bf16.msra.mxu0 %v4420
    %5094 = vmatprep.subr.bf16.mxu0 0
    %5095 = vmatpush1.bf16.msra.mxu0 %v4417
    %5096 = vmatprep.subr.bf16.mxu0 0
    %5097 = vmatpush1.bf16.msra.mxu0 %v4414
    %5098 = vmatprep.subr.bf16.mxu0 0
    %5099 = vmatpush1.bf16.msra.mxu0 %v4411
    %5100 = vmatprep.subr.bf16.mxu0 0
    %5101 = vmatpush1.bf16.msra.mxu0 %v4408
    %5102 = vmatprep.subr.bf16.mxu0 0
    %5103 = vmatpush1.bf16.msra.mxu0 %v4405
    %5104 = vmatprep.subr.bf16.mxu0 0
    %5105 = vmatpush2.bf16.msra.mxu0 %v4450
    %5106 = vmatprep.subr.bf16.mxu0 0
    %5107 = vmatpush2.bf16.msra.mxu0 %v4447
    %5108 = vmatprep.subr.bf16.mxu0 0
    %5109 = vmatpush2.bf16.msra.mxu0 %v4444
    %5110 = vmatprep.subr.bf16.mxu0 0
    %5111 = vmatpush2.bf16.msra.mxu0 %v4441
    %5112 = vmatprep.subr.bf16.mxu0 0
    %5113 = vmatpush2.bf16.msra.mxu0 %v4438
    %5114 = vmatprep.subr.bf16.mxu0 0
    %5115 = vmatpush2.bf16.msra.mxu0 %v4435
    %5116 = vmatprep.subr.bf16.mxu0 0
    %5117 = vmatpush2.bf16.msra.mxu0 %v4432
    %5118 = vmatprep.subr.bf16.mxu0 0
    %5119 = vmatpush2.bf16.msra.mxu0 %v4429
    %5120 = vmatprep.mubr.bf16.mxu0 %v1266
    %5121 = vmatmul.mubr.bf16.gmra.mxu0 %v1265
    %v5122 = vpop.f32.mrf.mxu0
    %v5123 = vadd.f32 0.0, %v5122
    %v5124 = vpop.f32.mrf.mxu0
    %v5125 = vpop.f32.mrf.mxu0
    %v5126 = vpop.f32.mrf.mxu0
    %5127 = vdwg.mxu0
    %5128 = vmatprep.subr.bf16.mxu0 0
    %5129 = vmatpush1.bf16.msra.mxu0 %v4474
    %5130 = vmatprep.subr.bf16.mxu0 0
    %5131 = vmatpush1.bf16.msra.mxu0 %v4471
    %5132 = vmatprep.subr.bf16.mxu0 0
    %5133 = vmatpush1.bf16.msra.mxu0 %v4468
    %5134 = vmatprep.subr.bf16.mxu0 0
    %5135 = vmatpush1.bf16.msra.mxu0 %v4465
    %5136 = vmatprep.subr.bf16.mxu0 0
    %5137 = vmatpush1.bf16.msra.mxu0 %v4462
    %5138 = vmatprep.subr.bf16.mxu0 0
    %5139 = vmatpush1.bf16.msra.mxu0 %v4459
    %5140 = vmatprep.subr.bf16.mxu0 0
    %5141 = vmatpush1.bf16.msra.mxu0 %v4456
    %5142 = vmatprep.subr.bf16.mxu0 0
    %5143 = vmatpush1.bf16.msra.mxu0 %v4453
    %5144 = vmatprep.subr.bf16.mxu0 0
    %5145 = vmatpush2.bf16.msra.mxu0 %v4498
    %5146 = vmatprep.subr.bf16.mxu0 0
    %5147 = vmatpush2.bf16.msra.mxu0 %v4495
    %5148 = vmatprep.subr.bf16.mxu0 0
    %5149 = vmatpush2.bf16.msra.mxu0 %v4492
    %5150 = vmatprep.subr.bf16.mxu0 0
    %5151 = vmatpush2.bf16.msra.mxu0 %v4489
    %5152 = vmatprep.subr.bf16.mxu0 0
    %5153 = vmatpush2.bf16.msra.mxu0 %v4486
    %5154 = vmatprep.subr.bf16.mxu0 0
    %5155 = vmatpush2.bf16.msra.mxu0 %v4483
    %5156 = vmatprep.subr.bf16.mxu0 0
    %5157 = vmatpush2.bf16.msra.mxu0 %v4480
    %5158 = vmatprep.subr.bf16.mxu0 0
    %5159 = vmatpush2.bf16.msra.mxu0 %v4477
    %5160 = vmatprep.mubr.bf16.mxu0 %v1268
    %5161 = vmatmul.mubr.bf16.gmra.mxu0 %v1267
    %v5162 = vpop.f32.mrf.mxu0
    %v5163 = vadd.f32 %v5123, %v5162
    %v5164 = vpop.f32.mrf.mxu0
    %v5165 = vpop.f32.mrf.mxu0
    %v5166 = vpop.f32.mrf.mxu0
    %5167 = vdwg.mxu0
    %5168 = vmatprep.subr.bf16.mxu0 0
    %5169 = vmatpush1.bf16.msra.mxu0 %v4522
    %5170 = vmatprep.subr.bf16.mxu0 0
    %5171 = vmatpush1.bf16.msra.mxu0 %v4519
    %5172 = vmatprep.subr.bf16.mxu0 0
    %5173 = vmatpush1.bf16.msra.mxu0 %v4516
    %5174 = vmatprep.subr.bf16.mxu0 0
    %5175 = vmatpush1.bf16.msra.mxu0 %v4513
    %5176 = vmatprep.subr.bf16.mxu0 0
    %5177 = vmatpush1.bf16.msra.mxu0 %v4510
    %5178 = vmatprep.subr.bf16.mxu0 0
    %5179 = vmatpush1.bf16.msra.mxu0 %v4507
    %5180 = vmatprep.subr.bf16.mxu0 0
    %5181 = vmatpush1.bf16.msra.mxu0 %v4504
    %5182 = vmatprep.subr.bf16.mxu0 0
    %5183 = vmatpush1.bf16.msra.mxu0 %v4501
    %5184 = vmatprep.subr.bf16.mxu0 0
    %5185 = vmatpush2.bf16.msra.mxu0 %v4546
    %5186 = vmatprep.subr.bf16.mxu0 0
    %5187 = vmatpush2.bf16.msra.mxu0 %v4543
    %5188 = vmatprep.subr.bf16.mxu0 0
    %5189 = vmatpush2.bf16.msra.mxu0 %v4540
    %5190 = vmatprep.subr.bf16.mxu0 0
    %5191 = vmatpush2.bf16.msra.mxu0 %v4537
    %5192 = vmatprep.subr.bf16.mxu0 0
    %5193 = vmatpush2.bf16.msra.mxu0 %v4534
    %5194 = vmatprep.subr.bf16.mxu0 0
    %5195 = vmatpush2.bf16.msra.mxu0 %v4531
    %5196 = vmatprep.subr.bf16.mxu0 0
    %5197 = vmatpush2.bf16.msra.mxu0 %v4528
    %5198 = vmatprep.subr.bf16.mxu0 0
    %5199 = vmatpush2.bf16.msra.mxu0 %v4525
    %5200 = vmatprep.mubr.bf16.mxu0 %v1270
    %5201 = vmatmul.mubr.bf16.gmra.mxu0 %v1269
    %v5202 = vpop.f32.mrf.mxu0
    %v5203 = vadd.f32 %v5163, %v5202
    %v5204 = vpop.f32.mrf.mxu0
    %v5205 = vpop.f32.mrf.mxu0
    %v5206 = vpop.f32.mrf.mxu0
    %5207 = vdwg.mxu0
    %5208 = vmatprep.subr.bf16.mxu0 0
    %5209 = vmatpush1.bf16.msra.mxu0 %v4570
    %5210 = vmatprep.subr.bf16.mxu0 0
    %5211 = vmatpush1.bf16.msra.mxu0 %v4567
    %5212 = vmatprep.subr.bf16.mxu0 0
    %5213 = vmatpush1.bf16.msra.mxu0 %v4564
    %5214 = vmatprep.subr.bf16.mxu0 0
    %5215 = vmatpush1.bf16.msra.mxu0 %v4561
    %5216 = vmatprep.subr.bf16.mxu0 0
    %5217 = vmatpush1.bf16.msra.mxu0 %v4558
    %5218 = vmatprep.subr.bf16.mxu0 0
    %5219 = vmatpush1.bf16.msra.mxu0 %v4555
    %5220 = vmatprep.subr.bf16.mxu0 0
    %5221 = vmatpush1.bf16.msra.mxu0 %v4552
    %5222 = vmatprep.subr.bf16.mxu0 0
    %5223 = vmatpush1.bf16.msra.mxu0 %v4549
    %5224 = vmatprep.subr.bf16.mxu0 0
    %5225 = vmatpush2.bf16.msra.mxu0 %v4594
    %5226 = vmatprep.subr.bf16.mxu0 0
    %5227 = vmatpush2.bf16.msra.mxu0 %v4591
    %5228 = vmatprep.subr.bf16.mxu0 0
    %5229 = vmatpush2.bf16.msra.mxu0 %v4588
    %5230 = vmatprep.subr.bf16.mxu0 0
    %5231 = vmatpush2.bf16.msra.mxu0 %v4585
    %5232 = vmatprep.subr.bf16.mxu0 0
    %5233 = vmatpush2.bf16.msra.mxu0 %v4582
    %5234 = vmatprep.subr.bf16.mxu0 0
    %5235 = vmatpush2.bf16.msra.mxu0 %v4579
    %5236 = vmatprep.subr.bf16.mxu0 0
    %5237 = vmatpush2.bf16.msra.mxu0 %v4576
    %5238 = vmatprep.subr.bf16.mxu0 0
    %5239 = vmatpush2.bf16.msra.mxu0 %v4573
    %5240 = vmatprep.mubr.bf16.mxu0 %v1272
    %5241 = vmatmul.mubr.bf16.gmra.mxu0 %v1271
    %v5242 = vpop.f32.mrf.mxu0
    %v5243 = vadd.f32 %v5203, %v5242
    %v5244 = vpop.f32.mrf.mxu0
    %v5245 = vpop.f32.mrf.mxu0
    %v5246 = vpop.f32.mrf.mxu0
    %5247 = vdwg.mxu0
    %5248 = vmatprep.subr.bf16.mxu0 0
    %5249 = vmatpush1.bf16.msra.mxu0 %v4618
    %5250 = vmatprep.subr.bf16.mxu0 0
    %5251 = vmatpush1.bf16.msra.mxu0 %v4615
    %5252 = vmatprep.subr.bf16.mxu0 0
    %5253 = vmatpush1.bf16.msra.mxu0 %v4612
    %5254 = vmatprep.subr.bf16.mxu0 0
    %5255 = vmatpush1.bf16.msra.mxu0 %v4609
    %5256 = vmatprep.subr.bf16.mxu0 0
    %5257 = vmatpush1.bf16.msra.mxu0 %v4606
    %5258 = vmatprep.subr.bf16.mxu0 0
    %5259 = vmatpush1.bf16.msra.mxu0 %v4603
    %5260 = vmatprep.subr.bf16.mxu0 0
    %5261 = vmatpush1.bf16.msra.mxu0 %v4600
    %5262 = vmatprep.subr.bf16.mxu0 0
    %5263 = vmatpush1.bf16.msra.mxu0 %v4597
    %5264 = vmatprep.subr.bf16.mxu0 0
    %5265 = vmatpush2.bf16.msra.mxu0 %v4642
    %5266 = vmatprep.subr.bf16.mxu0 0
    %5267 = vmatpush2.bf16.msra.mxu0 %v4639
    %5268 = vmatprep.subr.bf16.mxu0 0
    %5269 = vmatpush2.bf16.msra.mxu0 %v4636
    %5270 = vmatprep.subr.bf16.mxu0 0
    %5271 = vmatpush2.bf16.msra.mxu0 %v4633
    %5272 = vmatprep.subr.bf16.mxu0 0
    %5273 = vmatpush2.bf16.msra.mxu0 %v4630
    %5274 = vmatprep.subr.bf16.mxu0 0
    %5275 = vmatpush2.bf16.msra.mxu0 %v4627
    %5276 = vmatprep.subr.bf16.mxu0 0
    %5277 = vmatpush2.bf16.msra.mxu0 %v4624
    %5278 = vmatprep.subr.bf16.mxu0 0
    %5279 = vmatpush2.bf16.msra.mxu0 %v4621
    %5280 = vmatprep.mubr.bf16.mxu0 %v1274
    %5281 = vmatmul.mubr.bf16.gmra.mxu0 %v1273
    %v5282 = vpop.f32.mrf.mxu0
    %v5283 = vadd.f32 %v5243, %v5282
    %v5284 = vpop.f32.mrf.mxu0
    %v5285 = vpop.f32.mrf.mxu0
    %v5286 = vpop.f32.mrf.mxu0
    %5287 = vdwg.mxu0
    %v5288 = vadd.f32 %v3280, %v5082
    %v5289 = vadd.f32 %v3281, %v5084
    %v5290 = vadd.f32 %v3282, %v5283
    %5291 = vset.pattern.permute.xlu0 3
    %5292 = vperm.xlu0 %5291, %v90
    %v5293 = vpop.permute.xlu0 %5292
    %vm5294 = vcmp.eq.s32.totalorder %v89, %v5293
    %vm5295 = vcmp.eq.s32.totalorder %v1223, %v5293
    %vm5296 = vcmp.eq.s32.totalorder %v1224, %v5293
    %vm5297 = vcmp.eq.s32.totalorder %v1225, %v5293
    %vm5298 = vcmp.eq.s32.totalorder %v1226, %v5293
    %vm5299 = vcmp.eq.s32.totalorder %v1227, %v5293
    %v5300 = vsel %vm5294, 1, 0
    %v5301 = vsel %vm5295, 1, 0
    %v5302 = vsel %vm5296, 1, 0
    %v5303 = vsel %vm5297, 1, 0
    %v5304 = vsel %vm5298, 1, 0
    %v5305 = vsel %vm5299, 1, 0
    %v5306 = vcvt.s32.f32 %v5300
    %v5307 = vcvt.s32.f32 %v5301
    %v5308 = vcvt.s32.f32 %v5302
    %v5309 = vcvt.s32.f32 %v5303
    %v5310 = vcvt.s32.f32 %v5304
    %v5311 = vcvt.s32.f32 %v5305
    %v5312 = vpack.c.bf16 %v5306, %v5306
    %v5313 = vpack.c.bf16 %v5307, %v5307
    %v5314 = vpack.c.bf16 %v5308, %v5308
    %v5315 = vpack.c.bf16 %v5309, %v5309
    %v5316 = vpack.c.bf16 %v5310, %v5310
    %v5317 = vpack.c.bf16 %v5311, %v5311
    %v5318 = vld [vmem:[#allocation7 + $0x900] sm:$0xff]
    %v5319 = vld [vmem:[#allocation7 + $0x908] sm:$0xf]
    %v5320 = vld [vmem:[#allocation7 + $0x90c] sm:$0xff]
    %v5321 = vld [vmem:[#allocation7 + $0x914] sm:$0xf]
    %v5322 = vld [vmem:[#allocation7 + $0x918] sm:$0xff]
    %v5323 = vld [vmem:[#allocation7 + $0x920] sm:$0xf]
    %v5324 = vld [vmem:[#allocation7 + $0x924] sm:$0xff]
    %v5325 = vld [vmem:[#allocation7 + $0x92c] sm:$0xf]
    %v5326 = vld [vmem:[#allocation7 + $0x930] sm:$0xff]
    %v5327 = vld [vmem:[#allocation7 + $0x938] sm:$0xf]
    %v5328 = vld [vmem:[#allocation7 + $0x93c] sm:$0xff]
    %v5329 = vld [vmem:[#allocation7 + $0x944] sm:$0xf]
    %v5330 = vld [vmem:[#allocation7 + $0x948] sm:$0xff]
    %v5331 = vld [vmem:[#allocation7 + $0x950] sm:$0xf]
    %v5332 = vld [vmem:[#allocation7 + $0x954] sm:$0xff]
    %v5333 = vld [vmem:[#allocation7 + $0x95c] sm:$0xf]
    %v5334 = vld [vmem:[#allocation7 + $0x960] sm:$0xff]
    %v5335 = vld [vmem:[#allocation7 + $0x968] sm:$0xf]
    %v5336 = vld [vmem:[#allocation7 + $0x96c] sm:$0xff]
    %v5337 = vld [vmem:[#allocation7 + $0x974] sm:$0xf]
    %v5338 = vld [vmem:[#allocation7 + $0x978] sm:$0xff]
    %v5339 = vld [vmem:[#allocation7 + $0x980] sm:$0xf]
    %v5340 = vld [vmem:[#allocation7 + $0x984] sm:$0xff]
    %v5341 = vld [vmem:[#allocation7 + $0x98c] sm:$0xf]
    %v5342 = vld [vmem:[#allocation7 + $0x990] sm:$0xff]
    %v5343 = vld [vmem:[#allocation7 + $0x998] sm:$0xf]
    %v5344 = vld [vmem:[#allocation7 + $0x99c] sm:$0xff]
    %v5345 = vld [vmem:[#allocation7 + $0x9a4] sm:$0xf]
    %v5346 = vld [vmem:[#allocation7 + $0x9a8] sm:$0xff]
    %v5347 = vld [vmem:[#allocation7 + $0x9b0] sm:$0xf]
    %v5348 = vld [vmem:[#allocation7 + $0x9b4] sm:$0xff]
    %v5349 = vld [vmem:[#allocation7 + $0x9bc] sm:$0xf]
    %v5350 = vld [vmem:[#allocation7 + $0x9c0] sm:$0xff]
    %v5351 = vld [vmem:[#allocation7 + $0x9c8] sm:$0xf]
    %v5352 = vld [vmem:[#allocation7 + $0x9cc] sm:$0xff]
    %v5353 = vld [vmem:[#allocation7 + $0x9d4] sm:$0xf]
    %v5354 = vld [vmem:[#allocation7 + $0x9d8] sm:$0xff]
    %v5355 = vld [vmem:[#allocation7 + $0x9e0] sm:$0xf]
    %v5356 = vld [vmem:[#allocation7 + $0x9e4] sm:$0xff]
    %v5357 = vld [vmem:[#allocation7 + $0x9ec] sm:$0xf]
    %v5358 = vld [vmem:[#allocation7 + $0x9f0] sm:$0xff]
    %v5359 = vld [vmem:[#allocation7 + $0x9f8] sm:$0xf]
    %v5360 = vld [vmem:[#allocation7 + $0x9fc] sm:$0xff]
    %v5361 = vld [vmem:[#allocation7 + $0xa04] sm:$0xf]
    %v5362 = vld [vmem:[#allocation7 + $0xa08] sm:$0xff]
    %v5363 = vld [vmem:[#allocation7 + $0xa10] sm:$0xf]
    %v5364 = vld [vmem:[#allocation7 + $0xa14] sm:$0xff]
    %v5365 = vld [vmem:[#allocation7 + $0xa1c] sm:$0xf]
    %v5366 = vld [vmem:[#allocation7 + $0xa20] sm:$0xff]
    %v5367 = vld [vmem:[#allocation7 + $0xa28] sm:$0xf]
    %v5368 = vld [vmem:[#allocation7 + $0xa2c] sm:$0xff]
    %v5369 = vld [vmem:[#allocation7 + $0xa34] sm:$0xf]
    %v5370 = vld [vmem:[#allocation7 + $0xa38] sm:$0xff]
    %v5371 = vld [vmem:[#allocation7 + $0xa40] sm:$0xf]
    %v5372 = vld [vmem:[#allocation7 + $0xa44] sm:$0xff]
    %v5373 = vld [vmem:[#allocation7 + $0xa4c] sm:$0xf]
    %v5374 = vld [vmem:[#allocation7 + $0xa50] sm:$0xff]
    %v5375 = vld [vmem:[#allocation7 + $0xa58] sm:$0xf]
    %v5376 = vld [vmem:[#allocation7 + $0xa5c] sm:$0xff]
    %v5377 = vld [vmem:[#allocation7 + $0xa64] sm:$0xf]
    %v5378 = vld [vmem:[#allocation7 + $0xa68] sm:$0xff]
    %v5379 = vld [vmem:[#allocation7 + $0xa70] sm:$0xf]
    %v5380 = vld [vmem:[#allocation7 + $0xa74] sm:$0xff]
    %v5381 = vld [vmem:[#allocation7 + $0xa7c] sm:$0xf]
    %v5382 = vld [vmem:[#allocation7 + $0xa80] sm:$0xff]
    %v5383 = vld [vmem:[#allocation7 + $0xa88] sm:$0xf]
    %v5384 = vld [vmem:[#allocation7 + $0xa8c] sm:$0xff]
    %v5385 = vld [vmem:[#allocation7 + $0xa94] sm:$0xf]
    %v5386 = vld [vmem:[#allocation7 + $0xa98] sm:$0xff]
    %v5387 = vld [vmem:[#allocation7 + $0xaa0] sm:$0xf]
    %v5388 = vld [vmem:[#allocation7 + $0xaa4] sm:$0xff]
    %v5389 = vld [vmem:[#allocation7 + $0xaac] sm:$0xf]
    %v5390 = vld [vmem:[#allocation7 + $0xab0] sm:$0xff]
    %v5391 = vld [vmem:[#allocation7 + $0xab8] sm:$0xf]
    %v5392 = vld [vmem:[#allocation7 + $0xabc] sm:$0xff]
    %v5393 = vld [vmem:[#allocation7 + $0xac4] sm:$0xf]
    %v5394 = vld [vmem:[#allocation7 + $0xac8] sm:$0xff]
    %v5395 = vld [vmem:[#allocation7 + $0xad0] sm:$0xf]
    %v5396 = vld [vmem:[#allocation7 + $0xad4] sm:$0xff]
    %v5397 = vld [vmem:[#allocation7 + $0xadc] sm:$0xf]
    %v5398 = vld [vmem:[#allocation7 + $0xae0] sm:$0xff]
    %v5399 = vld [vmem:[#allocation7 + $0xae8] sm:$0xf]
    %v5400 = vld [vmem:[#allocation7 + $0xaec] sm:$0xff]
    %v5401 = vld [vmem:[#allocation7 + $0xaf4] sm:$0xf]
    %v5402 = vld [vmem:[#allocation7 + $0xaf8] sm:$0xff]
    %v5403 = vld [vmem:[#allocation7 + $0xb00] sm:$0xf]
    %v5404 = vld [vmem:[#allocation7 + $0xb04] sm:$0xff]
    %v5405 = vld [vmem:[#allocation7 + $0xb0c] sm:$0xf]
    %v5406 = vld [vmem:[#allocation7 + $0xb10] sm:$0xff]
    %v5407 = vld [vmem:[#allocation7 + $0xb18] sm:$0xf]
    %v5408 = vld [vmem:[#allocation7 + $0xb1c] sm:$0xff]
    %v5409 = vld [vmem:[#allocation7 + $0xb24] sm:$0xf]
    %v5410 = vld [vmem:[#allocation7 + $0xb28] sm:$0xff]
    %v5411 = vld [vmem:[#allocation7 + $0xb30] sm:$0xf]
    %v5412 = vld [vmem:[#allocation7 + $0xb34] sm:$0xff]
    %v5413 = vld [vmem:[#allocation7 + $0xb3c] sm:$0xf]
    %v5414 = vld [vmem:[#allocation7 + $0xb40] sm:$0xff]
    %v5415 = vld [vmem:[#allocation7 + $0xb48] sm:$0xf]
    %v5416 = vld [vmem:[#allocation7 + $0xb4c] sm:$0xff]
    %v5417 = vld [vmem:[#allocation7 + $0xb54] sm:$0xf]
    %v5418 = vld [vmem:[#allocation7 + $0xb58] sm:$0xff]
    %v5419 = vld [vmem:[#allocation7 + $0xb60] sm:$0xf]
    %v5420 = vld [vmem:[#allocation7 + $0xb64] sm:$0xff]
    %v5421 = vld [vmem:[#allocation7 + $0xb6c] sm:$0xf]
    %v5422 = vld [vmem:[#allocation7 + $0xb70] sm:$0xff]
    %v5423 = vld [vmem:[#allocation7 + $0xb78] sm:$0xf]
    %v5424 = vld [vmem:[#allocation7 + $0xb7c] sm:$0xff]
    %v5425 = vld [vmem:[#allocation7 + $0xb84] sm:$0xf]
    %v5426 = vld [vmem:[#allocation7 + $0xb88] sm:$0xff]
    %v5427 = vld [vmem:[#allocation7 + $0xb90] sm:$0xf]
    %v5428 = vld [vmem:[#allocation7 + $0xb94] sm:$0xff]
    %v5429 = vld [vmem:[#allocation7 + $0xb9c] sm:$0xf]
    %v5430 = vld [vmem:[#allocation7 + $0xba0] sm:$0xff]
    %v5431 = vld [vmem:[#allocation7 + $0xba8] sm:$0xf]
    %v5432 = vld [vmem:[#allocation7 + $0xbac] sm:$0xff]
    %v5433 = vld [vmem:[#allocation7 + $0xbb4] sm:$0xf]
    %v5434 = vld [vmem:[#allocation7 + $0xbb8] sm:$0xff]
    %v5435 = vld [vmem:[#allocation7 + $0xbc0] sm:$0xf]
    %v5436 = vld [vmem:[#allocation7 + $0xbc4] sm:$0xff]
    %v5437 = vld [vmem:[#allocation7 + $0xbcc] sm:$0xf]
    %v5438 = vld [vmem:[#allocation7 + $0xbd0] sm:$0xff]
    %v5439 = vld [vmem:[#allocation7 + $0xbd8] sm:$0xf]
    %v5440 = vld [vmem:[#allocation7 + $0xbdc] sm:$0xff]
    %v5441 = vld [vmem:[#allocation7 + $0xbe4] sm:$0xf]
    %v5442 = vld [vmem:[#allocation7 + $0xbe8] sm:$0xff]
    %v5443 = vld [vmem:[#allocation7 + $0xbf0] sm:$0xf]
    %v5444 = vld [vmem:[#allocation7 + $0xbf4] sm:$0xff]
    %v5445 = vld [vmem:[#allocation7 + $0xbfc] sm:$0xf]
    %v5446 = vld [vmem:[#allocation7 + $0xc00] sm:$0xff]
    %v5447 = vld [vmem:[#allocation7 + $0xc08] sm:$0xf]
    %v5448 = vld [vmem:[#allocation7 + $0xc0c] sm:$0xff]
    %v5449 = vld [vmem:[#allocation7 + $0xc14] sm:$0xf]
    %v5450 = vld [vmem:[#allocation7 + $0xc18] sm:$0xff]
    %v5451 = vld [vmem:[#allocation7 + $0xc20] sm:$0xf]
    %v5452 = vld [vmem:[#allocation7 + $0xc24] sm:$0xff]
    %v5453 = vld [vmem:[#allocation7 + $0xc2c] sm:$0xf]
    %v5454 = vld [vmem:[#allocation7 + $0xc30] sm:$0xff]
    %v5455 = vld [vmem:[#allocation7 + $0xc38] sm:$0xf]
    %v5456 = vld [vmem:[#allocation7 + $0xc3c] sm:$0xff]
    %v5457 = vld [vmem:[#allocation7 + $0xc44] sm:$0xf]
    %v5458 = vld [vmem:[#allocation7 + $0xc48] sm:$0xff]
    %v5459 = vld [vmem:[#allocation7 + $0xc50] sm:$0xf]
    %v5460 = vld [vmem:[#allocation7 + $0xc54] sm:$0xff]
    %v5461 = vld [vmem:[#allocation7 + $0xc5c] sm:$0xf]
    %v5462 = vld [vmem:[#allocation7 + $0xc60] sm:$0xff]
    %v5463 = vld [vmem:[#allocation7 + $0xc68] sm:$0xf]
    %v5464 = vld [vmem:[#allocation7 + $0xc6c] sm:$0xff]
    %v5465 = vld [vmem:[#allocation7 + $0xc74] sm:$0xf]
    %v5466 = vld [vmem:[#allocation7 + $0xc78] sm:$0xff]
    %v5467 = vld [vmem:[#allocation7 + $0xc80] sm:$0xf]
    %v5468 = vld [vmem:[#allocation7 + $0xc84] sm:$0xff]
    %v5469 = vld [vmem:[#allocation7 + $0xc8c] sm:$0xf]
    %v5470 = vld [vmem:[#allocation7 + $0xc90] sm:$0xff]
    %v5471 = vld [vmem:[#allocation7 + $0xc98] sm:$0xf]
    %v5472 = vld [vmem:[#allocation7 + $0xc9c] sm:$0xff]
    %v5473 = vld [vmem:[#allocation7 + $0xca4] sm:$0xf]
    %v5474 = vld [vmem:[#allocation7 + $0xca8] sm:$0xff]
    %v5475 = vld [vmem:[#allocation7 + $0xcb0] sm:$0xf]
    %v5476 = vld [vmem:[#allocation7 + $0xcb4] sm:$0xff]
    %v5477 = vld [vmem:[#allocation7 + $0xcbc] sm:$0xf]
    %v5478 = vld [vmem:[#allocation7 + $0xcc0] sm:$0xff]
    %v5479 = vld [vmem:[#allocation7 + $0xcc8] sm:$0xf]
    %v5480 = vld [vmem:[#allocation7 + $0xccc] sm:$0xff]
    %v5481 = vld [vmem:[#allocation7 + $0xcd4] sm:$0xf]
    %v5482 = vld [vmem:[#allocation7 + $0xcd8] sm:$0xff]
    %v5483 = vld [vmem:[#allocation7 + $0xce0] sm:$0xf]
    %v5484 = vld [vmem:[#allocation7 + $0xce4] sm:$0xff]
    %v5485 = vld [vmem:[#allocation7 + $0xcec] sm:$0xf]
    %v5486 = vld [vmem:[#allocation7 + $0xcf0] sm:$0xff]
    %v5487 = vld [vmem:[#allocation7 + $0xcf8] sm:$0xf]
    %v5488 = vld [vmem:[#allocation7 + $0xcfc] sm:$0xff]
    %v5489 = vld [vmem:[#allocation7 + $0xd04] sm:$0xf]
    %v5490 = vld [vmem:[#allocation7 + $0xd08] sm:$0xff]
    %v5491 = vld [vmem:[#allocation7 + $0xd10] sm:$0xf]
    %v5492 = vld [vmem:[#allocation7 + $0xd14] sm:$0xff]
    %v5493 = vld [vmem:[#allocation7 + $0xd1c] sm:$0xf]
    %v5494 = vld [vmem:[#allocation7 + $0xd20] sm:$0xff]
    %v5495 = vld [vmem:[#allocation7 + $0xd28] sm:$0xf]
    %v5496 = vld [vmem:[#allocation7 + $0xd2c] sm:$0xff]
    %v5497 = vld [vmem:[#allocation7 + $0xd34] sm:$0xf]
    %v5498 = vld [vmem:[#allocation7 + $0xd38] sm:$0xff]
    %v5499 = vld [vmem:[#allocation7 + $0xd40] sm:$0xf]
    %v5500 = vld [vmem:[#allocation7 + $0xd44] sm:$0xff]
    %v5501 = vld [vmem:[#allocation7 + $0xd4c] sm:$0xf]
    %v5502 = vld [vmem:[#allocation7 + $0xd50] sm:$0xff]
    %v5503 = vld [vmem:[#allocation7 + $0xd58] sm:$0xf]
    %v5504 = vld [vmem:[#allocation7 + $0xd5c] sm:$0xff]
    %v5505 = vld [vmem:[#allocation7 + $0xd64] sm:$0xf]
    %v5506 = vld [vmem:[#allocation7 + $0xd68] sm:$0xff]
    %v5507 = vld [vmem:[#allocation7 + $0xd70] sm:$0xf]
    %v5508 = vld [vmem:[#allocation7 + $0xd74] sm:$0xff]
    %v5509 = vld [vmem:[#allocation7 + $0xd7c] sm:$0xf]
    %v5702 = vunpack.c.l.b16 %v5318
    %v5703 = vunpack.c.h.b16 %v5318
    %v5704 = vunpack.c.l.b16 %v5319
    %v5705 = vunpack.c.l.b16 %v5320
    %v5706 = vunpack.c.h.b16 %v5320
    %v5707 = vunpack.c.l.b16 %v5321
    %v5708 = vunpack.c.l.b16 %v5322
    %v5709 = vunpack.c.h.b16 %v5322
    %v5710 = vunpack.c.l.b16 %v5323
    %v5711 = vunpack.c.l.b16 %v5324
    %v5712 = vunpack.c.h.b16 %v5324
    %v5713 = vunpack.c.l.b16 %v5325
    %v5714 = vunpack.c.l.b16 %v5326
    %v5715 = vunpack.c.h.b16 %v5326
    %v5716 = vunpack.c.l.b16 %v5327
    %v5717 = vunpack.c.l.b16 %v5328
    %v5718 = vunpack.c.h.b16 %v5328
    %v5719 = vunpack.c.l.b16 %v5329
    %v5720 = vunpack.c.l.b16 %v5330
    %v5721 = vunpack.c.h.b16 %v5330
    %v5722 = vunpack.c.l.b16 %v5331
    %v5723 = vunpack.c.l.b16 %v5332
    %v5724 = vunpack.c.h.b16 %v5332
    %v5725 = vunpack.c.l.b16 %v5333
    %v5726 = vunpack.c.l.b16 %v5334
    %v5727 = vunpack.c.h.b16 %v5334
    %v5728 = vunpack.c.l.b16 %v5335
    %v5729 = vunpack.c.l.b16 %v5336
    %v5730 = vunpack.c.h.b16 %v5336
    %v5731 = vunpack.c.l.b16 %v5337
    %v5732 = vunpack.c.l.b16 %v5338
    %v5733 = vunpack.c.h.b16 %v5338
    %v5734 = vunpack.c.l.b16 %v5339
    %v5735 = vunpack.c.l.b16 %v5340
    %v5736 = vunpack.c.h.b16 %v5340
    %v5737 = vunpack.c.l.b16 %v5341
    %v5738 = vunpack.c.l.b16 %v5342
    %v5739 = vunpack.c.h.b16 %v5342
    %v5740 = vunpack.c.l.b16 %v5343
    %v5741 = vunpack.c.l.b16 %v5344
    %v5742 = vunpack.c.h.b16 %v5344
    %v5743 = vunpack.c.l.b16 %v5345
    %v5744 = vunpack.c.l.b16 %v5346
    %v5745 = vunpack.c.h.b16 %v5346
    %v5746 = vunpack.c.l.b16 %v5347
    %v5747 = vunpack.c.l.b16 %v5348
    %v5748 = vunpack.c.h.b16 %v5348
    %v5749 = vunpack.c.l.b16 %v5349
    %v5750 = vunpack.c.l.b16 %v5350
    %v5751 = vunpack.c.h.b16 %v5350
    %v5752 = vunpack.c.l.b16 %v5351
    %v5753 = vunpack.c.l.b16 %v5352
    %v5754 = vunpack.c.h.b16 %v5352
    %v5755 = vunpack.c.l.b16 %v5353
    %v5756 = vunpack.c.l.b16 %v5354
    %v5757 = vunpack.c.h.b16 %v5354
    %v5758 = vunpack.c.l.b16 %v5355
    %v5759 = vunpack.c.l.b16 %v5356
    %v5760 = vunpack.c.h.b16 %v5356
    %v5761 = vunpack.c.l.b16 %v5357
    %v5762 = vunpack.c.l.b16 %v5358
    %v5763 = vunpack.c.h.b16 %v5358
    %v5764 = vunpack.c.l.b16 %v5359
    %v5765 = vunpack.c.l.b16 %v5360
    %v5766 = vunpack.c.h.b16 %v5360
    %v5767 = vunpack.c.l.b16 %v5361
    %v5768 = vunpack.c.l.b16 %v5362
    %v5769 = vunpack.c.h.b16 %v5362
    %v5770 = vunpack.c.l.b16 %v5363
    %v5771 = vunpack.c.l.b16 %v5364
    %v5772 = vunpack.c.h.b16 %v5364
    %v5773 = vunpack.c.l.b16 %v5365
    %v5774 = vunpack.c.l.b16 %v5366
    %v5775 = vunpack.c.h.b16 %v5366
    %v5776 = vunpack.c.l.b16 %v5367
    %v5777 = vunpack.c.l.b16 %v5368
    %v5778 = vunpack.c.h.b16 %v5368
    %v5779 = vunpack.c.l.b16 %v5369
    %v5780 = vunpack.c.l.b16 %v5370
    %v5781 = vunpack.c.h.b16 %v5370
    %v5782 = vunpack.c.l.b16 %v5371
    %v5783 = vunpack.c.l.b16 %v5372
    %v5784 = vunpack.c.h.b16 %v5372
    %v5785 = vunpack.c.l.b16 %v5373
    %v5786 = vunpack.c.l.b16 %v5374
    %v5787 = vunpack.c.h.b16 %v5374
    %v5788 = vunpack.c.l.b16 %v5375
    %v5789 = vunpack.c.l.b16 %v5376
    %v5790 = vunpack.c.h.b16 %v5376
    %v5791 = vunpack.c.l.b16 %v5377
    %v5792 = vunpack.c.l.b16 %v5378
    %v5793 = vunpack.c.h.b16 %v5378
    %v5794 = vunpack.c.l.b16 %v5379
    %v5795 = vunpack.c.l.b16 %v5380
    %v5796 = vunpack.c.h.b16 %v5380
    %v5797 = vunpack.c.l.b16 %v5381
    %v5798 = vunpack.c.l.b16 %v5382
    %v5799 = vunpack.c.h.b16 %v5382
    %v5800 = vunpack.c.l.b16 %v5383
    %v5801 = vunpack.c.l.b16 %v5384
    %v5802 = vunpack.c.h.b16 %v5384
    %v5803 = vunpack.c.l.b16 %v5385
    %v5804 = vunpack.c.l.b16 %v5386
    %v5805 = vunpack.c.h.b16 %v5386
    %v5806 = vunpack.c.l.b16 %v5387
    %v5807 = vunpack.c.l.b16 %v5388
    %v5808 = vunpack.c.h.b16 %v5388
    %v5809 = vunpack.c.l.b16 %v5389
    %v5810 = vunpack.c.l.b16 %v5390
    %v5811 = vunpack.c.h.b16 %v5390
    %v5812 = vunpack.c.l.b16 %v5391
    %v5813 = vunpack.c.l.b16 %v5392
    %v5814 = vunpack.c.h.b16 %v5392
    %v5815 = vunpack.c.l.b16 %v5393
    %v5816 = vunpack.c.l.b16 %v5394
    %v5817 = vunpack.c.h.b16 %v5394
    %v5818 = vunpack.c.l.b16 %v5395
    %v5819 = vunpack.c.l.b16 %v5396
    %v5820 = vunpack.c.h.b16 %v5396
    %v5821 = vunpack.c.l.b16 %v5397
    %v5822 = vunpack.c.l.b16 %v5398
    %v5823 = vunpack.c.h.b16 %v5398
    %v5824 = vunpack.c.l.b16 %v5399
    %v5825 = vunpack.c.l.b16 %v5400
    %v5826 = vunpack.c.h.b16 %v5400
    %v5827 = vunpack.c.l.b16 %v5401
    %v5828 = vunpack.c.l.b16 %v5402
    %v5829 = vunpack.c.h.b16 %v5402
    %v5830 = vunpack.c.l.b16 %v5403
    %v5831 = vunpack.c.l.b16 %v5404
    %v5832 = vunpack.c.h.b16 %v5404
    %v5833 = vunpack.c.l.b16 %v5405
    %v5834 = vunpack.c.l.b16 %v5406
    %v5835 = vunpack.c.h.b16 %v5406
    %v5836 = vunpack.c.l.b16 %v5407
    %v5837 = vunpack.c.l.b16 %v5408
    %v5838 = vunpack.c.h.b16 %v5408
    %v5839 = vunpack.c.l.b16 %v5409
    %v5840 = vunpack.c.l.b16 %v5410
    %v5841 = vunpack.c.h.b16 %v5410
    %v5842 = vunpack.c.l.b16 %v5411
    %v5843 = vunpack.c.l.b16 %v5412
    %v5844 = vunpack.c.h.b16 %v5412
    %v5845 = vunpack.c.l.b16 %v5413
    %v5846 = vunpack.c.l.b16 %v5414
    %v5847 = vunpack.c.h.b16 %v5414
    %v5848 = vunpack.c.l.b16 %v5415
    %v5849 = vunpack.c.l.b16 %v5416
    %v5850 = vunpack.c.h.b16 %v5416
    %v5851 = vunpack.c.l.b16 %v5417
    %v5852 = vunpack.c.l.b16 %v5418
    %v5853 = vunpack.c.h.b16 %v5418
    %v5854 = vunpack.c.l.b16 %v5419
    %v5855 = vunpack.c.l.b16 %v5420
    %v5856 = vunpack.c.h.b16 %v5420
    %v5857 = vunpack.c.l.b16 %v5421
    %v5858 = vunpack.c.l.b16 %v5422
    %v5859 = vunpack.c.h.b16 %v5422
    %v5860 = vunpack.c.l.b16 %v5423
    %v5861 = vunpack.c.l.b16 %v5424
    %v5862 = vunpack.c.h.b16 %v5424
    %v5863 = vunpack.c.l.b16 %v5425
    %v5864 = vunpack.c.l.b16 %v5426
    %v5865 = vunpack.c.h.b16 %v5426
    %v5866 = vunpack.c.l.b16 %v5427
    %v5867 = vunpack.c.l.b16 %v5428
    %v5868 = vunpack.c.h.b16 %v5428
    %v5869 = vunpack.c.l.b16 %v5429
    %v5870 = vunpack.c.l.b16 %v5430
    %v5871 = vunpack.c.h.b16 %v5430
    %v5872 = vunpack.c.l.b16 %v5431
    %v5873 = vunpack.c.l.b16 %v5432
    %v5874 = vunpack.c.h.b16 %v5432
    %v5875 = vunpack.c.l.b16 %v5433
    %v5876 = vunpack.c.l.b16 %v5434
    %v5877 = vunpack.c.h.b16 %v5434
    %v5878 = vunpack.c.l.b16 %v5435
    %v5879 = vunpack.c.l.b16 %v5436
    %v5880 = vunpack.c.h.b16 %v5436
    %v5881 = vunpack.c.l.b16 %v5437
    %v5882 = vunpack.c.l.b16 %v5438
    %v5883 = vunpack.c.h.b16 %v5438
    %v5884 = vunpack.c.l.b16 %v5439
    %v5885 = vunpack.c.l.b16 %v5440
    %v5886 = vunpack.c.h.b16 %v5440
    %v5887 = vunpack.c.l.b16 %v5441
    %v5888 = vunpack.c.l.b16 %v5442
    %v5889 = vunpack.c.h.b16 %v5442
    %v5890 = vunpack.c.l.b16 %v5443
    %v5891 = vunpack.c.l.b16 %v5444
    %v5892 = vunpack.c.h.b16 %v5444
    %v5893 = vunpack.c.l.b16 %v5445
    %v5894 = vunpack.c.l.b16 %v5446
    %v5895 = vunpack.c.h.b16 %v5446
    %v5896 = vunpack.c.l.b16 %v5447
    %v5897 = vunpack.c.l.b16 %v5448
    %v5898 = vunpack.c.h.b16 %v5448
    %v5899 = vunpack.c.l.b16 %v5449
    %v5900 = vunpack.c.l.b16 %v5450
    %v5901 = vunpack.c.h.b16 %v5450
    %v5902 = vunpack.c.l.b16 %v5451
    %v5903 = vunpack.c.l.b16 %v5452
    %v5904 = vunpack.c.h.b16 %v5452
    %v5905 = vunpack.c.l.b16 %v5453
    %v5906 = vunpack.c.l.b16 %v5454
    %v5907 = vunpack.c.h.b16 %v5454
    %v5908 = vunpack.c.l.b16 %v5455
    %v5909 = vunpack.c.l.b16 %v5456
    %v5910 = vunpack.c.h.b16 %v5456
    %v5911 = vunpack.c.l.b16 %v5457
    %v5912 = vunpack.c.l.b16 %v5458
    %v5913 = vunpack.c.h.b16 %v5458
    %v5914 = vunpack.c.l.b16 %v5459
    %v5915 = vunpack.c.l.b16 %v5460
    %v5916 = vunpack.c.h.b16 %v5460
    %v5917 = vunpack.c.l.b16 %v5461
    %v5918 = vunpack.c.l.b16 %v5462
    %v5919 = vunpack.c.h.b16 %v5462
    %v5920 = vunpack.c.l.b16 %v5463
    %v5921 = vunpack.c.l.b16 %v5464
    %v5922 = vunpack.c.h.b16 %v5464
    %v5923 = vunpack.c.l.b16 %v5465
    %v5924 = vunpack.c.l.b16 %v5466
    %v5925 = vunpack.c.h.b16 %v5466
    %v5926 = vunpack.c.l.b16 %v5467
    %v5927 = vunpack.c.l.b16 %v5468
    %v5928 = vunpack.c.h.b16 %v5468
    %v5929 = vunpack.c.l.b16 %v5469
    %v5930 = vunpack.c.l.b16 %v5470
    %v5931 = vunpack.c.h.b16 %v5470
    %v5932 = vunpack.c.l.b16 %v5471
    %v5933 = vunpack.c.l.b16 %v5472
    %v5934 = vunpack.c.h.b16 %v5472
    %v5935 = vunpack.c.l.b16 %v5473
    %v5936 = vunpack.c.l.b16 %v5474
    %v5937 = vunpack.c.h.b16 %v5474
    %v5938 = vunpack.c.l.b16 %v5475
    %v5939 = vunpack.c.l.b16 %v5476
    %v5940 = vunpack.c.h.b16 %v5476
    %v5941 = vunpack.c.l.b16 %v5477
    %v5942 = vunpack.c.l.b16 %v5478
    %v5943 = vunpack.c.h.b16 %v5478
    %v5944 = vunpack.c.l.b16 %v5479
    %v5945 = vunpack.c.l.b16 %v5480
    %v5946 = vunpack.c.h.b16 %v5480
    %v5947 = vunpack.c.l.b16 %v5481
    %v5948 = vunpack.c.l.b16 %v5482
    %v5949 = vunpack.c.h.b16 %v5482
    %v5950 = vunpack.c.l.b16 %v5483
    %v5951 = vunpack.c.l.b16 %v5484
    %v5952 = vunpack.c.h.b16 %v5484
    %v5953 = vunpack.c.l.b16 %v5485
    %v5954 = vunpack.c.l.b16 %v5486
    %v5955 = vunpack.c.h.b16 %v5486
    %v5956 = vunpack.c.l.b16 %v5487
    %v5957 = vunpack.c.l.b16 %v5488
    %v5958 = vunpack.c.h.b16 %v5488
    %v5959 = vunpack.c.l.b16 %v5489
    %v5960 = vunpack.c.l.b16 %v5490
    %v5961 = vunpack.c.h.b16 %v5490
    %v5962 = vunpack.c.l.b16 %v5491
    %v5963 = vunpack.c.l.b16 %v5492
    %v5964 = vunpack.c.h.b16 %v5492
    %v5965 = vunpack.c.l.b16 %v5493
    %v5966 = vunpack.c.l.b16 %v5494
    %v5967 = vunpack.c.h.b16 %v5494
    %v5968 = vunpack.c.l.b16 %v5495
    %v5969 = vunpack.c.l.b16 %v5496
    %v5970 = vunpack.c.h.b16 %v5496
    %v5971 = vunpack.c.l.b16 %v5497
    %v5972 = vunpack.c.l.b16 %v5498
    %v5973 = vunpack.c.h.b16 %v5498
    %v5974 = vunpack.c.l.b16 %v5499
    %v5975 = vunpack.c.l.b16 %v5500
    %v5976 = vunpack.c.h.b16 %v5500
    %v5977 = vunpack.c.l.b16 %v5501
    %v5978 = vunpack.c.l.b16 %v5502
    %v5979 = vunpack.c.h.b16 %v5502
    %v5980 = vunpack.c.l.b16 %v5503
    %v5981 = vunpack.c.l.b16 %v5504
    %v5982 = vunpack.c.h.b16 %v5504
    %v5983 = vunpack.c.l.b16 %v5505
    %v5984 = vunpack.c.l.b16 %v5506
    %v5985 = vunpack.c.h.b16 %v5506
    %v5986 = vunpack.c.l.b16 %v5507
    %v5987 = vunpack.c.l.b16 %v5508
    %v5988 = vunpack.c.h.b16 %v5508
    %v5989 = vunpack.c.l.b16 %v5509
    %v5990 = vpack.c.b16 %v5705, %v5702
    %v5991 = vpack.c.b16 %v5706, %v5703
    %v5992 = vpack.c.b16 %v5707, %v5704
    %v5993 = vpack.c.b16 %v5711, %v5708
    %v5994 = vpack.c.b16 %v5712, %v5709
    %v5995 = vpack.c.b16 %v5713, %v5710
    %v5996 = vpack.c.b16 %v5717, %v5714
    %v5997 = vpack.c.b16 %v5718, %v5715
    %v5998 = vpack.c.b16 %v5719, %v5716
    %v5999 = vpack.c.b16 %v5723, %v5720
    %v6000 = vpack.c.b16 %v5724, %v5721
    %v6001 = vpack.c.b16 %v5725, %v5722
    %v6002 = vpack.c.b16 %v5729, %v5726
    %v6003 = vpack.c.b16 %v5730, %v5727
    %v6004 = vpack.c.b16 %v5731, %v5728
    %v6005 = vpack.c.b16 %v5735, %v5732
    %v6006 = vpack.c.b16 %v5736, %v5733
    %v6007 = vpack.c.b16 %v5737, %v5734
    %v6008 = vpack.c.b16 %v5741, %v5738
    %v6009 = vpack.c.b16 %v5742, %v5739
    %v6010 = vpack.c.b16 %v5743, %v5740
    %v6011 = vpack.c.b16 %v5747, %v5744
    %v6012 = vpack.c.b16 %v5748, %v5745
    %v6013 = vpack.c.b16 %v5749, %v5746
    %v6014 = vpack.c.b16 %v5753, %v5750
    %v6015 = vpack.c.b16 %v5754, %v5751
    %v6016 = vpack.c.b16 %v5755, %v5752
    %v6017 = vpack.c.b16 %v5759, %v5756
    %v6018 = vpack.c.b16 %v5760, %v5757
    %v6019 = vpack.c.b16 %v5761, %v5758
    %v6020 = vpack.c.b16 %v5765, %v5762
    %v6021 = vpack.c.b16 %v5766, %v5763
    %v6022 = vpack.c.b16 %v5767, %v5764
    %v6023 = vpack.c.b16 %v5771, %v5768
    %v6024 = vpack.c.b16 %v5772, %v5769
    %v6025 = vpack.c.b16 %v5773, %v5770
    %v6026 = vpack.c.b16 %v5777, %v5774
    %v6027 = vpack.c.b16 %v5778, %v5775
    %v6028 = vpack.c.b16 %v5779, %v5776
    %v6029 = vpack.c.b16 %v5783, %v5780
    %v6030 = vpack.c.b16 %v5784, %v5781
    %v6031 = vpack.c.b16 %v5785, %v5782
    %v6032 = vpack.c.b16 %v5789, %v5786
    %v6033 = vpack.c.b16 %v5790, %v5787
    %v6034 = vpack.c.b16 %v5791, %v5788
    %v6035 = vpack.c.b16 %v5795, %v5792
    %v6036 = vpack.c.b16 %v5796, %v5793
    %v6037 = vpack.c.b16 %v5797, %v5794
    %v6038 = vpack.c.b16 %v5801, %v5798
    %v6039 = vpack.c.b16 %v5802, %v5799
    %v6040 = vpack.c.b16 %v5803, %v5800
    %v6041 = vpack.c.b16 %v5807, %v5804
    %v6042 = vpack.c.b16 %v5808, %v5805
    %v6043 = vpack.c.b16 %v5809, %v5806
    %v6044 = vpack.c.b16 %v5813, %v5810
    %v6045 = vpack.c.b16 %v5814, %v5811
    %v6046 = vpack.c.b16 %v5815, %v5812
    %v6047 = vpack.c.b16 %v5819, %v5816
    %v6048 = vpack.c.b16 %v5820, %v5817
    %v6049 = vpack.c.b16 %v5821, %v5818
    %v6050 = vpack.c.b16 %v5825, %v5822
    %v6051 = vpack.c.b16 %v5826, %v5823
    %v6052 = vpack.c.b16 %v5827, %v5824
    %v6053 = vpack.c.b16 %v5831, %v5828
    %v6054 = vpack.c.b16 %v5832, %v5829
    %v6055 = vpack.c.b16 %v5833, %v5830
    %v6056 = vpack.c.b16 %v5837, %v5834
    %v6057 = vpack.c.b16 %v5838, %v5835
    %v6058 = vpack.c.b16 %v5839, %v5836
    %v6059 = vpack.c.b16 %v5843, %v5840
    %v6060 = vpack.c.b16 %v5844, %v5841
    %v6061 = vpack.c.b16 %v5845, %v5842
    %v6062 = vpack.c.b16 %v5849, %v5846
    %v6063 = vpack.c.b16 %v5850, %v5847
    %v6064 = vpack.c.b16 %v5851, %v5848
    %v6065 = vpack.c.b16 %v5855, %v5852
    %v6066 = vpack.c.b16 %v5856, %v5853
    %v6067 = vpack.c.b16 %v5857, %v5854
    %v6068 = vpack.c.b16 %v5861, %v5858
    %v6069 = vpack.c.b16 %v5862, %v5859
    %v6070 = vpack.c.b16 %v5863, %v5860
    %v6071 = vpack.c.b16 %v5867, %v5864
    %v6072 = vpack.c.b16 %v5868, %v5865
    %v6073 = vpack.c.b16 %v5869, %v5866
    %v6074 = vpack.c.b16 %v5873, %v5870
    %v6075 = vpack.c.b16 %v5874, %v5871
    %v6076 = vpack.c.b16 %v5875, %v5872
    %v6077 = vpack.c.b16 %v5879, %v5876
    %v6078 = vpack.c.b16 %v5880, %v5877
    %v6079 = vpack.c.b16 %v5881, %v5878
    %v6080 = vpack.c.b16 %v5885, %v5882
    %v6081 = vpack.c.b16 %v5886, %v5883
    %v6082 = vpack.c.b16 %v5887, %v5884
    %v6083 = vpack.c.b16 %v5891, %v5888
    %v6084 = vpack.c.b16 %v5892, %v5889
    %v6085 = vpack.c.b16 %v5893, %v5890
    %v6086 = vpack.c.b16 %v5897, %v5894
    %v6087 = vpack.c.b16 %v5898, %v5895
    %v6088 = vpack.c.b16 %v5899, %v5896
    %v6089 = vpack.c.b16 %v5903, %v5900
    %v6090 = vpack.c.b16 %v5904, %v5901
    %v6091 = vpack.c.b16 %v5905, %v5902
    %v6092 = vpack.c.b16 %v5909, %v5906
    %v6093 = vpack.c.b16 %v5910, %v5907
    %v6094 = vpack.c.b16 %v5911, %v5908
    %v6095 = vpack.c.b16 %v5915, %v5912
    %v6096 = vpack.c.b16 %v5916, %v5913
    %v6097 = vpack.c.b16 %v5917, %v5914
    %v6098 = vpack.c.b16 %v5921, %v5918
    %v6099 = vpack.c.b16 %v5922, %v5919
    %v6100 = vpack.c.b16 %v5923, %v5920
    %v6101 = vpack.c.b16 %v5927, %v5924
    %v6102 = vpack.c.b16 %v5928, %v5925
    %v6103 = vpack.c.b16 %v5929, %v5926
    %v6104 = vpack.c.b16 %v5933, %v5930
    %v6105 = vpack.c.b16 %v5934, %v5931
    %v6106 = vpack.c.b16 %v5935, %v5932
    %v6107 = vpack.c.b16 %v5939, %v5936
    %v6108 = vpack.c.b16 %v5940, %v5937
    %v6109 = vpack.c.b16 %v5941, %v5938
    %v6110 = vpack.c.b16 %v5945, %v5942
    %v6111 = vpack.c.b16 %v5946, %v5943
    %v6112 = vpack.c.b16 %v5947, %v5944
    %v6113 = vpack.c.b16 %v5951, %v5948
    %v6114 = vpack.c.b16 %v5952, %v5949
    %v6115 = vpack.c.b16 %v5953, %v5950
    %v6116 = vpack.c.b16 %v5957, %v5954
    %v6117 = vpack.c.b16 %v5958, %v5955
    %v6118 = vpack.c.b16 %v5959, %v5956
    %v6119 = vpack.c.b16 %v5963, %v5960
    %v6120 = vpack.c.b16 %v5964, %v5961
    %v6121 = vpack.c.b16 %v5965, %v5962
    %v6122 = vpack.c.b16 %v5969, %v5966
    %v6123 = vpack.c.b16 %v5970, %v5967
    %v6124 = vpack.c.b16 %v5971, %v5968
    %v6125 = vpack.c.b16 %v5975, %v5972
    %v6126 = vpack.c.b16 %v5976, %v5973
    %v6127 = vpack.c.b16 %v5977, %v5974
    %v6128 = vpack.c.b16 %v5981, %v5978
    %v6129 = vpack.c.b16 %v5982, %v5979
    %v6130 = vpack.c.b16 %v5983, %v5980
    %v6131 = vpack.c.b16 %v5987, %v5984
    %v6132 = vpack.c.b16 %v5988, %v5985
    %v6133 = vpack.c.b16 %v5989, %v5986
    %6278 = vmatprep.subr.bf16.mxu0 %v6012
    %6279 = vmatpush1.bf16.msra.mxu0 %v6011
    %6280 = vmatprep.subr.bf16.mxu0 %v6009
    %6281 = vmatpush1.bf16.msra.mxu0 %v6008
    %6282 = vmatprep.subr.bf16.mxu0 %v6006
    %6283 = vmatpush1.bf16.msra.mxu0 %v6005
    %6284 = vmatprep.subr.bf16.mxu0 %v6003
    %6285 = vmatpush1.bf16.msra.mxu0 %v6002
    %6286 = vmatprep.subr.bf16.mxu0 %v6000
    %6287 = vmatpush1.bf16.msra.mxu0 %v5999
    %6288 = vmatprep.subr.bf16.mxu0 %v5997
    %6289 = vmatpush1.bf16.msra.mxu0 %v5996
    %6290 = vmatprep.subr.bf16.mxu0 %v5994
    %6291 = vmatpush1.bf16.msra.mxu0 %v5993
    %6292 = vmatprep.subr.bf16.mxu0 %v5991
    %6293 = vmatpush1.bf16.msra.mxu0 %v5990
    %6294 = vmatprep.subr.bf16.mxu0 %v6036
    %6295 = vmatpush2.bf16.msra.mxu0 %v6035
    %6296 = vmatprep.subr.bf16.mxu0 %v6033
    %6297 = vmatpush2.bf16.msra.mxu0 %v6032
    %6298 = vmatprep.subr.bf16.mxu0 %v6030
    %6299 = vmatpush2.bf16.msra.mxu0 %v6029
    %6300 = vmatprep.subr.bf16.mxu0 %v6027
    %6301 = vmatpush2.bf16.msra.mxu0 %v6026
    %6302 = vmatprep.subr.bf16.mxu0 %v6024
    %6303 = vmatpush2.bf16.msra.mxu0 %v6023
    %6304 = vmatprep.subr.bf16.mxu0 %v6021
    %6305 = vmatpush2.bf16.msra.mxu0 %v6020
    %6306 = vmatprep.subr.bf16.mxu0 %v6018
    %6307 = vmatpush2.bf16.msra.mxu0 %v6017
    %6308 = vmatprep.subr.bf16.mxu0 %v6015
    %6309 = vmatpush2.bf16.msra.mxu0 %v6014
    %6310 = vmatprep.mubr.bf16.mxu0 %v5313
    %6311 = vmatmul.mubr.bf16.gmra.mxu0 %v5312
    %v6312 = vpop.f32.mrf.mxu0
    %v6313 = vadd.f32 0.0, %v6312
    %v6314 = vpop.f32.mrf.mxu0
    %v6315 = vadd.f32 0.0, %v6314
    %v6316 = vpop.f32.mrf.mxu0
    %v6317 = vpop.f32.mrf.mxu0
    %6318 = vdwg.mxu0
    %6319 = vmatprep.subr.bf16.mxu0 %v6060
    %6320 = vmatpush1.bf16.msra.mxu0 %v6059
    %6321 = vmatprep.subr.bf16.mxu0 %v6057
    %6322 = vmatpush1.bf16.msra.mxu0 %v6056
    %6323 = vmatprep.subr.bf16.mxu0 %v6054
    %6324 = vmatpush1.bf16.msra.mxu0 %v6053
    %6325 = vmatprep.subr.bf16.mxu0 %v6051
    %6326 = vmatpush1.bf16.msra.mxu0 %v6050
    %6327 = vmatprep.subr.bf16.mxu0 %v6048
    %6328 = vmatpush1.bf16.msra.mxu0 %v6047
    %6329 = vmatprep.subr.bf16.mxu0 %v6045
    %6330 = vmatpush1.bf16.msra.mxu0 %v6044
    %6331 = vmatprep.subr.bf16.mxu0 %v6042
    %6332 = vmatpush1.bf16.msra.mxu0 %v6041
    %6333 = vmatprep.subr.bf16.mxu0 %v6039
    %6334 = vmatpush1.bf16.msra.mxu0 %v6038
    %6335 = vmatprep.subr.bf16.mxu0 %v6084
    %6336 = vmatpush2.bf16.msra.mxu0 %v6083
    %6337 = vmatprep.subr.bf16.mxu0 %v6081
    %6338 = vmatpush2.bf16.msra.mxu0 %v6080
    %6339 = vmatprep.subr.bf16.mxu0 %v6078
    %6340 = vmatpush2.bf16.msra.mxu0 %v6077
    %6341 = vmatprep.subr.bf16.mxu0 %v6075
    %6342 = vmatpush2.bf16.msra.mxu0 %v6074
    %6343 = vmatprep.subr.bf16.mxu0 %v6072
    %6344 = vmatpush2.bf16.msra.mxu0 %v6071
    %6345 = vmatprep.subr.bf16.mxu0 %v6069
    %6346 = vmatpush2.bf16.msra.mxu0 %v6068
    %6347 = vmatprep.subr.bf16.mxu0 %v6066
    %6348 = vmatpush2.bf16.msra.mxu0 %v6065
    %6349 = vmatprep.subr.bf16.mxu0 %v6063
    %6350 = vmatpush2.bf16.msra.mxu0 %v6062
    %6351 = vmatprep.mubr.bf16.mxu0 %v5315
    %6352 = vmatmul.mubr.bf16.gmra.mxu0 %v5314
    %v6353 = vpop.f32.mrf.mxu0
    %v6354 = vadd.f32 %v6313, %v6353
    %v6355 = vpop.f32.mrf.mxu0
    %v6356 = vadd.f32 %v6315, %v6355
    %v6357 = vpop.f32.mrf.mxu0
    %v6358 = vpop.f32.mrf.mxu0
    %6359 = vdwg.mxu0
    %6360 = vmatprep.subr.bf16.mxu0 %v6108
    %6361 = vmatpush1.bf16.msra.mxu0 %v6107
    %6362 = vmatprep.subr.bf16.mxu0 %v6105
    %6363 = vmatpush1.bf16.msra.mxu0 %v6104
    %6364 = vmatprep.subr.bf16.mxu0 %v6102
    %6365 = vmatpush1.bf16.msra.mxu0 %v6101
    %6366 = vmatprep.subr.bf16.mxu0 %v6099
    %6367 = vmatpush1.bf16.msra.mxu0 %v6098
    %6368 = vmatprep.subr.bf16.mxu0 %v6096
    %6369 = vmatpush1.bf16.msra.mxu0 %v6095
    %6370 = vmatprep.subr.bf16.mxu0 %v6093
    %6371 = vmatpush1.bf16.msra.mxu0 %v6092
    %6372 = vmatprep.subr.bf16.mxu0 %v6090
    %6373 = vmatpush1.bf16.msra.mxu0 %v6089
    %6374 = vmatprep.subr.bf16.mxu0 %v6087
    %6375 = vmatpush1.bf16.msra.mxu0 %v6086
    %6376 = vmatprep.subr.bf16.mxu0 %v6132
    %6377 = vmatpush2.bf16.msra.mxu0 %v6131
    %6378 = vmatprep.subr.bf16.mxu0 %v6129
    %6379 = vmatpush2.bf16.msra.mxu0 %v6128
    %6380 = vmatprep.subr.bf16.mxu0 %v6126
    %6381 = vmatpush2.bf16.msra.mxu0 %v6125
    %6382 = vmatprep.subr.bf16.mxu0 %v6123
    %6383 = vmatpush2.bf16.msra.mxu0 %v6122
    %6384 = vmatprep.subr.bf16.mxu0 %v6120
    %6385 = vmatpush2.bf16.msra.mxu0 %v6119
    %6386 = vmatprep.subr.bf16.mxu0 %v6117
    %6387 = vmatpush2.bf16.msra.mxu0 %v6116
    %6388 = vmatprep.subr.bf16.mxu0 %v6114
    %6389 = vmatpush2.bf16.msra.mxu0 %v6113
    %6390 = vmatprep.subr.bf16.mxu0 %v6111
    %6391 = vmatpush2.bf16.msra.mxu0 %v6110
    %6392 = vmatprep.mubr.bf16.mxu0 %v5317
    %6393 = vmatmul.mubr.bf16.gmra.mxu0 %v5316
    %v6394 = vpop.f32.mrf.mxu0
    %v6395 = vadd.f32 %v6354, %v6394
    %v6396 = vpop.f32.mrf.mxu0
    %v6397 = vadd.f32 %v6356, %v6396
    %v6398 = vpop.f32.mrf.mxu0
    %v6399 = vpop.f32.mrf.mxu0
    %6400 = vdwg.mxu0
    %6401 = vmatprep.subr.bf16.mxu0 0
    %6402 = vmatpush1.bf16.msra.mxu0 %v6013
    %6403 = vmatprep.subr.bf16.mxu0 0
    %6404 = vmatpush1.bf16.msra.mxu0 %v6010
    %6405 = vmatprep.subr.bf16.mxu0 0
    %6406 = vmatpush1.bf16.msra.mxu0 %v6007
    %6407 = vmatprep.subr.bf16.mxu0 0
    %6408 = vmatpush1.bf16.msra.mxu0 %v6004
    %6409 = vmatprep.subr.bf16.mxu0 0
    %6410 = vmatpush1.bf16.msra.mxu0 %v6001
    %6411 = vmatprep.subr.bf16.mxu0 0
    %6412 = vmatpush1.bf16.msra.mxu0 %v5998
    %6413 = vmatprep.subr.bf16.mxu0 0
    %6414 = vmatpush1.bf16.msra.mxu0 %v5995
    %6415 = vmatprep.subr.bf16.mxu0 0
    %6416 = vmatpush1.bf16.msra.mxu0 %v5992
    %6417 = vmatprep.subr.bf16.mxu0 0
    %6418 = vmatpush2.bf16.msra.mxu0 %v6037
    %6419 = vmatprep.subr.bf16.mxu0 0
    %6420 = vmatpush2.bf16.msra.mxu0 %v6034
    %6421 = vmatprep.subr.bf16.mxu0 0
    %6422 = vmatpush2.bf16.msra.mxu0 %v6031
    %6423 = vmatprep.subr.bf16.mxu0 0
    %6424 = vmatpush2.bf16.msra.mxu0 %v6028
    %6425 = vmatprep.subr.bf16.mxu0 0
    %6426 = vmatpush2.bf16.msra.mxu0 %v6025
    %6427 = vmatprep.subr.bf16.mxu0 0
    %6428 = vmatpush2.bf16.msra.mxu0 %v6022
    %6429 = vmatprep.subr.bf16.mxu0 0
    %6430 = vmatpush2.bf16.msra.mxu0 %v6019
    %6431 = vmatprep.subr.bf16.mxu0 0
    %6432 = vmatpush2.bf16.msra.mxu0 %v6016
    %6433 = vmatprep.mubr.bf16.mxu0 %v5313
    %6434 = vmatmul.mubr.bf16.gmra.mxu0 %v5312
    %v6435 = vpop.f32.mrf.mxu0
    %v6436 = vadd.f32 0.0, %v6435
    %v6437 = vpop.f32.mrf.mxu0
    %v6438 = vpop.f32.mrf.mxu0
    %v6439 = vpop.f32.mrf.mxu0
    %6440 = vdwg.mxu0
    %6441 = vmatprep.subr.bf16.mxu0 0
    %6442 = vmatpush1.bf16.msra.mxu0 %v6061
    %6443 = vmatprep.subr.bf16.mxu0 0
    %6444 = vmatpush1.bf16.msra.mxu0 %v6058
    %6445 = vmatprep.subr.bf16.mxu0 0
    %6446 = vmatpush1.bf16.msra.mxu0 %v6055
    %6447 = vmatprep.subr.bf16.mxu0 0
    %6448 = vmatpush1.bf16.msra.mxu0 %v6052
    %6449 = vmatprep.subr.bf16.mxu0 0
    %6450 = vmatpush1.bf16.msra.mxu0 %v6049
    %6451 = vmatprep.subr.bf16.mxu0 0
    %6452 = vmatpush1.bf16.msra.mxu0 %v6046
    %6453 = vmatprep.subr.bf16.mxu0 0
    %6454 = vmatpush1.bf16.msra.mxu0 %v6043
    %6455 = vmatprep.subr.bf16.mxu0 0
    %6456 = vmatpush1.bf16.msra.mxu0 %v6040
    %6457 = vmatprep.subr.bf16.mxu0 0
    %6458 = vmatpush2.bf16.msra.mxu0 %v6085
    %6459 = vmatprep.subr.bf16.mxu0 0
    %6460 = vmatpush2.bf16.msra.mxu0 %v6082
    %6461 = vmatprep.subr.bf16.mxu0 0
    %6462 = vmatpush2.bf16.msra.mxu0 %v6079
    %6463 = vmatprep.subr.bf16.mxu0 0
    %6464 = vmatpush2.bf16.msra.mxu0 %v6076
    %6465 = vmatprep.subr.bf16.mxu0 0
    %6466 = vmatpush2.bf16.msra.mxu0 %v6073
    %6467 = vmatprep.subr.bf16.mxu0 0
    %6468 = vmatpush2.bf16.msra.mxu0 %v6070
    %6469 = vmatprep.subr.bf16.mxu0 0
    %6470 = vmatpush2.bf16.msra.mxu0 %v6067
    %6471 = vmatprep.subr.bf16.mxu0 0
    %6472 = vmatpush2.bf16.msra.mxu0 %v6064
    %6473 = vmatprep.mubr.bf16.mxu0 %v5315
    %6474 = vmatmul.mubr.bf16.gmra.mxu0 %v5314
    %v6475 = vpop.f32.mrf.mxu0
    %v6476 = vadd.f32 %v6436, %v6475
    %v6477 = vpop.f32.mrf.mxu0
    %v6478 = vpop.f32.mrf.mxu0
    %v6479 = vpop.f32.mrf.mxu0
    %6480 = vdwg.mxu0
    %6481 = vmatprep.subr.bf16.mxu0 0
    %6482 = vmatpush1.bf16.msra.mxu0 %v6109
    %6483 = vmatprep.subr.bf16.mxu0 0
    %6484 = vmatpush1.bf16.msra.mxu0 %v6106
    %6485 = vmatprep.subr.bf16.mxu0 0
    %6486 = vmatpush1.bf16.msra.mxu0 %v6103
    %6487 = vmatprep.subr.bf16.mxu0 0
    %6488 = vmatpush1.bf16.msra.mxu0 %v6100
    %6489 = vmatprep.subr.bf16.mxu0 0
    %6490 = vmatpush1.bf16.msra.mxu0 %v6097
    %6491 = vmatprep.subr.bf16.mxu0 0
    %6492 = vmatpush1.bf16.msra.mxu0 %v6094
    %6493 = vmatprep.subr.bf16.mxu0 0
    %6494 = vmatpush1.bf16.msra.mxu0 %v6091
    %6495 = vmatprep.subr.bf16.mxu0 0
    %6496 = vmatpush1.bf16.msra.mxu0 %v6088
    %6497 = vmatprep.subr.bf16.mxu0 0
    %6498 = vmatpush2.bf16.msra.mxu0 %v6133
    %6499 = vmatprep.subr.bf16.mxu0 0
    %6500 = vmatpush2.bf16.msra.mxu0 %v6130
    %6501 = vmatprep.subr.bf16.mxu0 0
    %6502 = vmatpush2.bf16.msra.mxu0 %v6127
    %6503 = vmatprep.subr.bf16.mxu0 0
    %6504 = vmatpush2.bf16.msra.mxu0 %v6124
    %6505 = vmatprep.subr.bf16.mxu0 0
    %6506 = vmatpush2.bf16.msra.mxu0 %v6121
    %6507 = vmatprep.subr.bf16.mxu0 0
    %6508 = vmatpush2.bf16.msra.mxu0 %v6118
    %6509 = vmatprep.subr.bf16.mxu0 0
    %6510 = vmatpush2.bf16.msra.mxu0 %v6115
    %6511 = vmatprep.subr.bf16.mxu0 0
    %6512 = vmatpush2.bf16.msra.mxu0 %v6112
    %6513 = vmatprep.mubr.bf16.mxu0 %v5317
    %6514 = vmatmul.mubr.bf16.gmra.mxu0 %v5316
    %v6515 = vpop.f32.mrf.mxu0
    %v6516 = vadd.f32 %v6476, %v6515
    %v6517 = vpop.f32.mrf.mxu0
    %v6518 = vpop.f32.mrf.mxu0
    %v6519 = vpop.f32.mrf.mxu0
    %6520 = vdwg.mxu0
    %v6521 = vadd.f32 %v5288, %v6395
    %v6522 = vadd.f32 %v5289, %v6397
    %v6523 = vadd.f32 %v5290, %v6516
    %v6524 = vld [vmem:[#allocation8 + $0x900] sm:$0xff]
    %v6525 = vld [vmem:[#allocation8 + $0x908] sm:$0xf]
    %v6526 = vld [vmem:[#allocation8 + $0x90c] sm:$0xff]
    %v6527 = vld [vmem:[#allocation8 + $0x914] sm:$0xf]
    %v6528 = vld [vmem:[#allocation8 + $0x918] sm:$0xff]
    %v6529 = vld [vmem:[#allocation8 + $0x920] sm:$0xf]
    %v6530 = vld [vmem:[#allocation8 + $0x924] sm:$0xff]
    %v6531 = vld [vmem:[#allocation8 + $0x92c] sm:$0xf]
    %v6532 = vld [vmem:[#allocation8 + $0x930] sm:$0xff]
    %v6533 = vld [vmem:[#allocation8 + $0x938] sm:$0xf]
    %v6534 = vld [vmem:[#allocation8 + $0x93c] sm:$0xff]
    %v6535 = vld [vmem:[#allocation8 + $0x944] sm:$0xf]
    %v6536 = vld [vmem:[#allocation8 + $0x948] sm:$0xff]
    %v6537 = vld [vmem:[#allocation8 + $0x950] sm:$0xf]
    %v6538 = vld [vmem:[#allocation8 + $0x954] sm:$0xff]
    %v6539 = vld [vmem:[#allocation8 + $0x95c] sm:$0xf]
    %v6540 = vld [vmem:[#allocation8 + $0x960] sm:$0xff]
    %v6541 = vld [vmem:[#allocation8 + $0x968] sm:$0xf]
    %v6542 = vld [vmem:[#allocation8 + $0x96c] sm:$0xff]
    %v6543 = vld [vmem:[#allocation8 + $0x974] sm:$0xf]
    %v6544 = vld [vmem:[#allocation8 + $0x978] sm:$0xff]
    %v6545 = vld [vmem:[#allocation8 + $0x980] sm:$0xf]
    %v6546 = vld [vmem:[#allocation8 + $0x984] sm:$0xff]
    %v6547 = vld [vmem:[#allocation8 + $0x98c] sm:$0xf]
    %v6548 = vld [vmem:[#allocation8 + $0x990] sm:$0xff]
    %v6549 = vld [vmem:[#allocation8 + $0x998] sm:$0xf]
    %v6550 = vld [vmem:[#allocation8 + $0x99c] sm:$0xff]
    %v6551 = vld [vmem:[#allocation8 + $0x9a4] sm:$0xf]
    %v6552 = vld [vmem:[#allocation8 + $0x9a8] sm:$0xff]
    %v6553 = vld [vmem:[#allocation8 + $0x9b0] sm:$0xf]
    %v6554 = vld [vmem:[#allocation8 + $0x9b4] sm:$0xff]
    %v6555 = vld [vmem:[#allocation8 + $0x9bc] sm:$0xf]
    %v6556 = vld [vmem:[#allocation8 + $0x9c0] sm:$0xff]
    %v6557 = vld [vmem:[#allocation8 + $0x9c8] sm:$0xf]
    %v6558 = vld [vmem:[#allocation8 + $0x9cc] sm:$0xff]
    %v6559 = vld [vmem:[#allocation8 + $0x9d4] sm:$0xf]
    %v6560 = vld [vmem:[#allocation8 + $0x9d8] sm:$0xff]
    %v6561 = vld [vmem:[#allocation8 + $0x9e0] sm:$0xf]
    %v6562 = vld [vmem:[#allocation8 + $0x9e4] sm:$0xff]
    %v6563 = vld [vmem:[#allocation8 + $0x9ec] sm:$0xf]
    %v6564 = vld [vmem:[#allocation8 + $0x9f0] sm:$0xff]
    %v6565 = vld [vmem:[#allocation8 + $0x9f8] sm:$0xf]
    %v6566 = vld [vmem:[#allocation8 + $0x9fc] sm:$0xff]
    %v6567 = vld [vmem:[#allocation8 + $0xa04] sm:$0xf]
    %v6568 = vld [vmem:[#allocation8 + $0xa08] sm:$0xff]
    %v6569 = vld [vmem:[#allocation8 + $0xa10] sm:$0xf]
    %v6570 = vld [vmem:[#allocation8 + $0xa14] sm:$0xff]
    %v6571 = vld [vmem:[#allocation8 + $0xa1c] sm:$0xf]
    %v6572 = vld [vmem:[#allocation8 + $0xa20] sm:$0xff]
    %v6573 = vld [vmem:[#allocation8 + $0xa28] sm:$0xf]
    %v6574 = vld [vmem:[#allocation8 + $0xa2c] sm:$0xff]
    %v6575 = vld [vmem:[#allocation8 + $0xa34] sm:$0xf]
    %v6576 = vld [vmem:[#allocation8 + $0xa38] sm:$0xff]
    %v6577 = vld [vmem:[#allocation8 + $0xa40] sm:$0xf]
    %v6578 = vld [vmem:[#allocation8 + $0xa44] sm:$0xff]
    %v6579 = vld [vmem:[#allocation8 + $0xa4c] sm:$0xf]
    %v6580 = vld [vmem:[#allocation8 + $0xa50] sm:$0xff]
    %v6581 = vld [vmem:[#allocation8 + $0xa58] sm:$0xf]
    %v6582 = vld [vmem:[#allocation8 + $0xa5c] sm:$0xff]
    %v6583 = vld [vmem:[#allocation8 + $0xa64] sm:$0xf]
    %v6584 = vld [vmem:[#allocation8 + $0xa68] sm:$0xff]
    %v6585 = vld [vmem:[#allocation8 + $0xa70] sm:$0xf]
    %v6586 = vld [vmem:[#allocation8 + $0xa74] sm:$0xff]
    %v6587 = vld [vmem:[#allocation8 + $0xa7c] sm:$0xf]
    %v6588 = vld [vmem:[#allocation8 + $0xa80] sm:$0xff]
    %v6589 = vld [vmem:[#allocation8 + $0xa88] sm:$0xf]
    %v6590 = vld [vmem:[#allocation8 + $0xa8c] sm:$0xff]
    %v6591 = vld [vmem:[#allocation8 + $0xa94] sm:$0xf]
    %v6592 = vld [vmem:[#allocation8 + $0xa98] sm:$0xff]
    %v6593 = vld [vmem:[#allocation8 + $0xaa0] sm:$0xf]
    %v6594 = vld [vmem:[#allocation8 + $0xaa4] sm:$0xff]
    %v6595 = vld [vmem:[#allocation8 + $0xaac] sm:$0xf]
    %v6596 = vld [vmem:[#allocation8 + $0xab0] sm:$0xff]
    %v6597 = vld [vmem:[#allocation8 + $0xab8] sm:$0xf]
    %v6598 = vld [vmem:[#allocation8 + $0xabc] sm:$0xff]
    %v6599 = vld [vmem:[#allocation8 + $0xac4] sm:$0xf]
    %v6600 = vld [vmem:[#allocation8 + $0xac8] sm:$0xff]
    %v6601 = vld [vmem:[#allocation8 + $0xad0] sm:$0xf]
    %v6602 = vld [vmem:[#allocation8 + $0xad4] sm:$0xff]
    %v6603 = vld [vmem:[#allocation8 + $0xadc] sm:$0xf]
    %v6604 = vld [vmem:[#allocation8 + $0xae0] sm:$0xff]
    %v6605 = vld [vmem:[#allocation8 + $0xae8] sm:$0xf]
    %v6606 = vld [vmem:[#allocation8 + $0xaec] sm:$0xff]
    %v6607 = vld [vmem:[#allocation8 + $0xaf4] sm:$0xf]
    %v6608 = vld [vmem:[#allocation8 + $0xaf8] sm:$0xff]
    %v6609 = vld [vmem:[#allocation8 + $0xb00] sm:$0xf]
    %v6610 = vld [vmem:[#allocation8 + $0xb04] sm:$0xff]
    %v6611 = vld [vmem:[#allocation8 + $0xb0c] sm:$0xf]
    %v6612 = vld [vmem:[#allocation8 + $0xb10] sm:$0xff]
    %v6613 = vld [vmem:[#allocation8 + $0xb18] sm:$0xf]
    %v6614 = vld [vmem:[#allocation8 + $0xb1c] sm:$0xff]
    %v6615 = vld [vmem:[#allocation8 + $0xb24] sm:$0xf]
    %v6616 = vld [vmem:[#allocation8 + $0xb28] sm:$0xff]
    %v6617 = vld [vmem:[#allocation8 + $0xb30] sm:$0xf]
    %v6618 = vld [vmem:[#allocation8 + $0xb34] sm:$0xff]
    %v6619 = vld [vmem:[#allocation8 + $0xb3c] sm:$0xf]
    %v6620 = vld [vmem:[#allocation8 + $0xb40] sm:$0xff]
    %v6621 = vld [vmem:[#allocation8 + $0xb48] sm:$0xf]
    %v6622 = vld [vmem:[#allocation8 + $0xb4c] sm:$0xff]
    %v6623 = vld [vmem:[#allocation8 + $0xb54] sm:$0xf]
    %v6624 = vld [vmem:[#allocation8 + $0xb58] sm:$0xff]
    %v6625 = vld [vmem:[#allocation8 + $0xb60] sm:$0xf]
    %v6626 = vld [vmem:[#allocation8 + $0xb64] sm:$0xff]
    %v6627 = vld [vmem:[#allocation8 + $0xb6c] sm:$0xf]
    %v6628 = vld [vmem:[#allocation8 + $0xb70] sm:$0xff]
    %v6629 = vld [vmem:[#allocation8 + $0xb78] sm:$0xf]
    %v6630 = vld [vmem:[#allocation8 + $0xb7c] sm:$0xff]
    %v6631 = vld [vmem:[#allocation8 + $0xb84] sm:$0xf]
    %v6632 = vld [vmem:[#allocation8 + $0xb88] sm:$0xff]
    %v6633 = vld [vmem:[#allocation8 + $0xb90] sm:$0xf]
    %v6634 = vld [vmem:[#allocation8 + $0xb94] sm:$0xff]
    %v6635 = vld [vmem:[#allocation8 + $0xb9c] sm:$0xf]
    %v6636 = vld [vmem:[#allocation8 + $0xba0] sm:$0xff]
    %v6637 = vld [vmem:[#allocation8 + $0xba8] sm:$0xf]
    %v6638 = vld [vmem:[#allocation8 + $0xbac] sm:$0xff]
    %v6639 = vld [vmem:[#allocation8 + $0xbb4] sm:$0xf]
    %v6640 = vld [vmem:[#allocation8 + $0xbb8] sm:$0xff]
    %v6641 = vld [vmem:[#allocation8 + $0xbc0] sm:$0xf]
    %v6642 = vld [vmem:[#allocation8 + $0xbc4] sm:$0xff]
    %v6643 = vld [vmem:[#allocation8 + $0xbcc] sm:$0xf]
    %v6644 = vld [vmem:[#allocation8 + $0xbd0] sm:$0xff]
    %v6645 = vld [vmem:[#allocation8 + $0xbd8] sm:$0xf]
    %v6646 = vld [vmem:[#allocation8 + $0xbdc] sm:$0xff]
    %v6647 = vld [vmem:[#allocation8 + $0xbe4] sm:$0xf]
    %v6648 = vld [vmem:[#allocation8 + $0xbe8] sm:$0xff]
    %v6649 = vld [vmem:[#allocation8 + $0xbf0] sm:$0xf]
    %v6650 = vld [vmem:[#allocation8 + $0xbf4] sm:$0xff]
    %v6651 = vld [vmem:[#allocation8 + $0xbfc] sm:$0xf]
    %v6652 = vld [vmem:[#allocation8 + $0xc00] sm:$0xff]
    %v6653 = vld [vmem:[#allocation8 + $0xc08] sm:$0xf]
    %v6654 = vld [vmem:[#allocation8 + $0xc0c] sm:$0xff]
    %v6655 = vld [vmem:[#allocation8 + $0xc14] sm:$0xf]
    %v6656 = vld [vmem:[#allocation8 + $0xc18] sm:$0xff]
    %v6657 = vld [vmem:[#allocation8 + $0xc20] sm:$0xf]
    %v6658 = vld [vmem:[#allocation8 + $0xc24] sm:$0xff]
    %v6659 = vld [vmem:[#allocation8 + $0xc2c] sm:$0xf]
    %v6660 = vld [vmem:[#allocation8 + $0xc30] sm:$0xff]
    %v6661 = vld [vmem:[#allocation8 + $0xc38] sm:$0xf]
    %v6662 = vld [vmem:[#allocation8 + $0xc3c] sm:$0xff]
    %v6663 = vld [vmem:[#allocation8 + $0xc44] sm:$0xf]
    %v6664 = vld [vmem:[#allocation8 + $0xc48] sm:$0xff]
    %v6665 = vld [vmem:[#allocation8 + $0xc50] sm:$0xf]
    %v6666 = vld [vmem:[#allocation8 + $0xc54] sm:$0xff]
    %v6667 = vld [vmem:[#allocation8 + $0xc5c] sm:$0xf]
    %v6668 = vld [vmem:[#allocation8 + $0xc60] sm:$0xff]
    %v6669 = vld [vmem:[#allocation8 + $0xc68] sm:$0xf]
    %v6670 = vld [vmem:[#allocation8 + $0xc6c] sm:$0xff]
    %v6671 = vld [vmem:[#allocation8 + $0xc74] sm:$0xf]
    %v6672 = vld [vmem:[#allocation8 + $0xc78] sm:$0xff]
    %v6673 = vld [vmem:[#allocation8 + $0xc80] sm:$0xf]
    %v6674 = vld [vmem:[#allocation8 + $0xc84] sm:$0xff]
    %v6675 = vld [vmem:[#allocation8 + $0xc8c] sm:$0xf]
    %v6676 = vld [vmem:[#allocation8 + $0xc90] sm:$0xff]
    %v6677 = vld [vmem:[#allocation8 + $0xc98] sm:$0xf]
    %v6678 = vld [vmem:[#allocation8 + $0xc9c] sm:$0xff]
    %v6679 = vld [vmem:[#allocation8 + $0xca4] sm:$0xf]
    %v6680 = vld [vmem:[#allocation8 + $0xca8] sm:$0xff]
    %v6681 = vld [vmem:[#allocation8 + $0xcb0] sm:$0xf]
    %v6682 = vld [vmem:[#allocation8 + $0xcb4] sm:$0xff]
    %v6683 = vld [vmem:[#allocation8 + $0xcbc] sm:$0xf]
    %v6684 = vld [vmem:[#allocation8 + $0xcc0] sm:$0xff]
    %v6685 = vld [vmem:[#allocation8 + $0xcc8] sm:$0xf]
    %v6686 = vld [vmem:[#allocation8 + $0xccc] sm:$0xff]
    %v6687 = vld [vmem:[#allocation8 + $0xcd4] sm:$0xf]
    %v6688 = vld [vmem:[#allocation8 + $0xcd8] sm:$0xff]
    %v6689 = vld [vmem:[#allocation8 + $0xce0] sm:$0xf]
    %v6690 = vld [vmem:[#allocation8 + $0xce4] sm:$0xff]
    %v6691 = vld [vmem:[#allocation8 + $0xcec] sm:$0xf]
    %v6692 = vld [vmem:[#allocation8 + $0xcf0] sm:$0xff]
    %v6693 = vld [vmem:[#allocation8 + $0xcf8] sm:$0xf]
    %v6694 = vld [vmem:[#allocation8 + $0xcfc] sm:$0xff]
    %v6695 = vld [vmem:[#allocation8 + $0xd04] sm:$0xf]
    %v6696 = vld [vmem:[#allocation8 + $0xd08] sm:$0xff]
    %v6697 = vld [vmem:[#allocation8 + $0xd10] sm:$0xf]
    %v6698 = vld [vmem:[#allocation8 + $0xd14] sm:$0xff]
    %v6699 = vld [vmem:[#allocation8 + $0xd1c] sm:$0xf]
    %v6700 = vld [vmem:[#allocation8 + $0xd20] sm:$0xff]
    %v6701 = vld [vmem:[#allocation8 + $0xd28] sm:$0xf]
    %v6702 = vld [vmem:[#allocation8 + $0xd2c] sm:$0xff]
    %v6703 = vld [vmem:[#allocation8 + $0xd34] sm:$0xf]
    %v6704 = vld [vmem:[#allocation8 + $0xd38] sm:$0xff]
    %v6705 = vld [vmem:[#allocation8 + $0xd40] sm:$0xf]
    %v6706 = vld [vmem:[#allocation8 + $0xd44] sm:$0xff]
    %v6707 = vld [vmem:[#allocation8 + $0xd4c] sm:$0xf]
    %v6708 = vld [vmem:[#allocation8 + $0xd50] sm:$0xff]
    %v6709 = vld [vmem:[#allocation8 + $0xd58] sm:$0xf]
    %v6710 = vld [vmem:[#allocation8 + $0xd5c] sm:$0xff]
    %v6711 = vld [vmem:[#allocation8 + $0xd64] sm:$0xf]
    %v6712 = vld [vmem:[#allocation8 + $0xd68] sm:$0xff]
    %v6713 = vld [vmem:[#allocation8 + $0xd70] sm:$0xf]
    %v6714 = vld [vmem:[#allocation8 + $0xd74] sm:$0xff]
    %v6715 = vld [vmem:[#allocation8 + $0xd7c] sm:$0xf]
    %v6908 = vunpack.c.l.b16 %v6524
    %v6909 = vunpack.c.h.b16 %v6524
    %v6910 = vunpack.c.l.b16 %v6525
    %v6911 = vunpack.c.l.b16 %v6526
    %v6912 = vunpack.c.h.b16 %v6526
    %v6913 = vunpack.c.l.b16 %v6527
    %v6914 = vunpack.c.l.b16 %v6528
    %v6915 = vunpack.c.h.b16 %v6528
    %v6916 = vunpack.c.l.b16 %v6529
    %v6917 = vunpack.c.l.b16 %v6530
    %v6918 = vunpack.c.h.b16 %v6530
    %v6919 = vunpack.c.l.b16 %v6531
    %v6920 = vunpack.c.l.b16 %v6532
    %v6921 = vunpack.c.h.b16 %v6532
    %v6922 = vunpack.c.l.b16 %v6533
    %v6923 = vunpack.c.l.b16 %v6534
    %v6924 = vunpack.c.h.b16 %v6534
    %v6925 = vunpack.c.l.b16 %v6535
    %v6926 = vunpack.c.l.b16 %v6536
    %v6927 = vunpack.c.h.b16 %v6536
    %v6928 = vunpack.c.l.b16 %v6537
    %v6929 = vunpack.c.l.b16 %v6538
    %v6930 = vunpack.c.h.b16 %v6538
    %v6931 = vunpack.c.l.b16 %v6539
    %v6932 = vunpack.c.l.b16 %v6540
    %v6933 = vunpack.c.h.b16 %v6540
    %v6934 = vunpack.c.l.b16 %v6541
    %v6935 = vunpack.c.l.b16 %v6542
    %v6936 = vunpack.c.h.b16 %v6542
    %v6937 = vunpack.c.l.b16 %v6543
    %v6938 = vunpack.c.l.b16 %v6544
    %v6939 = vunpack.c.h.b16 %v6544
    %v6940 = vunpack.c.l.b16 %v6545
    %v6941 = vunpack.c.l.b16 %v6546
    %v6942 = vunpack.c.h.b16 %v6546
    %v6943 = vunpack.c.l.b16 %v6547
    %v6944 = vunpack.c.l.b16 %v6548
    %v6945 = vunpack.c.h.b16 %v6548
    %v6946 = vunpack.c.l.b16 %v6549
    %v6947 = vunpack.c.l.b16 %v6550
    %v6948 = vunpack.c.h.b16 %v6550
    %v6949 = vunpack.c.l.b16 %v6551
    %v6950 = vunpack.c.l.b16 %v6552
    %v6951 = vunpack.c.h.b16 %v6552
    %v6952 = vunpack.c.l.b16 %v6553
    %v6953 = vunpack.c.l.b16 %v6554
    %v6954 = vunpack.c.h.b16 %v6554
    %v6955 = vunpack.c.l.b16 %v6555
    %v6956 = vunpack.c.l.b16 %v6556
    %v6957 = vunpack.c.h.b16 %v6556
    %v6958 = vunpack.c.l.b16 %v6557
    %v6959 = vunpack.c.l.b16 %v6558
    %v6960 = vunpack.c.h.b16 %v6558
    %v6961 = vunpack.c.l.b16 %v6559
    %v6962 = vunpack.c.l.b16 %v6560
    %v6963 = vunpack.c.h.b16 %v6560
    %v6964 = vunpack.c.l.b16 %v6561
    %v6965 = vunpack.c.l.b16 %v6562
    %v6966 = vunpack.c.h.b16 %v6562
    %v6967 = vunpack.c.l.b16 %v6563
    %v6968 = vunpack.c.l.b16 %v6564
    %v6969 = vunpack.c.h.b16 %v6564
    %v6970 = vunpack.c.l.b16 %v6565
    %v6971 = vunpack.c.l.b16 %v6566
    %v6972 = vunpack.c.h.b16 %v6566
    %v6973 = vunpack.c.l.b16 %v6567
    %v6974 = vunpack.c.l.b16 %v6568
    %v6975 = vunpack.c.h.b16 %v6568
    %v6976 = vunpack.c.l.b16 %v6569
    %v6977 = vunpack.c.l.b16 %v6570
    %v6978 = vunpack.c.h.b16 %v6570
    %v6979 = vunpack.c.l.b16 %v6571
    %v6980 = vunpack.c.l.b16 %v6572
    %v6981 = vunpack.c.h.b16 %v6572
    %v6982 = vunpack.c.l.b16 %v6573
    %v6983 = vunpack.c.l.b16 %v6574
    %v6984 = vunpack.c.h.b16 %v6574
    %v6985 = vunpack.c.l.b16 %v6575
    %v6986 = vunpack.c.l.b16 %v6576
    %v6987 = vunpack.c.h.b16 %v6576
    %v6988 = vunpack.c.l.b16 %v6577
    %v6989 = vunpack.c.l.b16 %v6578
    %v6990 = vunpack.c.h.b16 %v6578
    %v6991 = vunpack.c.l.b16 %v6579
    %v6992 = vunpack.c.l.b16 %v6580
    %v6993 = vunpack.c.h.b16 %v6580
    %v6994 = vunpack.c.l.b16 %v6581
    %v6995 = vunpack.c.l.b16 %v6582
    %v6996 = vunpack.c.h.b16 %v6582
    %v6997 = vunpack.c.l.b16 %v6583
    %v6998 = vunpack.c.l.b16 %v6584
    %v6999 = vunpack.c.h.b16 %v6584
    %v7000 = vunpack.c.l.b16 %v6585
    %v7001 = vunpack.c.l.b16 %v6586
    %v7002 = vunpack.c.h.b16 %v6586
    %v7003 = vunpack.c.l.b16 %v6587
    %v7004 = vunpack.c.l.b16 %v6588
    %v7005 = vunpack.c.h.b16 %v6588
    %v7006 = vunpack.c.l.b16 %v6589
    %v7007 = vunpack.c.l.b16 %v6590
    %v7008 = vunpack.c.h.b16 %v6590
    %v7009 = vunpack.c.l.b16 %v6591
    %v7010 = vunpack.c.l.b16 %v6592
    %v7011 = vunpack.c.h.b16 %v6592
    %v7012 = vunpack.c.l.b16 %v6593
    %v7013 = vunpack.c.l.b16 %v6594
    %v7014 = vunpack.c.h.b16 %v6594
    %v7015 = vunpack.c.l.b16 %v6595
    %v7016 = vunpack.c.l.b16 %v6596
    %v7017 = vunpack.c.h.b16 %v6596
    %v7018 = vunpack.c.l.b16 %v6597
    %v7019 = vunpack.c.l.b16 %v6598
    %v7020 = vunpack.c.h.b16 %v6598
    %v7021 = vunpack.c.l.b16 %v6599
    %v7022 = vunpack.c.l.b16 %v6600
    %v7023 = vunpack.c.h.b16 %v6600
    %v7024 = vunpack.c.l.b16 %v6601
    %v7025 = vunpack.c.l.b16 %v6602
    %v7026 = vunpack.c.h.b16 %v6602
    %v7027 = vunpack.c.l.b16 %v6603
    %v7028 = vunpack.c.l.b16 %v6604
    %v7029 = vunpack.c.h.b16 %v6604
    %v7030 = vunpack.c.l.b16 %v6605
    %v7031 = vunpack.c.l.b16 %v6606
    %v7032 = vunpack.c.h.b16 %v6606
    %v7033 = vunpack.c.l.b16 %v6607
    %v7034 = vunpack.c.l.b16 %v6608
    %v7035 = vunpack.c.h.b16 %v6608
    %v7036 = vunpack.c.l.b16 %v6609
    %v7037 = vunpack.c.l.b16 %v6610
    %v7038 = vunpack.c.h.b16 %v6610
    %v7039 = vunpack.c.l.b16 %v6611
    %v7040 = vunpack.c.l.b16 %v6612
    %v7041 = vunpack.c.h.b16 %v6612
    %v7042 = vunpack.c.l.b16 %v6613
    %v7043 = vunpack.c.l.b16 %v6614
    %v7044 = vunpack.c.h.b16 %v6614
    %v7045 = vunpack.c.l.b16 %v6615
    %v7046 = vunpack.c.l.b16 %v6616
    %v7047 = vunpack.c.h.b16 %v6616
    %v7048 = vunpack.c.l.b16 %v6617
    %v7049 = vunpack.c.l.b16 %v6618
    %v7050 = vunpack.c.h.b16 %v6618
    %v7051 = vunpack.c.l.b16 %v6619
    %v7052 = vunpack.c.l.b16 %v6620
    %v7053 = vunpack.c.h.b16 %v6620
    %v7054 = vunpack.c.l.b16 %v6621
    %v7055 = vunpack.c.l.b16 %v6622
    %v7056 = vunpack.c.h.b16 %v6622
    %v7057 = vunpack.c.l.b16 %v6623
    %v7058 = vunpack.c.l.b16 %v6624
    %v7059 = vunpack.c.h.b16 %v6624
    %v7060 = vunpack.c.l.b16 %v6625
    %v7061 = vunpack.c.l.b16 %v6626
    %v7062 = vunpack.c.h.b16 %v6626
    %v7063 = vunpack.c.l.b16 %v6627
    %v7064 = vunpack.c.l.b16 %v6628
    %v7065 = vunpack.c.h.b16 %v6628
    %v7066 = vunpack.c.l.b16 %v6629
    %v7067 = vunpack.c.l.b16 %v6630
    %v7068 = vunpack.c.h.b16 %v6630
    %v7069 = vunpack.c.l.b16 %v6631
    %v7070 = vunpack.c.l.b16 %v6632
    %v7071 = vunpack.c.h.b16 %v6632
    %v7072 = vunpack.c.l.b16 %v6633
    %v7073 = vunpack.c.l.b16 %v6634
    %v7074 = vunpack.c.h.b16 %v6634
    %v7075 = vunpack.c.l.b16 %v6635
    %v7076 = vunpack.c.l.b16 %v6636
    %v7077 = vunpack.c.h.b16 %v6636
    %v7078 = vunpack.c.l.b16 %v6637
    %v7079 = vunpack.c.l.b16 %v6638
    %v7080 = vunpack.c.h.b16 %v6638
    %v7081 = vunpack.c.l.b16 %v6639
    %v7082 = vunpack.c.l.b16 %v6640
    %v7083 = vunpack.c.h.b16 %v6640
    %v7084 = vunpack.c.l.b16 %v6641
    %v7085 = vunpack.c.l.b16 %v6642
    %v7086 = vunpack.c.h.b16 %v6642
    %v7087 = vunpack.c.l.b16 %v6643
    %v7088 = vunpack.c.l.b16 %v6644
    %v7089 = vunpack.c.h.b16 %v6644
    %v7090 = vunpack.c.l.b16 %v6645
    %v7091 = vunpack.c.l.b16 %v6646
    %v7092 = vunpack.c.h.b16 %v6646
    %v7093 = vunpack.c.l.b16 %v6647
    %v7094 = vunpack.c.l.b16 %v6648
    %v7095 = vunpack.c.h.b16 %v6648
    %v7096 = vunpack.c.l.b16 %v6649
    %v7097 = vunpack.c.l.b16 %v6650
    %v7098 = vunpack.c.h.b16 %v6650
    %v7099 = vunpack.c.l.b16 %v6651
    %v7100 = vunpack.c.l.b16 %v6652
    %v7101 = vunpack.c.h.b16 %v6652
    %v7102 = vunpack.c.l.b16 %v6653
    %v7103 = vunpack.c.l.b16 %v6654
    %v7104 = vunpack.c.h.b16 %v6654
    %v7105 = vunpack.c.l.b16 %v6655
    %v7106 = vunpack.c.l.b16 %v6656
    %v7107 = vunpack.c.h.b16 %v6656
    %v7108 = vunpack.c.l.b16 %v6657
    %v7109 = vunpack.c.l.b16 %v6658
    %v7110 = vunpack.c.h.b16 %v6658
    %v7111 = vunpack.c.l.b16 %v6659
    %v7112 = vunpack.c.l.b16 %v6660
    %v7113 = vunpack.c.h.b16 %v6660
    %v7114 = vunpack.c.l.b16 %v6661
    %v7115 = vunpack.c.l.b16 %v6662
    %v7116 = vunpack.c.h.b16 %v6662
    %v7117 = vunpack.c.l.b16 %v6663
    %v7118 = vunpack.c.l.b16 %v6664
    %v7119 = vunpack.c.h.b16 %v6664
    %v7120 = vunpack.c.l.b16 %v6665
    %v7121 = vunpack.c.l.b16 %v6666
    %v7122 = vunpack.c.h.b16 %v6666
    %v7123 = vunpack.c.l.b16 %v6667
    %v7124 = vunpack.c.l.b16 %v6668
    %v7125 = vunpack.c.h.b16 %v6668
    %v7126 = vunpack.c.l.b16 %v6669
    %v7127 = vunpack.c.l.b16 %v6670
    %v7128 = vunpack.c.h.b16 %v6670
    %v7129 = vunpack.c.l.b16 %v6671
    %v7130 = vunpack.c.l.b16 %v6672
    %v7131 = vunpack.c.h.b16 %v6672
    %v7132 = vunpack.c.l.b16 %v6673
    %v7133 = vunpack.c.l.b16 %v6674
    %v7134 = vunpack.c.h.b16 %v6674
    %v7135 = vunpack.c.l.b16 %v6675
    %v7136 = vunpack.c.l.b16 %v6676
    %v7137 = vunpack.c.h.b16 %v6676
    %v7138 = vunpack.c.l.b16 %v6677
    %v7139 = vunpack.c.l.b16 %v6678
    %v7140 = vunpack.c.h.b16 %v6678
    %v7141 = vunpack.c.l.b16 %v6679
    %v7142 = vunpack.c.l.b16 %v6680
    %v7143 = vunpack.c.h.b16 %v6680
    %v7144 = vunpack.c.l.b16 %v6681
    %v7145 = vunpack.c.l.b16 %v6682
    %v7146 = vunpack.c.h.b16 %v6682
    %v7147 = vunpack.c.l.b16 %v6683
    %v7148 = vunpack.c.l.b16 %v6684
    %v7149 = vunpack.c.h.b16 %v6684
    %v7150 = vunpack.c.l.b16 %v6685
    %v7151 = vunpack.c.l.b16 %v6686
    %v7152 = vunpack.c.h.b16 %v6686
    %v7153 = vunpack.c.l.b16 %v6687
    %v7154 = vunpack.c.l.b16 %v6688
    %v7155 = vunpack.c.h.b16 %v6688
    %v7156 = vunpack.c.l.b16 %v6689
    %v7157 = vunpack.c.l.b16 %v6690
    %v7158 = vunpack.c.h.b16 %v6690
    %v7159 = vunpack.c.l.b16 %v6691
    %v7160 = vunpack.c.l.b16 %v6692
    %v7161 = vunpack.c.h.b16 %v6692
    %v7162 = vunpack.c.l.b16 %v6693
    %v7163 = vunpack.c.l.b16 %v6694
    %v7164 = vunpack.c.h.b16 %v6694
    %v7165 = vunpack.c.l.b16 %v6695
    %v7166 = vunpack.c.l.b16 %v6696
    %v7167 = vunpack.c.h.b16 %v6696
    %v7168 = vunpack.c.l.b16 %v6697
    %v7169 = vunpack.c.l.b16 %v6698
    %v7170 = vunpack.c.h.b16 %v6698
    %v7171 = vunpack.c.l.b16 %v6699
    %v7172 = vunpack.c.l.b16 %v6700
    %v7173 = vunpack.c.h.b16 %v6700
    %v7174 = vunpack.c.l.b16 %v6701
    %v7175 = vunpack.c.l.b16 %v6702
    %v7176 = vunpack.c.h.b16 %v6702
    %v7177 = vunpack.c.l.b16 %v6703
    %v7178 = vunpack.c.l.b16 %v6704
    %v7179 = vunpack.c.h.b16 %v6704
    %v7180 = vunpack.c.l.b16 %v6705
    %v7181 = vunpack.c.l.b16 %v6706
    %v7182 = vunpack.c.h.b16 %v6706
    %v7183 = vunpack.c.l.b16 %v6707
    %v7184 = vunpack.c.l.b16 %v6708
    %v7185 = vunpack.c.h.b16 %v6708
    %v7186 = vunpack.c.l.b16 %v6709
    %v7187 = vunpack.c.l.b16 %v6710
    %v7188 = vunpack.c.h.b16 %v6710
    %v7189 = vunpack.c.l.b16 %v6711
    %v7190 = vunpack.c.l.b16 %v6712
    %v7191 = vunpack.c.h.b16 %v6712
    %v7192 = vunpack.c.l.b16 %v6713
    %v7193 = vunpack.c.l.b16 %v6714
    %v7194 = vunpack.c.h.b16 %v6714
    %v7195 = vunpack.c.l.b16 %v6715
    %v7196 = vpack.c.b16 %v6911, %v6908
    %v7197 = vpack.c.b16 %v6912, %v6909
    %v7198 = vpack.c.b16 %v6913, %v6910
    %v7199 = vpack.c.b16 %v6917, %v6914
    %v7200 = vpack.c.b16 %v6918, %v6915
    %v7201 = vpack.c.b16 %v6919, %v6916
    %v7202 = vpack.c.b16 %v6923, %v6920
    %v7203 = vpack.c.b16 %v6924, %v6921
    %v7204 = vpack.c.b16 %v6925, %v6922
    %v7205 = vpack.c.b16 %v6929, %v6926
    %v7206 = vpack.c.b16 %v6930, %v6927
    %v7207 = vpack.c.b16 %v6931, %v6928
    %v7208 = vpack.c.b16 %v6935, %v6932
    %v7209 = vpack.c.b16 %v6936, %v6933
    %v7210 = vpack.c.b16 %v6937, %v6934
    %v7211 = vpack.c.b16 %v6941, %v6938
    %v7212 = vpack.c.b16 %v6942, %v6939
    %v7213 = vpack.c.b16 %v6943, %v6940
    %v7214 = vpack.c.b16 %v6947, %v6944
    %v7215 = vpack.c.b16 %v6948, %v6945
    %v7216 = vpack.c.b16 %v6949, %v6946
    %v7217 = vpack.c.b16 %v6953, %v6950
    %v7218 = vpack.c.b16 %v6954, %v6951
    %v7219 = vpack.c.b16 %v6955, %v6952
    %v7220 = vpack.c.b16 %v6959, %v6956
    %v7221 = vpack.c.b16 %v6960, %v6957
    %v7222 = vpack.c.b16 %v6961, %v6958
    %v7223 = vpack.c.b16 %v6965, %v6962
    %v7224 = vpack.c.b16 %v6966, %v6963
    %v7225 = vpack.c.b16 %v6967, %v6964
    %v7226 = vpack.c.b16 %v6971, %v6968
    %v7227 = vpack.c.b16 %v6972, %v6969
    %v7228 = vpack.c.b16 %v6973, %v6970
    %v7229 = vpack.c.b16 %v6977, %v6974
    %v7230 = vpack.c.b16 %v6978, %v6975
    %v7231 = vpack.c.b16 %v6979, %v6976
    %v7232 = vpack.c.b16 %v6983, %v6980
    %v7233 = vpack.c.b16 %v6984, %v6981
    %v7234 = vpack.c.b16 %v6985, %v6982
    %v7235 = vpack.c.b16 %v6989, %v6986
    %v7236 = vpack.c.b16 %v6990, %v6987
    %v7237 = vpack.c.b16 %v6991, %v6988
    %v7238 = vpack.c.b16 %v6995, %v6992
    %v7239 = vpack.c.b16 %v6996, %v6993
    %v7240 = vpack.c.b16 %v6997, %v6994
    %v7241 = vpack.c.b16 %v7001, %v6998
    %v7242 = vpack.c.b16 %v7002, %v6999
    %v7243 = vpack.c.b16 %v7003, %v7000
    %v7244 = vpack.c.b16 %v7007, %v7004
    %v7245 = vpack.c.b16 %v7008, %v7005
    %v7246 = vpack.c.b16 %v7009, %v7006
    %v7247 = vpack.c.b16 %v7013, %v7010
    %v7248 = vpack.c.b16 %v7014, %v7011
    %v7249 = vpack.c.b16 %v7015, %v7012
    %v7250 = vpack.c.b16 %v7019, %v7016
    %v7251 = vpack.c.b16 %v7020, %v7017
    %v7252 = vpack.c.b16 %v7021, %v7018
    %v7253 = vpack.c.b16 %v7025, %v7022
    %v7254 = vpack.c.b16 %v7026, %v7023
    %v7255 = vpack.c.b16 %v7027, %v7024
    %v7256 = vpack.c.b16 %v7031, %v7028
    %v7257 = vpack.c.b16 %v7032, %v7029
    %v7258 = vpack.c.b16 %v7033, %v7030
    %v7259 = vpack.c.b16 %v7037, %v7034
    %v7260 = vpack.c.b16 %v7038, %v7035
    %v7261 = vpack.c.b16 %v7039, %v7036
    %v7262 = vpack.c.b16 %v7043, %v7040
    %v7263 = vpack.c.b16 %v7044, %v7041
    %v7264 = vpack.c.b16 %v7045, %v7042
    %v7265 = vpack.c.b16 %v7049, %v7046
    %v7266 = vpack.c.b16 %v7050, %v7047
    %v7267 = vpack.c.b16 %v7051, %v7048
    %v7268 = vpack.c.b16 %v7055, %v7052
    %v7269 = vpack.c.b16 %v7056, %v7053
    %v7270 = vpack.c.b16 %v7057, %v7054
    %v7271 = vpack.c.b16 %v7061, %v7058
    %v7272 = vpack.c.b16 %v7062, %v7059
    %v7273 = vpack.c.b16 %v7063, %v7060
    %v7274 = vpack.c.b16 %v7067, %v7064
    %v7275 = vpack.c.b16 %v7068, %v7065
    %v7276 = vpack.c.b16 %v7069, %v7066
    %v7277 = vpack.c.b16 %v7073, %v7070
    %v7278 = vpack.c.b16 %v7074, %v7071
    %v7279 = vpack.c.b16 %v7075, %v7072
    %v7280 = vpack.c.b16 %v7079, %v7076
    %v7281 = vpack.c.b16 %v7080, %v7077
    %v7282 = vpack.c.b16 %v7081, %v7078
    %v7283 = vpack.c.b16 %v7085, %v7082
    %v7284 = vpack.c.b16 %v7086, %v7083
    %v7285 = vpack.c.b16 %v7087, %v7084
    %v7286 = vpack.c.b16 %v7091, %v7088
    %v7287 = vpack.c.b16 %v7092, %v7089
    %v7288 = vpack.c.b16 %v7093, %v7090
    %v7289 = vpack.c.b16 %v7097, %v7094
    %v7290 = vpack.c.b16 %v7098, %v7095
    %v7291 = vpack.c.b16 %v7099, %v7096
    %v7292 = vpack.c.b16 %v7103, %v7100
    %v7293 = vpack.c.b16 %v7104, %v7101
    %v7294 = vpack.c.b16 %v7105, %v7102
    %v7295 = vpack.c.b16 %v7109, %v7106
    %v7296 = vpack.c.b16 %v7110, %v7107
    %v7297 = vpack.c.b16 %v7111, %v7108
    %v7298 = vpack.c.b16 %v7115, %v7112
    %v7299 = vpack.c.b16 %v7116, %v7113
    %v7300 = vpack.c.b16 %v7117, %v7114
    %v7301 = vpack.c.b16 %v7121, %v7118
    %v7302 = vpack.c.b16 %v7122, %v7119
    %v7303 = vpack.c.b16 %v7123, %v7120
    %v7304 = vpack.c.b16 %v7127, %v7124
    %v7305 = vpack.c.b16 %v7128, %v7125
    %v7306 = vpack.c.b16 %v7129, %v7126
    %v7307 = vpack.c.b16 %v7133, %v7130
    %v7308 = vpack.c.b16 %v7134, %v7131
    %v7309 = vpack.c.b16 %v7135, %v7132
    %v7310 = vpack.c.b16 %v7139, %v7136
    %v7311 = vpack.c.b16 %v7140, %v7137
    %v7312 = vpack.c.b16 %v7141, %v7138
    %v7313 = vpack.c.b16 %v7145, %v7142
    %v7314 = vpack.c.b16 %v7146, %v7143
    %v7315 = vpack.c.b16 %v7147, %v7144
    %v7316 = vpack.c.b16 %v7151, %v7148
    %v7317 = vpack.c.b16 %v7152, %v7149
    %v7318 = vpack.c.b16 %v7153, %v7150
    %v7319 = vpack.c.b16 %v7157, %v7154
    %v7320 = vpack.c.b16 %v7158, %v7155
    %v7321 = vpack.c.b16 %v7159, %v7156
    %v7322 = vpack.c.b16 %v7163, %v7160
    %v7323 = vpack.c.b16 %v7164, %v7161
    %v7324 = vpack.c.b16 %v7165, %v7162
    %v7325 = vpack.c.b16 %v7169, %v7166
    %v7326 = vpack.c.b16 %v7170, %v7167
    %v7327 = vpack.c.b16 %v7171, %v7168
    %v7328 = vpack.c.b16 %v7175, %v7172
    %v7329 = vpack.c.b16 %v7176, %v7173
    %v7330 = vpack.c.b16 %v7177, %v7174
    %v7331 = vpack.c.b16 %v7181, %v7178
    %v7332 = vpack.c.b16 %v7182, %v7179
    %v7333 = vpack.c.b16 %v7183, %v7180
    %v7334 = vpack.c.b16 %v7187, %v7184
    %v7335 = vpack.c.b16 %v7188, %v7185
    %v7336 = vpack.c.b16 %v7189, %v7186
    %v7337 = vpack.c.b16 %v7193, %v7190
    %v7338 = vpack.c.b16 %v7194, %v7191
    %v7339 = vpack.c.b16 %v7195, %v7192
    %7484 = vmatprep.subr.bf16.mxu0 %v7218
    %7485 = vmatpush1.bf16.msra.mxu0 %v7217
    %7486 = vmatprep.subr.bf16.mxu0 %v7215
    %7487 = vmatpush1.bf16.msra.mxu0 %v7214
    %7488 = vmatprep.subr.bf16.mxu0 %v7212
    %7489 = vmatpush1.bf16.msra.mxu0 %v7211
    %7490 = vmatprep.subr.bf16.mxu0 %v7209
    %7491 = vmatpush1.bf16.msra.mxu0 %v7208
    %7492 = vmatprep.subr.bf16.mxu0 %v7206
    %7493 = vmatpush1.bf16.msra.mxu0 %v7205
    %7494 = vmatprep.subr.bf16.mxu0 %v7203
    %7495 = vmatpush1.bf16.msra.mxu0 %v7202
    %7496 = vmatprep.subr.bf16.mxu0 %v7200
    %7497 = vmatpush1.bf16.msra.mxu0 %v7199
    %7498 = vmatprep.subr.bf16.mxu0 %v7197
    %7499 = vmatpush1.bf16.msra.mxu0 %v7196
    %7500 = vmatprep.subr.bf16.mxu0 %v7242
    %7501 = vmatpush2.bf16.msra.mxu0 %v7241
    %7502 = vmatprep.subr.bf16.mxu0 %v7239
    %7503 = vmatpush2.bf16.msra.mxu0 %v7238
    %7504 = vmatprep.subr.bf16.mxu0 %v7236
    %7505 = vmatpush2.bf16.msra.mxu0 %v7235
    %7506 = vmatprep.subr.bf16.mxu0 %v7233
    %7507 = vmatpush2.bf16.msra.mxu0 %v7232
    %7508 = vmatprep.subr.bf16.mxu0 %v7230
    %7509 = vmatpush2.bf16.msra.mxu0 %v7229
    %7510 = vmatprep.subr.bf16.mxu0 %v7227
    %7511 = vmatpush2.bf16.msra.mxu0 %v7226
    %7512 = vmatprep.subr.bf16.mxu0 %v7224
    %7513 = vmatpush2.bf16.msra.mxu0 %v7223
    %7514 = vmatprep.subr.bf16.mxu0 %v7221
    %7515 = vmatpush2.bf16.msra.mxu0 %v7220
    %7516 = vmatprep.mubr.bf16.mxu0 %v5313
    %7517 = vmatmul.mubr.bf16.gmra.mxu0 %v5312
    %v7518 = vpop.f32.mrf.mxu0
    %v7519 = vadd.f32 0.0, %v7518
    %v7520 = vpop.f32.mrf.mxu0
    %v7521 = vadd.f32 0.0, %v7520
    %v7522 = vpop.f32.mrf.mxu0
    %v7523 = vpop.f32.mrf.mxu0
    %7524 = vdwg.mxu0
    %7525 = vmatprep.subr.bf16.mxu0 %v7266
    %7526 = vmatpush1.bf16.msra.mxu0 %v7265
    %7527 = vmatprep.subr.bf16.mxu0 %v7263
    %7528 = vmatpush1.bf16.msra.mxu0 %v7262
    %7529 = vmatprep.subr.bf16.mxu0 %v7260
    %7530 = vmatpush1.bf16.msra.mxu0 %v7259
    %7531 = vmatprep.subr.bf16.mxu0 %v7257
    %7532 = vmatpush1.bf16.msra.mxu0 %v7256
    %7533 = vmatprep.subr.bf16.mxu0 %v7254
    %7534 = vmatpush1.bf16.msra.mxu0 %v7253
    %7535 = vmatprep.subr.bf16.mxu0 %v7251
    %7536 = vmatpush1.bf16.msra.mxu0 %v7250
    %7537 = vmatprep.subr.bf16.mxu0 %v7248
    %7538 = vmatpush1.bf16.msra.mxu0 %v7247
    %7539 = vmatprep.subr.bf16.mxu0 %v7245
    %7540 = vmatpush1.bf16.msra.mxu0 %v7244
    %7541 = vmatprep.subr.bf16.mxu0 %v7290
    %7542 = vmatpush2.bf16.msra.mxu0 %v7289
    %7543 = vmatprep.subr.bf16.mxu0 %v7287
    %7544 = vmatpush2.bf16.msra.mxu0 %v7286
    %7545 = vmatprep.subr.bf16.mxu0 %v7284
    %7546 = vmatpush2.bf16.msra.mxu0 %v7283
    %7547 = vmatprep.subr.bf16.mxu0 %v7281
    %7548 = vmatpush2.bf16.msra.mxu0 %v7280
    %7549 = vmatprep.subr.bf16.mxu0 %v7278
    %7550 = vmatpush2.bf16.msra.mxu0 %v7277
    %7551 = vmatprep.subr.bf16.mxu0 %v7275
    %7552 = vmatpush2.bf16.msra.mxu0 %v7274
    %7553 = vmatprep.subr.bf16.mxu0 %v7272
    %7554 = vmatpush2.bf16.msra.mxu0 %v7271
    %7555 = vmatprep.subr.bf16.mxu0 %v7269
    %7556 = vmatpush2.bf16.msra.mxu0 %v7268
    %7557 = vmatprep.mubr.bf16.mxu0 %v5315
    %7558 = vmatmul.mubr.bf16.gmra.mxu0 %v5314
    %v7559 = vpop.f32.mrf.mxu0
    %v7560 = vadd.f32 %v7519, %v7559
    %v7561 = vpop.f32.mrf.mxu0
    %v7562 = vadd.f32 %v7521, %v7561
    %v7563 = vpop.f32.mrf.mxu0
    %v7564 = vpop.f32.mrf.mxu0
    %7565 = vdwg.mxu0
    %7566 = vmatprep.subr.bf16.mxu0 %v7314
    %7567 = vmatpush1.bf16.msra.mxu0 %v7313
    %7568 = vmatprep.subr.bf16.mxu0 %v7311
    %7569 = vmatpush1.bf16.msra.mxu0 %v7310
    %7570 = vmatprep.subr.bf16.mxu0 %v7308
    %7571 = vmatpush1.bf16.msra.mxu0 %v7307
    %7572 = vmatprep.subr.bf16.mxu0 %v7305
    %7573 = vmatpush1.bf16.msra.mxu0 %v7304
    %7574 = vmatprep.subr.bf16.mxu0 %v7302
    %7575 = vmatpush1.bf16.msra.mxu0 %v7301
    %7576 = vmatprep.subr.bf16.mxu0 %v7299
    %7577 = vmatpush1.bf16.msra.mxu0 %v7298
    %7578 = vmatprep.subr.bf16.mxu0 %v7296
    %7579 = vmatpush1.bf16.msra.mxu0 %v7295
    %7580 = vmatprep.subr.bf16.mxu0 %v7293
    %7581 = vmatpush1.bf16.msra.mxu0 %v7292
    %7582 = vmatprep.subr.bf16.mxu0 %v7338
    %7583 = vmatpush2.bf16.msra.mxu0 %v7337
    %7584 = vmatprep.subr.bf16.mxu0 %v7335
    %7585 = vmatpush2.bf16.msra.mxu0 %v7334
    %7586 = vmatprep.subr.bf16.mxu0 %v7332
    %7587 = vmatpush2.bf16.msra.mxu0 %v7331
    %7588 = vmatprep.subr.bf16.mxu0 %v7329
    %7589 = vmatpush2.bf16.msra.mxu0 %v7328
    %7590 = vmatprep.subr.bf16.mxu0 %v7326
    %7591 = vmatpush2.bf16.msra.mxu0 %v7325
    %7592 = vmatprep.subr.bf16.mxu0 %v7323
    %7593 = vmatpush2.bf16.msra.mxu0 %v7322
    %7594 = vmatprep.subr.bf16.mxu0 %v7320
    %7595 = vmatpush2.bf16.msra.mxu0 %v7319
    %7596 = vmatprep.subr.bf16.mxu0 %v7317
    %7597 = vmatpush2.bf16.msra.mxu0 %v7316
    %7598 = vmatprep.mubr.bf16.mxu0 %v5317
    %7599 = vmatmul.mubr.bf16.gmra.mxu0 %v5316
    %v7600 = vpop.f32.mrf.mxu0
    %v7601 = vadd.f32 %v7560, %v7600
    %v7602 = vpop.f32.mrf.mxu0
    %v7603 = vadd.f32 %v7562, %v7602
    %v7604 = vpop.f32.mrf.mxu0
    %v7605 = vpop.f32.mrf.mxu0
    %7606 = vdwg.mxu0
    %7607 = vmatprep.subr.bf16.mxu0 0
    %7608 = vmatpush1.bf16.msra.mxu0 %v7219
    %7609 = vmatprep.subr.bf16.mxu0 0
    %7610 = vmatpush1.bf16.msra.mxu0 %v7216
    %7611 = vmatprep.subr.bf16.mxu0 0
    %7612 = vmatpush1.bf16.msra.mxu0 %v7213
    %7613 = vmatprep.subr.bf16.mxu0 0
    %7614 = vmatpush1.bf16.msra.mxu0 %v7210
    %7615 = vmatprep.subr.bf16.mxu0 0
    %7616 = vmatpush1.bf16.msra.mxu0 %v7207
    %7617 = vmatprep.subr.bf16.mxu0 0
    %7618 = vmatpush1.bf16.msra.mxu0 %v7204
    %7619 = vmatprep.subr.bf16.mxu0 0
    %7620 = vmatpush1.bf16.msra.mxu0 %v7201
    %7621 = vmatprep.subr.bf16.mxu0 0
    %7622 = vmatpush1.bf16.msra.mxu0 %v7198
    %7623 = vmatprep.subr.bf16.mxu0 0
    %7624 = vmatpush2.bf16.msra.mxu0 %v7243
    %7625 = vmatprep.subr.bf16.mxu0 0
    %7626 = vmatpush2.bf16.msra.mxu0 %v7240
    %7627 = vmatprep.subr.bf16.mxu0 0
    %7628 = vmatpush2.bf16.msra.mxu0 %v7237
    %7629 = vmatprep.subr.bf16.mxu0 0
    %7630 = vmatpush2.bf16.msra.mxu0 %v7234
    %7631 = vmatprep.subr.bf16.mxu0 0
    %7632 = vmatpush2.bf16.msra.mxu0 %v7231
    %7633 = vmatprep.subr.bf16.mxu0 0
    %7634 = vmatpush2.bf16.msra.mxu0 %v7228
    %7635 = vmatprep.subr.bf16.mxu0 0
    %7636 = vmatpush2.bf16.msra.mxu0 %v7225
    %7637 = vmatprep.subr.bf16.mxu0 0
    %7638 = vmatpush2.bf16.msra.mxu0 %v7222
    %7639 = vmatprep.mubr.bf16.mxu0 %v5313
    %7640 = vmatmul.mubr.bf16.gmra.mxu0 %v5312
    %v7641 = vpop.f32.mrf.mxu0
    %v7642 = vadd.f32 0.0, %v7641
    %v7643 = vpop.f32.mrf.mxu0
    %v7644 = vpop.f32.mrf.mxu0
    %v7645 = vpop.f32.mrf.mxu0
    %7646 = vdwg.mxu0
    %7647 = vmatprep.subr.bf16.mxu0 0
    %7648 = vmatpush1.bf16.msra.mxu0 %v7267
    %7649 = vmatprep.subr.bf16.mxu0 0
    %7650 = vmatpush1.bf16.msra.mxu0 %v7264
    %7651 = vmatprep.subr.bf16.mxu0 0
    %7652 = vmatpush1.bf16.msra.mxu0 %v7261
    %7653 = vmatprep.subr.bf16.mxu0 0
    %7654 = vmatpush1.bf16.msra.mxu0 %v7258
    %7655 = vmatprep.subr.bf16.mxu0 0
    %7656 = vmatpush1.bf16.msra.mxu0 %v7255
    %7657 = vmatprep.subr.bf16.mxu0 0
    %7658 = vmatpush1.bf16.msra.mxu0 %v7252
    %7659 = vmatprep.subr.bf16.mxu0 0
    %7660 = vmatpush1.bf16.msra.mxu0 %v7249
    %7661 = vmatprep.subr.bf16.mxu0 0
    %7662 = vmatpush1.bf16.msra.mxu0 %v7246
    %7663 = vmatprep.subr.bf16.mxu0 0
    %7664 = vmatpush2.bf16.msra.mxu0 %v7291
    %7665 = vmatprep.subr.bf16.mxu0 0
    %7666 = vmatpush2.bf16.msra.mxu0 %v7288
    %7667 = vmatprep.subr.bf16.mxu0 0
    %7668 = vmatpush2.bf16.msra.mxu0 %v7285
    %7669 = vmatprep.subr.bf16.mxu0 0
    %7670 = vmatpush2.bf16.msra.mxu0 %v7282
    %7671 = vmatprep.subr.bf16.mxu0 0
    %7672 = vmatpush2.bf16.msra.mxu0 %v7279
    %7673 = vmatprep.subr.bf16.mxu0 0
    %7674 = vmatpush2.bf16.msra.mxu0 %v7276
    %7675 = vmatprep.subr.bf16.mxu0 0
    %7676 = vmatpush2.bf16.msra.mxu0 %v7273
    %7677 = vmatprep.subr.bf16.mxu0 0
    %7678 = vmatpush2.bf16.msra.mxu0 %v7270
    %7679 = vmatprep.mubr.bf16.mxu0 %v5315
    %7680 = vmatmul.mubr.bf16.gmra.mxu0 %v5314
    %v7681 = vpop.f32.mrf.mxu0
    %v7682 = vadd.f32 %v7642, %v7681
    %v7683 = vpop.f32.mrf.mxu0
    %v7684 = vpop.f32.mrf.mxu0
    %v7685 = vpop.f32.mrf.mxu0
    %7686 = vdwg.mxu0
    %7687 = vmatprep.subr.bf16.mxu0 0
    %7688 = vmatpush1.bf16.msra.mxu0 %v7315
    %7689 = vmatprep.subr.bf16.mxu0 0
    %7690 = vmatpush1.bf16.msra.mxu0 %v7312
    %7691 = vmatprep.subr.bf16.mxu0 0
    %7692 = vmatpush1.bf16.msra.mxu0 %v7309
    %7693 = vmatprep.subr.bf16.mxu0 0
    %7694 = vmatpush1.bf16.msra.mxu0 %v7306
    %7695 = vmatprep.subr.bf16.mxu0 0
    %7696 = vmatpush1.bf16.msra.mxu0 %v7303
    %7697 = vmatprep.subr.bf16.mxu0 0
    %7698 = vmatpush1.bf16.msra.mxu0 %v7300
    %7699 = vmatprep.subr.bf16.mxu0 0
    %7700 = vmatpush1.bf16.msra.mxu0 %v7297
    %7701 = vmatprep.subr.bf16.mxu0 0
    %7702 = vmatpush1.bf16.msra.mxu0 %v7294
    %7703 = vmatprep.subr.bf16.mxu0 0
    %7704 = vmatpush2.bf16.msra.mxu0 %v7339
    %7705 = vmatprep.subr.bf16.mxu0 0
    %7706 = vmatpush2.bf16.msra.mxu0 %v7336
    %7707 = vmatprep.subr.bf16.mxu0 0
    %7708 = vmatpush2.bf16.msra.mxu0 %v7333
    %7709 = vmatprep.subr.bf16.mxu0 0
    %7710 = vmatpush2.bf16.msra.mxu0 %v7330
    %7711 = vmatprep.subr.bf16.mxu0 0
    %7712 = vmatpush2.bf16.msra.mxu0 %v7327
    %7713 = vmatprep.subr.bf16.mxu0 0
    %7714 = vmatpush2.bf16.msra.mxu0 %v7324
    %7715 = vmatprep.subr.bf16.mxu0 0
    %7716 = vmatpush2.bf16.msra.mxu0 %v7321
    %7717 = vmatprep.subr.bf16.mxu0 0
    %7718 = vmatpush2.bf16.msra.mxu0 %v7318
    %7719 = vmatprep.mubr.bf16.mxu0 %v5317
    %7720 = vmatmul.mubr.bf16.gmra.mxu0 %v5316
    %v7721 = vpop.f32.mrf.mxu0
    %v7722 = vadd.f32 %v7682, %v7721
    %v7723 = vpop.f32.mrf.mxu0
    %v7724 = vpop.f32.mrf.mxu0
    %v7725 = vpop.f32.mrf.mxu0
    %7726 = vdwg.mxu0
    %v7727 = vadd.f32 %v6521, %v7601
    %v7728 = vadd.f32 %v6522, %v7603
    %v7729 = vadd.f32 %v6523, %v7722
    %7730 = vset.pattern.permute.xlu0 4
    %7731 = vperm.xlu0 %7730, %v90
    %v7732 = vpop.permute.xlu0 %7731
    %vm7733 = vcmp.eq.s32.totalorder %v89, %v7732
    %v7734 = vsel %vm7733, 1, 0
    %v7735 = vcvt.s32.f32 %v7734
    %v7736 = vpack.c.bf16 %v7735, %v7735
    %v7737 = vld [vmem:[#allocation7 + $0xd80] sm:$0xff]
    %v7738 = vld [vmem:[#allocation7 + $0xd88] sm:$0xf]
    %v7739 = vld [vmem:[#allocation7 + $0xd8c] sm:$0xff]
    %v7740 = vld [vmem:[#allocation7 + $0xd94] sm:$0xf]
    %v7741 = vld [vmem:[#allocation7 + $0xd98] sm:$0xff]
    %v7742 = vld [vmem:[#allocation7 + $0xda0] sm:$0xf]
    %v7743 = vld [vmem:[#allocation7 + $0xda4] sm:$0xff]
    %v7744 = vld [vmem:[#allocation7 + $0xdac] sm:$0xf]
    %v7745 = vld [vmem:[#allocation7 + $0xdb0] sm:$0xff]
    %v7746 = vld [vmem:[#allocation7 + $0xdb8] sm:$0xf]
    %v7747 = vld [vmem:[#allocation7 + $0xdbc] sm:$0xff]
    %v7748 = vld [vmem:[#allocation7 + $0xdc4] sm:$0xf]
    %v7749 = vld [vmem:[#allocation7 + $0xdc8] sm:$0xff]
    %v7750 = vld [vmem:[#allocation7 + $0xdd0] sm:$0xf]
    %v7751 = vld [vmem:[#allocation7 + $0xdd4] sm:$0xff]
    %v7752 = vld [vmem:[#allocation7 + $0xddc] sm:$0xf]
    %v7753 = vld [vmem:[#allocation7 + $0xde0] sm:$0xff]
    %v7754 = vld [vmem:[#allocation7 + $0xde8] sm:$0xf]
    %v7755 = vld [vmem:[#allocation7 + $0xdec] sm:$0xff]
    %v7756 = vld [vmem:[#allocation7 + $0xdf4] sm:$0xf]
    %v7757 = vld [vmem:[#allocation7 + $0xdf8] sm:$0xff]
    %v7758 = vld [vmem:[#allocation7 + $0xe00] sm:$0xf]
    %v7759 = vld [vmem:[#allocation7 + $0xe04] sm:$0xff]
    %v7760 = vld [vmem:[#allocation7 + $0xe0c] sm:$0xf]
    %v7761 = vld [vmem:[#allocation7 + $0xe10] sm:$0xff]
    %v7762 = vld [vmem:[#allocation7 + $0xe18] sm:$0xf]
    %v7763 = vld [vmem:[#allocation7 + $0xe1c] sm:$0xff]
    %v7764 = vld [vmem:[#allocation7 + $0xe24] sm:$0xf]
    %v7765 = vld [vmem:[#allocation7 + $0xe28] sm:$0xff]
    %v7766 = vld [vmem:[#allocation7 + $0xe30] sm:$0xf]
    %v7767 = vld [vmem:[#allocation7 + $0xe34] sm:$0xff]
    %v7768 = vld [vmem:[#allocation7 + $0xe3c] sm:$0xf]
    %v7801 = vunpack.c.l.b16 %v7737
    %v7802 = vunpack.c.h.b16 %v7737
    %v7803 = vunpack.c.l.b16 %v7738
    %v7804 = vunpack.c.l.b16 %v7739
    %v7805 = vunpack.c.h.b16 %v7739
    %v7806 = vunpack.c.l.b16 %v7740
    %v7807 = vunpack.c.l.b16 %v7741
    %v7808 = vunpack.c.h.b16 %v7741
    %v7809 = vunpack.c.l.b16 %v7742
    %v7810 = vunpack.c.l.b16 %v7743
    %v7811 = vunpack.c.h.b16 %v7743
    %v7812 = vunpack.c.l.b16 %v7744
    %v7813 = vunpack.c.l.b16 %v7745
    %v7814 = vunpack.c.h.b16 %v7745
    %v7815 = vunpack.c.l.b16 %v7746
    %v7816 = vunpack.c.l.b16 %v7747
    %v7817 = vunpack.c.h.b16 %v7747
    %v7818 = vunpack.c.l.b16 %v7748
    %v7819 = vunpack.c.l.b16 %v7749
    %v7820 = vunpack.c.h.b16 %v7749
    %v7821 = vunpack.c.l.b16 %v7750
    %v7822 = vunpack.c.l.b16 %v7751
    %v7823 = vunpack.c.h.b16 %v7751
    %v7824 = vunpack.c.l.b16 %v7752
    %v7825 = vunpack.c.l.b16 %v7753
    %v7826 = vunpack.c.h.b16 %v7753
    %v7827 = vunpack.c.l.b16 %v7754
    %v7828 = vunpack.c.l.b16 %v7755
    %v7829 = vunpack.c.h.b16 %v7755
    %v7830 = vunpack.c.l.b16 %v7756
    %v7831 = vunpack.c.l.b16 %v7757
    %v7832 = vunpack.c.h.b16 %v7757
    %v7833 = vunpack.c.l.b16 %v7758
    %v7834 = vunpack.c.l.b16 %v7759
    %v7835 = vunpack.c.h.b16 %v7759
    %v7836 = vunpack.c.l.b16 %v7760
    %v7837 = vunpack.c.l.b16 %v7761
    %v7838 = vunpack.c.h.b16 %v7761
    %v7839 = vunpack.c.l.b16 %v7762
    %v7840 = vunpack.c.l.b16 %v7763
    %v7841 = vunpack.c.h.b16 %v7763
    %v7842 = vunpack.c.l.b16 %v7764
    %v7843 = vunpack.c.l.b16 %v7765
    %v7844 = vunpack.c.h.b16 %v7765
    %v7845 = vunpack.c.l.b16 %v7766
    %v7846 = vunpack.c.l.b16 %v7767
    %v7847 = vunpack.c.h.b16 %v7767
    %v7848 = vunpack.c.l.b16 %v7768
    %v7849 = vpack.c.b16 %v7804, %v7801
    %v7850 = vpack.c.b16 %v7805, %v7802
    %v7851 = vpack.c.b16 %v7806, %v7803
    %v7852 = vpack.c.b16 %v7810, %v7807
    %v7853 = vpack.c.b16 %v7811, %v7808
    %v7854 = vpack.c.b16 %v7812, %v7809
    %v7855 = vpack.c.b16 %v7816, %v7813
    %v7856 = vpack.c.b16 %v7817, %v7814
    %v7857 = vpack.c.b16 %v7818, %v7815
    %v7858 = vpack.c.b16 %v7822, %v7819
    %v7859 = vpack.c.b16 %v7823, %v7820
    %v7860 = vpack.c.b16 %v7824, %v7821
    %v7861 = vpack.c.b16 %v7828, %v7825
    %v7862 = vpack.c.b16 %v7829, %v7826
    %v7863 = vpack.c.b16 %v7830, %v7827
    %v7864 = vpack.c.b16 %v7834, %v7831
    %v7865 = vpack.c.b16 %v7835, %v7832
    %v7866 = vpack.c.b16 %v7836, %v7833
    %v7867 = vpack.c.b16 %v7840, %v7837
    %v7868 = vpack.c.b16 %v7841, %v7838
    %v7869 = vpack.c.b16 %v7842, %v7839
    %v7870 = vpack.c.b16 %v7846, %v7843
    %v7871 = vpack.c.b16 %v7847, %v7844
    %v7872 = vpack.c.b16 %v7848, %v7845
    %7897 = vmatprep.subr.bf16.mxu0 %v7871
    %7898 = vmatpush1.bf16.msra.mxu0 %v7870
    %7899 = vmatprep.subr.bf16.mxu0 %v7868
    %7900 = vmatpush1.bf16.msra.mxu0 %v7867
    %7901 = vmatprep.subr.bf16.mxu0 %v7865
    %7902 = vmatpush1.bf16.msra.mxu0 %v7864
    %7903 = vmatprep.subr.bf16.mxu0 %v7862
    %7904 = vmatpush1.bf16.msra.mxu0 %v7861
    %7905 = vmatprep.subr.bf16.mxu0 %v7859
    %7906 = vmatpush1.bf16.msra.mxu0 %v7858
    %7907 = vmatprep.subr.bf16.mxu0 %v7856
    %7908 = vmatpush1.bf16.msra.mxu0 %v7855
    %7909 = vmatprep.subr.bf16.mxu0 %v7853
    %7910 = vmatpush1.bf16.msra.mxu0 %v7852
    %7911 = vmatprep.subr.bf16.mxu0 %v7850
    %7912 = vmatpush1.bf16.msra.mxu0 %v7849
    %7913 = vmatprep.subr.bf16.mxu0 0
    %7914 = vmatpush2.bf16.msra.mxu0 0
    %7915 = vmatprep.subr.bf16.mxu0 0
    %7916 = vmatpush2.bf16.msra.mxu0 0
    %7917 = vmatprep.subr.bf16.mxu0 0
    %7918 = vmatpush2.bf16.msra.mxu0 0
    %7919 = vmatprep.subr.bf16.mxu0 0
    %7920 = vmatpush2.bf16.msra.mxu0 0
    %7921 = vmatprep.subr.bf16.mxu0 0
    %7922 = vmatpush2.bf16.msra.mxu0 0
    %7923 = vmatprep.subr.bf16.mxu0 0
    %7924 = vmatpush2.bf16.msra.mxu0 0
    %7925 = vmatprep.subr.bf16.mxu0 0
    %7926 = vmatpush2.bf16.msra.mxu0 0
    %7927 = vmatprep.subr.bf16.mxu0 0
    %7928 = vmatpush2.bf16.msra.mxu0 0
    %7929 = vmatprep.mubr.bf16.mxu0 0
    %7930 = vmatmul.mubr.bf16.gmra.mxu0 %v7736
    %v7931 = vpop.f32.mrf.mxu0
    %v7932 = vadd.f32 0.0, %v7931
    %v7933 = vpop.f32.mrf.mxu0
    %v7934 = vadd.f32 0.0, %v7933
    %v7935 = vpop.f32.mrf.mxu0
    %v7936 = vpop.f32.mrf.mxu0
    %7937 = vdwg.mxu0
    %7938 = vmatprep.subr.bf16.mxu0 0
    %7939 = vmatpush1.bf16.msra.mxu0 %v7872
    %7940 = vmatprep.subr.bf16.mxu0 0
    %7941 = vmatpush1.bf16.msra.mxu0 %v7869
    %7942 = vmatprep.subr.bf16.mxu0 0
    %7943 = vmatpush1.bf16.msra.mxu0 %v7866
    %7944 = vmatprep.subr.bf16.mxu0 0
    %7945 = vmatpush1.bf16.msra.mxu0 %v7863
    %7946 = vmatprep.subr.bf16.mxu0 0
    %7947 = vmatpush1.bf16.msra.mxu0 %v7860
    %7948 = vmatprep.subr.bf16.mxu0 0
    %7949 = vmatpush1.bf16.msra.mxu0 %v7857
    %7950 = vmatprep.subr.bf16.mxu0 0
    %7951 = vmatpush1.bf16.msra.mxu0 %v7854
    %7952 = vmatprep.subr.bf16.mxu0 0
    %7953 = vmatpush1.bf16.msra.mxu0 %v7851
    %7954 = vmatprep.subr.bf16.mxu0 0
    %7955 = vmatpush2.bf16.msra.mxu0 0
    %7956 = vmatprep.subr.bf16.mxu0 0
    %7957 = vmatpush2.bf16.msra.mxu0 0
    %7958 = vmatprep.subr.bf16.mxu0 0
    %7959 = vmatpush2.bf16.msra.mxu0 0
    %7960 = vmatprep.subr.bf16.mxu0 0
    %7961 = vmatpush2.bf16.msra.mxu0 0
    %7962 = vmatprep.subr.bf16.mxu0 0
    %7963 = vmatpush2.bf16.msra.mxu0 0
    %7964 = vmatprep.subr.bf16.mxu0 0
    %7965 = vmatpush2.bf16.msra.mxu0 0
    %7966 = vmatprep.subr.bf16.mxu0 0
    %7967 = vmatpush2.bf16.msra.mxu0 0
    %7968 = vmatprep.subr.bf16.mxu0 0
    %7969 = vmatpush2.bf16.msra.mxu0 0
    %7970 = vmatprep.mubr.bf16.mxu0 0
    %7971 = vmatmul.mubr.bf16.gmra.mxu0 %v7736
    %v7972 = vpop.f32.mrf.mxu0
    %v7973 = vadd.f32 0.0, %v7972
    %v7974 = vpop.f32.mrf.mxu0
    %v7975 = vpop.f32.mrf.mxu0
    %v7976 = vpop.f32.mrf.mxu0
    %7977 = vdwg.mxu0
    %v7978 = vadd.f32 %v7727, %v7932
    %v7979 = vadd.f32 %v7728, %v7934
    %v7980 = vadd.f32 %v7729, %v7973
    %v7981 = vld [vmem:[#allocation8 + $0xd80] sm:$0xff]
    %v7982 = vld [vmem:[#allocation8 + $0xd88] sm:$0xf]
    %v7983 = vld [vmem:[#allocation8 + $0xd8c] sm:$0xff]
    %v7984 = vld [vmem:[#allocation8 + $0xd94] sm:$0xf]
    %v7985 = vld [vmem:[#allocation8 + $0xd98] sm:$0xff]
    %v7986 = vld [vmem:[#allocation8 + $0xda0] sm:$0xf]
    %v7987 = vld [vmem:[#allocation8 + $0xda4] sm:$0xff]
    %v7988 = vld [vmem:[#allocation8 + $0xdac] sm:$0xf]
    %v7989 = vld [vmem:[#allocation8 + $0xdb0] sm:$0xff]
    %v7990 = vld [vmem:[#allocation8 + $0xdb8] sm:$0xf]
    %v7991 = vld [vmem:[#allocation8 + $0xdbc] sm:$0xff]
    %v7992 = vld [vmem:[#allocation8 + $0xdc4] sm:$0xf]
    %v7993 = vld [vmem:[#allocation8 + $0xdc8] sm:$0xff]
    %v7994 = vld [vmem:[#allocation8 + $0xdd0] sm:$0xf]
    %v7995 = vld [vmem:[#allocation8 + $0xdd4] sm:$0xff]
    %v7996 = vld [vmem:[#allocation8 + $0xddc] sm:$0xf]
    %v7997 = vld [vmem:[#allocation8 + $0xde0] sm:$0xff]
    %v7998 = vld [vmem:[#allocation8 + $0xde8] sm:$0xf]
    %v7999 = vld [vmem:[#allocation8 + $0xdec] sm:$0xff]
    %v8000 = vld [vmem:[#allocation8 + $0xdf4] sm:$0xf]
    %v8001 = vld [vmem:[#allocation8 + $0xdf8] sm:$0xff]
    %v8002 = vld [vmem:[#allocation8 + $0xe00] sm:$0xf]
    %v8003 = vld [vmem:[#allocation8 + $0xe04] sm:$0xff]
    %v8004 = vld [vmem:[#allocation8 + $0xe0c] sm:$0xf]
    %v8005 = vld [vmem:[#allocation8 + $0xe10] sm:$0xff]
    %v8006 = vld [vmem:[#allocation8 + $0xe18] sm:$0xf]
    %v8007 = vld [vmem:[#allocation8 + $0xe1c] sm:$0xff]
    %v8008 = vld [vmem:[#allocation8 + $0xe24] sm:$0xf]
    %v8009 = vld [vmem:[#allocation8 + $0xe28] sm:$0xff]
    %v8010 = vld [vmem:[#allocation8 + $0xe30] sm:$0xf]
    %v8011 = vld [vmem:[#allocation8 + $0xe34] sm:$0xff]
    %v8012 = vld [vmem:[#allocation8 + $0xe3c] sm:$0xf]
    %v8045 = vunpack.c.l.b16 %v7981
    %v8046 = vunpack.c.h.b16 %v7981
    %v8047 = vunpack.c.l.b16 %v7982
    %v8048 = vunpack.c.l.b16 %v7983
    %v8049 = vunpack.c.h.b16 %v7983
    %v8050 = vunpack.c.l.b16 %v7984
    %v8051 = vunpack.c.l.b16 %v7985
    %v8052 = vunpack.c.h.b16 %v7985
    %v8053 = vunpack.c.l.b16 %v7986
    %v8054 = vunpack.c.l.b16 %v7987
    %v8055 = vunpack.c.h.b16 %v7987
    %v8056 = vunpack.c.l.b16 %v7988
    %v8057 = vunpack.c.l.b16 %v7989
    %v8058 = vunpack.c.h.b16 %v7989
    %v8059 = vunpack.c.l.b16 %v7990
    %v8060 = vunpack.c.l.b16 %v7991
    %v8061 = vunpack.c.h.b16 %v7991
    %v8062 = vunpack.c.l.b16 %v7992
    %v8063 = vunpack.c.l.b16 %v7993
    %v8064 = vunpack.c.h.b16 %v7993
    %v8065 = vunpack.c.l.b16 %v7994
    %v8066 = vunpack.c.l.b16 %v7995
    %v8067 = vunpack.c.h.b16 %v7995
    %v8068 = vunpack.c.l.b16 %v7996
    %v8069 = vunpack.c.l.b16 %v7997
    %v8070 = vunpack.c.h.b16 %v7997
    %v8071 = vunpack.c.l.b16 %v7998
    %v8072 = vunpack.c.l.b16 %v7999
    %v8073 = vunpack.c.h.b16 %v7999
    %v8074 = vunpack.c.l.b16 %v8000
    %v8075 = vunpack.c.l.b16 %v8001
    %v8076 = vunpack.c.h.b16 %v8001
    %v8077 = vunpack.c.l.b16 %v8002
    %v8078 = vunpack.c.l.b16 %v8003
    %v8079 = vunpack.c.h.b16 %v8003
    %v8080 = vunpack.c.l.b16 %v8004
    %v8081 = vunpack.c.l.b16 %v8005
    %v8082 = vunpack.c.h.b16 %v8005
    %v8083 = vunpack.c.l.b16 %v8006
    %v8084 = vunpack.c.l.b16 %v8007
    %v8085 = vunpack.c.h.b16 %v8007
    %v8086 = vunpack.c.l.b16 %v8008
    %v8087 = vunpack.c.l.b16 %v8009
    %v8088 = vunpack.c.h.b16 %v8009
    %v8089 = vunpack.c.l.b16 %v8010
    %v8090 = vunpack.c.l.b16 %v8011
    %v8091 = vunpack.c.h.b16 %v8011
    %v8092 = vunpack.c.l.b16 %v8012
    %v8093 = vpack.c.b16 %v8048, %v8045
    %v8094 = vpack.c.b16 %v8049, %v8046
    %v8095 = vpack.c.b16 %v8050, %v8047
    %v8096 = vpack.c.b16 %v8054, %v8051
    %v8097 = vpack.c.b16 %v8055, %v8052
    %v8098 = vpack.c.b16 %v8056, %v8053
    %v8099 = vpack.c.b16 %v8060, %v8057
    %v8100 = vpack.c.b16 %v8061, %v8058
    %v8101 = vpack.c.b16 %v8062, %v8059
    %v8102 = vpack.c.b16 %v8066, %v8063
    %v8103 = vpack.c.b16 %v8067, %v8064
    %v8104 = vpack.c.b16 %v8068, %v8065
    %v8105 = vpack.c.b16 %v8072, %v8069
    %v8106 = vpack.c.b16 %v8073, %v8070
    %v8107 = vpack.c.b16 %v8074, %v8071
    %v8108 = vpack.c.b16 %v8078, %v8075
    %v8109 = vpack.c.b16 %v8079, %v8076
    %v8110 = vpack.c.b16 %v8080, %v8077
    %v8111 = vpack.c.b16 %v8084, %v8081
    %v8112 = vpack.c.b16 %v8085, %v8082
    %v8113 = vpack.c.b16 %v8086, %v8083
    %v8114 = vpack.c.b16 %v8090, %v8087
    %v8115 = vpack.c.b16 %v8091, %v8088
    %v8116 = vpack.c.b16 %v8092, %v8089
    %8141 = vmatprep.subr.bf16.mxu0 %v8115
    %8142 = vmatpush1.bf16.msra.mxu0 %v8114
    %8143 = vmatprep.subr.bf16.mxu0 %v8112
    %8144 = vmatpush1.bf16.msra.mxu0 %v8111
    %8145 = vmatprep.subr.bf16.mxu0 %v8109
    %8146 = vmatpush1.bf16.msra.mxu0 %v8108
    %8147 = vmatprep.subr.bf16.mxu0 %v8106
    %8148 = vmatpush1.bf16.msra.mxu0 %v8105
    %8149 = vmatprep.subr.bf16.mxu0 %v8103
    %8150 = vmatpush1.bf16.msra.mxu0 %v8102
    %8151 = vmatprep.subr.bf16.mxu0 %v8100
    %8152 = vmatpush1.bf16.msra.mxu0 %v8099
    %8153 = vmatprep.subr.bf16.mxu0 %v8097
    %8154 = vmatpush1.bf16.msra.mxu0 %v8096
    %8155 = vmatprep.subr.bf16.mxu0 %v8094
    %8156 = vmatpush1.bf16.msra.mxu0 %v8093
    %8157 = vmatprep.subr.bf16.mxu0 0
    %8158 = vmatpush2.bf16.msra.mxu0 0
    %8159 = vmatprep.subr.bf16.mxu0 0
    %8160 = vmatpush2.bf16.msra.mxu0 0
    %8161 = vmatprep.subr.bf16.mxu0 0
    %8162 = vmatpush2.bf16.msra.mxu0 0
    %8163 = vmatprep.subr.bf16.mxu0 0
    %8164 = vmatpush2.bf16.msra.mxu0 0
    %8165 = vmatprep.subr.bf16.mxu0 0
    %8166 = vmatpush2.bf16.msra.mxu0 0
    %8167 = vmatprep.subr.bf16.mxu0 0
    %8168 = vmatpush2.bf16.msra.mxu0 0
    %8169 = vmatprep.subr.bf16.mxu0 0
    %8170 = vmatpush2.bf16.msra.mxu0 0
    %8171 = vmatprep.subr.bf16.mxu0 0
    %8172 = vmatpush2.bf16.msra.mxu0 0
    %8173 = vmatprep.mubr.bf16.mxu0 0
    %8174 = vmatmul.mubr.bf16.gmra.mxu0 %v7736
    %v8175 = vpop.f32.mrf.mxu0
    %v8176 = vadd.f32 0.0, %v8175
    %v8177 = vpop.f32.mrf.mxu0
    %v8178 = vadd.f32 0.0, %v8177
    %v8179 = vpop.f32.mrf.mxu0
    %v8180 = vpop.f32.mrf.mxu0
    %8181 = vdwg.mxu0
    %8182 = vmatprep.subr.bf16.mxu0 0
    %8183 = vmatpush1.bf16.msra.mxu0 %v8116
    %8184 = vmatprep.subr.bf16.mxu0 0
    %8185 = vmatpush1.bf16.msra.mxu0 %v8113
    %8186 = vmatprep.subr.bf16.mxu0 0
    %8187 = vmatpush1.bf16.msra.mxu0 %v8110
    %8188 = vmatprep.subr.bf16.mxu0 0
    %8189 = vmatpush1.bf16.msra.mxu0 %v8107
    %8190 = vmatprep.subr.bf16.mxu0 0
    %8191 = vmatpush1.bf16.msra.mxu0 %v8104
    %8192 = vmatprep.subr.bf16.mxu0 0
    %8193 = vmatpush1.bf16.msra.mxu0 %v8101
    %8194 = vmatprep.subr.bf16.mxu0 0
    %8195 = vmatpush1.bf16.msra.mxu0 %v8098
    %8196 = vmatprep.subr.bf16.mxu0 0
    %8197 = vmatpush1.bf16.msra.mxu0 %v8095
    %8198 = vmatprep.subr.bf16.mxu0 0
    %8199 = vmatpush2.bf16.msra.mxu0 0
    %8200 = vmatprep.subr.bf16.mxu0 0
    %8201 = vmatpush2.bf16.msra.mxu0 0
    %8202 = vmatprep.subr.bf16.mxu0 0
    %8203 = vmatpush2.bf16.msra.mxu0 0
    %8204 = vmatprep.subr.bf16.mxu0 0
    %8205 = vmatpush2.bf16.msra.mxu0 0
    %8206 = vmatprep.subr.bf16.mxu0 0
    %8207 = vmatpush2.bf16.msra.mxu0 0
    %8208 = vmatprep.subr.bf16.mxu0 0
    %8209 = vmatpush2.bf16.msra.mxu0 0
    %8210 = vmatprep.subr.bf16.mxu0 0
    %8211 = vmatpush2.bf16.msra.mxu0 0
    %8212 = vmatprep.subr.bf16.mxu0 0
    %8213 = vmatpush2.bf16.msra.mxu0 0
    %8214 = vmatprep.mubr.bf16.mxu0 0
    %8215 = vmatmul.mubr.bf16.gmra.mxu0 %v7736
    %v8216 = vpop.f32.mrf.mxu0
    %v8217 = vadd.f32 0.0, %v8216
    %v8218 = vpop.f32.mrf.mxu0
    %v8219 = vpop.f32.mrf.mxu0
    %v8220 = vpop.f32.mrf.mxu0
    %8221 = vdwg.mxu0
    %v8222 = vadd.f32 %v7978, %v8176
    %v8223 = vadd.f32 %v7979, %v8178
    %v8224 = vadd.f32 %v7980, %v8217
    %8225 = vset.pattern.permute.xlu0 5
    %8226 = vperm.xlu0 %8225, %v90
    %v8227 = vpop.permute.xlu0 %8226
    %vm8228 = vcmp.eq.s32.totalorder %v89, %v8227
    %vm8229 = vcmp.eq.s32.totalorder %v1223, %v8227
    %vm8230 = vcmp.eq.s32.totalorder %v1224, %v8227
    %v8231 = vsel %vm8228, 1, 0
    %v8232 = vsel %vm8229, 1, 0
    %v8233 = vsel %vm8230, 1, 0
    %v8234 = vcvt.s32.f32 %v8231
    %v8235 = vcvt.s32.f32 %v8232
    %v8236 = vcvt.s32.f32 %v8233
    %v8237 = vpack.c.bf16 %v8234, %v8234
    %v8238 = vpack.c.bf16 %v8235, %v8235
    %v8239 = vpack.c.bf16 %v8236, %v8236
    %v8240 = vld [vmem:[#allocation7 + $0xe40] sm:$0xff]
    %v8241 = vld [vmem:[#allocation7 + $0xe48] sm:$0xf]
    %v8242 = vld [vmem:[#allocation7 + $0xe4c] sm:$0xff]
    %v8243 = vld [vmem:[#allocation7 + $0xe54] sm:$0xf]
    %v8244 = vld [vmem:[#allocation7 + $0xe58] sm:$0xff]
    %v8245 = vld [vmem:[#allocation7 + $0xe60] sm:$0xf]
    %v8246 = vld [vmem:[#allocation7 + $0xe64] sm:$0xff]
    %v8247 = vld [vmem:[#allocation7 + $0xe6c] sm:$0xf]
    %v8248 = vld [vmem:[#allocation7 + $0xe70] sm:$0xff]
    %v8249 = vld [vmem:[#allocation7 + $0xe78] sm:$0xf]
    %v8250 = vld [vmem:[#allocation7 + $0xe7c] sm:$0xff]
    %v8251 = vld [vmem:[#allocation7 + $0xe84] sm:$0xf]
    %v8252 = vld [vmem:[#allocation7 + $0xe88] sm:$0xff]
    %v8253 = vld [vmem:[#allocation7 + $0xe90] sm:$0xf]
    %v8254 = vld [vmem:[#allocation7 + $0xe94] sm:$0xff]
    %v8255 = vld [vmem:[#allocation7 + $0xe9c] sm:$0xf]
    %v8256 = vld [vmem:[#allocation7 + $0xea0] sm:$0xff]
    %v8257 = vld [vmem:[#allocation7 + $0xea8] sm:$0xf]
    %v8258 = vld [vmem:[#allocation7 + $0xeac] sm:$0xff]
    %v8259 = vld [vmem:[#allocation7 + $0xeb4] sm:$0xf]
    %v8260 = vld [vmem:[#allocation7 + $0xeb8] sm:$0xff]
    %v8261 = vld [vmem:[#allocation7 + $0xec0] sm:$0xf]
    %v8262 = vld [vmem:[#allocation7 + $0xec4] sm:$0xff]
    %v8263 = vld [vmem:[#allocation7 + $0xecc] sm:$0xf]
    %v8264 = vld [vmem:[#allocation7 + $0xed0] sm:$0xff]
    %v8265 = vld [vmem:[#allocation7 + $0xed8] sm:$0xf]
    %v8266 = vld [vmem:[#allocation7 + $0xedc] sm:$0xff]
    %v8267 = vld [vmem:[#allocation7 + $0xee4] sm:$0xf]
    %v8268 = vld [vmem:[#allocation7 + $0xee8] sm:$0xff]
    %v8269 = vld [vmem:[#allocation7 + $0xef0] sm:$0xf]
    %v8270 = vld [vmem:[#allocation7 + $0xef4] sm:$0xff]
    %v8271 = vld [vmem:[#allocation7 + $0xefc] sm:$0xf]
    %v8272 = vld [vmem:[#allocation7 + $0xf00] sm:$0xff]
    %v8273 = vld [vmem:[#allocation7 + $0xf08] sm:$0xf]
    %v8274 = vld [vmem:[#allocation7 + $0xf0c] sm:$0xff]
    %v8275 = vld [vmem:[#allocation7 + $0xf14] sm:$0xf]
    %v8276 = vld [vmem:[#allocation7 + $0xf18] sm:$0xff]
    %v8277 = vld [vmem:[#allocation7 + $0xf20] sm:$0xf]
    %v8278 = vld [vmem:[#allocation7 + $0xf24] sm:$0xff]
    %v8279 = vld [vmem:[#allocation7 + $0xf2c] sm:$0xf]
    %v8280 = vld [vmem:[#allocation7 + $0xf30] sm:$0xff]
    %v8281 = vld [vmem:[#allocation7 + $0xf38] sm:$0xf]
    %v8282 = vld [vmem:[#allocation7 + $0xf3c] sm:$0xff]
    %v8283 = vld [vmem:[#allocation7 + $0xf44] sm:$0xf]
    %v8284 = vld [vmem:[#allocation7 + $0xf48] sm:$0xff]
    %v8285 = vld [vmem:[#allocation7 + $0xf50] sm:$0xf]
    %v8286 = vld [vmem:[#allocation7 + $0xf54] sm:$0xff]
    %v8287 = vld [vmem:[#allocation7 + $0xf5c] sm:$0xf]
    %v8288 = vld [vmem:[#allocation7 + $0xf60] sm:$0xff]
    %v8289 = vld [vmem:[#allocation7 + $0xf68] sm:$0xf]
    %v8290 = vld [vmem:[#allocation7 + $0xf6c] sm:$0xff]
    %v8291 = vld [vmem:[#allocation7 + $0xf74] sm:$0xf]
    %v8292 = vld [vmem:[#allocation7 + $0xf78] sm:$0xff]
    %v8293 = vld [vmem:[#allocation7 + $0xf80] sm:$0xf]
    %v8294 = vld [vmem:[#allocation7 + $0xf84] sm:$0xff]
    %v8295 = vld [vmem:[#allocation7 + $0xf8c] sm:$0xf]
    %v8296 = vld [vmem:[#allocation7 + $0xf90] sm:$0xff]
    %v8297 = vld [vmem:[#allocation7 + $0xf98] sm:$0xf]
    %v8298 = vld [vmem:[#allocation7 + $0xf9c] sm:$0xff]
    %v8299 = vld [vmem:[#allocation7 + $0xfa4] sm:$0xf]
    %v8300 = vld [vmem:[#allocation7 + $0xfa8] sm:$0xff]
    %v8301 = vld [vmem:[#allocation7 + $0xfb0] sm:$0xf]
    %v8302 = vld [vmem:[#allocation7 + $0xfb4] sm:$0xff]
    %v8303 = vld [vmem:[#allocation7 + $0xfbc] sm:$0xf]
    %v8304 = vld [vmem:[#allocation7 + $0xfc0] sm:$0xff]
    %v8305 = vld [vmem:[#allocation7 + $0xfc8] sm:$0xf]
    %v8306 = vld [vmem:[#allocation7 + $0xfcc] sm:$0xff]
    %v8307 = vld [vmem:[#allocation7 + $0xfd4] sm:$0xf]
    %v8308 = vld [vmem:[#allocation7 + $0xfd8] sm:$0xff]
    %v8309 = vld [vmem:[#allocation7 + $0xfe0] sm:$0xf]
    %v8310 = vld [vmem:[#allocation7 + $0xfe4] sm:$0xff]
    %v8311 = vld [vmem:[#allocation7 + $0xfec] sm:$0xf]
    %v8312 = vld [vmem:[#allocation7 + $0xff0] sm:$0xff]
    %v8313 = vld [vmem:[#allocation7 + $0xff8] sm:$0xf]
    %v8314 = vld [vmem:[#allocation7 + $0xffc] sm:$0xff]
    %v8315 = vld [vmem:[#allocation7 + $0x1004] sm:$0xf]
    %v8316 = vld [vmem:[#allocation7 + $0x1008] sm:$0xff]
    %v8317 = vld [vmem:[#allocation7 + $0x1010] sm:$0xf]
    %v8318 = vld [vmem:[#allocation7 + $0x1014] sm:$0xff]
    %v8319 = vld [vmem:[#allocation7 + $0x101c] sm:$0xf]
    %v8320 = vld [vmem:[#allocation7 + $0x1020] sm:$0xff]
    %v8321 = vld [vmem:[#allocation7 + $0x1028] sm:$0xf]
    %v8322 = vld [vmem:[#allocation7 + $0x102c] sm:$0xff]
    %v8323 = vld [vmem:[#allocation7 + $0x1034] sm:$0xf]
    %v8324 = vld [vmem:[#allocation7 + $0x1038] sm:$0xff]
    %v8325 = vld [vmem:[#allocation7 + $0x1040] sm:$0xf]
    %v8326 = vld [vmem:[#allocation7 + $0x1044] sm:$0xff]
    %v8327 = vld [vmem:[#allocation7 + $0x104c] sm:$0xf]
    %v8328 = vld [vmem:[#allocation7 + $0x1050] sm:$0xff]
    %v8329 = vld [vmem:[#allocation7 + $0x1058] sm:$0xf]
    %v8330 = vld [vmem:[#allocation7 + $0x105c] sm:$0xff]
    %v8331 = vld [vmem:[#allocation7 + $0x1064] sm:$0xf]
    %v8332 = vld [vmem:[#allocation7 + $0x1068] sm:$0xff]
    %v8333 = vld [vmem:[#allocation7 + $0x1070] sm:$0xf]
    %v8334 = vld [vmem:[#allocation7 + $0x1074] sm:$0xff]
    %v8335 = vld [vmem:[#allocation7 + $0x107c] sm:$0xf]
    %v8432 = vunpack.c.l.b16 %v8240
    %v8433 = vunpack.c.h.b16 %v8240
    %v8434 = vunpack.c.l.b16 %v8241
    %v8435 = vunpack.c.l.b16 %v8242
    %v8436 = vunpack.c.h.b16 %v8242
    %v8437 = vunpack.c.l.b16 %v8243
    %v8438 = vunpack.c.l.b16 %v8244
    %v8439 = vunpack.c.h.b16 %v8244
    %v8440 = vunpack.c.l.b16 %v8245
    %v8441 = vunpack.c.l.b16 %v8246
    %v8442 = vunpack.c.h.b16 %v8246
    %v8443 = vunpack.c.l.b16 %v8247
    %v8444 = vunpack.c.l.b16 %v8248
    %v8445 = vunpack.c.h.b16 %v8248
    %v8446 = vunpack.c.l.b16 %v8249
    %v8447 = vunpack.c.l.b16 %v8250
    %v8448 = vunpack.c.h.b16 %v8250
    %v8449 = vunpack.c.l.b16 %v8251
    %v8450 = vunpack.c.l.b16 %v8252
    %v8451 = vunpack.c.h.b16 %v8252
    %v8452 = vunpack.c.l.b16 %v8253
    %v8453 = vunpack.c.l.b16 %v8254
    %v8454 = vunpack.c.h.b16 %v8254
    %v8455 = vunpack.c.l.b16 %v8255
    %v8456 = vunpack.c.l.b16 %v8256
    %v8457 = vunpack.c.h.b16 %v8256
    %v8458 = vunpack.c.l.b16 %v8257
    %v8459 = vunpack.c.l.b16 %v8258
    %v8460 = vunpack.c.h.b16 %v8258
    %v8461 = vunpack.c.l.b16 %v8259
    %v8462 = vunpack.c.l.b16 %v8260
    %v8463 = vunpack.c.h.b16 %v8260
    %v8464 = vunpack.c.l.b16 %v8261
    %v8465 = vunpack.c.l.b16 %v8262
    %v8466 = vunpack.c.h.b16 %v8262
    %v8467 = vunpack.c.l.b16 %v8263
    %v8468 = vunpack.c.l.b16 %v8264
    %v8469 = vunpack.c.h.b16 %v8264
    %v8470 = vunpack.c.l.b16 %v8265
    %v8471 = vunpack.c.l.b16 %v8266
    %v8472 = vunpack.c.h.b16 %v8266
    %v8473 = vunpack.c.l.b16 %v8267
    %v8474 = vunpack.c.l.b16 %v8268
    %v8475 = vunpack.c.h.b16 %v8268
    %v8476 = vunpack.c.l.b16 %v8269
    %v8477 = vunpack.c.l.b16 %v8270
    %v8478 = vunpack.c.h.b16 %v8270
    %v8479 = vunpack.c.l.b16 %v8271
    %v8480 = vunpack.c.l.b16 %v8272
    %v8481 = vunpack.c.h.b16 %v8272
    %v8482 = vunpack.c.l.b16 %v8273
    %v8483 = vunpack.c.l.b16 %v8274
    %v8484 = vunpack.c.h.b16 %v8274
    %v8485 = vunpack.c.l.b16 %v8275
    %v8486 = vunpack.c.l.b16 %v8276
    %v8487 = vunpack.c.h.b16 %v8276
    %v8488 = vunpack.c.l.b16 %v8277
    %v8489 = vunpack.c.l.b16 %v8278
    %v8490 = vunpack.c.h.b16 %v8278
    %v8491 = vunpack.c.l.b16 %v8279
    %v8492 = vunpack.c.l.b16 %v8280
    %v8493 = vunpack.c.h.b16 %v8280
    %v8494 = vunpack.c.l.b16 %v8281
    %v8495 = vunpack.c.l.b16 %v8282
    %v8496 = vunpack.c.h.b16 %v8282
    %v8497 = vunpack.c.l.b16 %v8283
    %v8498 = vunpack.c.l.b16 %v8284
    %v8499 = vunpack.c.h.b16 %v8284
    %v8500 = vunpack.c.l.b16 %v8285
    %v8501 = vunpack.c.l.b16 %v8286
    %v8502 = vunpack.c.h.b16 %v8286
    %v8503 = vunpack.c.l.b16 %v8287
    %v8504 = vunpack.c.l.b16 %v8288
    %v8505 = vunpack.c.h.b16 %v8288
    %v8506 = vunpack.c.l.b16 %v8289
    %v8507 = vunpack.c.l.b16 %v8290
    %v8508 = vunpack.c.h.b16 %v8290
    %v8509 = vunpack.c.l.b16 %v8291
    %v8510 = vunpack.c.l.b16 %v8292
    %v8511 = vunpack.c.h.b16 %v8292
    %v8512 = vunpack.c.l.b16 %v8293
    %v8513 = vunpack.c.l.b16 %v8294
    %v8514 = vunpack.c.h.b16 %v8294
    %v8515 = vunpack.c.l.b16 %v8295
    %v8516 = vunpack.c.l.b16 %v8296
    %v8517 = vunpack.c.h.b16 %v8296
    %v8518 = vunpack.c.l.b16 %v8297
    %v8519 = vunpack.c.l.b16 %v8298
    %v8520 = vunpack.c.h.b16 %v8298
    %v8521 = vunpack.c.l.b16 %v8299
    %v8522 = vunpack.c.l.b16 %v8300
    %v8523 = vunpack.c.h.b16 %v8300
    %v8524 = vunpack.c.l.b16 %v8301
    %v8525 = vunpack.c.l.b16 %v8302
    %v8526 = vunpack.c.h.b16 %v8302
    %v8527 = vunpack.c.l.b16 %v8303
    %v8528 = vunpack.c.l.b16 %v8304
    %v8529 = vunpack.c.h.b16 %v8304
    %v8530 = vunpack.c.l.b16 %v8305
    %v8531 = vunpack.c.l.b16 %v8306
    %v8532 = vunpack.c.h.b16 %v8306
    %v8533 = vunpack.c.l.b16 %v8307
    %v8534 = vunpack.c.l.b16 %v8308
    %v8535 = vunpack.c.h.b16 %v8308
    %v8536 = vunpack.c.l.b16 %v8309
    %v8537 = vunpack.c.l.b16 %v8310
    %v8538 = vunpack.c.h.b16 %v8310
    %v8539 = vunpack.c.l.b16 %v8311
    %v8540 = vunpack.c.l.b16 %v8312
    %v8541 = vunpack.c.h.b16 %v8312
    %v8542 = vunpack.c.l.b16 %v8313
    %v8543 = vunpack.c.l.b16 %v8314
    %v8544 = vunpack.c.h.b16 %v8314
    %v8545 = vunpack.c.l.b16 %v8315
    %v8546 = vunpack.c.l.b16 %v8316
    %v8547 = vunpack.c.h.b16 %v8316
    %v8548 = vunpack.c.l.b16 %v8317
    %v8549 = vunpack.c.l.b16 %v8318
    %v8550 = vunpack.c.h.b16 %v8318
    %v8551 = vunpack.c.l.b16 %v8319
    %v8552 = vunpack.c.l.b16 %v8320
    %v8553 = vunpack.c.h.b16 %v8320
    %v8554 = vunpack.c.l.b16 %v8321
    %v8555 = vunpack.c.l.b16 %v8322
    %v8556 = vunpack.c.h.b16 %v8322
    %v8557 = vunpack.c.l.b16 %v8323
    %v8558 = vunpack.c.l.b16 %v8324
    %v8559 = vunpack.c.h.b16 %v8324
    %v8560 = vunpack.c.l.b16 %v8325
    %v8561 = vunpack.c.l.b16 %v8326
    %v8562 = vunpack.c.h.b16 %v8326
    %v8563 = vunpack.c.l.b16 %v8327
    %v8564 = vunpack.c.l.b16 %v8328
    %v8565 = vunpack.c.h.b16 %v8328
    %v8566 = vunpack.c.l.b16 %v8329
    %v8567 = vunpack.c.l.b16 %v8330
    %v8568 = vunpack.c.h.b16 %v8330
    %v8569 = vunpack.c.l.b16 %v8331
    %v8570 = vunpack.c.l.b16 %v8332
    %v8571 = vunpack.c.h.b16 %v8332
    %v8572 = vunpack.c.l.b16 %v8333
    %v8573 = vunpack.c.l.b16 %v8334
    %v8574 = vunpack.c.h.b16 %v8334
    %v8575 = vunpack.c.l.b16 %v8335
    %v8576 = vpack.c.b16 %v8435, %v8432
    %v8577 = vpack.c.b16 %v8436, %v8433
    %v8578 = vpack.c.b16 %v8437, %v8434
    %v8579 = vpack.c.b16 %v8441, %v8438
    %v8580 = vpack.c.b16 %v8442, %v8439
    %v8581 = vpack.c.b16 %v8443, %v8440
    %v8582 = vpack.c.b16 %v8447, %v8444
    %v8583 = vpack.c.b16 %v8448, %v8445
    %v8584 = vpack.c.b16 %v8449, %v8446
    %v8585 = vpack.c.b16 %v8453, %v8450
    %v8586 = vpack.c.b16 %v8454, %v8451
    %v8587 = vpack.c.b16 %v8455, %v8452
    %v8588 = vpack.c.b16 %v8459, %v8456
    %v8589 = vpack.c.b16 %v8460, %v8457
    %v8590 = vpack.c.b16 %v8461, %v8458
    %v8591 = vpack.c.b16 %v8465, %v8462
    %v8592 = vpack.c.b16 %v8466, %v8463
    %v8593 = vpack.c.b16 %v8467, %v8464
    %v8594 = vpack.c.b16 %v8471, %v8468
    %v8595 = vpack.c.b16 %v8472, %v8469
    %v8596 = vpack.c.b16 %v8473, %v8470
    %v8597 = vpack.c.b16 %v8477, %v8474
    %v8598 = vpack.c.b16 %v8478, %v8475
    %v8599 = vpack.c.b16 %v8479, %v8476
    %v8600 = vpack.c.b16 %v8483, %v8480
    %v8601 = vpack.c.b16 %v8484, %v8481
    %v8602 = vpack.c.b16 %v8485, %v8482
    %v8603 = vpack.c.b16 %v8489, %v8486
    %v8604 = vpack.c.b16 %v8490, %v8487
    %v8605 = vpack.c.b16 %v8491, %v8488
    %v8606 = vpack.c.b16 %v8495, %v8492
    %v8607 = vpack.c.b16 %v8496, %v8493
    %v8608 = vpack.c.b16 %v8497, %v8494
    %v8609 = vpack.c.b16 %v8501, %v8498
    %v8610 = vpack.c.b16 %v8502, %v8499
    %v8611 = vpack.c.b16 %v8503, %v8500
    %v8612 = vpack.c.b16 %v8507, %v8504
    %v8613 = vpack.c.b16 %v8508, %v8505
    %v8614 = vpack.c.b16 %v8509, %v8506
    %v8615 = vpack.c.b16 %v8513, %v8510
    %v8616 = vpack.c.b16 %v8514, %v8511
    %v8617 = vpack.c.b16 %v8515, %v8512
    %v8618 = vpack.c.b16 %v8519, %v8516
    %v8619 = vpack.c.b16 %v8520, %v8517
    %v8620 = vpack.c.b16 %v8521, %v8518
    %v8621 = vpack.c.b16 %v8525, %v8522
    %v8622 = vpack.c.b16 %v8526, %v8523
    %v8623 = vpack.c.b16 %v8527, %v8524
    %v8624 = vpack.c.b16 %v8531, %v8528
    %v8625 = vpack.c.b16 %v8532, %v8529
    %v8626 = vpack.c.b16 %v8533, %v8530
    %v8627 = vpack.c.b16 %v8537, %v8534
    %v8628 = vpack.c.b16 %v8538, %v8535
    %v8629 = vpack.c.b16 %v8539, %v8536
    %v8630 = vpack.c.b16 %v8543, %v8540
    %v8631 = vpack.c.b16 %v8544, %v8541
    %v8632 = vpack.c.b16 %v8545, %v8542
    %v8633 = vpack.c.b16 %v8549, %v8546
    %v8634 = vpack.c.b16 %v8550, %v8547
    %v8635 = vpack.c.b16 %v8551, %v8548
    %v8636 = vpack.c.b16 %v8555, %v8552
    %v8637 = vpack.c.b16 %v8556, %v8553
    %v8638 = vpack.c.b16 %v8557, %v8554
    %v8639 = vpack.c.b16 %v8561, %v8558
    %v8640 = vpack.c.b16 %v8562, %v8559
    %v8641 = vpack.c.b16 %v8563, %v8560
    %v8642 = vpack.c.b16 %v8567, %v8564
    %v8643 = vpack.c.b16 %v8568, %v8565
    %v8644 = vpack.c.b16 %v8569, %v8566
    %v8645 = vpack.c.b16 %v8573, %v8570
    %v8646 = vpack.c.b16 %v8574, %v8571
    %v8647 = vpack.c.b16 %v8575, %v8572
    %8720 = vmatprep.subr.bf16.mxu0 %v8598
    %8721 = vmatpush1.bf16.msra.mxu0 %v8597
    %8722 = vmatprep.subr.bf16.mxu0 %v8595
    %8723 = vmatpush1.bf16.msra.mxu0 %v8594
    %8724 = vmatprep.subr.bf16.mxu0 %v8592
    %8725 = vmatpush1.bf16.msra.mxu0 %v8591
    %8726 = vmatprep.subr.bf16.mxu0 %v8589
    %8727 = vmatpush1.bf16.msra.mxu0 %v8588
    %8728 = vmatprep.subr.bf16.mxu0 %v8586
    %8729 = vmatpush1.bf16.msra.mxu0 %v8585
    %8730 = vmatprep.subr.bf16.mxu0 %v8583
    %8731 = vmatpush1.bf16.msra.mxu0 %v8582
    %8732 = vmatprep.subr.bf16.mxu0 %v8580
    %8733 = vmatpush1.bf16.msra.mxu0 %v8579
    %8734 = vmatprep.subr.bf16.mxu0 %v8577
    %8735 = vmatpush1.bf16.msra.mxu0 %v8576
    %8736 = vmatprep.subr.bf16.mxu0 %v8622
    %8737 = vmatpush2.bf16.msra.mxu0 %v8621
    %8738 = vmatprep.subr.bf16.mxu0 %v8619
    %8739 = vmatpush2.bf16.msra.mxu0 %v8618
    %8740 = vmatprep.subr.bf16.mxu0 %v8616
    %8741 = vmatpush2.bf16.msra.mxu0 %v8615
    %8742 = vmatprep.subr.bf16.mxu0 %v8613
    %8743 = vmatpush2.bf16.msra.mxu0 %v8612
    %8744 = vmatprep.subr.bf16.mxu0 %v8610
    %8745 = vmatpush2.bf16.msra.mxu0 %v8609
    %8746 = vmatprep.subr.bf16.mxu0 %v8607
    %8747 = vmatpush2.bf16.msra.mxu0 %v8606
    %8748 = vmatprep.subr.bf16.mxu0 %v8604
    %8749 = vmatpush2.bf16.msra.mxu0 %v8603
    %8750 = vmatprep.subr.bf16.mxu0 %v8601
    %8751 = vmatpush2.bf16.msra.mxu0 %v8600
    %8752 = vmatprep.mubr.bf16.mxu0 %v8238
    %8753 = vmatmul.mubr.bf16.gmra.mxu0 %v8237
    %v8754 = vpop.f32.mrf.mxu0
    %v8755 = vadd.f32 0.0, %v8754
    %v8756 = vpop.f32.mrf.mxu0
    %v8757 = vadd.f32 0.0, %v8756
    %v8758 = vpop.f32.mrf.mxu0
    %v8759 = vpop.f32.mrf.mxu0
    %8760 = vdwg.mxu0
    %8761 = vmatprep.subr.bf16.mxu0 %v8646
    %8762 = vmatpush1.bf16.msra.mxu0 %v8645
    %8763 = vmatprep.subr.bf16.mxu0 %v8643
    %8764 = vmatpush1.bf16.msra.mxu0 %v8642
    %8765 = vmatprep.subr.bf16.mxu0 %v8640
    %8766 = vmatpush1.bf16.msra.mxu0 %v8639
    %8767 = vmatprep.subr.bf16.mxu0 %v8637
    %8768 = vmatpush1.bf16.msra.mxu0 %v8636
    %8769 = vmatprep.subr.bf16.mxu0 %v8634
    %8770 = vmatpush1.bf16.msra.mxu0 %v8633
    %8771 = vmatprep.subr.bf16.mxu0 %v8631
    %8772 = vmatpush1.bf16.msra.mxu0 %v8630
    %8773 = vmatprep.subr.bf16.mxu0 %v8628
    %8774 = vmatpush1.bf16.msra.mxu0 %v8627
    %8775 = vmatprep.subr.bf16.mxu0 %v8625
    %8776 = vmatpush1.bf16.msra.mxu0 %v8624
    %8777 = vmatprep.subr.bf16.mxu0 0
    %8778 = vmatpush2.bf16.msra.mxu0 0
    %8779 = vmatprep.subr.bf16.mxu0 0
    %8780 = vmatpush2.bf16.msra.mxu0 0
    %8781 = vmatprep.subr.bf16.mxu0 0
    %8782 = vmatpush2.bf16.msra.mxu0 0
    %8783 = vmatprep.subr.bf16.mxu0 0
    %8784 = vmatpush2.bf16.msra.mxu0 0
    %8785 = vmatprep.subr.bf16.mxu0 0
    %8786 = vmatpush2.bf16.msra.mxu0 0
    %8787 = vmatprep.subr.bf16.mxu0 0
    %8788 = vmatpush2.bf16.msra.mxu0 0
    %8789 = vmatprep.subr.bf16.mxu0 0
    %8790 = vmatpush2.bf16.msra.mxu0 0
    %8791 = vmatprep.subr.bf16.mxu0 0
    %8792 = vmatpush2.bf16.msra.mxu0 0
    %8793 = vmatprep.mubr.bf16.mxu0 0
    %8794 = vmatmul.mubr.bf16.gmra.mxu0 %v8239
    %v8795 = vpop.f32.mrf.mxu0
    %v8796 = vadd.f32 %v8755, %v8795
    %v8797 = vpop.f32.mrf.mxu0
    %v8798 = vadd.f32 %v8757, %v8797
    %v8799 = vpop.f32.mrf.mxu0
    %v8800 = vpop.f32.mrf.mxu0
    %8801 = vdwg.mxu0
    %8802 = vmatprep.subr.bf16.mxu0 0
    %8803 = vmatpush1.bf16.msra.mxu0 %v8599
    %8804 = vmatprep.subr.bf16.mxu0 0
    %8805 = vmatpush1.bf16.msra.mxu0 %v8596
    %8806 = vmatprep.subr.bf16.mxu0 0
    %8807 = vmatpush1.bf16.msra.mxu0 %v8593
    %8808 = vmatprep.subr.bf16.mxu0 0
    %8809 = vmatpush1.bf16.msra.mxu0 %v8590
    %8810 = vmatprep.subr.bf16.mxu0 0
    %8811 = vmatpush1.bf16.msra.mxu0 %v8587
    %8812 = vmatprep.subr.bf16.mxu0 0
    %8813 = vmatpush1.bf16.msra.mxu0 %v8584
    %8814 = vmatprep.subr.bf16.mxu0 0
    %8815 = vmatpush1.bf16.msra.mxu0 %v8581
    %8816 = vmatprep.subr.bf16.mxu0 0
    %8817 = vmatpush1.bf16.msra.mxu0 %v8578
    %8818 = vmatprep.subr.bf16.mxu0 0
    %8819 = vmatpush2.bf16.msra.mxu0 %v8623
    %8820 = vmatprep.subr.bf16.mxu0 0
    %8821 = vmatpush2.bf16.msra.mxu0 %v8620
    %8822 = vmatprep.subr.bf16.mxu0 0
    %8823 = vmatpush2.bf16.msra.mxu0 %v8617
    %8824 = vmatprep.subr.bf16.mxu0 0
    %8825 = vmatpush2.bf16.msra.mxu0 %v8614
    %8826 = vmatprep.subr.bf16.mxu0 0
    %8827 = vmatpush2.bf16.msra.mxu0 %v8611
    %8828 = vmatprep.subr.bf16.mxu0 0
    %8829 = vmatpush2.bf16.msra.mxu0 %v8608
    %8830 = vmatprep.subr.bf16.mxu0 0
    %8831 = vmatpush2.bf16.msra.mxu0 %v8605
    %8832 = vmatprep.subr.bf16.mxu0 0
    %8833 = vmatpush2.bf16.msra.mxu0 %v8602
    %8834 = vmatprep.mubr.bf16.mxu0 %v8238
    %8835 = vmatmul.mubr.bf16.gmra.mxu0 %v8237
    %v8836 = vpop.f32.mrf.mxu0
    %v8837 = vadd.f32 0.0, %v8836
    %v8838 = vpop.f32.mrf.mxu0
    %v8839 = vpop.f32.mrf.mxu0
    %v8840 = vpop.f32.mrf.mxu0
    %8841 = vdwg.mxu0
    %8842 = vmatprep.subr.bf16.mxu0 0
    %8843 = vmatpush1.bf16.msra.mxu0 %v8647
    %8844 = vmatprep.subr.bf16.mxu0 0
    %8845 = vmatpush1.bf16.msra.mxu0 %v8644
    %8846 = vmatprep.subr.bf16.mxu0 0
    %8847 = vmatpush1.bf16.msra.mxu0 %v8641
    %8848 = vmatprep.subr.bf16.mxu0 0
    %8849 = vmatpush1.bf16.msra.mxu0 %v8638
    %8850 = vmatprep.subr.bf16.mxu0 0
    %8851 = vmatpush1.bf16.msra.mxu0 %v8635
    %8852 = vmatprep.subr.bf16.mxu0 0
    %8853 = vmatpush1.bf16.msra.mxu0 %v8632
    %8854 = vmatprep.subr.bf16.mxu0 0
    %8855 = vmatpush1.bf16.msra.mxu0 %v8629
    %8856 = vmatprep.subr.bf16.mxu0 0
    %8857 = vmatpush1.bf16.msra.mxu0 %v8626
    %8858 = vmatprep.subr.bf16.mxu0 0
    %8859 = vmatpush2.bf16.msra.mxu0 0
    %8860 = vmatprep.subr.bf16.mxu0 0
    %8861 = vmatpush2.bf16.msra.mxu0 0
    %8862 = vmatprep.subr.bf16.mxu0 0
    %8863 = vmatpush2.bf16.msra.mxu0 0
    %8864 = vmatprep.subr.bf16.mxu0 0
    %8865 = vmatpush2.bf16.msra.mxu0 0
    %8866 = vmatprep.subr.bf16.mxu0 0
    %8867 = vmatpush2.bf16.msra.mxu0 0
    %8868 = vmatprep.subr.bf16.mxu0 0
    %8869 = vmatpush2.bf16.msra.mxu0 0
    %8870 = vmatprep.subr.bf16.mxu0 0
    %8871 = vmatpush2.bf16.msra.mxu0 0
    %8872 = vmatprep.subr.bf16.mxu0 0
    %8873 = vmatpush2.bf16.msra.mxu0 0
    %8874 = vmatprep.mubr.bf16.mxu0 0
    %8875 = vmatmul.mubr.bf16.gmra.mxu0 %v8239
    %v8876 = vpop.f32.mrf.mxu0
    %v8877 = vadd.f32 %v8837, %v8876
    %v8878 = vpop.f32.mrf.mxu0
    %v8879 = vpop.f32.mrf.mxu0
    %v8880 = vpop.f32.mrf.mxu0
    %8881 = vdwg.mxu0
    %v8882 = vadd.f32 %v8222, %v8796
    %v8883 = vadd.f32 %v8223, %v8798
    %v8884 = vadd.f32 %v8224, %v8877
    %v8885 = vld [vmem:[#allocation8 + $0xe40] sm:$0xff]
    %v8886 = vld [vmem:[#allocation8 + $0xe48] sm:$0xf]
    %v8887 = vld [vmem:[#allocation8 + $0xe4c] sm:$0xff]
    %v8888 = vld [vmem:[#allocation8 + $0xe54] sm:$0xf]
    %v8889 = vld [vmem:[#allocation8 + $0xe58] sm:$0xff]
    %v8890 = vld [vmem:[#allocation8 + $0xe60] sm:$0xf]
    %v8891 = vld [vmem:[#allocation8 + $0xe64] sm:$0xff]
    %v8892 = vld [vmem:[#allocation8 + $0xe6c] sm:$0xf]
    %v8893 = vld [vmem:[#allocation8 + $0xe70] sm:$0xff]
    %v8894 = vld [vmem:[#allocation8 + $0xe78] sm:$0xf]
    %v8895 = vld [vmem:[#allocation8 + $0xe7c] sm:$0xff]
    %v8896 = vld [vmem:[#allocation8 + $0xe84] sm:$0xf]
    %v8897 = vld [vmem:[#allocation8 + $0xe88] sm:$0xff]
    %v8898 = vld [vmem:[#allocation8 + $0xe90] sm:$0xf]
    %v8899 = vld [vmem:[#allocation8 + $0xe94] sm:$0xff]
    %v8900 = vld [vmem:[#allocation8 + $0xe9c] sm:$0xf]
    %v8901 = vld [vmem:[#allocation8 + $0xea0] sm:$0xff]
    %v8902 = vld [vmem:[#allocation8 + $0xea8] sm:$0xf]
    %v8903 = vld [vmem:[#allocation8 + $0xeac] sm:$0xff]
    %v8904 = vld [vmem:[#allocation8 + $0xeb4] sm:$0xf]
    %v8905 = vld [vmem:[#allocation8 + $0xeb8] sm:$0xff]
    %v8906 = vld [vmem:[#allocation8 + $0xec0] sm:$0xf]
    %v8907 = vld [vmem:[#allocation8 + $0xec4] sm:$0xff]
    %v8908 = vld [vmem:[#allocation8 + $0xecc] sm:$0xf]
    %v8909 = vld [vmem:[#allocation8 + $0xed0] sm:$0xff]
    %v8910 = vld [vmem:[#allocation8 + $0xed8] sm:$0xf]
    %v8911 = vld [vmem:[#allocation8 + $0xedc] sm:$0xff]
    %v8912 = vld [vmem:[#allocation8 + $0xee4] sm:$0xf]
    %v8913 = vld [vmem:[#allocation8 + $0xee8] sm:$0xff]
    %v8914 = vld [vmem:[#allocation8 + $0xef0] sm:$0xf]
    %v8915 = vld [vmem:[#allocation8 + $0xef4] sm:$0xff]
    %v8916 = vld [vmem:[#allocation8 + $0xefc] sm:$0xf]
    %v8917 = vld [vmem:[#allocation8 + $0xf00] sm:$0xff]
    %v8918 = vld [vmem:[#allocation8 + $0xf08] sm:$0xf]
    %v8919 = vld [vmem:[#allocation8 + $0xf0c] sm:$0xff]
    %v8920 = vld [vmem:[#allocation8 + $0xf14] sm:$0xf]
    %v8921 = vld [vmem:[#allocation8 + $0xf18] sm:$0xff]
    %v8922 = vld [vmem:[#allocation8 + $0xf20] sm:$0xf]
    %v8923 = vld [vmem:[#allocation8 + $0xf24] sm:$0xff]
    %v8924 = vld [vmem:[#allocation8 + $0xf2c] sm:$0xf]
    %v8925 = vld [vmem:[#allocation8 + $0xf30] sm:$0xff]
    %v8926 = vld [vmem:[#allocation8 + $0xf38] sm:$0xf]
    %v8927 = vld [vmem:[#allocation8 + $0xf3c] sm:$0xff]
    %v8928 = vld [vmem:[#allocation8 + $0xf44] sm:$0xf]
    %v8929 = vld [vmem:[#allocation8 + $0xf48] sm:$0xff]
    %v8930 = vld [vmem:[#allocation8 + $0xf50] sm:$0xf]
    %v8931 = vld [vmem:[#allocation8 + $0xf54] sm:$0xff]
    %v8932 = vld [vmem:[#allocation8 + $0xf5c] sm:$0xf]
    %v8933 = vld [vmem:[#allocation8 + $0xf60] sm:$0xff]
    %v8934 = vld [vmem:[#allocation8 + $0xf68] sm:$0xf]
    %v8935 = vld [vmem:[#allocation8 + $0xf6c] sm:$0xff]
    %v8936 = vld [vmem:[#allocation8 + $0xf74] sm:$0xf]
    %v8937 = vld [vmem:[#allocation8 + $0xf78] sm:$0xff]
    %v8938 = vld [vmem:[#allocation8 + $0xf80] sm:$0xf]
    %v8939 = vld [vmem:[#allocation8 + $0xf84] sm:$0xff]
    %v8940 = vld [vmem:[#allocation8 + $0xf8c] sm:$0xf]
    %v8941 = vld [vmem:[#allocation8 + $0xf90] sm:$0xff]
    %v8942 = vld [vmem:[#allocation8 + $0xf98] sm:$0xf]
    %v8943 = vld [vmem:[#allocation8 + $0xf9c] sm:$0xff]
    %v8944 = vld [vmem:[#allocation8 + $0xfa4] sm:$0xf]
    %v8945 = vld [vmem:[#allocation8 + $0xfa8] sm:$0xff]
    %v8946 = vld [vmem:[#allocation8 + $0xfb0] sm:$0xf]
    %v8947 = vld [vmem:[#allocation8 + $0xfb4] sm:$0xff]
    %v8948 = vld [vmem:[#allocation8 + $0xfbc] sm:$0xf]
    %v8949 = vld [vmem:[#allocation8 + $0xfc0] sm:$0xff]
    %v8950 = vld [vmem:[#allocation8 + $0xfc8] sm:$0xf]
    %v8951 = vld [vmem:[#allocation8 + $0xfcc] sm:$0xff]
    %v8952 = vld [vmem:[#allocation8 + $0xfd4] sm:$0xf]
    %v8953 = vld [vmem:[#allocation8 + $0xfd8] sm:$0xff]
    %v8954 = vld [vmem:[#allocation8 + $0xfe0] sm:$0xf]
    %v8955 = vld [vmem:[#allocation8 + $0xfe4] sm:$0xff]
    %v8956 = vld [vmem:[#allocation8 + $0xfec] sm:$0xf]
    %v8957 = vld [vmem:[#allocation8 + $0xff0] sm:$0xff]
    %v8958 = vld [vmem:[#allocation8 + $0xff8] sm:$0xf]
    %v8959 = vld [vmem:[#allocation8 + $0xffc] sm:$0xff]
    %v8960 = vld [vmem:[#allocation8 + $0x1004] sm:$0xf]
    %v8961 = vld [vmem:[#allocation8 + $0x1008] sm:$0xff]
    %v8962 = vld [vmem:[#allocation8 + $0x1010] sm:$0xf]
    %v8963 = vld [vmem:[#allocation8 + $0x1014] sm:$0xff]
    %v8964 = vld [vmem:[#allocation8 + $0x101c] sm:$0xf]
    %v8965 = vld [vmem:[#allocation8 + $0x1020] sm:$0xff]
    %v8966 = vld [vmem:[#allocation8 + $0x1028] sm:$0xf]
    %v8967 = vld [vmem:[#allocation8 + $0x102c] sm:$0xff]
    %v8968 = vld [vmem:[#allocation8 + $0x1034] sm:$0xf]
    %v8969 = vld [vmem:[#allocation8 + $0x1038] sm:$0xff]
    %v8970 = vld [vmem:[#allocation8 + $0x1040] sm:$0xf]
    %v8971 = vld [vmem:[#allocation8 + $0x1044] sm:$0xff]
    %v8972 = vld [vmem:[#allocation8 + $0x104c] sm:$0xf]
    %v8973 = vld [vmem:[#allocation8 + $0x1050] sm:$0xff]
    %v8974 = vld [vmem:[#allocation8 + $0x1058] sm:$0xf]
    %v8975 = vld [vmem:[#allocation8 + $0x105c] sm:$0xff]
    %v8976 = vld [vmem:[#allocation8 + $0x1064] sm:$0xf]
    %v8977 = vld [vmem:[#allocation8 + $0x1068] sm:$0xff]
    %v8978 = vld [vmem:[#allocation8 + $0x1070] sm:$0xf]
    %v8979 = vld [vmem:[#allocation8 + $0x1074] sm:$0xff]
    %v8980 = vld [vmem:[#allocation8 + $0x107c] sm:$0xf]
    %v9077 = vunpack.c.l.b16 %v8885
    %v9078 = vunpack.c.h.b16 %v8885
    %v9079 = vunpack.c.l.b16 %v8886
    %v9080 = vunpack.c.l.b16 %v8887
    %v9081 = vunpack.c.h.b16 %v8887
    %v9082 = vunpack.c.l.b16 %v8888
    %v9083 = vunpack.c.l.b16 %v8889
    %v9084 = vunpack.c.h.b16 %v8889
    %v9085 = vunpack.c.l.b16 %v8890
    %v9086 = vunpack.c.l.b16 %v8891
    %v9087 = vunpack.c.h.b16 %v8891
    %v9088 = vunpack.c.l.b16 %v8892
    %v9089 = vunpack.c.l.b16 %v8893
    %v9090 = vunpack.c.h.b16 %v8893
    %v9091 = vunpack.c.l.b16 %v8894
    %v9092 = vunpack.c.l.b16 %v8895
    %v9093 = vunpack.c.h.b16 %v8895
    %v9094 = vunpack.c.l.b16 %v8896
    %v9095 = vunpack.c.l.b16 %v8897
    %v9096 = vunpack.c.h.b16 %v8897
    %v9097 = vunpack.c.l.b16 %v8898
    %v9098 = vunpack.c.l.b16 %v8899
    %v9099 = vunpack.c.h.b16 %v8899
    %v9100 = vunpack.c.l.b16 %v8900
    %v9101 = vunpack.c.l.b16 %v8901
    %v9102 = vunpack.c.h.b16 %v8901
    %v9103 = vunpack.c.l.b16 %v8902
    %v9104 = vunpack.c.l.b16 %v8903
    %v9105 = vunpack.c.h.b16 %v8903
    %v9106 = vunpack.c.l.b16 %v8904
    %v9107 = vunpack.c.l.b16 %v8905
    %v9108 = vunpack.c.h.b16 %v8905
    %v9109 = vunpack.c.l.b16 %v8906
    %v9110 = vunpack.c.l.b16 %v8907
    %v9111 = vunpack.c.h.b16 %v8907
    %v9112 = vunpack.c.l.b16 %v8908
    %v9113 = vunpack.c.l.b16 %v8909
    %v9114 = vunpack.c.h.b16 %v8909
    %v9115 = vunpack.c.l.b16 %v8910
    %v9116 = vunpack.c.l.b16 %v8911
    %v9117 = vunpack.c.h.b16 %v8911
    %v9118 = vunpack.c.l.b16 %v8912
    %v9119 = vunpack.c.l.b16 %v8913
    %v9120 = vunpack.c.h.b16 %v8913
    %v9121 = vunpack.c.l.b16 %v8914
    %v9122 = vunpack.c.l.b16 %v8915
    %v9123 = vunpack.c.h.b16 %v8915
    %v9124 = vunpack.c.l.b16 %v8916
    %v9125 = vunpack.c.l.b16 %v8917
    %v9126 = vunpack.c.h.b16 %v8917
    %v9127 = vunpack.c.l.b16 %v8918
    %v9128 = vunpack.c.l.b16 %v8919
    %v9129 = vunpack.c.h.b16 %v8919
    %v9130 = vunpack.c.l.b16 %v8920
    %v9131 = vunpack.c.l.b16 %v8921
    %v9132 = vunpack.c.h.b16 %v8921
    %v9133 = vunpack.c.l.b16 %v8922
    %v9134 = vunpack.c.l.b16 %v8923
    %v9135 = vunpack.c.h.b16 %v8923
    %v9136 = vunpack.c.l.b16 %v8924
    %v9137 = vunpack.c.l.b16 %v8925
    %v9138 = vunpack.c.h.b16 %v8925
    %v9139 = vunpack.c.l.b16 %v8926
    %v9140 = vunpack.c.l.b16 %v8927
    %v9141 = vunpack.c.h.b16 %v8927
    %v9142 = vunpack.c.l.b16 %v8928
    %v9143 = vunpack.c.l.b16 %v8929
    %v9144 = vunpack.c.h.b16 %v8929
    %v9145 = vunpack.c.l.b16 %v8930
    %v9146 = vunpack.c.l.b16 %v8931
    %v9147 = vunpack.c.h.b16 %v8931
    %v9148 = vunpack.c.l.b16 %v8932
    %v9149 = vunpack.c.l.b16 %v8933
    %v9150 = vunpack.c.h.b16 %v8933
    %v9151 = vunpack.c.l.b16 %v8934
    %v9152 = vunpack.c.l.b16 %v8935
    %v9153 = vunpack.c.h.b16 %v8935
    %v9154 = vunpack.c.l.b16 %v8936
    %v9155 = vunpack.c.l.b16 %v8937
    %v9156 = vunpack.c.h.b16 %v8937
    %v9157 = vunpack.c.l.b16 %v8938
    %v9158 = vunpack.c.l.b16 %v8939
    %v9159 = vunpack.c.h.b16 %v8939
    %v9160 = vunpack.c.l.b16 %v8940
    %v9161 = vunpack.c.l.b16 %v8941
    %v9162 = vunpack.c.h.b16 %v8941
    %v9163 = vunpack.c.l.b16 %v8942
    %v9164 = vunpack.c.l.b16 %v8943
    %v9165 = vunpack.c.h.b16 %v8943
    %v9166 = vunpack.c.l.b16 %v8944
    %v9167 = vunpack.c.l.b16 %v8945
    %v9168 = vunpack.c.h.b16 %v8945
    %v9169 = vunpack.c.l.b16 %v8946
    %v9170 = vunpack.c.l.b16 %v8947
    %v9171 = vunpack.c.h.b16 %v8947
    %v9172 = vunpack.c.l.b16 %v8948
    %v9173 = vunpack.c.l.b16 %v8949
    %v9174 = vunpack.c.h.b16 %v8949
    %v9175 = vunpack.c.l.b16 %v8950
    %v9176 = vunpack.c.l.b16 %v8951
    %v9177 = vunpack.c.h.b16 %v8951
    %v9178 = vunpack.c.l.b16 %v8952
    %v9179 = vunpack.c.l.b16 %v8953
    %v9180 = vunpack.c.h.b16 %v8953
    %v9181 = vunpack.c.l.b16 %v8954
    %v9182 = vunpack.c.l.b16 %v8955
    %v9183 = vunpack.c.h.b16 %v8955
    %v9184 = vunpack.c.l.b16 %v8956
    %v9185 = vunpack.c.l.b16 %v8957
    %v9186 = vunpack.c.h.b16 %v8957
    %v9187 = vunpack.c.l.b16 %v8958
    %v9188 = vunpack.c.l.b16 %v8959
    %v9189 = vunpack.c.h.b16 %v8959
    %v9190 = vunpack.c.l.b16 %v8960
    %v9191 = vunpack.c.l.b16 %v8961
    %v9192 = vunpack.c.h.b16 %v8961
    %v9193 = vunpack.c.l.b16 %v8962
    %v9194 = vunpack.c.l.b16 %v8963
    %v9195 = vunpack.c.h.b16 %v8963
    %v9196 = vunpack.c.l.b16 %v8964
    %v9197 = vunpack.c.l.b16 %v8965
    %v9198 = vunpack.c.h.b16 %v8965
    %v9199 = vunpack.c.l.b16 %v8966
    %v9200 = vunpack.c.l.b16 %v8967
    %v9201 = vunpack.c.h.b16 %v8967
    %v9202 = vunpack.c.l.b16 %v8968
    %v9203 = vunpack.c.l.b16 %v8969
    %v9204 = vunpack.c.h.b16 %v8969
    %v9205 = vunpack.c.l.b16 %v8970
    %v9206 = vunpack.c.l.b16 %v8971
    %v9207 = vunpack.c.h.b16 %v8971
    %v9208 = vunpack.c.l.b16 %v8972
    %v9209 = vunpack.c.l.b16 %v8973
    %v9210 = vunpack.c.h.b16 %v8973
    %v9211 = vunpack.c.l.b16 %v8974
    %v9212 = vunpack.c.l.b16 %v8975
    %v9213 = vunpack.c.h.b16 %v8975
    %v9214 = vunpack.c.l.b16 %v8976
    %v9215 = vunpack.c.l.b16 %v8977
    %v9216 = vunpack.c.h.b16 %v8977
    %v9217 = vunpack.c.l.b16 %v8978
    %v9218 = vunpack.c.l.b16 %v8979
    %v9219 = vunpack.c.h.b16 %v8979
    %v9220 = vunpack.c.l.b16 %v8980
    %v9221 = vpack.c.b16 %v9080, %v9077
    %v9222 = vpack.c.b16 %v9081, %v9078
    %v9223 = vpack.c.b16 %v9082, %v9079
    %v9224 = vpack.c.b16 %v9086, %v9083
    %v9225 = vpack.c.b16 %v9087, %v9084
    %v9226 = vpack.c.b16 %v9088, %v9085
    %v9227 = vpack.c.b16 %v9092, %v9089
    %v9228 = vpack.c.b16 %v9093, %v9090
    %v9229 = vpack.c.b16 %v9094, %v9091
    %v9230 = vpack.c.b16 %v9098, %v9095
    %v9231 = vpack.c.b16 %v9099, %v9096
    %v9232 = vpack.c.b16 %v9100, %v9097
    %v9233 = vpack.c.b16 %v9104, %v9101
    %v9234 = vpack.c.b16 %v9105, %v9102
    %v9235 = vpack.c.b16 %v9106, %v9103
    %v9236 = vpack.c.b16 %v9110, %v9107
    %v9237 = vpack.c.b16 %v9111, %v9108
    %v9238 = vpack.c.b16 %v9112, %v9109
    %v9239 = vpack.c.b16 %v9116, %v9113
    %v9240 = vpack.c.b16 %v9117, %v9114
    %v9241 = vpack.c.b16 %v9118, %v9115
    %v9242 = vpack.c.b16 %v9122, %v9119
    %v9243 = vpack.c.b16 %v9123, %v9120
    %v9244 = vpack.c.b16 %v9124, %v9121
    %v9245 = vpack.c.b16 %v9128, %v9125
    %v9246 = vpack.c.b16 %v9129, %v9126
    %v9247 = vpack.c.b16 %v9130, %v9127
    %v9248 = vpack.c.b16 %v9134, %v9131
    %v9249 = vpack.c.b16 %v9135, %v9132
    %v9250 = vpack.c.b16 %v9136, %v9133
    %v9251 = vpack.c.b16 %v9140, %v9137
    %v9252 = vpack.c.b16 %v9141, %v9138
    %v9253 = vpack.c.b16 %v9142, %v9139
    %v9254 = vpack.c.b16 %v9146, %v9143
    %v9255 = vpack.c.b16 %v9147, %v9144
    %v9256 = vpack.c.b16 %v9148, %v9145
    %v9257 = vpack.c.b16 %v9152, %v9149
    %v9258 = vpack.c.b16 %v9153, %v9150
    %v9259 = vpack.c.b16 %v9154, %v9151
    %v9260 = vpack.c.b16 %v9158, %v9155
    %v9261 = vpack.c.b16 %v9159, %v9156
    %v9262 = vpack.c.b16 %v9160, %v9157
    %v9263 = vpack.c.b16 %v9164, %v9161
    %v9264 = vpack.c.b16 %v9165, %v9162
    %v9265 = vpack.c.b16 %v9166, %v9163
    %v9266 = vpack.c.b16 %v9170, %v9167
    %v9267 = vpack.c.b16 %v9171, %v9168
    %v9268 = vpack.c.b16 %v9172, %v9169
    %v9269 = vpack.c.b16 %v9176, %v9173
    %v9270 = vpack.c.b16 %v9177, %v9174
    %v9271 = vpack.c.b16 %v9178, %v9175
    %v9272 = vpack.c.b16 %v9182, %v9179
    %v9273 = vpack.c.b16 %v9183, %v9180
    %v9274 = vpack.c.b16 %v9184, %v9181
    %v9275 = vpack.c.b16 %v9188, %v9185
    %v9276 = vpack.c.b16 %v9189, %v9186
    %v9277 = vpack.c.b16 %v9190, %v9187
    %v9278 = vpack.c.b16 %v9194, %v9191
    %v9279 = vpack.c.b16 %v9195, %v9192
    %v9280 = vpack.c.b16 %v9196, %v9193
    %v9281 = vpack.c.b16 %v9200, %v9197
    %v9282 = vpack.c.b16 %v9201, %v9198
    %v9283 = vpack.c.b16 %v9202, %v9199
    %v9284 = vpack.c.b16 %v9206, %v9203
    %v9285 = vpack.c.b16 %v9207, %v9204
    %v9286 = vpack.c.b16 %v9208, %v9205
    %v9287 = vpack.c.b16 %v9212, %v9209
    %v9288 = vpack.c.b16 %v9213, %v9210
    %v9289 = vpack.c.b16 %v9214, %v9211
    %v9290 = vpack.c.b16 %v9218, %v9215
    %v9291 = vpack.c.b16 %v9219, %v9216
    %v9292 = vpack.c.b16 %v9220, %v9217
    %9365 = vmatprep.subr.bf16.mxu0 %v9243
    %9366 = vmatpush1.bf16.msra.mxu0 %v9242
    %9367 = vmatprep.subr.bf16.mxu0 %v9240
    %9368 = vmatpush1.bf16.msra.mxu0 %v9239
    %9369 = vmatprep.subr.bf16.mxu0 %v9237
    %9370 = vmatpush1.bf16.msra.mxu0 %v9236
    %9371 = vmatprep.subr.bf16.mxu0 %v9234
    %9372 = vmatpush1.bf16.msra.mxu0 %v9233
    %9373 = vmatprep.subr.bf16.mxu0 %v9231
    %9374 = vmatpush1.bf16.msra.mxu0 %v9230
    %9375 = vmatprep.subr.bf16.mxu0 %v9228
    %9376 = vmatpush1.bf16.msra.mxu0 %v9227
    %9377 = vmatprep.subr.bf16.mxu0 %v9225
    %9378 = vmatpush1.bf16.msra.mxu0 %v9224
    %9379 = vmatprep.subr.bf16.mxu0 %v9222
    %9380 = vmatpush1.bf16.msra.mxu0 %v9221
    %9381 = vmatprep.subr.bf16.mxu0 %v9267
    %9382 = vmatpush2.bf16.msra.mxu0 %v9266
    %9383 = vmatprep.subr.bf16.mxu0 %v9264
    %9384 = vmatpush2.bf16.msra.mxu0 %v9263
    %9385 = vmatprep.subr.bf16.mxu0 %v9261
    %9386 = vmatpush2.bf16.msra.mxu0 %v9260
    %9387 = vmatprep.subr.bf16.mxu0 %v9258
    %9388 = vmatpush2.bf16.msra.mxu0 %v9257
    %9389 = vmatprep.subr.bf16.mxu0 %v9255
    %9390 = vmatpush2.bf16.msra.mxu0 %v9254
    %9391 = vmatprep.subr.bf16.mxu0 %v9252
    %9392 = vmatpush2.bf16.msra.mxu0 %v9251
    %9393 = vmatprep.subr.bf16.mxu0 %v9249
    %9394 = vmatpush2.bf16.msra.mxu0 %v9248
    %9395 = vmatprep.subr.bf16.mxu0 %v9246
    %9396 = vmatpush2.bf16.msra.mxu0 %v9245
    %9397 = vmatprep.mubr.bf16.mxu0 %v8238
    %9398 = vmatmul.mubr.bf16.gmra.mxu0 %v8237
    %v9399 = vpop.f32.mrf.mxu0
    %v9400 = vadd.f32 0.0, %v9399
    %v9401 = vpop.f32.mrf.mxu0
    %v9402 = vadd.f32 0.0, %v9401
    %v9403 = vpop.f32.mrf.mxu0
    %v9404 = vpop.f32.mrf.mxu0
    %9405 = vdwg.mxu0
    %9406 = vmatprep.subr.bf16.mxu0 %v9291
    %9407 = vmatpush1.bf16.msra.mxu0 %v9290
    %9408 = vmatprep.subr.bf16.mxu0 %v9288
    %9409 = vmatpush1.bf16.msra.mxu0 %v9287
    %9410 = vmatprep.subr.bf16.mxu0 %v9285
    %9411 = vmatpush1.bf16.msra.mxu0 %v9284
    %9412 = vmatprep.subr.bf16.mxu0 %v9282
    %9413 = vmatpush1.bf16.msra.mxu0 %v9281
    %9414 = vmatprep.subr.bf16.mxu0 %v9279
    %9415 = vmatpush1.bf16.msra.mxu0 %v9278
    %9416 = vmatprep.subr.bf16.mxu0 %v9276
    %9417 = vmatpush1.bf16.msra.mxu0 %v9275
    %9418 = vmatprep.subr.bf16.mxu0 %v9273
    %9419 = vmatpush1.bf16.msra.mxu0 %v9272
    %9420 = vmatprep.subr.bf16.mxu0 %v9270
    %9421 = vmatpush1.bf16.msra.mxu0 %v9269
    %9422 = vmatprep.subr.bf16.mxu0 0
    %9423 = vmatpush2.bf16.msra.mxu0 0
    %9424 = vmatprep.subr.bf16.mxu0 0
    %9425 = vmatpush2.bf16.msra.mxu0 0
    %9426 = vmatprep.subr.bf16.mxu0 0
    %9427 = vmatpush2.bf16.msra.mxu0 0
    %9428 = vmatprep.subr.bf16.mxu0 0
    %9429 = vmatpush2.bf16.msra.mxu0 0
    %9430 = vmatprep.subr.bf16.mxu0 0
    %9431 = vmatpush2.bf16.msra.mxu0 0
    %9432 = vmatprep.subr.bf16.mxu0 0
    %9433 = vmatpush2.bf16.msra.mxu0 0
    %9434 = vmatprep.subr.bf16.mxu0 0
    %9435 = vmatpush2.bf16.msra.mxu0 0
    %9436 = vmatprep.subr.bf16.mxu0 0
    %9437 = vmatpush2.bf16.msra.mxu0 0
    %9438 = vmatprep.mubr.bf16.mxu0 0
    %9439 = vmatmul.mubr.bf16.gmra.mxu0 %v8239
    %v9440 = vpop.f32.mrf.mxu0
    %v9441 = vadd.f32 %v9400, %v9440
    %v9442 = vpop.f32.mrf.mxu0
    %v9443 = vadd.f32 %v9402, %v9442
    %v9444 = vpop.f32.mrf.mxu0
    %v9445 = vpop.f32.mrf.mxu0
    %9446 = vdwg.mxu0
    %9447 = vmatprep.subr.bf16.mxu0 0
    %9448 = vmatpush1.bf16.msra.mxu0 %v9244
    %9449 = vmatprep.subr.bf16.mxu0 0
    %9450 = vmatpush1.bf16.msra.mxu0 %v9241
    %9451 = vmatprep.subr.bf16.mxu0 0
    %9452 = vmatpush1.bf16.msra.mxu0 %v9238
    %9453 = vmatprep.subr.bf16.mxu0 0
    %9454 = vmatpush1.bf16.msra.mxu0 %v9235
    %9455 = vmatprep.subr.bf16.mxu0 0
    %9456 = vmatpush1.bf16.msra.mxu0 %v9232
    %9457 = vmatprep.subr.bf16.mxu0 0
    %9458 = vmatpush1.bf16.msra.mxu0 %v9229
    %9459 = vmatprep.subr.bf16.mxu0 0
    %9460 = vmatpush1.bf16.msra.mxu0 %v9226
    %9461 = vmatprep.subr.bf16.mxu0 0
    %9462 = vmatpush1.bf16.msra.mxu0 %v9223
    %9463 = vmatprep.subr.bf16.mxu0 0
    %9464 = vmatpush2.bf16.msra.mxu0 %v9268
    %9465 = vmatprep.subr.bf16.mxu0 0
    %9466 = vmatpush2.bf16.msra.mxu0 %v9265
    %9467 = vmatprep.subr.bf16.mxu0 0
    %9468 = vmatpush2.bf16.msra.mxu0 %v9262
    %9469 = vmatprep.subr.bf16.mxu0 0
    %9470 = vmatpush2.bf16.msra.mxu0 %v9259
    %9471 = vmatprep.subr.bf16.mxu0 0
    %9472 = vmatpush2.bf16.msra.mxu0 %v9256
    %9473 = vmatprep.subr.bf16.mxu0 0
    %9474 = vmatpush2.bf16.msra.mxu0 %v9253
    %9475 = vmatprep.subr.bf16.mxu0 0
    %9476 = vmatpush2.bf16.msra.mxu0 %v9250
    %9477 = vmatprep.subr.bf16.mxu0 0
    %9478 = vmatpush2.bf16.msra.mxu0 %v9247
    %9479 = vmatprep.mubr.bf16.mxu0 %v8238
    %9480 = vmatmul.mubr.bf16.gmra.mxu0 %v8237
    %v9481 = vpop.f32.mrf.mxu0
    %v9482 = vadd.f32 0.0, %v9481
    %v9483 = vpop.f32.mrf.mxu0
    %v9484 = vpop.f32.mrf.mxu0
    %v9485 = vpop.f32.mrf.mxu0
    %9486 = vdwg.mxu0
    %9487 = vmatprep.subr.bf16.mxu0 0
    %9488 = vmatpush1.bf16.msra.mxu0 %v9292
    %9489 = vmatprep.subr.bf16.mxu0 0
    %9490 = vmatpush1.bf16.msra.mxu0 %v9289
    %9491 = vmatprep.subr.bf16.mxu0 0
    %9492 = vmatpush1.bf16.msra.mxu0 %v9286
    %9493 = vmatprep.subr.bf16.mxu0 0
    %9494 = vmatpush1.bf16.msra.mxu0 %v9283
    %9495 = vmatprep.subr.bf16.mxu0 0
    %9496 = vmatpush1.bf16.msra.mxu0 %v9280
    %9497 = vmatprep.subr.bf16.mxu0 0
    %9498 = vmatpush1.bf16.msra.mxu0 %v9277
    %9499 = vmatprep.subr.bf16.mxu0 0
    %9500 = vmatpush1.bf16.msra.mxu0 %v9274
    %9501 = vmatprep.subr.bf16.mxu0 0
    %9502 = vmatpush1.bf16.msra.mxu0 %v9271
    %9503 = vmatprep.subr.bf16.mxu0 0
    %9504 = vmatpush2.bf16.msra.mxu0 0
    %9505 = vmatprep.subr.bf16.mxu0 0
    %9506 = vmatpush2.bf16.msra.mxu0 0
    %9507 = vmatprep.subr.bf16.mxu0 0
    %9508 = vmatpush2.bf16.msra.mxu0 0
    %9509 = vmatprep.subr.bf16.mxu0 0
    %9510 = vmatpush2.bf16.msra.mxu0 0
    %9511 = vmatprep.subr.bf16.mxu0 0
    %9512 = vmatpush2.bf16.msra.mxu0 0
    %9513 = vmatprep.subr.bf16.mxu0 0
    %9514 = vmatpush2.bf16.msra.mxu0 0
    %9515 = vmatprep.subr.bf16.mxu0 0
    %9516 = vmatpush2.bf16.msra.mxu0 0
    %9517 = vmatprep.subr.bf16.mxu0 0
    %9518 = vmatpush2.bf16.msra.mxu0 0
    %9519 = vmatprep.mubr.bf16.mxu0 0
    %9520 = vmatmul.mubr.bf16.gmra.mxu0 %v8239
    %v9521 = vpop.f32.mrf.mxu0
    %v9522 = vadd.f32 %v9482, %v9521
    %v9523 = vpop.f32.mrf.mxu0
    %v9524 = vpop.f32.mrf.mxu0
    %v9525 = vpop.f32.mrf.mxu0
    %9526 = vdwg.mxu0
    %v9527 = vadd.f32 %v8882, %v9441
    %v9528 = vadd.f32 %v8883, %v9443
    %v9529 = vadd.f32 %v8884, %v9522
    %9530 = vset.pattern.permute.xlu0 6
    %9531 = vperm.xlu0 %9530, %v90
    %v9532 = vpop.permute.xlu0 %9531
    %vm9533 = vcmp.eq.s32.totalorder %v89, %v9532
    %vm9534 = vcmp.eq.s32.totalorder %v1223, %v9532
    %vm9535 = vcmp.eq.s32.totalorder %v1224, %v9532
    %vm9536 = vcmp.eq.s32.totalorder %v1225, %v9532
    %vm9537 = vcmp.eq.s32.totalorder %v1226, %v9532
    %vm9538 = vcmp.eq.s32.totalorder %v1227, %v9532
    %vm9539 = vcmp.eq.s32.totalorder %v1228, %v9532
    %v9540 = vsel %vm9533, 1, 0
    %v9541 = vsel %vm9534, 1, 0
    %v9542 = vsel %vm9535, 1, 0
    %v9543 = vsel %vm9536, 1, 0
    %v9544 = vsel %vm9537, 1, 0
    %v9545 = vsel %vm9538, 1, 0
    %v9546 = vsel %vm9539, 1, 0
    %v9547 = vcvt.s32.f32 %v9540
    %v9548 = vcvt.s32.f32 %v9541
    %v9549 = vcvt.s32.f32 %v9542
    %v9550 = vcvt.s32.f32 %v9543
    %v9551 = vcvt.s32.f32 %v9544
    %v9552 = vcvt.s32.f32 %v9545
    %v9553 = vcvt.s32.f32 %v9546
    %v9554 = vpack.c.bf16 %v9547, %v9547
    %v9555 = vpack.c.bf16 %v9548, %v9548
    %v9556 = vpack.c.bf16 %v9549, %v9549
    %v9557 = vpack.c.bf16 %v9550, %v9550
    %v9558 = vpack.c.bf16 %v9551, %v9551
    %v9559 = vpack.c.bf16 %v9552, %v9552
    %v9560 = vpack.c.bf16 %v9553, %v9553
    %v9561 = vld [vmem:[#allocation7 + $0x1080] sm:$0xff]
    %v9562 = vld [vmem:[#allocation7 + $0x1088] sm:$0xf]
    %v9563 = vld [vmem:[#allocation7 + $0x108c] sm:$0xff]
    %v9564 = vld [vmem:[#allocation7 + $0x1094] sm:$0xf]
    %v9565 = vld [vmem:[#allocation7 + $0x1098] sm:$0xff]
    %v9566 = vld [vmem:[#allocation7 + $0x10a0] sm:$0xf]
    %v9567 = vld [vmem:[#allocation7 + $0x10a4] sm:$0xff]
    %v9568 = vld [vmem:[#allocation7 + $0x10ac] sm:$0xf]
    %v9569 = vld [vmem:[#allocation7 + $0x10b0] sm:$0xff]
    %v9570 = vld [vmem:[#allocation7 + $0x10b8] sm:$0xf]
    %v9571 = vld [vmem:[#allocation7 + $0x10bc] sm:$0xff]
    %v9572 = vld [vmem:[#allocation7 + $0x10c4] sm:$0xf]
    %v9573 = vld [vmem:[#allocation7 + $0x10c8] sm:$0xff]
    %v9574 = vld [vmem:[#allocation7 + $0x10d0] sm:$0xf]
    %v9575 = vld [vmem:[#allocation7 + $0x10d4] sm:$0xff]
    %v9576 = vld [vmem:[#allocation7 + $0x10dc] sm:$0xf]
    %v9577 = vld [vmem:[#allocation7 + $0x10e0] sm:$0xff]
    %v9578 = vld [vmem:[#allocation7 + $0x10e8] sm:$0xf]
    %v9579 = vld [vmem:[#allocation7 + $0x10ec] sm:$0xff]
    %v9580 = vld [vmem:[#allocation7 + $0x10f4] sm:$0xf]
    %v9581 = vld [vmem:[#allocation7 + $0x10f8] sm:$0xff]
    %v9582 = vld [vmem:[#allocation7 + $0x1100] sm:$0xf]
    %v9583 = vld [vmem:[#allocation7 + $0x1104] sm:$0xff]
    %v9584 = vld [vmem:[#allocation7 + $0x110c] sm:$0xf]
    %v9585 = vld [vmem:[#allocation7 + $0x1110] sm:$0xff]
    %v9586 = vld [vmem:[#allocation7 + $0x1118] sm:$0xf]
    %v9587 = vld [vmem:[#allocation7 + $0x111c] sm:$0xff]
    %v9588 = vld [vmem:[#allocation7 + $0x1124] sm:$0xf]
    %v9589 = vld [vmem:[#allocation7 + $0x1128] sm:$0xff]
    %v9590 = vld [vmem:[#allocation7 + $0x1130] sm:$0xf]
    %v9591 = vld [vmem:[#allocation7 + $0x1134] sm:$0xff]
    %v9592 = vld [vmem:[#allocation7 + $0x113c] sm:$0xf]
    %v9593 = vld [vmem:[#allocation7 + $0x1140] sm:$0xff]
    %v9594 = vld [vmem:[#allocation7 + $0x1148] sm:$0xf]
    %v9595 = vld [vmem:[#allocation7 + $0x114c] sm:$0xff]
    %v9596 = vld [vmem:[#allocation7 + $0x1154] sm:$0xf]
    %v9597 = vld [vmem:[#allocation7 + $0x1158] sm:$0xff]
    %v9598 = vld [vmem:[#allocation7 + $0x1160] sm:$0xf]
    %v9599 = vld [vmem:[#allocation7 + $0x1164] sm:$0xff]
    %v9600 = vld [vmem:[#allocation7 + $0x116c] sm:$0xf]
    %v9601 = vld [vmem:[#allocation7 + $0x1170] sm:$0xff]
    %v9602 = vld [vmem:[#allocation7 + $0x1178] sm:$0xf]
    %v9603 = vld [vmem:[#allocation7 + $0x117c] sm:$0xff]
    %v9604 = vld [vmem:[#allocation7 + $0x1184] sm:$0xf]
    %v9605 = vld [vmem:[#allocation7 + $0x1188] sm:$0xff]
    %v9606 = vld [vmem:[#allocation7 + $0x1190] sm:$0xf]
    %v9607 = vld [vmem:[#allocation7 + $0x1194] sm:$0xff]
    %v9608 = vld [vmem:[#allocation7 + $0x119c] sm:$0xf]
    %v9609 = vld [vmem:[#allocation7 + $0x11a0] sm:$0xff]
    %v9610 = vld [vmem:[#allocation7 + $0x11a8] sm:$0xf]
    %v9611 = vld [vmem:[#allocation7 + $0x11ac] sm:$0xff]
    %v9612 = vld [vmem:[#allocation7 + $0x11b4] sm:$0xf]
    %v9613 = vld [vmem:[#allocation7 + $0x11b8] sm:$0xff]
    %v9614 = vld [vmem:[#allocation7 + $0x11c0] sm:$0xf]
    %v9615 = vld [vmem:[#allocation7 + $0x11c4] sm:$0xff]
    %v9616 = vld [vmem:[#allocation7 + $0x11cc] sm:$0xf]
    %v9617 = vld [vmem:[#allocation7 + $0x11d0] sm:$0xff]
    %v9618 = vld [vmem:[#allocation7 + $0x11d8] sm:$0xf]
    %v9619 = vld [vmem:[#allocation7 + $0x11dc] sm:$0xff]
    %v9620 = vld [vmem:[#allocation7 + $0x11e4] sm:$0xf]
    %v9621 = vld [vmem:[#allocation7 + $0x11e8] sm:$0xff]
    %v9622 = vld [vmem:[#allocation7 + $0x11f0] sm:$0xf]
    %v9623 = vld [vmem:[#allocation7 + $0x11f4] sm:$0xff]
    %v9624 = vld [vmem:[#allocation7 + $0x11fc] sm:$0xf]
    %v9625 = vld [vmem:[#allocation7 + $0x1200] sm:$0xff]
    %v9626 = vld [vmem:[#allocation7 + $0x1208] sm:$0xf]
    %v9627 = vld [vmem:[#allocation7 + $0x120c] sm:$0xff]
    %v9628 = vld [vmem:[#allocation7 + $0x1214] sm:$0xf]
    %v9629 = vld [vmem:[#allocation7 + $0x1218] sm:$0xff]
    %v9630 = vld [vmem:[#allocation7 + $0x1220] sm:$0xf]
    %v9631 = vld [vmem:[#allocation7 + $0x1224] sm:$0xff]
    %v9632 = vld [vmem:[#allocation7 + $0x122c] sm:$0xf]
    %v9633 = vld [vmem:[#allocation7 + $0x1230] sm:$0xff]
    %v9634 = vld [vmem:[#allocation7 + $0x1238] sm:$0xf]
    %v9635 = vld [vmem:[#allocation7 + $0x123c] sm:$0xff]
    %v9636 = vld [vmem:[#allocation7 + $0x1244] sm:$0xf]
    %v9637 = vld [vmem:[#allocation7 + $0x1248] sm:$0xff]
    %v9638 = vld [vmem:[#allocation7 + $0x1250] sm:$0xf]
    %v9639 = vld [vmem:[#allocation7 + $0x1254] sm:$0xff]
    %v9640 = vld [vmem:[#allocation7 + $0x125c] sm:$0xf]
    %v9641 = vld [vmem:[#allocation7 + $0x1260] sm:$0xff]
    %v9642 = vld [vmem:[#allocation7 + $0x1268] sm:$0xf]
    %v9643 = vld [vmem:[#allocation7 + $0x126c] sm:$0xff]
    %v9644 = vld [vmem:[#allocation7 + $0x1274] sm:$0xf]
    %v9645 = vld [vmem:[#allocation7 + $0x1278] sm:$0xff]
    %v9646 = vld [vmem:[#allocation7 + $0x1280] sm:$0xf]
    %v9647 = vld [vmem:[#allocation7 + $0x1284] sm:$0xff]
    %v9648 = vld [vmem:[#allocation7 + $0x128c] sm:$0xf]
    %v9649 = vld [vmem:[#allocation7 + $0x1290] sm:$0xff]
    %v9650 = vld [vmem:[#allocation7 + $0x1298] sm:$0xf]
    %v9651 = vld [vmem:[#allocation7 + $0x129c] sm:$0xff]
    %v9652 = vld [vmem:[#allocation7 + $0x12a4] sm:$0xf]
    %v9653 = vld [vmem:[#allocation7 + $0x12a8] sm:$0xff]
    %v9654 = vld [vmem:[#allocation7 + $0x12b0] sm:$0xf]
    %v9655 = vld [vmem:[#allocation7 + $0x12b4] sm:$0xff]
    %v9656 = vld [vmem:[#allocation7 + $0x12bc] sm:$0xf]
    %v9657 = vld [vmem:[#allocation7 + $0x12c0] sm:$0xff]
    %v9658 = vld [vmem:[#allocation7 + $0x12c8] sm:$0xf]
    %v9659 = vld [vmem:[#allocation7 + $0x12cc] sm:$0xff]
    %v9660 = vld [vmem:[#allocation7 + $0x12d4] sm:$0xf]
    %v9661 = vld [vmem:[#allocation7 + $0x12d8] sm:$0xff]
    %v9662 = vld [vmem:[#allocation7 + $0x12e0] sm:$0xf]
    %v9663 = vld [vmem:[#allocation7 + $0x12e4] sm:$0xff]
    %v9664 = vld [vmem:[#allocation7 + $0x12ec] sm:$0xf]
    %v9665 = vld [vmem:[#allocation7 + $0x12f0] sm:$0xff]
    %v9666 = vld [vmem:[#allocation7 + $0x12f8] sm:$0xf]
    %v9667 = vld [vmem:[#allocation7 + $0x12fc] sm:$0xff]
    %v9668 = vld [vmem:[#allocation7 + $0x1304] sm:$0xf]
    %v9669 = vld [vmem:[#allocation7 + $0x1308] sm:$0xff]
    %v9670 = vld [vmem:[#allocation7 + $0x1310] sm:$0xf]
    %v9671 = vld [vmem:[#allocation7 + $0x1314] sm:$0xff]
    %v9672 = vld [vmem:[#allocation7 + $0x131c] sm:$0xf]
    %v9673 = vld [vmem:[#allocation7 + $0x1320] sm:$0xff]
    %v9674 = vld [vmem:[#allocation7 + $0x1328] sm:$0xf]
    %v9675 = vld [vmem:[#allocation7 + $0x132c] sm:$0xff]
    %v9676 = vld [vmem:[#allocation7 + $0x1334] sm:$0xf]
    %v9677 = vld [vmem:[#allocation7 + $0x1338] sm:$0xff]
    %v9678 = vld [vmem:[#allocation7 + $0x1340] sm:$0xf]
    %v9679 = vld [vmem:[#allocation7 + $0x1344] sm:$0xff]
    %v9680 = vld [vmem:[#allocation7 + $0x134c] sm:$0xf]
    %v9681 = vld [vmem:[#allocation7 + $0x1350] sm:$0xff]
    %v9682 = vld [vmem:[#allocation7 + $0x1358] sm:$0xf]
    %v9683 = vld [vmem:[#allocation7 + $0x135c] sm:$0xff]
    %v9684 = vld [vmem:[#allocation7 + $0x1364] sm:$0xf]
    %v9685 = vld [vmem:[#allocation7 + $0x1368] sm:$0xff]
    %v9686 = vld [vmem:[#allocation7 + $0x1370] sm:$0xf]
    %v9687 = vld [vmem:[#allocation7 + $0x1374] sm:$0xff]
    %v9688 = vld [vmem:[#allocation7 + $0x137c] sm:$0xf]
    %v9689 = vld [vmem:[#allocation7 + $0x1380] sm:$0xff]
    %v9690 = vld [vmem:[#allocation7 + $0x1388] sm:$0xf]
    %v9691 = vld [vmem:[#allocation7 + $0x138c] sm:$0xff]
    %v9692 = vld [vmem:[#allocation7 + $0x1394] sm:$0xf]
    %v9693 = vld [vmem:[#allocation7 + $0x1398] sm:$0xff]
    %v9694 = vld [vmem:[#allocation7 + $0x13a0] sm:$0xf]
    %v9695 = vld [vmem:[#allocation7 + $0x13a4] sm:$0xff]
    %v9696 = vld [vmem:[#allocation7 + $0x13ac] sm:$0xf]
    %v9697 = vld [vmem:[#allocation7 + $0x13b0] sm:$0xff]
    %v9698 = vld [vmem:[#allocation7 + $0x13b8] sm:$0xf]
    %v9699 = vld [vmem:[#allocation7 + $0x13bc] sm:$0xff]
    %v9700 = vld [vmem:[#allocation7 + $0x13c4] sm:$0xf]
    %v9701 = vld [vmem:[#allocation7 + $0x13c8] sm:$0xff]
    %v9702 = vld [vmem:[#allocation7 + $0x13d0] sm:$0xf]
    %v9703 = vld [vmem:[#allocation7 + $0x13d4] sm:$0xff]
    %v9704 = vld [vmem:[#allocation7 + $0x13dc] sm:$0xf]
    %v9705 = vld [vmem:[#allocation7 + $0x13e0] sm:$0xff]
    %v9706 = vld [vmem:[#allocation7 + $0x13e8] sm:$0xf]
    %v9707 = vld [vmem:[#allocation7 + $0x13ec] sm:$0xff]
    %v9708 = vld [vmem:[#allocation7 + $0x13f4] sm:$0xf]
    %v9709 = vld [vmem:[#allocation7 + $0x13f8] sm:$0xff]
    %v9710 = vld [vmem:[#allocation7 + $0x1400] sm:$0xf]
    %v9711 = vld [vmem:[#allocation7 + $0x1404] sm:$0xff]
    %v9712 = vld [vmem:[#allocation7 + $0x140c] sm:$0xf]
    %v9713 = vld [vmem:[#allocation7 + $0x1410] sm:$0xff]
    %v9714 = vld [vmem:[#allocation7 + $0x1418] sm:$0xf]
    %v9715 = vld [vmem:[#allocation7 + $0x141c] sm:$0xff]
    %v9716 = vld [vmem:[#allocation7 + $0x1424] sm:$0xf]
    %v9717 = vld [vmem:[#allocation7 + $0x1428] sm:$0xff]
    %v9718 = vld [vmem:[#allocation7 + $0x1430] sm:$0xf]
    %v9719 = vld [vmem:[#allocation7 + $0x1434] sm:$0xff]
    %v9720 = vld [vmem:[#allocation7 + $0x143c] sm:$0xf]
    %v9721 = vld [vmem:[#allocation7 + $0x1440] sm:$0xff]
    %v9722 = vld [vmem:[#allocation7 + $0x1448] sm:$0xf]
    %v9723 = vld [vmem:[#allocation7 + $0x144c] sm:$0xff]
    %v9724 = vld [vmem:[#allocation7 + $0x1454] sm:$0xf]
    %v9725 = vld [vmem:[#allocation7 + $0x1458] sm:$0xff]
    %v9726 = vld [vmem:[#allocation7 + $0x1460] sm:$0xf]
    %v9727 = vld [vmem:[#allocation7 + $0x1464] sm:$0xff]
    %v9728 = vld [vmem:[#allocation7 + $0x146c] sm:$0xf]
    %v9729 = vld [vmem:[#allocation7 + $0x1470] sm:$0xff]
    %v9730 = vld [vmem:[#allocation7 + $0x1478] sm:$0xf]
    %v9731 = vld [vmem:[#allocation7 + $0x147c] sm:$0xff]
    %v9732 = vld [vmem:[#allocation7 + $0x1484] sm:$0xf]
    %v9733 = vld [vmem:[#allocation7 + $0x1488] sm:$0xff]
    %v9734 = vld [vmem:[#allocation7 + $0x1490] sm:$0xf]
    %v9735 = vld [vmem:[#allocation7 + $0x1494] sm:$0xff]
    %v9736 = vld [vmem:[#allocation7 + $0x149c] sm:$0xf]
    %v9737 = vld [vmem:[#allocation7 + $0x14a0] sm:$0xff]
    %v9738 = vld [vmem:[#allocation7 + $0x14a8] sm:$0xf]
    %v9739 = vld [vmem:[#allocation7 + $0x14ac] sm:$0xff]
    %v9740 = vld [vmem:[#allocation7 + $0x14b4] sm:$0xf]
    %v9741 = vld [vmem:[#allocation7 + $0x14b8] sm:$0xff]
    %v9742 = vld [vmem:[#allocation7 + $0x14c0] sm:$0xf]
    %v9743 = vld [vmem:[#allocation7 + $0x14c4] sm:$0xff]
    %v9744 = vld [vmem:[#allocation7 + $0x14cc] sm:$0xf]
    %v9745 = vld [vmem:[#allocation7 + $0x14d0] sm:$0xff]
    %v9746 = vld [vmem:[#allocation7 + $0x14d8] sm:$0xf]
    %v9747 = vld [vmem:[#allocation7 + $0x14dc] sm:$0xff]
    %v9748 = vld [vmem:[#allocation7 + $0x14e4] sm:$0xf]
    %v9749 = vld [vmem:[#allocation7 + $0x14e8] sm:$0xff]
    %v9750 = vld [vmem:[#allocation7 + $0x14f0] sm:$0xf]
    %v9751 = vld [vmem:[#allocation7 + $0x14f4] sm:$0xff]
    %v9752 = vld [vmem:[#allocation7 + $0x14fc] sm:$0xf]
    %v9753 = vld [vmem:[#allocation7 + $0x1500] sm:$0xff]
    %v9754 = vld [vmem:[#allocation7 + $0x1508] sm:$0xf]
    %v9755 = vld [vmem:[#allocation7 + $0x150c] sm:$0xff]
    %v9756 = vld [vmem:[#allocation7 + $0x1514] sm:$0xf]
    %v9757 = vld [vmem:[#allocation7 + $0x1518] sm:$0xff]
    %v9758 = vld [vmem:[#allocation7 + $0x1520] sm:$0xf]
    %v9759 = vld [vmem:[#allocation7 + $0x1524] sm:$0xff]
    %v9760 = vld [vmem:[#allocation7 + $0x152c] sm:$0xf]
    %v9761 = vld [vmem:[#allocation7 + $0x1530] sm:$0xff]
    %v9762 = vld [vmem:[#allocation7 + $0x1538] sm:$0xf]
    %v9763 = vld [vmem:[#allocation7 + $0x153c] sm:$0xff]
    %v9764 = vld [vmem:[#allocation7 + $0x1544] sm:$0xf]
    %v9765 = vld [vmem:[#allocation7 + $0x1548] sm:$0xff]
    %v9766 = vld [vmem:[#allocation7 + $0x1550] sm:$0xf]
    %v9767 = vld [vmem:[#allocation7 + $0x1554] sm:$0xff]
    %v9768 = vld [vmem:[#allocation7 + $0x155c] sm:$0xf]
    %v9769 = vld [vmem:[#allocation7 + $0x1560] sm:$0xff]
    %v9770 = vld [vmem:[#allocation7 + $0x1568] sm:$0xf]
    %v9771 = vld [vmem:[#allocation7 + $0x156c] sm:$0xff]
    %v9772 = vld [vmem:[#allocation7 + $0x1574] sm:$0xf]
    %v9773 = vld [vmem:[#allocation7 + $0x1578] sm:$0xff]
    %v9774 = vld [vmem:[#allocation7 + $0x1580] sm:$0xf]
    %v9775 = vld [vmem:[#allocation7 + $0x1584] sm:$0xff]
    %v9776 = vld [vmem:[#allocation7 + $0x158c] sm:$0xf]
    %v9777 = vld [vmem:[#allocation7 + $0x1590] sm:$0xff]
    %v9778 = vld [vmem:[#allocation7 + $0x1598] sm:$0xf]
    %v9779 = vld [vmem:[#allocation7 + $0x159c] sm:$0xff]
    %v9780 = vld [vmem:[#allocation7 + $0x15a4] sm:$0xf]
    %v9781 = vld [vmem:[#allocation7 + $0x15a8] sm:$0xff]
    %v9782 = vld [vmem:[#allocation7 + $0x15b0] sm:$0xf]
    %v9783 = vld [vmem:[#allocation7 + $0x15b4] sm:$0xff]
    %v9784 = vld [vmem:[#allocation7 + $0x15bc] sm:$0xf]
    %v10009 = vunpack.c.l.b16 %v9561
    %v10010 = vunpack.c.h.b16 %v9561
    %v10011 = vunpack.c.l.b16 %v9562
    %v10012 = vunpack.c.l.b16 %v9563
    %v10013 = vunpack.c.h.b16 %v9563
    %v10014 = vunpack.c.l.b16 %v9564
    %v10015 = vunpack.c.l.b16 %v9565
    %v10016 = vunpack.c.h.b16 %v9565
    %v10017 = vunpack.c.l.b16 %v9566
    %v10018 = vunpack.c.l.b16 %v9567
    %v10019 = vunpack.c.h.b16 %v9567
    %v10020 = vunpack.c.l.b16 %v9568
    %v10021 = vunpack.c.l.b16 %v9569
    %v10022 = vunpack.c.h.b16 %v9569
    %v10023 = vunpack.c.l.b16 %v9570
    %v10024 = vunpack.c.l.b16 %v9571
    %v10025 = vunpack.c.h.b16 %v9571
    %v10026 = vunpack.c.l.b16 %v9572
    %v10027 = vunpack.c.l.b16 %v9573
    %v10028 = vunpack.c.h.b16 %v9573
    %v10029 = vunpack.c.l.b16 %v9574
    %v10030 = vunpack.c.l.b16 %v9575
    %v10031 = vunpack.c.h.b16 %v9575
    %v10032 = vunpack.c.l.b16 %v9576
    %v10033 = vunpack.c.l.b16 %v9577
    %v10034 = vunpack.c.h.b16 %v9577
    %v10035 = vunpack.c.l.b16 %v9578
    %v10036 = vunpack.c.l.b16 %v9579
    %v10037 = vunpack.c.h.b16 %v9579
    %v10038 = vunpack.c.l.b16 %v9580
    %v10039 = vunpack.c.l.b16 %v9581
    %v10040 = vunpack.c.h.b16 %v9581
    %v10041 = vunpack.c.l.b16 %v9582
    %v10042 = vunpack.c.l.b16 %v9583
    %v10043 = vunpack.c.h.b16 %v9583
    %v10044 = vunpack.c.l.b16 %v9584
    %v10045 = vunpack.c.l.b16 %v9585
    %v10046 = vunpack.c.h.b16 %v9585
    %v10047 = vunpack.c.l.b16 %v9586
    %v10048 = vunpack.c.l.b16 %v9587
    %v10049 = vunpack.c.h.b16 %v9587
    %v10050 = vunpack.c.l.b16 %v9588
    %v10051 = vunpack.c.l.b16 %v9589
    %v10052 = vunpack.c.h.b16 %v9589
    %v10053 = vunpack.c.l.b16 %v9590
    %v10054 = vunpack.c.l.b16 %v9591
    %v10055 = vunpack.c.h.b16 %v9591
    %v10056 = vunpack.c.l.b16 %v9592
    %v10057 = vunpack.c.l.b16 %v9593
    %v10058 = vunpack.c.h.b16 %v9593
    %v10059 = vunpack.c.l.b16 %v9594
    %v10060 = vunpack.c.l.b16 %v9595
    %v10061 = vunpack.c.h.b16 %v9595
    %v10062 = vunpack.c.l.b16 %v9596
    %v10063 = vunpack.c.l.b16 %v9597
    %v10064 = vunpack.c.h.b16 %v9597
    %v10065 = vunpack.c.l.b16 %v9598
    %v10066 = vunpack.c.l.b16 %v9599
    %v10067 = vunpack.c.h.b16 %v9599
    %v10068 = vunpack.c.l.b16 %v9600
    %v10069 = vunpack.c.l.b16 %v9601
    %v10070 = vunpack.c.h.b16 %v9601
    %v10071 = vunpack.c.l.b16 %v9602
    %v10072 = vunpack.c.l.b16 %v9603
    %v10073 = vunpack.c.h.b16 %v9603
    %v10074 = vunpack.c.l.b16 %v9604
    %v10075 = vunpack.c.l.b16 %v9605
    %v10076 = vunpack.c.h.b16 %v9605
    %v10077 = vunpack.c.l.b16 %v9606
    %v10078 = vunpack.c.l.b16 %v9607
    %v10079 = vunpack.c.h.b16 %v9607
    %v10080 = vunpack.c.l.b16 %v9608
    %v10081 = vunpack.c.l.b16 %v9609
    %v10082 = vunpack.c.h.b16 %v9609
    %v10083 = vunpack.c.l.b16 %v9610
    %v10084 = vunpack.c.l.b16 %v9611
    %v10085 = vunpack.c.h.b16 %v9611
    %v10086 = vunpack.c.l.b16 %v9612
    %v10087 = vunpack.c.l.b16 %v9613
    %v10088 = vunpack.c.h.b16 %v9613
    %v10089 = vunpack.c.l.b16 %v9614
    %v10090 = vunpack.c.l.b16 %v9615
    %v10091 = vunpack.c.h.b16 %v9615
    %v10092 = vunpack.c.l.b16 %v9616
    %v10093 = vunpack.c.l.b16 %v9617
    %v10094 = vunpack.c.h.b16 %v9617
    %v10095 = vunpack.c.l.b16 %v9618
    %v10096 = vunpack.c.l.b16 %v9619
    %v10097 = vunpack.c.h.b16 %v9619
    %v10098 = vunpack.c.l.b16 %v9620
    %v10099 = vunpack.c.l.b16 %v9621
    %v10100 = vunpack.c.h.b16 %v9621
    %v10101 = vunpack.c.l.b16 %v9622
    %v10102 = vunpack.c.l.b16 %v9623
    %v10103 = vunpack.c.h.b16 %v9623
    %v10104 = vunpack.c.l.b16 %v9624
    %v10105 = vunpack.c.l.b16 %v9625
    %v10106 = vunpack.c.h.b16 %v9625
    %v10107 = vunpack.c.l.b16 %v9626
    %v10108 = vunpack.c.l.b16 %v9627
    %v10109 = vunpack.c.h.b16 %v9627
    %v10110 = vunpack.c.l.b16 %v9628
    %v10111 = vunpack.c.l.b16 %v9629
    %v10112 = vunpack.c.h.b16 %v9629
    %v10113 = vunpack.c.l.b16 %v9630
    %v10114 = vunpack.c.l.b16 %v9631
    %v10115 = vunpack.c.h.b16 %v9631
    %v10116 = vunpack.c.l.b16 %v9632
    %v10117 = vunpack.c.l.b16 %v9633
    %v10118 = vunpack.c.h.b16 %v9633
    %v10119 = vunpack.c.l.b16 %v9634
    %v10120 = vunpack.c.l.b16 %v9635
    %v10121 = vunpack.c.h.b16 %v9635
    %v10122 = vunpack.c.l.b16 %v9636
    %v10123 = vunpack.c.l.b16 %v9637
    %v10124 = vunpack.c.h.b16 %v9637
    %v10125 = vunpack.c.l.b16 %v9638
    %v10126 = vunpack.c.l.b16 %v9639
    %v10127 = vunpack.c.h.b16 %v9639
    %v10128 = vunpack.c.l.b16 %v9640
    %v10129 = vunpack.c.l.b16 %v9641
    %v10130 = vunpack.c.h.b16 %v9641
    %v10131 = vunpack.c.l.b16 %v9642
    %v10132 = vunpack.c.l.b16 %v9643
    %v10133 = vunpack.c.h.b16 %v9643
    %v10134 = vunpack.c.l.b16 %v9644
    %v10135 = vunpack.c.l.b16 %v9645
    %v10136 = vunpack.c.h.b16 %v9645
    %v10137 = vunpack.c.l.b16 %v9646
    %v10138 = vunpack.c.l.b16 %v9647
    %v10139 = vunpack.c.h.b16 %v9647
    %v10140 = vunpack.c.l.b16 %v9648
    %v10141 = vunpack.c.l.b16 %v9649
    %v10142 = vunpack.c.h.b16 %v9649
    %v10143 = vunpack.c.l.b16 %v9650
    %v10144 = vunpack.c.l.b16 %v9651
    %v10145 = vunpack.c.h.b16 %v9651
    %v10146 = vunpack.c.l.b16 %v9652
    %v10147 = vunpack.c.l.b16 %v9653
    %v10148 = vunpack.c.h.b16 %v9653
    %v10149 = vunpack.c.l.b16 %v9654
    %v10150 = vunpack.c.l.b16 %v9655
    %v10151 = vunpack.c.h.b16 %v9655
    %v10152 = vunpack.c.l.b16 %v9656
    %v10153 = vunpack.c.l.b16 %v9657
    %v10154 = vunpack.c.h.b16 %v9657
    %v10155 = vunpack.c.l.b16 %v9658
    %v10156 = vunpack.c.l.b16 %v9659
    %v10157 = vunpack.c.h.b16 %v9659
    %v10158 = vunpack.c.l.b16 %v9660
    %v10159 = vunpack.c.l.b16 %v9661
    %v10160 = vunpack.c.h.b16 %v9661
    %v10161 = vunpack.c.l.b16 %v9662
    %v10162 = vunpack.c.l.b16 %v9663
    %v10163 = vunpack.c.h.b16 %v9663
    %v10164 = vunpack.c.l.b16 %v9664
    %v10165 = vunpack.c.l.b16 %v9665
    %v10166 = vunpack.c.h.b16 %v9665
    %v10167 = vunpack.c.l.b16 %v9666
    %v10168 = vunpack.c.l.b16 %v9667
    %v10169 = vunpack.c.h.b16 %v9667
    %v10170 = vunpack.c.l.b16 %v9668
    %v10171 = vunpack.c.l.b16 %v9669
    %v10172 = vunpack.c.h.b16 %v9669
    %v10173 = vunpack.c.l.b16 %v9670
    %v10174 = vunpack.c.l.b16 %v9671
    %v10175 = vunpack.c.h.b16 %v9671
    %v10176 = vunpack.c.l.b16 %v9672
    %v10177 = vunpack.c.l.b16 %v9673
    %v10178 = vunpack.c.h.b16 %v9673
    %v10179 = vunpack.c.l.b16 %v9674
    %v10180 = vunpack.c.l.b16 %v9675
    %v10181 = vunpack.c.h.b16 %v9675
    %v10182 = vunpack.c.l.b16 %v9676
    %v10183 = vunpack.c.l.b16 %v9677
    %v10184 = vunpack.c.h.b16 %v9677
    %v10185 = vunpack.c.l.b16 %v9678
    %v10186 = vunpack.c.l.b16 %v9679
    %v10187 = vunpack.c.h.b16 %v9679
    %v10188 = vunpack.c.l.b16 %v9680
    %v10189 = vunpack.c.l.b16 %v9681
    %v10190 = vunpack.c.h.b16 %v9681
    %v10191 = vunpack.c.l.b16 %v9682
    %v10192 = vunpack.c.l.b16 %v9683
    %v10193 = vunpack.c.h.b16 %v9683
    %v10194 = vunpack.c.l.b16 %v9684
    %v10195 = vunpack.c.l.b16 %v9685
    %v10196 = vunpack.c.h.b16 %v9685
    %v10197 = vunpack.c.l.b16 %v9686
    %v10198 = vunpack.c.l.b16 %v9687
    %v10199 = vunpack.c.h.b16 %v9687
    %v10200 = vunpack.c.l.b16 %v9688
    %v10201 = vunpack.c.l.b16 %v9689
    %v10202 = vunpack.c.h.b16 %v9689
    %v10203 = vunpack.c.l.b16 %v9690
    %v10204 = vunpack.c.l.b16 %v9691
    %v10205 = vunpack.c.h.b16 %v9691
    %v10206 = vunpack.c.l.b16 %v9692
    %v10207 = vunpack.c.l.b16 %v9693
    %v10208 = vunpack.c.h.b16 %v9693
    %v10209 = vunpack.c.l.b16 %v9694
    %v10210 = vunpack.c.l.b16 %v9695
    %v10211 = vunpack.c.h.b16 %v9695
    %v10212 = vunpack.c.l.b16 %v9696
    %v10213 = vunpack.c.l.b16 %v9697
    %v10214 = vunpack.c.h.b16 %v9697
    %v10215 = vunpack.c.l.b16 %v9698
    %v10216 = vunpack.c.l.b16 %v9699
    %v10217 = vunpack.c.h.b16 %v9699
    %v10218 = vunpack.c.l.b16 %v9700
    %v10219 = vunpack.c.l.b16 %v9701
    %v10220 = vunpack.c.h.b16 %v9701
    %v10221 = vunpack.c.l.b16 %v9702
    %v10222 = vunpack.c.l.b16 %v9703
    %v10223 = vunpack.c.h.b16 %v9703
    %v10224 = vunpack.c.l.b16 %v9704
    %v10225 = vunpack.c.l.b16 %v9705
    %v10226 = vunpack.c.h.b16 %v9705
    %v10227 = vunpack.c.l.b16 %v9706
    %v10228 = vunpack.c.l.b16 %v9707
    %v10229 = vunpack.c.h.b16 %v9707
    %v10230 = vunpack.c.l.b16 %v9708
    %v10231 = vunpack.c.l.b16 %v9709
    %v10232 = vunpack.c.h.b16 %v9709
    %v10233 = vunpack.c.l.b16 %v9710
    %v10234 = vunpack.c.l.b16 %v9711
    %v10235 = vunpack.c.h.b16 %v9711
    %v10236 = vunpack.c.l.b16 %v9712
    %v10237 = vunpack.c.l.b16 %v9713
    %v10238 = vunpack.c.h.b16 %v9713
    %v10239 = vunpack.c.l.b16 %v9714
    %v10240 = vunpack.c.l.b16 %v9715
    %v10241 = vunpack.c.h.b16 %v9715
    %v10242 = vunpack.c.l.b16 %v9716
    %v10243 = vunpack.c.l.b16 %v9717
    %v10244 = vunpack.c.h.b16 %v9717
    %v10245 = vunpack.c.l.b16 %v9718
    %v10246 = vunpack.c.l.b16 %v9719
    %v10247 = vunpack.c.h.b16 %v9719
    %v10248 = vunpack.c.l.b16 %v9720
    %v10249 = vunpack.c.l.b16 %v9721
    %v10250 = vunpack.c.h.b16 %v9721
    %v10251 = vunpack.c.l.b16 %v9722
    %v10252 = vunpack.c.l.b16 %v9723
    %v10253 = vunpack.c.h.b16 %v9723
    %v10254 = vunpack.c.l.b16 %v9724
    %v10255 = vunpack.c.l.b16 %v9725
    %v10256 = vunpack.c.h.b16 %v9725
    %v10257 = vunpack.c.l.b16 %v9726
    %v10258 = vunpack.c.l.b16 %v9727
    %v10259 = vunpack.c.h.b16 %v9727
    %v10260 = vunpack.c.l.b16 %v9728
    %v10261 = vunpack.c.l.b16 %v9729
    %v10262 = vunpack.c.h.b16 %v9729
    %v10263 = vunpack.c.l.b16 %v9730
    %v10264 = vunpack.c.l.b16 %v9731
    %v10265 = vunpack.c.h.b16 %v9731
    %v10266 = vunpack.c.l.b16 %v9732
    %v10267 = vunpack.c.l.b16 %v9733
    %v10268 = vunpack.c.h.b16 %v9733
    %v10269 = vunpack.c.l.b16 %v9734
    %v10270 = vunpack.c.l.b16 %v9735
    %v10271 = vunpack.c.h.b16 %v9735
    %v10272 = vunpack.c.l.b16 %v9736
    %v10273 = vunpack.c.l.b16 %v9737
    %v10274 = vunpack.c.h.b16 %v9737
    %v10275 = vunpack.c.l.b16 %v9738
    %v10276 = vunpack.c.l.b16 %v9739
    %v10277 = vunpack.c.h.b16 %v9739
    %v10278 = vunpack.c.l.b16 %v9740
    %v10279 = vunpack.c.l.b16 %v9741
    %v10280 = vunpack.c.h.b16 %v9741
    %v10281 = vunpack.c.l.b16 %v9742
    %v10282 = vunpack.c.l.b16 %v9743
    %v10283 = vunpack.c.h.b16 %v9743
    %v10284 = vunpack.c.l.b16 %v9744
    %v10285 = vunpack.c.l.b16 %v9745
    %v10286 = vunpack.c.h.b16 %v9745
    %v10287 = vunpack.c.l.b16 %v9746
    %v10288 = vunpack.c.l.b16 %v9747
    %v10289 = vunpack.c.h.b16 %v9747
    %v10290 = vunpack.c.l.b16 %v9748
    %v10291 = vunpack.c.l.b16 %v9749
    %v10292 = vunpack.c.h.b16 %v9749
    %v10293 = vunpack.c.l.b16 %v9750
    %v10294 = vunpack.c.l.b16 %v9751
    %v10295 = vunpack.c.h.b16 %v9751
    %v10296 = vunpack.c.l.b16 %v9752
    %v10297 = vunpack.c.l.b16 %v9753
    %v10298 = vunpack.c.h.b16 %v9753
    %v10299 = vunpack.c.l.b16 %v9754
    %v10300 = vunpack.c.l.b16 %v9755
    %v10301 = vunpack.c.h.b16 %v9755
    %v10302 = vunpack.c.l.b16 %v9756
    %v10303 = vunpack.c.l.b16 %v9757
    %v10304 = vunpack.c.h.b16 %v9757
    %v10305 = vunpack.c.l.b16 %v9758
    %v10306 = vunpack.c.l.b16 %v9759
    %v10307 = vunpack.c.h.b16 %v9759
    %v10308 = vunpack.c.l.b16 %v9760
    %v10309 = vunpack.c.l.b16 %v9761
    %v10310 = vunpack.c.h.b16 %v9761
    %v10311 = vunpack.c.l.b16 %v9762
    %v10312 = vunpack.c.l.b16 %v9763
    %v10313 = vunpack.c.h.b16 %v9763
    %v10314 = vunpack.c.l.b16 %v9764
    %v10315 = vunpack.c.l.b16 %v9765
    %v10316 = vunpack.c.h.b16 %v9765
    %v10317 = vunpack.c.l.b16 %v9766
    %v10318 = vunpack.c.l.b16 %v9767
    %v10319 = vunpack.c.h.b16 %v9767
    %v10320 = vunpack.c.l.b16 %v9768
    %v10321 = vunpack.c.l.b16 %v9769
    %v10322 = vunpack.c.h.b16 %v9769
    %v10323 = vunpack.c.l.b16 %v9770
    %v10324 = vunpack.c.l.b16 %v9771
    %v10325 = vunpack.c.h.b16 %v9771
    %v10326 = vunpack.c.l.b16 %v9772
    %v10327 = vunpack.c.l.b16 %v9773
    %v10328 = vunpack.c.h.b16 %v9773
    %v10329 = vunpack.c.l.b16 %v9774
    %v10330 = vunpack.c.l.b16 %v9775
    %v10331 = vunpack.c.h.b16 %v9775
    %v10332 = vunpack.c.l.b16 %v9776
    %v10333 = vunpack.c.l.b16 %v9777
    %v10334 = vunpack.c.h.b16 %v9777
    %v10335 = vunpack.c.l.b16 %v9778
    %v10336 = vunpack.c.l.b16 %v9779
    %v10337 = vunpack.c.h.b16 %v9779
    %v10338 = vunpack.c.l.b16 %v9780
    %v10339 = vunpack.c.l.b16 %v9781
    %v10340 = vunpack.c.h.b16 %v9781
    %v10341 = vunpack.c.l.b16 %v9782
    %v10342 = vunpack.c.l.b16 %v9783
    %v10343 = vunpack.c.h.b16 %v9783
    %v10344 = vunpack.c.l.b16 %v9784
    %v10345 = vpack.c.b16 %v10012, %v10009
    %v10346 = vpack.c.b16 %v10013, %v10010
    %v10347 = vpack.c.b16 %v10014, %v10011
    %v10348 = vpack.c.b16 %v10018, %v10015
    %v10349 = vpack.c.b16 %v10019, %v10016
    %v10350 = vpack.c.b16 %v10020, %v10017
    %v10351 = vpack.c.b16 %v10024, %v10021
    %v10352 = vpack.c.b16 %v10025, %v10022
    %v10353 = vpack.c.b16 %v10026, %v10023
    %v10354 = vpack.c.b16 %v10030, %v10027
    %v10355 = vpack.c.b16 %v10031, %v10028
    %v10356 = vpack.c.b16 %v10032, %v10029
    %v10357 = vpack.c.b16 %v10036, %v10033
    %v10358 = vpack.c.b16 %v10037, %v10034
    %v10359 = vpack.c.b16 %v10038, %v10035
    %v10360 = vpack.c.b16 %v10042, %v10039
    %v10361 = vpack.c.b16 %v10043, %v10040
    %v10362 = vpack.c.b16 %v10044, %v10041
    %v10363 = vpack.c.b16 %v10048, %v10045
    %v10364 = vpack.c.b16 %v10049, %v10046
    %v10365 = vpack.c.b16 %v10050, %v10047
    %v10366 = vpack.c.b16 %v10054, %v10051
    %v10367 = vpack.c.b16 %v10055, %v10052
    %v10368 = vpack.c.b16 %v10056, %v10053
    %v10369 = vpack.c.b16 %v10060, %v10057
    %v10370 = vpack.c.b16 %v10061, %v10058
    %v10371 = vpack.c.b16 %v10062, %v10059
    %v10372 = vpack.c.b16 %v10066, %v10063
    %v10373 = vpack.c.b16 %v10067, %v10064
    %v10374 = vpack.c.b16 %v10068, %v10065
    %v10375 = vpack.c.b16 %v10072, %v10069
    %v10376 = vpack.c.b16 %v10073, %v10070
    %v10377 = vpack.c.b16 %v10074, %v10071
    %v10378 = vpack.c.b16 %v10078, %v10075
    %v10379 = vpack.c.b16 %v10079, %v10076
    %v10380 = vpack.c.b16 %v10080, %v10077
    %v10381 = vpack.c.b16 %v10084, %v10081
    %v10382 = vpack.c.b16 %v10085, %v10082
    %v10383 = vpack.c.b16 %v10086, %v10083
    %v10384 = vpack.c.b16 %v10090, %v10087
    %v10385 = vpack.c.b16 %v10091, %v10088
    %v10386 = vpack.c.b16 %v10092, %v10089
    %v10387 = vpack.c.b16 %v10096, %v10093
    %v10388 = vpack.c.b16 %v10097, %v10094
    %v10389 = vpack.c.b16 %v10098, %v10095
    %v10390 = vpack.c.b16 %v10102, %v10099
    %v10391 = vpack.c.b16 %v10103, %v10100
    %v10392 = vpack.c.b16 %v10104, %v10101
    %v10393 = vpack.c.b16 %v10108, %v10105
    %v10394 = vpack.c.b16 %v10109, %v10106
    %v10395 = vpack.c.b16 %v10110, %v10107
    %v10396 = vpack.c.b16 %v10114, %v10111
    %v10397 = vpack.c.b16 %v10115, %v10112
    %v10398 = vpack.c.b16 %v10116, %v10113
    %v10399 = vpack.c.b16 %v10120, %v10117
    %v10400 = vpack.c.b16 %v10121, %v10118
    %v10401 = vpack.c.b16 %v10122, %v10119
    %v10402 = vpack.c.b16 %v10126, %v10123
    %v10403 = vpack.c.b16 %v10127, %v10124
    %v10404 = vpack.c.b16 %v10128, %v10125
    %v10405 = vpack.c.b16 %v10132, %v10129
    %v10406 = vpack.c.b16 %v10133, %v10130
    %v10407 = vpack.c.b16 %v10134, %v10131
    %v10408 = vpack.c.b16 %v10138, %v10135
    %v10409 = vpack.c.b16 %v10139, %v10136
    %v10410 = vpack.c.b16 %v10140, %v10137
    %v10411 = vpack.c.b16 %v10144, %v10141
    %v10412 = vpack.c.b16 %v10145, %v10142
    %v10413 = vpack.c.b16 %v10146, %v10143
    %v10414 = vpack.c.b16 %v10150, %v10147
    %v10415 = vpack.c.b16 %v10151, %v10148
    %v10416 = vpack.c.b16 %v10152, %v10149
    %v10417 = vpack.c.b16 %v10156, %v10153
    %v10418 = vpack.c.b16 %v10157, %v10154
    %v10419 = vpack.c.b16 %v10158, %v10155
    %v10420 = vpack.c.b16 %v10162, %v10159
    %v10421 = vpack.c.b16 %v10163, %v10160
    %v10422 = vpack.c.b16 %v10164, %v10161
    %v10423 = vpack.c.b16 %v10168, %v10165
    %v10424 = vpack.c.b16 %v10169, %v10166
    %v10425 = vpack.c.b16 %v10170, %v10167
    %v10426 = vpack.c.b16 %v10174, %v10171
    %v10427 = vpack.c.b16 %v10175, %v10172
    %v10428 = vpack.c.b16 %v10176, %v10173
    %v10429 = vpack.c.b16 %v10180, %v10177
    %v10430 = vpack.c.b16 %v10181, %v10178
    %v10431 = vpack.c.b16 %v10182, %v10179
    %v10432 = vpack.c.b16 %v10186, %v10183
    %v10433 = vpack.c.b16 %v10187, %v10184
    %v10434 = vpack.c.b16 %v10188, %v10185
    %v10435 = vpack.c.b16 %v10192, %v10189
    %v10436 = vpack.c.b16 %v10193, %v10190
    %v10437 = vpack.c.b16 %v10194, %v10191
    %v10438 = vpack.c.b16 %v10198, %v10195
    %v10439 = vpack.c.b16 %v10199, %v10196
    %v10440 = vpack.c.b16 %v10200, %v10197
    %v10441 = vpack.c.b16 %v10204, %v10201
    %v10442 = vpack.c.b16 %v10205, %v10202
    %v10443 = vpack.c.b16 %v10206, %v10203
    %v10444 = vpack.c.b16 %v10210, %v10207
    %v10445 = vpack.c.b16 %v10211, %v10208
    %v10446 = vpack.c.b16 %v10212, %v10209
    %v10447 = vpack.c.b16 %v10216, %v10213
    %v10448 = vpack.c.b16 %v10217, %v10214
    %v10449 = vpack.c.b16 %v10218, %v10215
    %v10450 = vpack.c.b16 %v10222, %v10219
    %v10451 = vpack.c.b16 %v10223, %v10220
    %v10452 = vpack.c.b16 %v10224, %v10221
    %v10453 = vpack.c.b16 %v10228, %v10225
    %v10454 = vpack.c.b16 %v10229, %v10226
    %v10455 = vpack.c.b16 %v10230, %v10227
    %v10456 = vpack.c.b16 %v10234, %v10231
    %v10457 = vpack.c.b16 %v10235, %v10232
    %v10458 = vpack.c.b16 %v10236, %v10233
    %v10459 = vpack.c.b16 %v10240, %v10237
    %v10460 = vpack.c.b16 %v10241, %v10238
    %v10461 = vpack.c.b16 %v10242, %v10239
    %v10462 = vpack.c.b16 %v10246, %v10243
    %v10463 = vpack.c.b16 %v10247, %v10244
    %v10464 = vpack.c.b16 %v10248, %v10245
    %v10465 = vpack.c.b16 %v10252, %v10249
    %v10466 = vpack.c.b16 %v10253, %v10250
    %v10467 = vpack.c.b16 %v10254, %v10251
    %v10468 = vpack.c.b16 %v10258, %v10255
    %v10469 = vpack.c.b16 %v10259, %v10256
    %v10470 = vpack.c.b16 %v10260, %v10257
    %v10471 = vpack.c.b16 %v10264, %v10261
    %v10472 = vpack.c.b16 %v10265, %v10262
    %v10473 = vpack.c.b16 %v10266, %v10263
    %v10474 = vpack.c.b16 %v10270, %v10267
    %v10475 = vpack.c.b16 %v10271, %v10268
    %v10476 = vpack.c.b16 %v10272, %v10269
    %v10477 = vpack.c.b16 %v10276, %v10273
    %v10478 = vpack.c.b16 %v10277, %v10274
    %v10479 = vpack.c.b16 %v10278, %v10275
    %v10480 = vpack.c.b16 %v10282, %v10279
    %v10481 = vpack.c.b16 %v10283, %v10280
    %v10482 = vpack.c.b16 %v10284, %v10281
    %v10483 = vpack.c.b16 %v10288, %v10285
    %v10484 = vpack.c.b16 %v10289, %v10286
    %v10485 = vpack.c.b16 %v10290, %v10287
    %v10486 = vpack.c.b16 %v10294, %v10291
    %v10487 = vpack.c.b16 %v10295, %v10292
    %v10488 = vpack.c.b16 %v10296, %v10293
    %v10489 = vpack.c.b16 %v10300, %v10297
    %v10490 = vpack.c.b16 %v10301, %v10298
    %v10491 = vpack.c.b16 %v10302, %v10299
    %v10492 = vpack.c.b16 %v10306, %v10303
    %v10493 = vpack.c.b16 %v10307, %v10304
    %v10494 = vpack.c.b16 %v10308, %v10305
    %v10495 = vpack.c.b16 %v10312, %v10309
    %v10496 = vpack.c.b16 %v10313, %v10310
    %v10497 = vpack.c.b16 %v10314, %v10311
    %v10498 = vpack.c.b16 %v10318, %v10315
    %v10499 = vpack.c.b16 %v10319, %v10316
    %v10500 = vpack.c.b16 %v10320, %v10317
    %v10501 = vpack.c.b16 %v10324, %v10321
    %v10502 = vpack.c.b16 %v10325, %v10322
    %v10503 = vpack.c.b16 %v10326, %v10323
    %v10504 = vpack.c.b16 %v10330, %v10327
    %v10505 = vpack.c.b16 %v10331, %v10328
    %v10506 = vpack.c.b16 %v10332, %v10329
    %v10507 = vpack.c.b16 %v10336, %v10333
    %v10508 = vpack.c.b16 %v10337, %v10334
    %v10509 = vpack.c.b16 %v10338, %v10335
    %v10510 = vpack.c.b16 %v10342, %v10339
    %v10511 = vpack.c.b16 %v10343, %v10340
    %v10512 = vpack.c.b16 %v10344, %v10341
    %10681 = vmatprep.subr.bf16.mxu0 %v10367
    %10682 = vmatpush1.bf16.msra.mxu0 %v10366
    %10683 = vmatprep.subr.bf16.mxu0 %v10364
    %10684 = vmatpush1.bf16.msra.mxu0 %v10363
    %10685 = vmatprep.subr.bf16.mxu0 %v10361
    %10686 = vmatpush1.bf16.msra.mxu0 %v10360
    %10687 = vmatprep.subr.bf16.mxu0 %v10358
    %10688 = vmatpush1.bf16.msra.mxu0 %v10357
    %10689 = vmatprep.subr.bf16.mxu0 %v10355
    %10690 = vmatpush1.bf16.msra.mxu0 %v10354
    %10691 = vmatprep.subr.bf16.mxu0 %v10352
    %10692 = vmatpush1.bf16.msra.mxu0 %v10351
    %10693 = vmatprep.subr.bf16.mxu0 %v10349
    %10694 = vmatpush1.bf16.msra.mxu0 %v10348
    %10695 = vmatprep.subr.bf16.mxu0 %v10346
    %10696 = vmatpush1.bf16.msra.mxu0 %v10345
    %10697 = vmatprep.subr.bf16.mxu0 %v10391
    %10698 = vmatpush2.bf16.msra.mxu0 %v10390
    %10699 = vmatprep.subr.bf16.mxu0 %v10388
    %10700 = vmatpush2.bf16.msra.mxu0 %v10387
    %10701 = vmatprep.subr.bf16.mxu0 %v10385
    %10702 = vmatpush2.bf16.msra.mxu0 %v10384
    %10703 = vmatprep.subr.bf16.mxu0 %v10382
    %10704 = vmatpush2.bf16.msra.mxu0 %v10381
    %10705 = vmatprep.subr.bf16.mxu0 %v10379
    %10706 = vmatpush2.bf16.msra.mxu0 %v10378
    %10707 = vmatprep.subr.bf16.mxu0 %v10376
    %10708 = vmatpush2.bf16.msra.mxu0 %v10375
    %10709 = vmatprep.subr.bf16.mxu0 %v10373
    %10710 = vmatpush2.bf16.msra.mxu0 %v10372
    %10711 = vmatprep.subr.bf16.mxu0 %v10370
    %10712 = vmatpush2.bf16.msra.mxu0 %v10369
    %10713 = vmatprep.mubr.bf16.mxu0 %v9555
    %10714 = vmatmul.mubr.bf16.gmra.mxu0 %v9554
    %v10715 = vpop.f32.mrf.mxu0
    %v10716 = vadd.f32 0.0, %v10715
    %v10717 = vpop.f32.mrf.mxu0
    %v10718 = vadd.f32 0.0, %v10717
    %v10719 = vpop.f32.mrf.mxu0
    %v10720 = vpop.f32.mrf.mxu0
    %10721 = vdwg.mxu0
    %10722 = vmatprep.subr.bf16.mxu0 %v10415
    %10723 = vmatpush1.bf16.msra.mxu0 %v10414
    %10724 = vmatprep.subr.bf16.mxu0 %v10412
    %10725 = vmatpush1.bf16.msra.mxu0 %v10411
    %10726 = vmatprep.subr.bf16.mxu0 %v10409
    %10727 = vmatpush1.bf16.msra.mxu0 %v10408
    %10728 = vmatprep.subr.bf16.mxu0 %v10406
    %10729 = vmatpush1.bf16.msra.mxu0 %v10405
    %10730 = vmatprep.subr.bf16.mxu0 %v10403
    %10731 = vmatpush1.bf16.msra.mxu0 %v10402
    %10732 = vmatprep.subr.bf16.mxu0 %v10400
    %10733 = vmatpush1.bf16.msra.mxu0 %v10399
    %10734 = vmatprep.subr.bf16.mxu0 %v10397
    %10735 = vmatpush1.bf16.msra.mxu0 %v10396
    %10736 = vmatprep.subr.bf16.mxu0 %v10394
    %10737 = vmatpush1.bf16.msra.mxu0 %v10393
    %10738 = vmatprep.subr.bf16.mxu0 %v10439
    %10739 = vmatpush2.bf16.msra.mxu0 %v10438
    %10740 = vmatprep.subr.bf16.mxu0 %v10436
    %10741 = vmatpush2.bf16.msra.mxu0 %v10435
    %10742 = vmatprep.subr.bf16.mxu0 %v10433
    %10743 = vmatpush2.bf16.msra.mxu0 %v10432
    %10744 = vmatprep.subr.bf16.mxu0 %v10430
    %10745 = vmatpush2.bf16.msra.mxu0 %v10429
    %10746 = vmatprep.subr.bf16.mxu0 %v10427
    %10747 = vmatpush2.bf16.msra.mxu0 %v10426
    %10748 = vmatprep.subr.bf16.mxu0 %v10424
    %10749 = vmatpush2.bf16.msra.mxu0 %v10423
    %10750 = vmatprep.subr.bf16.mxu0 %v10421
    %10751 = vmatpush2.bf16.msra.mxu0 %v10420
    %10752 = vmatprep.subr.bf16.mxu0 %v10418
    %10753 = vmatpush2.bf16.msra.mxu0 %v10417
    %10754 = vmatprep.mubr.bf16.mxu0 %v9557
    %10755 = vmatmul.mubr.bf16.gmra.mxu0 %v9556
    %v10756 = vpop.f32.mrf.mxu0
    %v10757 = vadd.f32 %v10716, %v10756
    %v10758 = vpop.f32.mrf.mxu0
    %v10759 = vadd.f32 %v10718, %v10758
    %v10760 = vpop.f32.mrf.mxu0
    %v10761 = vpop.f32.mrf.mxu0
    %10762 = vdwg.mxu0
    %10763 = vmatprep.subr.bf16.mxu0 %v10463
    %10764 = vmatpush1.bf16.msra.mxu0 %v10462
    %10765 = vmatprep.subr.bf16.mxu0 %v10460
    %10766 = vmatpush1.bf16.msra.mxu0 %v10459
    %10767 = vmatprep.subr.bf16.mxu0 %v10457
    %10768 = vmatpush1.bf16.msra.mxu0 %v10456
    %10769 = vmatprep.subr.bf16.mxu0 %v10454
    %10770 = vmatpush1.bf16.msra.mxu0 %v10453
    %10771 = vmatprep.subr.bf16.mxu0 %v10451
    %10772 = vmatpush1.bf16.msra.mxu0 %v10450
    %10773 = vmatprep.subr.bf16.mxu0 %v10448
    %10774 = vmatpush1.bf16.msra.mxu0 %v10447
    %10775 = vmatprep.subr.bf16.mxu0 %v10445
    %10776 = vmatpush1.bf16.msra.mxu0 %v10444
    %10777 = vmatprep.subr.bf16.mxu0 %v10442
    %10778 = vmatpush1.bf16.msra.mxu0 %v10441
    %10779 = vmatprep.subr.bf16.mxu0 %v10487
    %10780 = vmatpush2.bf16.msra.mxu0 %v10486
    %10781 = vmatprep.subr.bf16.mxu0 %v10484
    %10782 = vmatpush2.bf16.msra.mxu0 %v10483
    %10783 = vmatprep.subr.bf16.mxu0 %v10481
    %10784 = vmatpush2.bf16.msra.mxu0 %v10480
    %10785 = vmatprep.subr.bf16.mxu0 %v10478
    %10786 = vmatpush2.bf16.msra.mxu0 %v10477
    %10787 = vmatprep.subr.bf16.mxu0 %v10475
    %10788 = vmatpush2.bf16.msra.mxu0 %v10474
    %10789 = vmatprep.subr.bf16.mxu0 %v10472
    %10790 = vmatpush2.bf16.msra.mxu0 %v10471
    %10791 = vmatprep.subr.bf16.mxu0 %v10469
    %10792 = vmatpush2.bf16.msra.mxu0 %v10468
    %10793 = vmatprep.subr.bf16.mxu0 %v10466
    %10794 = vmatpush2.bf16.msra.mxu0 %v10465
    %10795 = vmatprep.mubr.bf16.mxu0 %v9559
    %10796 = vmatmul.mubr.bf16.gmra.mxu0 %v9558
    %v10797 = vpop.f32.mrf.mxu0
    %v10798 = vadd.f32 %v10757, %v10797
    %v10799 = vpop.f32.mrf.mxu0
    %v10800 = vadd.f32 %v10759, %v10799
    %v10801 = vpop.f32.mrf.mxu0
    %v10802 = vpop.f32.mrf.mxu0
    %10803 = vdwg.mxu0
    %10804 = vmatprep.subr.bf16.mxu0 %v10511
    %10805 = vmatpush1.bf16.msra.mxu0 %v10510
    %10806 = vmatprep.subr.bf16.mxu0 %v10508
    %10807 = vmatpush1.bf16.msra.mxu0 %v10507
    %10808 = vmatprep.subr.bf16.mxu0 %v10505
    %10809 = vmatpush1.bf16.msra.mxu0 %v10504
    %10810 = vmatprep.subr.bf16.mxu0 %v10502
    %10811 = vmatpush1.bf16.msra.mxu0 %v10501
    %10812 = vmatprep.subr.bf16.mxu0 %v10499
    %10813 = vmatpush1.bf16.msra.mxu0 %v10498
    %10814 = vmatprep.subr.bf16.mxu0 %v10496
    %10815 = vmatpush1.bf16.msra.mxu0 %v10495
    %10816 = vmatprep.subr.bf16.mxu0 %v10493
    %10817 = vmatpush1.bf16.msra.mxu0 %v10492
    %10818 = vmatprep.subr.bf16.mxu0 %v10490
    %10819 = vmatpush1.bf16.msra.mxu0 %v10489
    %10820 = vmatprep.subr.bf16.mxu0 0
    %10821 = vmatpush2.bf16.msra.mxu0 0
    %10822 = vmatprep.subr.bf16.mxu0 0
    %10823 = vmatpush2.bf16.msra.mxu0 0
    %10824 = vmatprep.subr.bf16.mxu0 0
    %10825 = vmatpush2.bf16.msra.mxu0 0
    %10826 = vmatprep.subr.bf16.mxu0 0
    %10827 = vmatpush2.bf16.msra.mxu0 0
    %10828 = vmatprep.subr.bf16.mxu0 0
    %10829 = vmatpush2.bf16.msra.mxu0 0
    %10830 = vmatprep.subr.bf16.mxu0 0
    %10831 = vmatpush2.bf16.msra.mxu0 0
    %10832 = vmatprep.subr.bf16.mxu0 0
    %10833 = vmatpush2.bf16.msra.mxu0 0
    %10834 = vmatprep.subr.bf16.mxu0 0
    %10835 = vmatpush2.bf16.msra.mxu0 0
    %10836 = vmatprep.mubr.bf16.mxu0 0
    %10837 = vmatmul.mubr.bf16.gmra.mxu0 %v9560
    %v10838 = vpop.f32.mrf.mxu0
    %v10839 = vadd.f32 %v10798, %v10838
    %v10840 = vpop.f32.mrf.mxu0
    %v10841 = vadd.f32 %v10800, %v10840
    %v10842 = vpop.f32.mrf.mxu0
    %v10843 = vpop.f32.mrf.mxu0
    %10844 = vdwg.mxu0
    %10845 = vmatprep.subr.bf16.mxu0 0
    %10846 = vmatpush1.bf16.msra.mxu0 %v10368
    %10847 = vmatprep.subr.bf16.mxu0 0
    %10848 = vmatpush1.bf16.msra.mxu0 %v10365
    %10849 = vmatprep.subr.bf16.mxu0 0
    %10850 = vmatpush1.bf16.msra.mxu0 %v10362
    %10851 = vmatprep.subr.bf16.mxu0 0
    %10852 = vmatpush1.bf16.msra.mxu0 %v10359
    %10853 = vmatprep.subr.bf16.mxu0 0
    %10854 = vmatpush1.bf16.msra.mxu0 %v10356
    %10855 = vmatprep.subr.bf16.mxu0 0
    %10856 = vmatpush1.bf16.msra.mxu0 %v10353
    %10857 = vmatprep.subr.bf16.mxu0 0
    %10858 = vmatpush1.bf16.msra.mxu0 %v10350
    %10859 = vmatprep.subr.bf16.mxu0 0
    %10860 = vmatpush1.bf16.msra.mxu0 %v10347
    %10861 = vmatprep.subr.bf16.mxu0 0
    %10862 = vmatpush2.bf16.msra.mxu0 %v10392
    %10863 = vmatprep.subr.bf16.mxu0 0
    %10864 = vmatpush2.bf16.msra.mxu0 %v10389
    %10865 = vmatprep.subr.bf16.mxu0 0
    %10866 = vmatpush2.bf16.msra.mxu0 %v10386
    %10867 = vmatprep.subr.bf16.mxu0 0
    %10868 = vmatpush2.bf16.msra.mxu0 %v10383
    %10869 = vmatprep.subr.bf16.mxu0 0
    %10870 = vmatpush2.bf16.msra.mxu0 %v10380
    %10871 = vmatprep.subr.bf16.mxu0 0
    %10872 = vmatpush2.bf16.msra.mxu0 %v10377
    %10873 = vmatprep.subr.bf16.mxu0 0
    %10874 = vmatpush2.bf16.msra.mxu0 %v10374
    %10875 = vmatprep.subr.bf16.mxu0 0
    %10876 = vmatpush2.bf16.msra.mxu0 %v10371
    %10877 = vmatprep.mubr.bf16.mxu0 %v9555
    %10878 = vmatmul.mubr.bf16.gmra.mxu0 %v9554
    %v10879 = vpop.f32.mrf.mxu0
    %v10880 = vadd.f32 0.0, %v10879
    %v10881 = vpop.f32.mrf.mxu0
    %v10882 = vpop.f32.mrf.mxu0
    %v10883 = vpop.f32.mrf.mxu0
    %10884 = vdwg.mxu0
    %10885 = vmatprep.subr.bf16.mxu0 0
    %10886 = vmatpush1.bf16.msra.mxu0 %v10416
    %10887 = vmatprep.subr.bf16.mxu0 0
    %10888 = vmatpush1.bf16.msra.mxu0 %v10413
    %10889 = vmatprep.subr.bf16.mxu0 0
    %10890 = vmatpush1.bf16.msra.mxu0 %v10410
    %10891 = vmatprep.subr.bf16.mxu0 0
    %10892 = vmatpush1.bf16.msra.mxu0 %v10407
    %10893 = vmatprep.subr.bf16.mxu0 0
    %10894 = vmatpush1.bf16.msra.mxu0 %v10404
    %10895 = vmatprep.subr.bf16.mxu0 0
    %10896 = vmatpush1.bf16.msra.mxu0 %v10401
    %10897 = vmatprep.subr.bf16.mxu0 0
    %10898 = vmatpush1.bf16.msra.mxu0 %v10398
    %10899 = vmatprep.subr.bf16.mxu0 0
    %10900 = vmatpush1.bf16.msra.mxu0 %v10395
    %10901 = vmatprep.subr.bf16.mxu0 0
    %10902 = vmatpush2.bf16.msra.mxu0 %v10440
    %10903 = vmatprep.subr.bf16.mxu0 0
    %10904 = vmatpush2.bf16.msra.mxu0 %v10437
    %10905 = vmatprep.subr.bf16.mxu0 0
    %10906 = vmatpush2.bf16.msra.mxu0 %v10434
    %10907 = vmatprep.subr.bf16.mxu0 0
    %10908 = vmatpush2.bf16.msra.mxu0 %v10431
    %10909 = vmatprep.subr.bf16.mxu0 0
    %10910 = vmatpush2.bf16.msra.mxu0 %v10428
    %10911 = vmatprep.subr.bf16.mxu0 0
    %10912 = vmatpush2.bf16.msra.mxu0 %v10425
    %10913 = vmatprep.subr.bf16.mxu0 0
    %10914 = vmatpush2.bf16.msra.mxu0 %v10422
    %10915 = vmatprep.subr.bf16.mxu0 0
    %10916 = vmatpush2.bf16.msra.mxu0 %v10419
    %10917 = vmatprep.mubr.bf16.mxu0 %v9557
    %10918 = vmatmul.mubr.bf16.gmra.mxu0 %v9556
    %v10919 = vpop.f32.mrf.mxu0
    %v10920 = vadd.f32 %v10880, %v10919
    %v10921 = vpop.f32.mrf.mxu0
    %v10922 = vpop.f32.mrf.mxu0
    %v10923 = vpop.f32.mrf.mxu0
    %10924 = vdwg.mxu0
    %10925 = vmatprep.subr.bf16.mxu0 0
    %10926 = vmatpush1.bf16.msra.mxu0 %v10464
    %10927 = vmatprep.subr.bf16.mxu0 0
    %10928 = vmatpush1.bf16.msra.mxu0 %v10461
    %10929 = vmatprep.subr.bf16.mxu0 0
    %10930 = vmatpush1.bf16.msra.mxu0 %v10458
    %10931 = vmatprep.subr.bf16.mxu0 0
    %10932 = vmatpush1.bf16.msra.mxu0 %v10455
    %10933 = vmatprep.subr.bf16.mxu0 0
    %10934 = vmatpush1.bf16.msra.mxu0 %v10452
    %10935 = vmatprep.subr.bf16.mxu0 0
    %10936 = vmatpush1.bf16.msra.mxu0 %v10449
    %10937 = vmatprep.subr.bf16.mxu0 0
    %10938 = vmatpush1.bf16.msra.mxu0 %v10446
    %10939 = vmatprep.subr.bf16.mxu0 0
    %10940 = vmatpush1.bf16.msra.mxu0 %v10443
    %10941 = vmatprep.subr.bf16.mxu0 0
    %10942 = vmatpush2.bf16.msra.mxu0 %v10488
    %10943 = vmatprep.subr.bf16.mxu0 0
    %10944 = vmatpush2.bf16.msra.mxu0 %v10485
    %10945 = vmatprep.subr.bf16.mxu0 0
    %10946 = vmatpush2.bf16.msra.mxu0 %v10482
    %10947 = vmatprep.subr.bf16.mxu0 0
    %10948 = vmatpush2.bf16.msra.mxu0 %v10479
    %10949 = vmatprep.subr.bf16.mxu0 0
    %10950 = vmatpush2.bf16.msra.mxu0 %v10476
    %10951 = vmatprep.subr.bf16.mxu0 0
    %10952 = vmatpush2.bf16.msra.mxu0 %v10473
    %10953 = vmatprep.subr.bf16.mxu0 0
    %10954 = vmatpush2.bf16.msra.mxu0 %v10470
    %10955 = vmatprep.subr.bf16.mxu0 0
    %10956 = vmatpush2.bf16.msra.mxu0 %v10467
    %10957 = vmatprep.mubr.bf16.mxu0 %v9559
    %10958 = vmatmul.mubr.bf16.gmra.mxu0 %v9558
    %v10959 = vpop.f32.mrf.mxu0
    %v10960 = vadd.f32 %v10920, %v10959
    %v10961 = vpop.f32.mrf.mxu0
    %v10962 = vpop.f32.mrf.mxu0
    %v10963 = vpop.f32.mrf.mxu0
    %10964 = vdwg.mxu0
    %10965 = vmatprep.subr.bf16.mxu0 0
    %10966 = vmatpush1.bf16.msra.mxu0 %v10512
    %10967 = vmatprep.subr.bf16.mxu0 0
    %10968 = vmatpush1.bf16.msra.mxu0 %v10509
    %10969 = vmatprep.subr.bf16.mxu0 0
    %10970 = vmatpush1.bf16.msra.mxu0 %v10506
    %10971 = vmatprep.subr.bf16.mxu0 0
    %10972 = vmatpush1.bf16.msra.mxu0 %v10503
    %10973 = vmatprep.subr.bf16.mxu0 0
    %10974 = vmatpush1.bf16.msra.mxu0 %v10500
    %10975 = vmatprep.subr.bf16.mxu0 0
    %10976 = vmatpush1.bf16.msra.mxu0 %v10497
    %10977 = vmatprep.subr.bf16.mxu0 0
    %10978 = vmatpush1.bf16.msra.mxu0 %v10494
    %10979 = vmatprep.subr.bf16.mxu0 0
    %10980 = vmatpush1.bf16.msra.mxu0 %v10491
    %10981 = vmatprep.subr.bf16.mxu0 0
    %10982 = vmatpush2.bf16.msra.mxu0 0
    %10983 = vmatprep.subr.bf16.mxu0 0
    %10984 = vmatpush2.bf16.msra.mxu0 0
    %10985 = vmatprep.subr.bf16.mxu0 0
    %10986 = vmatpush2.bf16.msra.mxu0 0
    %10987 = vmatprep.subr.bf16.mxu0 0
    %10988 = vmatpush2.bf16.msra.mxu0 0
    %10989 = vmatprep.subr.bf16.mxu0 0
    %10990 = vmatpush2.bf16.msra.mxu0 0
    %10991 = vmatprep.subr.bf16.mxu0 0
    %10992 = vmatpush2.bf16.msra.mxu0 0
    %10993 = vmatprep.subr.bf16.mxu0 0
    %10994 = vmatpush2.bf16.msra.mxu0 0
    %10995 = vmatprep.subr.bf16.mxu0 0
    %10996 = vmatpush2.bf16.msra.mxu0 0
    %10997 = vmatprep.mubr.bf16.mxu0 0
    %10998 = vmatmul.mubr.bf16.gmra.mxu0 %v9560
    %v10999 = vpop.f32.mrf.mxu0
    %v11000 = vadd.f32 %v10960, %v10999
    %v11001 = vpop.f32.mrf.mxu0
    %v11002 = vpop.f32.mrf.mxu0
    %v11003 = vpop.f32.mrf.mxu0
    %11004 = vdwg.mxu0
    %v11005 = vadd.f32 %v9527, %v10839
    %v11006 = vadd.f32 %v9528, %v10841
    %v11007 = vadd.f32 %v9529, %v11000
    %v11008 = vld [vmem:[#allocation8 + $0x1080] sm:$0xff]
    %v11009 = vld [vmem:[#allocation8 + $0x1088] sm:$0xf]
    %v11010 = vld [vmem:[#allocation8 + $0x108c] sm:$0xff]
    %v11011 = vld [vmem:[#allocation8 + $0x1094] sm:$0xf]
    %v11012 = vld [vmem:[#allocation8 + $0x1098] sm:$0xff]
    %v11013 = vld [vmem:[#allocation8 + $0x10a0] sm:$0xf]
    %v11014 = vld [vmem:[#allocation8 + $0x10a4] sm:$0xff]
    %v11015 = vld [vmem:[#allocation8 + $0x10ac] sm:$0xf]
    %v11016 = vld [vmem:[#allocation8 + $0x10b0] sm:$0xff]
    %v11017 = vld [vmem:[#allocation8 + $0x10b8] sm:$0xf]
    %v11018 = vld [vmem:[#allocation8 + $0x10bc] sm:$0xff]
    %v11019 = vld [vmem:[#allocation8 + $0x10c4] sm:$0xf]
    %v11020 = vld [vmem:[#allocation8 + $0x10c8] sm:$0xff]
    %v11021 = vld [vmem:[#allocation8 + $0x10d0] sm:$0xf]
    %v11022 = vld [vmem:[#allocation8 + $0x10d4] sm:$0xff]
    %v11023 = vld [vmem:[#allocation8 + $0x10dc] sm:$0xf]
    %v11024 = vld [vmem:[#allocation8 + $0x10e0] sm:$0xff]
    %v11025 = vld [vmem:[#allocation8 + $0x10e8] sm:$0xf]
    %v11026 = vld [vmem:[#allocation8 + $0x10ec] sm:$0xff]
    %v11027 = vld [vmem:[#allocation8 + $0x10f4] sm:$0xf]
    %v11028 = vld [vmem:[#allocation8 + $0x10f8] sm:$0xff]
    %v11029 = vld [vmem:[#allocation8 + $0x1100] sm:$0xf]
    %v11030 = vld [vmem:[#allocation8 + $0x1104] sm:$0xff]
    %v11031 = vld [vmem:[#allocation8 + $0x110c] sm:$0xf]
    %v11032 = vld [vmem:[#allocation8 + $0x1110] sm:$0xff]
    %v11033 = vld [vmem:[#allocation8 + $0x1118] sm:$0xf]
    %v11034 = vld [vmem:[#allocation8 + $0x111c] sm:$0xff]
    %v11035 = vld [vmem:[#allocation8 + $0x1124] sm:$0xf]
    %v11036 = vld [vmem:[#allocation8 + $0x1128] sm:$0xff]
    %v11037 = vld [vmem:[#allocation8 + $0x1130] sm:$0xf]
    %v11038 = vld [vmem:[#allocation8 + $0x1134] sm:$0xff]
    %v11039 = vld [vmem:[#allocation8 + $0x113c] sm:$0xf]
    %v11040 = vld [vmem:[#allocation8 + $0x1140] sm:$0xff]
    %v11041 = vld [vmem:[#allocation8 + $0x1148] sm:$0xf]
    %v11042 = vld [vmem:[#allocation8 + $0x114c] sm:$0xff]
    %v11043 = vld [vmem:[#allocation8 + $0x1154] sm:$0xf]
    %v11044 = vld [vmem:[#allocation8 + $0x1158] sm:$0xff]
    %v11045 = vld [vmem:[#allocation8 + $0x1160] sm:$0xf]
    %v11046 = vld [vmem:[#allocation8 + $0x1164] sm:$0xff]
    %v11047 = vld [vmem:[#allocation8 + $0x116c] sm:$0xf]
    %v11048 = vld [vmem:[#allocation8 + $0x1170] sm:$0xff]
    %v11049 = vld [vmem:[#allocation8 + $0x1178] sm:$0xf]
    %v11050 = vld [vmem:[#allocation8 + $0x117c] sm:$0xff]
    %v11051 = vld [vmem:[#allocation8 + $0x1184] sm:$0xf]
    %v11052 = vld [vmem:[#allocation8 + $0x1188] sm:$0xff]
    %v11053 = vld [vmem:[#allocation8 + $0x1190] sm:$0xf]
    %v11054 = vld [vmem:[#allocation8 + $0x1194] sm:$0xff]
    %v11055 = vld [vmem:[#allocation8 + $0x119c] sm:$0xf]
    %v11056 = vld [vmem:[#allocation8 + $0x11a0] sm:$0xff]
    %v11057 = vld [vmem:[#allocation8 + $0x11a8] sm:$0xf]
    %v11058 = vld [vmem:[#allocation8 + $0x11ac] sm:$0xff]
    %v11059 = vld [vmem:[#allocation8 + $0x11b4] sm:$0xf]
    %v11060 = vld [vmem:[#allocation8 + $0x11b8] sm:$0xff]
    %v11061 = vld [vmem:[#allocation8 + $0x11c0] sm:$0xf]
    %v11062 = vld [vmem:[#allocation8 + $0x11c4] sm:$0xff]
    %v11063 = vld [vmem:[#allocation8 + $0x11cc] sm:$0xf]
    %v11064 = vld [vmem:[#allocation8 + $0x11d0] sm:$0xff]
    %v11065 = vld [vmem:[#allocation8 + $0x11d8] sm:$0xf]
    %v11066 = vld [vmem:[#allocation8 + $0x11dc] sm:$0xff]
    %v11067 = vld [vmem:[#allocation8 + $0x11e4] sm:$0xf]
    %v11068 = vld [vmem:[#allocation8 + $0x11e8] sm:$0xff]
    %v11069 = vld [vmem:[#allocation8 + $0x11f0] sm:$0xf]
    %v11070 = vld [vmem:[#allocation8 + $0x11f4] sm:$0xff]
    %v11071 = vld [vmem:[#allocation8 + $0x11fc] sm:$0xf]
    %v11072 = vld [vmem:[#allocation8 + $0x1200] sm:$0xff]
    %v11073 = vld [vmem:[#allocation8 + $0x1208] sm:$0xf]
    %v11074 = vld [vmem:[#allocation8 + $0x120c] sm:$0xff]
    %v11075 = vld [vmem:[#allocation8 + $0x1214] sm:$0xf]
    %v11076 = vld [vmem:[#allocation8 + $0x1218] sm:$0xff]
    %v11077 = vld [vmem:[#allocation8 + $0x1220] sm:$0xf]
    %v11078 = vld [vmem:[#allocation8 + $0x1224] sm:$0xff]
    %v11079 = vld [vmem:[#allocation8 + $0x122c] sm:$0xf]
    %v11080 = vld [vmem:[#allocation8 + $0x1230] sm:$0xff]
    %v11081 = vld [vmem:[#allocation8 + $0x1238] sm:$0xf]
    %v11082 = vld [vmem:[#allocation8 + $0x123c] sm:$0xff]
    %v11083 = vld [vmem:[#allocation8 + $0x1244] sm:$0xf]
    %v11084 = vld [vmem:[#allocation8 + $0x1248] sm:$0xff]
    %v11085 = vld [vmem:[#allocation8 + $0x1250] sm:$0xf]
    %v11086 = vld [vmem:[#allocation8 + $0x1254] sm:$0xff]
    %v11087 = vld [vmem:[#allocation8 + $0x125c] sm:$0xf]
    %v11088 = vld [vmem:[#allocation8 + $0x1260] sm:$0xff]
    %v11089 = vld [vmem:[#allocation8 + $0x1268] sm:$0xf]
    %v11090 = vld [vmem:[#allocation8 + $0x126c] sm:$0xff]
    %v11091 = vld [vmem:[#allocation8 + $0x1274] sm:$0xf]
    %v11092 = vld [vmem:[#allocation8 + $0x1278] sm:$0xff]
    %v11093 = vld [vmem:[#allocation8 + $0x1280] sm:$0xf]
    %v11094 = vld [vmem:[#allocation8 + $0x1284] sm:$0xff]
    %v11095 = vld [vmem:[#allocation8 + $0x128c] sm:$0xf]
    %v11096 = vld [vmem:[#allocation8 + $0x1290] sm:$0xff]
    %v11097 = vld [vmem:[#allocation8 + $0x1298] sm:$0xf]
    %v11098 = vld [vmem:[#allocation8 + $0x129c] sm:$0xff]
    %v11099 = vld [vmem:[#allocation8 + $0x12a4] sm:$0xf]
    %v11100 = vld [vmem:[#allocation8 + $0x12a8] sm:$0xff]
    %v11101 = vld [vmem:[#allocation8 + $0x12b0] sm:$0xf]
    %v11102 = vld [vmem:[#allocation8 + $0x12b4] sm:$0xff]
    %v11103 = vld [vmem:[#allocation8 + $0x12bc] sm:$0xf]
    %v11104 = vld [vmem:[#allocation8 + $0x12c0] sm:$0xff]
    %v11105 = vld [vmem:[#allocation8 + $0x12c8] sm:$0xf]
    %v11106 = vld [vmem:[#allocation8 + $0x12cc] sm:$0xff]
    %v11107 = vld [vmem:[#allocation8 + $0x12d4] sm:$0xf]
    %v11108 = vld [vmem:[#allocation8 + $0x12d8] sm:$0xff]
    %v11109 = vld [vmem:[#allocation8 + $0x12e0] sm:$0xf]
    %v11110 = vld [vmem:[#allocation8 + $0x12e4] sm:$0xff]
    %v11111 = vld [vmem:[#allocation8 + $0x12ec] sm:$0xf]
    %v11112 = vld [vmem:[#allocation8 + $0x12f0] sm:$0xff]
    %v11113 = vld [vmem:[#allocation8 + $0x12f8] sm:$0xf]
    %v11114 = vld [vmem:[#allocation8 + $0x12fc] sm:$0xff]
    %v11115 = vld [vmem:[#allocation8 + $0x1304] sm:$0xf]
    %v11116 = vld [vmem:[#allocation8 + $0x1308] sm:$0xff]
    %v11117 = vld [vmem:[#allocation8 + $0x1310] sm:$0xf]
    %v11118 = vld [vmem:[#allocation8 + $0x1314] sm:$0xff]
    %v11119 = vld [vmem:[#allocation8 + $0x131c] sm:$0xf]
    %v11120 = vld [vmem:[#allocation8 + $0x1320] sm:$0xff]
    %v11121 = vld [vmem:[#allocation8 + $0x1328] sm:$0xf]
    %v11122 = vld [vmem:[#allocation8 + $0x132c] sm:$0xff]
    %v11123 = vld [vmem:[#allocation8 + $0x1334] sm:$0xf]
    %v11124 = vld [vmem:[#allocation8 + $0x1338] sm:$0xff]
    %v11125 = vld [vmem:[#allocation8 + $0x1340] sm:$0xf]
    %v11126 = vld [vmem:[#allocation8 + $0x1344] sm:$0xff]
    %v11127 = vld [vmem:[#allocation8 + $0x134c] sm:$0xf]
    %v11128 = vld [vmem:[#allocation8 + $0x1350] sm:$0xff]
    %v11129 = vld [vmem:[#allocation8 + $0x1358] sm:$0xf]
    %v11130 = vld [vmem:[#allocation8 + $0x135c] sm:$0xff]
    %v11131 = vld [vmem:[#allocation8 + $0x1364] sm:$0xf]
    %v11132 = vld [vmem:[#allocation8 + $0x1368] sm:$0xff]
    %v11133 = vld [vmem:[#allocation8 + $0x1370] sm:$0xf]
    %v11134 = vld [vmem:[#allocation8 + $0x1374] sm:$0xff]
    %v11135 = vld [vmem:[#allocation8 + $0x137c] sm:$0xf]
    %v11136 = vld [vmem:[#allocation8 + $0x1380] sm:$0xff]
    %v11137 = vld [vmem:[#allocation8 + $0x1388] sm:$0xf]
    %v11138 = vld [vmem:[#allocation8 + $0x138c] sm:$0xff]
    %v11139 = vld [vmem:[#allocation8 + $0x1394] sm:$0xf]
    %v11140 = vld [vmem:[#allocation8 + $0x1398] sm:$0xff]
    %v11141 = vld [vmem:[#allocation8 + $0x13a0] sm:$0xf]
    %v11142 = vld [vmem:[#allocation8 + $0x13a4] sm:$0xff]
    %v11143 = vld [vmem:[#allocation8 + $0x13ac] sm:$0xf]
    %v11144 = vld [vmem:[#allocation8 + $0x13b0] sm:$0xff]
    %v11145 = vld [vmem:[#allocation8 + $0x13b8] sm:$0xf]
    %v11146 = vld [vmem:[#allocation8 + $0x13bc] sm:$0xff]
    %v11147 = vld [vmem:[#allocation8 + $0x13c4] sm:$0xf]
    %v11148 = vld [vmem:[#allocation8 + $0x13c8] sm:$0xff]
    %v11149 = vld [vmem:[#allocation8 + $0x13d0] sm:$0xf]
    %v11150 = vld [vmem:[#allocation8 + $0x13d4] sm:$0xff]
    %v11151 = vld [vmem:[#allocation8 + $0x13dc] sm:$0xf]
    %v11152 = vld [vmem:[#allocation8 + $0x13e0] sm:$0xff]
    %v11153 = vld [vmem:[#allocation8 + $0x13e8] sm:$0xf]
    %v11154 = vld [vmem:[#allocation8 + $0x13ec] sm:$0xff]
    %v11155 = vld [vmem:[#allocation8 + $0x13f4] sm:$0xf]
    %v11156 = vld [vmem:[#allocation8 + $0x13f8] sm:$0xff]
    %v11157 = vld [vmem:[#allocation8 + $0x1400] sm:$0xf]
    %v11158 = vld [vmem:[#allocation8 + $0x1404] sm:$0xff]
    %v11159 = vld [vmem:[#allocation8 + $0x140c] sm:$0xf]
    %v11160 = vld [vmem:[#allocation8 + $0x1410] sm:$0xff]
    %v11161 = vld [vmem:[#allocation8 + $0x1418] sm:$0xf]
    %v11162 = vld [vmem:[#allocation8 + $0x141c] sm:$0xff]
    %v11163 = vld [vmem:[#allocation8 + $0x1424] sm:$0xf]
    %v11164 = vld [vmem:[#allocation8 + $0x1428] sm:$0xff]
    %v11165 = vld [vmem:[#allocation8 + $0x1430] sm:$0xf]
    %v11166 = vld [vmem:[#allocation8 + $0x1434] sm:$0xff]
    %v11167 = vld [vmem:[#allocation8 + $0x143c] sm:$0xf]
    %v11168 = vld [vmem:[#allocation8 + $0x1440] sm:$0xff]
    %v11169 = vld [vmem:[#allocation8 + $0x1448] sm:$0xf]
    %v11170 = vld [vmem:[#allocation8 + $0x144c] sm:$0xff]
    %v11171 = vld [vmem:[#allocation8 + $0x1454] sm:$0xf]
    %v11172 = vld [vmem:[#allocation8 + $0x1458] sm:$0xff]
    %v11173 = vld [vmem:[#allocation8 + $0x1460] sm:$0xf]
    %v11174 = vld [vmem:[#allocation8 + $0x1464] sm:$0xff]
    %v11175 = vld [vmem:[#allocation8 + $0x146c] sm:$0xf]
    %v11176 = vld [vmem:[#allocation8 + $0x1470] sm:$0xff]
    %v11177 = vld [vmem:[#allocation8 + $0x1478] sm:$0xf]
    %v11178 = vld [vmem:[#allocation8 + $0x147c] sm:$0xff]
    %v11179 = vld [vmem:[#allocation8 + $0x1484] sm:$0xf]
    %v11180 = vld [vmem:[#allocation8 + $0x1488] sm:$0xff]
    %v11181 = vld [vmem:[#allocation8 + $0x1490] sm:$0xf]
    %v11182 = vld [vmem:[#allocation8 + $0x1494] sm:$0xff]
    %v11183 = vld [vmem:[#allocation8 + $0x149c] sm:$0xf]
    %v11184 = vld [vmem:[#allocation8 + $0x14a0] sm:$0xff]
    %v11185 = vld [vmem:[#allocation8 + $0x14a8] sm:$0xf]
    %v11186 = vld [vmem:[#allocation8 + $0x14ac] sm:$0xff]
    %v11187 = vld [vmem:[#allocation8 + $0x14b4] sm:$0xf]
    %v11188 = vld [vmem:[#allocation8 + $0x14b8] sm:$0xff]
    %v11189 = vld [vmem:[#allocation8 + $0x14c0] sm:$0xf]
    %v11190 = vld [vmem:[#allocation8 + $0x14c4] sm:$0xff]
    %v11191 = vld [vmem:[#allocation8 + $0x14cc] sm:$0xf]
    %v11192 = vld [vmem:[#allocation8 + $0x14d0] sm:$0xff]
    %v11193 = vld [vmem:[#allocation8 + $0x14d8] sm:$0xf]
    %v11194 = vld [vmem:[#allocation8 + $0x14dc] sm:$0xff]
    %v11195 = vld [vmem:[#allocation8 + $0x14e4] sm:$0xf]
    %v11196 = vld [vmem:[#allocation8 + $0x14e8] sm:$0xff]
    %v11197 = vld [vmem:[#allocation8 + $0x14f0] sm:$0xf]
    %v11198 = vld [vmem:[#allocation8 + $0x14f4] sm:$0xff]
    %v11199 = vld [vmem:[#allocation8 + $0x14fc] sm:$0xf]
    %v11200 = vld [vmem:[#allocation8 + $0x1500] sm:$0xff]
    %v11201 = vld [vmem:[#allocation8 + $0x1508] sm:$0xf]
    %v11202 = vld [vmem:[#allocation8 + $0x150c] sm:$0xff]
    %v11203 = vld [vmem:[#allocation8 + $0x1514] sm:$0xf]
    %v11204 = vld [vmem:[#allocation8 + $0x1518] sm:$0xff]
    %v11205 = vld [vmem:[#allocation8 + $0x1520] sm:$0xf]
    %v11206 = vld [vmem:[#allocation8 + $0x1524] sm:$0xff]
    %v11207 = vld [vmem:[#allocation8 + $0x152c] sm:$0xf]
    %v11208 = vld [vmem:[#allocation8 + $0x1530] sm:$0xff]
    %v11209 = vld [vmem:[#allocation8 + $0x1538] sm:$0xf]
    %v11210 = vld [vmem:[#allocation8 + $0x153c] sm:$0xff]
    %v11211 = vld [vmem:[#allocation8 + $0x1544] sm:$0xf]
    %v11212 = vld [vmem:[#allocation8 + $0x1548] sm:$0xff]
    %v11213 = vld [vmem:[#allocation8 + $0x1550] sm:$0xf]
    %v11214 = vld [vmem:[#allocation8 + $0x1554] sm:$0xff]
    %v11215 = vld [vmem:[#allocation8 + $0x155c] sm:$0xf]
    %v11216 = vld [vmem:[#allocation8 + $0x1560] sm:$0xff]
    %v11217 = vld [vmem:[#allocation8 + $0x1568] sm:$0xf]
    %v11218 = vld [vmem:[#allocation8 + $0x156c] sm:$0xff]
    %v11219 = vld [vmem:[#allocation8 + $0x1574] sm:$0xf]
    %v11220 = vld [vmem:[#allocation8 + $0x1578] sm:$0xff]
    %v11221 = vld [vmem:[#allocation8 + $0x1580] sm:$0xf]
    %v11222 = vld [vmem:[#allocation8 + $0x1584] sm:$0xff]
    %v11223 = vld [vmem:[#allocation8 + $0x158c] sm:$0xf]
    %v11224 = vld [vmem:[#allocation8 + $0x1590] sm:$0xff]
    %v11225 = vld [vmem:[#allocation8 + $0x1598] sm:$0xf]
    %v11226 = vld [vmem:[#allocation8 + $0x159c] sm:$0xff]
    %v11227 = vld [vmem:[#allocation8 + $0x15a4] sm:$0xf]
    %v11228 = vld [vmem:[#allocation8 + $0x15a8] sm:$0xff]
    %v11229 = vld [vmem:[#allocation8 + $0x15b0] sm:$0xf]
    %v11230 = vld [vmem:[#allocation8 + $0x15b4] sm:$0xff]
    %v11231 = vld [vmem:[#allocation8 + $0x15bc] sm:$0xf]
    %v11456 = vunpack.c.l.b16 %v11008
    %v11457 = vunpack.c.h.b16 %v11008
    %v11458 = vunpack.c.l.b16 %v11009
    %v11459 = vunpack.c.l.b16 %v11010
    %v11460 = vunpack.c.h.b16 %v11010
    %v11461 = vunpack.c.l.b16 %v11011
    %v11462 = vunpack.c.l.b16 %v11012
    %v11463 = vunpack.c.h.b16 %v11012
    %v11464 = vunpack.c.l.b16 %v11013
    %v11465 = vunpack.c.l.b16 %v11014
    %v11466 = vunpack.c.h.b16 %v11014
    %v11467 = vunpack.c.l.b16 %v11015
    %v11468 = vunpack.c.l.b16 %v11016
    %v11469 = vunpack.c.h.b16 %v11016
    %v11470 = vunpack.c.l.b16 %v11017
    %v11471 = vunpack.c.l.b16 %v11018
    %v11472 = vunpack.c.h.b16 %v11018
    %v11473 = vunpack.c.l.b16 %v11019
    %v11474 = vunpack.c.l.b16 %v11020
    %v11475 = vunpack.c.h.b16 %v11020
    %v11476 = vunpack.c.l.b16 %v11021
    %v11477 = vunpack.c.l.b16 %v11022
    %v11478 = vunpack.c.h.b16 %v11022
    %v11479 = vunpack.c.l.b16 %v11023
    %v11480 = vunpack.c.l.b16 %v11024
    %v11481 = vunpack.c.h.b16 %v11024
    %v11482 = vunpack.c.l.b16 %v11025
    %v11483 = vunpack.c.l.b16 %v11026
    %v11484 = vunpack.c.h.b16 %v11026
    %v11485 = vunpack.c.l.b16 %v11027
    %v11486 = vunpack.c.l.b16 %v11028
    %v11487 = vunpack.c.h.b16 %v11028
    %v11488 = vunpack.c.l.b16 %v11029
    %v11489 = vunpack.c.l.b16 %v11030
    %v11490 = vunpack.c.h.b16 %v11030
    %v11491 = vunpack.c.l.b16 %v11031
    %v11492 = vunpack.c.l.b16 %v11032
    %v11493 = vunpack.c.h.b16 %v11032
    %v11494 = vunpack.c.l.b16 %v11033
    %v11495 = vunpack.c.l.b16 %v11034
    %v11496 = vunpack.c.h.b16 %v11034
    %v11497 = vunpack.c.l.b16 %v11035
    %v11498 = vunpack.c.l.b16 %v11036
    %v11499 = vunpack.c.h.b16 %v11036
    %v11500 = vunpack.c.l.b16 %v11037
    %v11501 = vunpack.c.l.b16 %v11038
    %v11502 = vunpack.c.h.b16 %v11038
    %v11503 = vunpack.c.l.b16 %v11039
    %v11504 = vunpack.c.l.b16 %v11040
    %v11505 = vunpack.c.h.b16 %v11040
    %v11506 = vunpack.c.l.b16 %v11041
    %v11507 = vunpack.c.l.b16 %v11042
    %v11508 = vunpack.c.h.b16 %v11042
    %v11509 = vunpack.c.l.b16 %v11043
    %v11510 = vunpack.c.l.b16 %v11044
    %v11511 = vunpack.c.h.b16 %v11044
    %v11512 = vunpack.c.l.b16 %v11045
    %v11513 = vunpack.c.l.b16 %v11046
    %v11514 = vunpack.c.h.b16 %v11046
    %v11515 = vunpack.c.l.b16 %v11047
    %v11516 = vunpack.c.l.b16 %v11048
    %v11517 = vunpack.c.h.b16 %v11048
    %v11518 = vunpack.c.l.b16 %v11049
    %v11519 = vunpack.c.l.b16 %v11050
    %v11520 = vunpack.c.h.b16 %v11050
    %v11521 = vunpack.c.l.b16 %v11051
    %v11522 = vunpack.c.l.b16 %v11052
    %v11523 = vunpack.c.h.b16 %v11052
    %v11524 = vunpack.c.l.b16 %v11053
    %v11525 = vunpack.c.l.b16 %v11054
    %v11526 = vunpack.c.h.b16 %v11054
    %v11527 = vunpack.c.l.b16 %v11055
    %v11528 = vunpack.c.l.b16 %v11056
    %v11529 = vunpack.c.h.b16 %v11056
    %v11530 = vunpack.c.l.b16 %v11057
    %v11531 = vunpack.c.l.b16 %v11058
    %v11532 = vunpack.c.h.b16 %v11058
    %v11533 = vunpack.c.l.b16 %v11059
    %v11534 = vunpack.c.l.b16 %v11060
    %v11535 = vunpack.c.h.b16 %v11060
    %v11536 = vunpack.c.l.b16 %v11061
    %v11537 = vunpack.c.l.b16 %v11062
    %v11538 = vunpack.c.h.b16 %v11062
    %v11539 = vunpack.c.l.b16 %v11063
    %v11540 = vunpack.c.l.b16 %v11064
    %v11541 = vunpack.c.h.b16 %v11064
    %v11542 = vunpack.c.l.b16 %v11065
    %v11543 = vunpack.c.l.b16 %v11066
    %v11544 = vunpack.c.h.b16 %v11066
    %v11545 = vunpack.c.l.b16 %v11067
    %v11546 = vunpack.c.l.b16 %v11068
    %v11547 = vunpack.c.h.b16 %v11068
    %v11548 = vunpack.c.l.b16 %v11069
    %v11549 = vunpack.c.l.b16 %v11070
    %v11550 = vunpack.c.h.b16 %v11070
    %v11551 = vunpack.c.l.b16 %v11071
    %v11552 = vunpack.c.l.b16 %v11072
    %v11553 = vunpack.c.h.b16 %v11072
    %v11554 = vunpack.c.l.b16 %v11073
    %v11555 = vunpack.c.l.b16 %v11074
    %v11556 = vunpack.c.h.b16 %v11074
    %v11557 = vunpack.c.l.b16 %v11075
    %v11558 = vunpack.c.l.b16 %v11076
    %v11559 = vunpack.c.h.b16 %v11076
    %v11560 = vunpack.c.l.b16 %v11077
    %v11561 = vunpack.c.l.b16 %v11078
    %v11562 = vunpack.c.h.b16 %v11078
    %v11563 = vunpack.c.l.b16 %v11079
    %v11564 = vunpack.c.l.b16 %v11080
    %v11565 = vunpack.c.h.b16 %v11080
    %v11566 = vunpack.c.l.b16 %v11081
    %v11567 = vunpack.c.l.b16 %v11082
    %v11568 = vunpack.c.h.b16 %v11082
    %v11569 = vunpack.c.l.b16 %v11083
    %v11570 = vunpack.c.l.b16 %v11084
    %v11571 = vunpack.c.h.b16 %v11084
    %v11572 = vunpack.c.l.b16 %v11085
    %v11573 = vunpack.c.l.b16 %v11086
    %v11574 = vunpack.c.h.b16 %v11086
    %v11575 = vunpack.c.l.b16 %v11087
    %v11576 = vunpack.c.l.b16 %v11088
    %v11577 = vunpack.c.h.b16 %v11088
    %v11578 = vunpack.c.l.b16 %v11089
    %v11579 = vunpack.c.l.b16 %v11090
    %v11580 = vunpack.c.h.b16 %v11090
    %v11581 = vunpack.c.l.b16 %v11091
    %v11582 = vunpack.c.l.b16 %v11092
    %v11583 = vunpack.c.h.b16 %v11092
    %v11584 = vunpack.c.l.b16 %v11093
    %v11585 = vunpack.c.l.b16 %v11094
    %v11586 = vunpack.c.h.b16 %v11094
    %v11587 = vunpack.c.l.b16 %v11095
    %v11588 = vunpack.c.l.b16 %v11096
    %v11589 = vunpack.c.h.b16 %v11096
    %v11590 = vunpack.c.l.b16 %v11097
    %v11591 = vunpack.c.l.b16 %v11098
    %v11592 = vunpack.c.h.b16 %v11098
    %v11593 = vunpack.c.l.b16 %v11099
    %v11594 = vunpack.c.l.b16 %v11100
    %v11595 = vunpack.c.h.b16 %v11100
    %v11596 = vunpack.c.l.b16 %v11101
    %v11597 = vunpack.c.l.b16 %v11102
    %v11598 = vunpack.c.h.b16 %v11102
    %v11599 = vunpack.c.l.b16 %v11103
    %v11600 = vunpack.c.l.b16 %v11104
    %v11601 = vunpack.c.h.b16 %v11104
    %v11602 = vunpack.c.l.b16 %v11105
    %v11603 = vunpack.c.l.b16 %v11106
    %v11604 = vunpack.c.h.b16 %v11106
    %v11605 = vunpack.c.l.b16 %v11107
    %v11606 = vunpack.c.l.b16 %v11108
    %v11607 = vunpack.c.h.b16 %v11108
    %v11608 = vunpack.c.l.b16 %v11109
    %v11609 = vunpack.c.l.b16 %v11110
    %v11610 = vunpack.c.h.b16 %v11110
    %v11611 = vunpack.c.l.b16 %v11111
    %v11612 = vunpack.c.l.b16 %v11112
    %v11613 = vunpack.c.h.b16 %v11112
    %v11614 = vunpack.c.l.b16 %v11113
    %v11615 = vunpack.c.l.b16 %v11114
    %v11616 = vunpack.c.h.b16 %v11114
    %v11617 = vunpack.c.l.b16 %v11115
    %v11618 = vunpack.c.l.b16 %v11116
    %v11619 = vunpack.c.h.b16 %v11116
    %v11620 = vunpack.c.l.b16 %v11117
    %v11621 = vunpack.c.l.b16 %v11118
    %v11622 = vunpack.c.h.b16 %v11118
    %v11623 = vunpack.c.l.b16 %v11119
    %v11624 = vunpack.c.l.b16 %v11120
    %v11625 = vunpack.c.h.b16 %v11120
    %v11626 = vunpack.c.l.b16 %v11121
    %v11627 = vunpack.c.l.b16 %v11122
    %v11628 = vunpack.c.h.b16 %v11122
    %v11629 = vunpack.c.l.b16 %v11123
    %v11630 = vunpack.c.l.b16 %v11124
    %v11631 = vunpack.c.h.b16 %v11124
    %v11632 = vunpack.c.l.b16 %v11125
    %v11633 = vunpack.c.l.b16 %v11126
    %v11634 = vunpack.c.h.b16 %v11126
    %v11635 = vunpack.c.l.b16 %v11127
    %v11636 = vunpack.c.l.b16 %v11128
    %v11637 = vunpack.c.h.b16 %v11128
    %v11638 = vunpack.c.l.b16 %v11129
    %v11639 = vunpack.c.l.b16 %v11130
    %v11640 = vunpack.c.h.b16 %v11130
    %v11641 = vunpack.c.l.b16 %v11131
    %v11642 = vunpack.c.l.b16 %v11132
    %v11643 = vunpack.c.h.b16 %v11132
    %v11644 = vunpack.c.l.b16 %v11133
    %v11645 = vunpack.c.l.b16 %v11134
    %v11646 = vunpack.c.h.b16 %v11134
    %v11647 = vunpack.c.l.b16 %v11135
    %v11648 = vunpack.c.l.b16 %v11136
    %v11649 = vunpack.c.h.b16 %v11136
    %v11650 = vunpack.c.l.b16 %v11137
    %v11651 = vunpack.c.l.b16 %v11138
    %v11652 = vunpack.c.h.b16 %v11138
    %v11653 = vunpack.c.l.b16 %v11139
    %v11654 = vunpack.c.l.b16 %v11140
    %v11655 = vunpack.c.h.b16 %v11140
    %v11656 = vunpack.c.l.b16 %v11141
    %v11657 = vunpack.c.l.b16 %v11142
    %v11658 = vunpack.c.h.b16 %v11142
    %v11659 = vunpack.c.l.b16 %v11143
    %v11660 = vunpack.c.l.b16 %v11144
    %v11661 = vunpack.c.h.b16 %v11144
    %v11662 = vunpack.c.l.b16 %v11145
    %v11663 = vunpack.c.l.b16 %v11146
    %v11664 = vunpack.c.h.b16 %v11146
    %v11665 = vunpack.c.l.b16 %v11147
    %v11666 = vunpack.c.l.b16 %v11148
    %v11667 = vunpack.c.h.b16 %v11148
    %v11668 = vunpack.c.l.b16 %v11149
    %v11669 = vunpack.c.l.b16 %v11150
    %v11670 = vunpack.c.h.b16 %v11150
    %v11671 = vunpack.c.l.b16 %v11151
    %v11672 = vunpack.c.l.b16 %v11152
    %v11673 = vunpack.c.h.b16 %v11152
    %v11674 = vunpack.c.l.b16 %v11153
    %v11675 = vunpack.c.l.b16 %v11154
    %v11676 = vunpack.c.h.b16 %v11154
    %v11677 = vunpack.c.l.b16 %v11155
    %v11678 = vunpack.c.l.b16 %v11156
    %v11679 = vunpack.c.h.b16 %v11156
    %v11680 = vunpack.c.l.b16 %v11157
    %v11681 = vunpack.c.l.b16 %v11158
    %v11682 = vunpack.c.h.b16 %v11158
    %v11683 = vunpack.c.l.b16 %v11159
    %v11684 = vunpack.c.l.b16 %v11160
    %v11685 = vunpack.c.h.b16 %v11160
    %v11686 = vunpack.c.l.b16 %v11161
    %v11687 = vunpack.c.l.b16 %v11162
    %v11688 = vunpack.c.h.b16 %v11162
    %v11689 = vunpack.c.l.b16 %v11163
    %v11690 = vunpack.c.l.b16 %v11164
    %v11691 = vunpack.c.h.b16 %v11164
    %v11692 = vunpack.c.l.b16 %v11165
    %v11693 = vunpack.c.l.b16 %v11166
    %v11694 = vunpack.c.h.b16 %v11166
    %v11695 = vunpack.c.l.b16 %v11167
    %v11696 = vunpack.c.l.b16 %v11168
    %v11697 = vunpack.c.h.b16 %v11168
    %v11698 = vunpack.c.l.b16 %v11169
    %v11699 = vunpack.c.l.b16 %v11170
    %v11700 = vunpack.c.h.b16 %v11170
    %v11701 = vunpack.c.l.b16 %v11171
    %v11702 = vunpack.c.l.b16 %v11172
    %v11703 = vunpack.c.h.b16 %v11172
    %v11704 = vunpack.c.l.b16 %v11173
    %v11705 = vunpack.c.l.b16 %v11174
    %v11706 = vunpack.c.h.b16 %v11174
    %v11707 = vunpack.c.l.b16 %v11175
    %v11708 = vunpack.c.l.b16 %v11176
    %v11709 = vunpack.c.h.b16 %v11176
    %v11710 = vunpack.c.l.b16 %v11177
    %v11711 = vunpack.c.l.b16 %v11178
    %v11712 = vunpack.c.h.b16 %v11178
    %v11713 = vunpack.c.l.b16 %v11179
    %v11714 = vunpack.c.l.b16 %v11180
    %v11715 = vunpack.c.h.b16 %v11180
    %v11716 = vunpack.c.l.b16 %v11181
    %v11717 = vunpack.c.l.b16 %v11182
    %v11718 = vunpack.c.h.b16 %v11182
    %v11719 = vunpack.c.l.b16 %v11183
    %v11720 = vunpack.c.l.b16 %v11184
    %v11721 = vunpack.c.h.b16 %v11184
    %v11722 = vunpack.c.l.b16 %v11185
    %v11723 = vunpack.c.l.b16 %v11186
    %v11724 = vunpack.c.h.b16 %v11186
    %v11725 = vunpack.c.l.b16 %v11187
    %v11726 = vunpack.c.l.b16 %v11188
    %v11727 = vunpack.c.h.b16 %v11188
    %v11728 = vunpack.c.l.b16 %v11189
    %v11729 = vunpack.c.l.b16 %v11190
    %v11730 = vunpack.c.h.b16 %v11190
    %v11731 = vunpack.c.l.b16 %v11191
    %v11732 = vunpack.c.l.b16 %v11192
    %v11733 = vunpack.c.h.b16 %v11192
    %v11734 = vunpack.c.l.b16 %v11193
    %v11735 = vunpack.c.l.b16 %v11194
    %v11736 = vunpack.c.h.b16 %v11194
    %v11737 = vunpack.c.l.b16 %v11195
    %v11738 = vunpack.c.l.b16 %v11196
    %v11739 = vunpack.c.h.b16 %v11196
    %v11740 = vunpack.c.l.b16 %v11197
    %v11741 = vunpack.c.l.b16 %v11198
    %v11742 = vunpack.c.h.b16 %v11198
    %v11743 = vunpack.c.l.b16 %v11199
    %v11744 = vunpack.c.l.b16 %v11200
    %v11745 = vunpack.c.h.b16 %v11200
    %v11746 = vunpack.c.l.b16 %v11201
    %v11747 = vunpack.c.l.b16 %v11202
    %v11748 = vunpack.c.h.b16 %v11202
    %v11749 = vunpack.c.l.b16 %v11203
    %v11750 = vunpack.c.l.b16 %v11204
    %v11751 = vunpack.c.h.b16 %v11204
    %v11752 = vunpack.c.l.b16 %v11205
    %v11753 = vunpack.c.l.b16 %v11206
    %v11754 = vunpack.c.h.b16 %v11206
    %v11755 = vunpack.c.l.b16 %v11207
    %v11756 = vunpack.c.l.b16 %v11208
    %v11757 = vunpack.c.h.b16 %v11208
    %v11758 = vunpack.c.l.b16 %v11209
    %v11759 = vunpack.c.l.b16 %v11210
    %v11760 = vunpack.c.h.b16 %v11210
    %v11761 = vunpack.c.l.b16 %v11211
    %v11762 = vunpack.c.l.b16 %v11212
    %v11763 = vunpack.c.h.b16 %v11212
    %v11764 = vunpack.c.l.b16 %v11213
    %v11765 = vunpack.c.l.b16 %v11214
    %v11766 = vunpack.c.h.b16 %v11214
    %v11767 = vunpack.c.l.b16 %v11215
    %v11768 = vunpack.c.l.b16 %v11216
    %v11769 = vunpack.c.h.b16 %v11216
    %v11770 = vunpack.c.l.b16 %v11217
    %v11771 = vunpack.c.l.b16 %v11218
    %v11772 = vunpack.c.h.b16 %v11218
    %v11773 = vunpack.c.l.b16 %v11219
    %v11774 = vunpack.c.l.b16 %v11220
    %v11775 = vunpack.c.h.b16 %v11220
    %v11776 = vunpack.c.l.b16 %v11221
    %v11777 = vunpack.c.l.b16 %v11222
    %v11778 = vunpack.c.h.b16 %v11222
    %v11779 = vunpack.c.l.b16 %v11223
    %v11780 = vunpack.c.l.b16 %v11224
    %v11781 = vunpack.c.h.b16 %v11224
    %v11782 = vunpack.c.l.b16 %v11225
    %v11783 = vunpack.c.l.b16 %v11226
    %v11784 = vunpack.c.h.b16 %v11226
    %v11785 = vunpack.c.l.b16 %v11227
    %v11786 = vunpack.c.l.b16 %v11228
    %v11787 = vunpack.c.h.b16 %v11228
    %v11788 = vunpack.c.l.b16 %v11229
    %v11789 = vunpack.c.l.b16 %v11230
    %v11790 = vunpack.c.h.b16 %v11230
    %v11791 = vunpack.c.l.b16 %v11231
    %v11792 = vpack.c.b16 %v11459, %v11456
    %v11793 = vpack.c.b16 %v11460, %v11457
    %v11794 = vpack.c.b16 %v11461, %v11458
    %v11795 = vpack.c.b16 %v11465, %v11462
    %v11796 = vpack.c.b16 %v11466, %v11463
    %v11797 = vpack.c.b16 %v11467, %v11464
    %v11798 = vpack.c.b16 %v11471, %v11468
    %v11799 = vpack.c.b16 %v11472, %v11469
    %v11800 = vpack.c.b16 %v11473, %v11470
    %v11801 = vpack.c.b16 %v11477, %v11474
    %v11802 = vpack.c.b16 %v11478, %v11475
    %v11803 = vpack.c.b16 %v11479, %v11476
    %v11804 = vpack.c.b16 %v11483, %v11480
    %v11805 = vpack.c.b16 %v11484, %v11481
    %v11806 = vpack.c.b16 %v11485, %v11482
    %v11807 = vpack.c.b16 %v11489, %v11486
    %v11808 = vpack.c.b16 %v11490, %v11487
    %v11809 = vpack.c.b16 %v11491, %v11488
    %v11810 = vpack.c.b16 %v11495, %v11492
    %v11811 = vpack.c.b16 %v11496, %v11493
    %v11812 = vpack.c.b16 %v11497, %v11494
    %v11813 = vpack.c.b16 %v11501, %v11498
    %v11814 = vpack.c.b16 %v11502, %v11499
    %v11815 = vpack.c.b16 %v11503, %v11500
    %v11816 = vpack.c.b16 %v11507, %v11504
    %v11817 = vpack.c.b16 %v11508, %v11505
    %v11818 = vpack.c.b16 %v11509, %v11506
    %v11819 = vpack.c.b16 %v11513, %v11510
    %v11820 = vpack.c.b16 %v11514, %v11511
    %v11821 = vpack.c.b16 %v11515, %v11512
    %v11822 = vpack.c.b16 %v11519, %v11516
    %v11823 = vpack.c.b16 %v11520, %v11517
    %v11824 = vpack.c.b16 %v11521, %v11518
    %v11825 = vpack.c.b16 %v11525, %v11522
    %v11826 = vpack.c.b16 %v11526, %v11523
    %v11827 = vpack.c.b16 %v11527, %v11524
    %v11828 = vpack.c.b16 %v11531, %v11528
    %v11829 = vpack.c.b16 %v11532, %v11529
    %v11830 = vpack.c.b16 %v11533, %v11530
    %v11831 = vpack.c.b16 %v11537, %v11534
    %v11832 = vpack.c.b16 %v11538, %v11535
    %v11833 = vpack.c.b16 %v11539, %v11536
    %v11834 = vpack.c.b16 %v11543, %v11540
    %v11835 = vpack.c.b16 %v11544, %v11541
    %v11836 = vpack.c.b16 %v11545, %v11542
    %v11837 = vpack.c.b16 %v11549, %v11546
    %v11838 = vpack.c.b16 %v11550, %v11547
    %v11839 = vpack.c.b16 %v11551, %v11548
    %v11840 = vpack.c.b16 %v11555, %v11552
    %v11841 = vpack.c.b16 %v11556, %v11553
    %v11842 = vpack.c.b16 %v11557, %v11554
    %v11843 = vpack.c.b16 %v11561, %v11558
    %v11844 = vpack.c.b16 %v11562, %v11559
    %v11845 = vpack.c.b16 %v11563, %v11560
    %v11846 = vpack.c.b16 %v11567, %v11564
    %v11847 = vpack.c.b16 %v11568, %v11565
    %v11848 = vpack.c.b16 %v11569, %v11566
    %v11849 = vpack.c.b16 %v11573, %v11570
    %v11850 = vpack.c.b16 %v11574, %v11571
    %v11851 = vpack.c.b16 %v11575, %v11572
    %v11852 = vpack.c.b16 %v11579, %v11576
    %v11853 = vpack.c.b16 %v11580, %v11577
    %v11854 = vpack.c.b16 %v11581, %v11578
    %v11855 = vpack.c.b16 %v11585, %v11582
    %v11856 = vpack.c.b16 %v11586, %v11583
    %v11857 = vpack.c.b16 %v11587, %v11584
    %v11858 = vpack.c.b16 %v11591, %v11588
    %v11859 = vpack.c.b16 %v11592, %v11589
    %v11860 = vpack.c.b16 %v11593, %v11590
    %v11861 = vpack.c.b16 %v11597, %v11594
    %v11862 = vpack.c.b16 %v11598, %v11595
    %v11863 = vpack.c.b16 %v11599, %v11596
    %v11864 = vpack.c.b16 %v11603, %v11600
    %v11865 = vpack.c.b16 %v11604, %v11601
    %v11866 = vpack.c.b16 %v11605, %v11602
    %v11867 = vpack.c.b16 %v11609, %v11606
    %v11868 = vpack.c.b16 %v11610, %v11607
    %v11869 = vpack.c.b16 %v11611, %v11608
    %v11870 = vpack.c.b16 %v11615, %v11612
    %v11871 = vpack.c.b16 %v11616, %v11613
    %v11872 = vpack.c.b16 %v11617, %v11614
    %v11873 = vpack.c.b16 %v11621, %v11618
    %v11874 = vpack.c.b16 %v11622, %v11619
    %v11875 = vpack.c.b16 %v11623, %v11620
    %v11876 = vpack.c.b16 %v11627, %v11624
    %v11877 = vpack.c.b16 %v11628, %v11625
    %v11878 = vpack.c.b16 %v11629, %v11626
    %v11879 = vpack.c.b16 %v11633, %v11630
    %v11880 = vpack.c.b16 %v11634, %v11631
    %v11881 = vpack.c.b16 %v11635, %v11632
    %v11882 = vpack.c.b16 %v11639, %v11636
    %v11883 = vpack.c.b16 %v11640, %v11637
    %v11884 = vpack.c.b16 %v11641, %v11638
    %v11885 = vpack.c.b16 %v11645, %v11642
    %v11886 = vpack.c.b16 %v11646, %v11643
    %v11887 = vpack.c.b16 %v11647, %v11644
    %v11888 = vpack.c.b16 %v11651, %v11648
    %v11889 = vpack.c.b16 %v11652, %v11649
    %v11890 = vpack.c.b16 %v11653, %v11650
    %v11891 = vpack.c.b16 %v11657, %v11654
    %v11892 = vpack.c.b16 %v11658, %v11655
    %v11893 = vpack.c.b16 %v11659, %v11656
    %v11894 = vpack.c.b16 %v11663, %v11660
    %v11895 = vpack.c.b16 %v11664, %v11661
    %v11896 = vpack.c.b16 %v11665, %v11662
    %v11897 = vpack.c.b16 %v11669, %v11666
    %v11898 = vpack.c.b16 %v11670, %v11667
    %v11899 = vpack.c.b16 %v11671, %v11668
    %v11900 = vpack.c.b16 %v11675, %v11672
    %v11901 = vpack.c.b16 %v11676, %v11673
    %v11902 = vpack.c.b16 %v11677, %v11674
    %v11903 = vpack.c.b16 %v11681, %v11678
    %v11904 = vpack.c.b16 %v11682, %v11679
    %v11905 = vpack.c.b16 %v11683, %v11680
    %v11906 = vpack.c.b16 %v11687, %v11684
    %v11907 = vpack.c.b16 %v11688, %v11685
    %v11908 = vpack.c.b16 %v11689, %v11686
    %v11909 = vpack.c.b16 %v11693, %v11690
    %v11910 = vpack.c.b16 %v11694, %v11691
    %v11911 = vpack.c.b16 %v11695, %v11692
    %v11912 = vpack.c.b16 %v11699, %v11696
    %v11913 = vpack.c.b16 %v11700, %v11697
    %v11914 = vpack.c.b16 %v11701, %v11698
    %v11915 = vpack.c.b16 %v11705, %v11702
    %v11916 = vpack.c.b16 %v11706, %v11703
    %v11917 = vpack.c.b16 %v11707, %v11704
    %v11918 = vpack.c.b16 %v11711, %v11708
    %v11919 = vpack.c.b16 %v11712, %v11709
    %v11920 = vpack.c.b16 %v11713, %v11710
    %v11921 = vpack.c.b16 %v11717, %v11714
    %v11922 = vpack.c.b16 %v11718, %v11715
    %v11923 = vpack.c.b16 %v11719, %v11716
    %v11924 = vpack.c.b16 %v11723, %v11720
    %v11925 = vpack.c.b16 %v11724, %v11721
    %v11926 = vpack.c.b16 %v11725, %v11722
    %v11927 = vpack.c.b16 %v11729, %v11726
    %v11928 = vpack.c.b16 %v11730, %v11727
    %v11929 = vpack.c.b16 %v11731, %v11728
    %v11930 = vpack.c.b16 %v11735, %v11732
    %v11931 = vpack.c.b16 %v11736, %v11733
    %v11932 = vpack.c.b16 %v11737, %v11734
    %v11933 = vpack.c.b16 %v11741, %v11738
    %v11934 = vpack.c.b16 %v11742, %v11739
    %v11935 = vpack.c.b16 %v11743, %v11740
    %v11936 = vpack.c.b16 %v11747, %v11744
    %v11937 = vpack.c.b16 %v11748, %v11745
    %v11938 = vpack.c.b16 %v11749, %v11746
    %v11939 = vpack.c.b16 %v11753, %v11750
    %v11940 = vpack.c.b16 %v11754, %v11751
    %v11941 = vpack.c.b16 %v11755, %v11752
    %v11942 = vpack.c.b16 %v11759, %v11756
    %v11943 = vpack.c.b16 %v11760, %v11757
    %v11944 = vpack.c.b16 %v11761, %v11758
    %v11945 = vpack.c.b16 %v11765, %v11762
    %v11946 = vpack.c.b16 %v11766, %v11763
    %v11947 = vpack.c.b16 %v11767, %v11764
    %v11948 = vpack.c.b16 %v11771, %v11768
    %v11949 = vpack.c.b16 %v11772, %v11769
    %v11950 = vpack.c.b16 %v11773, %v11770
    %v11951 = vpack.c.b16 %v11777, %v11774
    %v11952 = vpack.c.b16 %v11778, %v11775
    %v11953 = vpack.c.b16 %v11779, %v11776
    %v11954 = vpack.c.b16 %v11783, %v11780
    %v11955 = vpack.c.b16 %v11784, %v11781
    %v11956 = vpack.c.b16 %v11785, %v11782
    %v11957 = vpack.c.b16 %v11789, %v11786
    %v11958 = vpack.c.b16 %v11790, %v11787
    %v11959 = vpack.c.b16 %v11791, %v11788
    %12128 = vmatprep.subr.bf16.mxu0 %v11814
    %12129 = vmatpush1.bf16.msra.mxu0 %v11813
    %12130 = vmatprep.subr.bf16.mxu0 %v11811
    %12131 = vmatpush1.bf16.msra.mxu0 %v11810
    %12132 = vmatprep.subr.bf16.mxu0 %v11808
    %12133 = vmatpush1.bf16.msra.mxu0 %v11807
    %12134 = vmatprep.subr.bf16.mxu0 %v11805
    %12135 = vmatpush1.bf16.msra.mxu0 %v11804
    %12136 = vmatprep.subr.bf16.mxu0 %v11802
    %12137 = vmatpush1.bf16.msra.mxu0 %v11801
    %12138 = vmatprep.subr.bf16.mxu0 %v11799
    %12139 = vmatpush1.bf16.msra.mxu0 %v11798
    %12140 = vmatprep.subr.bf16.mxu0 %v11796
    %12141 = vmatpush1.bf16.msra.mxu0 %v11795
    %12142 = vmatprep.subr.bf16.mxu0 %v11793
    %12143 = vmatpush1.bf16.msra.mxu0 %v11792
    %12144 = vmatprep.subr.bf16.mxu0 %v11838
    %12145 = vmatpush2.bf16.msra.mxu0 %v11837
    %12146 = vmatprep.subr.bf16.mxu0 %v11835
    %12147 = vmatpush2.bf16.msra.mxu0 %v11834
    %12148 = vmatprep.subr.bf16.mxu0 %v11832
    %12149 = vmatpush2.bf16.msra.mxu0 %v11831
    %12150 = vmatprep.subr.bf16.mxu0 %v11829
    %12151 = vmatpush2.bf16.msra.mxu0 %v11828
    %12152 = vmatprep.subr.bf16.mxu0 %v11826
    %12153 = vmatpush2.bf16.msra.mxu0 %v11825
    %12154 = vmatprep.subr.bf16.mxu0 %v11823
    %12155 = vmatpush2.bf16.msra.mxu0 %v11822
    %12156 = vmatprep.subr.bf16.mxu0 %v11820
    %12157 = vmatpush2.bf16.msra.mxu0 %v11819
    %12158 = vmatprep.subr.bf16.mxu0 %v11817
    %12159 = vmatpush2.bf16.msra.mxu0 %v11816
    %12160 = vmatprep.mubr.bf16.mxu0 %v9555
    %12161 = vmatmul.mubr.bf16.gmra.mxu0 %v9554
    %v12162 = vpop.f32.mrf.mxu0
    %v12163 = vadd.f32 0.0, %v12162
    %v12164 = vpop.f32.mrf.mxu0
    %v12165 = vadd.f32 0.0, %v12164
    %v12166 = vpop.f32.mrf.mxu0
    %v12167 = vpop.f32.mrf.mxu0
    %12168 = vdwg.mxu0
    %12169 = vmatprep.subr.bf16.mxu0 %v11862
    %12170 = vmatpush1.bf16.msra.mxu0 %v11861
    %12171 = vmatprep.subr.bf16.mxu0 %v11859
    %12172 = vmatpush1.bf16.msra.mxu0 %v11858
    %12173 = vmatprep.subr.bf16.mxu0 %v11856
    %12174 = vmatpush1.bf16.msra.mxu0 %v11855
    %12175 = vmatprep.subr.bf16.mxu0 %v11853
    %12176 = vmatpush1.bf16.msra.mxu0 %v11852
    %12177 = vmatprep.subr.bf16.mxu0 %v11850
    %12178 = vmatpush1.bf16.msra.mxu0 %v11849
    %12179 = vmatprep.subr.bf16.mxu0 %v11847
    %12180 = vmatpush1.bf16.msra.mxu0 %v11846
    %12181 = vmatprep.subr.bf16.mxu0 %v11844
    %12182 = vmatpush1.bf16.msra.mxu0 %v11843
    %12183 = vmatprep.subr.bf16.mxu0 %v11841
    %12184 = vmatpush1.bf16.msra.mxu0 %v11840
    %12185 = vmatprep.subr.bf16.mxu0 %v11886
    %12186 = vmatpush2.bf16.msra.mxu0 %v11885
    %12187 = vmatprep.subr.bf16.mxu0 %v11883
    %12188 = vmatpush2.bf16.msra.mxu0 %v11882
    %12189 = vmatprep.subr.bf16.mxu0 %v11880
    %12190 = vmatpush2.bf16.msra.mxu0 %v11879
    %12191 = vmatprep.subr.bf16.mxu0 %v11877
    %12192 = vmatpush2.bf16.msra.mxu0 %v11876
    %12193 = vmatprep.subr.bf16.mxu0 %v11874
    %12194 = vmatpush2.bf16.msra.mxu0 %v11873
    %12195 = vmatprep.subr.bf16.mxu0 %v11871
    %12196 = vmatpush2.bf16.msra.mxu0 %v11870
    %12197 = vmatprep.subr.bf16.mxu0 %v11868
    %12198 = vmatpush2.bf16.msra.mxu0 %v11867
    %12199 = vmatprep.subr.bf16.mxu0 %v11865
    %12200 = vmatpush2.bf16.msra.mxu0 %v11864
    %12201 = vmatprep.mubr.bf16.mxu0 %v9557
    %12202 = vmatmul.mubr.bf16.gmra.mxu0 %v9556
    %v12203 = vpop.f32.mrf.mxu0
    %v12204 = vadd.f32 %v12163, %v12203
    %v12205 = vpop.f32.mrf.mxu0
    %v12206 = vadd.f32 %v12165, %v12205
    %v12207 = vpop.f32.mrf.mxu0
    %v12208 = vpop.f32.mrf.mxu0
    %12209 = vdwg.mxu0
    %12210 = vmatprep.subr.bf16.mxu0 %v11910
    %12211 = vmatpush1.bf16.msra.mxu0 %v11909
    %12212 = vmatprep.subr.bf16.mxu0 %v11907
    %12213 = vmatpush1.bf16.msra.mxu0 %v11906
    %12214 = vmatprep.subr.bf16.mxu0 %v11904
    %12215 = vmatpush1.bf16.msra.mxu0 %v11903
    %12216 = vmatprep.subr.bf16.mxu0 %v11901
    %12217 = vmatpush1.bf16.msra.mxu0 %v11900
    %12218 = vmatprep.subr.bf16.mxu0 %v11898
    %12219 = vmatpush1.bf16.msra.mxu0 %v11897
    %12220 = vmatprep.subr.bf16.mxu0 %v11895
    %12221 = vmatpush1.bf16.msra.mxu0 %v11894
    %12222 = vmatprep.subr.bf16.mxu0 %v11892
    %12223 = vmatpush1.bf16.msra.mxu0 %v11891
    %12224 = vmatprep.subr.bf16.mxu0 %v11889
    %12225 = vmatpush1.bf16.msra.mxu0 %v11888
    %12226 = vmatprep.subr.bf16.mxu0 %v11934
    %12227 = vmatpush2.bf16.msra.mxu0 %v11933
    %12228 = vmatprep.subr.bf16.mxu0 %v11931
    %12229 = vmatpush2.bf16.msra.mxu0 %v11930
    %12230 = vmatprep.subr.bf16.mxu0 %v11928
    %12231 = vmatpush2.bf16.msra.mxu0 %v11927
    %12232 = vmatprep.subr.bf16.mxu0 %v11925
    %12233 = vmatpush2.bf16.msra.mxu0 %v11924
    %12234 = vmatprep.subr.bf16.mxu0 %v11922
    %12235 = vmatpush2.bf16.msra.mxu0 %v11921
    %12236 = vmatprep.subr.bf16.mxu0 %v11919
    %12237 = vmatpush2.bf16.msra.mxu0 %v11918
    %12238 = vmatprep.subr.bf16.mxu0 %v11916
    %12239 = vmatpush2.bf16.msra.mxu0 %v11915
    %12240 = vmatprep.subr.bf16.mxu0 %v11913
    %12241 = vmatpush2.bf16.msra.mxu0 %v11912
    %12242 = vmatprep.mubr.bf16.mxu0 %v9559
    %12243 = vmatmul.mubr.bf16.gmra.mxu0 %v9558
    %v12244 = vpop.f32.mrf.mxu0
    %v12245 = vadd.f32 %v12204, %v12244
    %v12246 = vpop.f32.mrf.mxu0
    %v12247 = vadd.f32 %v12206, %v12246
    %v12248 = vpop.f32.mrf.mxu0
    %v12249 = vpop.f32.mrf.mxu0
    %12250 = vdwg.mxu0
    %12251 = vmatprep.subr.bf16.mxu0 %v11958
    %12252 = vmatpush1.bf16.msra.mxu0 %v11957
    %12253 = vmatprep.subr.bf16.mxu0 %v11955
    %12254 = vmatpush1.bf16.msra.mxu0 %v11954
    %12255 = vmatprep.subr.bf16.mxu0 %v11952
    %12256 = vmatpush1.bf16.msra.mxu0 %v11951
    %12257 = vmatprep.subr.bf16.mxu0 %v11949
    %12258 = vmatpush1.bf16.msra.mxu0 %v11948
    %12259 = vmatprep.subr.bf16.mxu0 %v11946
    %12260 = vmatpush1.bf16.msra.mxu0 %v11945
    %12261 = vmatprep.subr.bf16.mxu0 %v11943
    %12262 = vmatpush1.bf16.msra.mxu0 %v11942
    %12263 = vmatprep.subr.bf16.mxu0 %v11940
    %12264 = vmatpush1.bf16.msra.mxu0 %v11939
    %12265 = vmatprep.subr.bf16.mxu0 %v11937
    %12266 = vmatpush1.bf16.msra.mxu0 %v11936
    %12267 = vmatprep.subr.bf16.mxu0 0
    %12268 = vmatpush2.bf16.msra.mxu0 0
    %12269 = vmatprep.subr.bf16.mxu0 0
    %12270 = vmatpush2.bf16.msra.mxu0 0
    %12271 = vmatprep.subr.bf16.mxu0 0
    %12272 = vmatpush2.bf16.msra.mxu0 0
    %12273 = vmatprep.subr.bf16.mxu0 0
    %12274 = vmatpush2.bf16.msra.mxu0 0
    %12275 = vmatprep.subr.bf16.mxu0 0
    %12276 = vmatpush2.bf16.msra.mxu0 0
    %12277 = vmatprep.subr.bf16.mxu0 0
    %12278 = vmatpush2.bf16.msra.mxu0 0
    %12279 = vmatprep.subr.bf16.mxu0 0
    %12280 = vmatpush2.bf16.msra.mxu0 0
    %12281 = vmatprep.subr.bf16.mxu0 0
    %12282 = vmatpush2.bf16.msra.mxu0 0
    %12283 = vmatprep.mubr.bf16.mxu0 0
    %12284 = vmatmul.mubr.bf16.gmra.mxu0 %v9560
    %v12285 = vpop.f32.mrf.mxu0
    %v12286 = vadd.f32 %v12245, %v12285
    %v12287 = vpop.f32.mrf.mxu0
    %v12288 = vadd.f32 %v12247, %v12287
    %v12289 = vpop.f32.mrf.mxu0
    %v12290 = vpop.f32.mrf.mxu0
    %12291 = vdwg.mxu0
    %12292 = vmatprep.subr.bf16.mxu0 0
    %12293 = vmatpush1.bf16.msra.mxu0 %v11815
    %12294 = vmatprep.subr.bf16.mxu0 0
    %12295 = vmatpush1.bf16.msra.mxu0 %v11812
    %12296 = vmatprep.subr.bf16.mxu0 0
    %12297 = vmatpush1.bf16.msra.mxu0 %v11809
    %12298 = vmatprep.subr.bf16.mxu0 0
    %12299 = vmatpush1.bf16.msra.mxu0 %v11806
    %12300 = vmatprep.subr.bf16.mxu0 0
    %12301 = vmatpush1.bf16.msra.mxu0 %v11803
    %12302 = vmatprep.subr.bf16.mxu0 0
    %12303 = vmatpush1.bf16.msra.mxu0 %v11800
    %12304 = vmatprep.subr.bf16.mxu0 0
    %12305 = vmatpush1.bf16.msra.mxu0 %v11797
    %12306 = vmatprep.subr.bf16.mxu0 0
    %12307 = vmatpush1.bf16.msra.mxu0 %v11794
    %12308 = vmatprep.subr.bf16.mxu0 0
    %12309 = vmatpush2.bf16.msra.mxu0 %v11839
    %12310 = vmatprep.subr.bf16.mxu0 0
    %12311 = vmatpush2.bf16.msra.mxu0 %v11836
    %12312 = vmatprep.subr.bf16.mxu0 0
    %12313 = vmatpush2.bf16.msra.mxu0 %v11833
    %12314 = vmatprep.subr.bf16.mxu0 0
    %12315 = vmatpush2.bf16.msra.mxu0 %v11830
    %12316 = vmatprep.subr.bf16.mxu0 0
    %12317 = vmatpush2.bf16.msra.mxu0 %v11827
    %12318 = vmatprep.subr.bf16.mxu0 0
    %12319 = vmatpush2.bf16.msra.mxu0 %v11824
    %12320 = vmatprep.subr.bf16.mxu0 0
    %12321 = vmatpush2.bf16.msra.mxu0 %v11821
    %12322 = vmatprep.subr.bf16.mxu0 0
    %12323 = vmatpush2.bf16.msra.mxu0 %v11818
    %12324 = vmatprep.mubr.bf16.mxu0 %v9555
    %12325 = vmatmul.mubr.bf16.gmra.mxu0 %v9554
    %v12326 = vpop.f32.mrf.mxu0
    %v12327 = vadd.f32 0.0, %v12326
    %v12328 = vpop.f32.mrf.mxu0
    %v12329 = vpop.f32.mrf.mxu0
    %v12330 = vpop.f32.mrf.mxu0
    %12331 = vdwg.mxu0
    %12332 = vmatprep.subr.bf16.mxu0 0
    %12333 = vmatpush1.bf16.msra.mxu0 %v11863
    %12334 = vmatprep.subr.bf16.mxu0 0
    %12335 = vmatpush1.bf16.msra.mxu0 %v11860
    %12336 = vmatprep.subr.bf16.mxu0 0
    %12337 = vmatpush1.bf16.msra.mxu0 %v11857
    %12338 = vmatprep.subr.bf16.mxu0 0
    %12339 = vmatpush1.bf16.msra.mxu0 %v11854
    %12340 = vmatprep.subr.bf16.mxu0 0
    %12341 = vmatpush1.bf16.msra.mxu0 %v11851
    %12342 = vmatprep.subr.bf16.mxu0 0
    %12343 = vmatpush1.bf16.msra.mxu0 %v11848
    %12344 = vmatprep.subr.bf16.mxu0 0
    %12345 = vmatpush1.bf16.msra.mxu0 %v11845
    %12346 = vmatprep.subr.bf16.mxu0 0
    %12347 = vmatpush1.bf16.msra.mxu0 %v11842
    %12348 = vmatprep.subr.bf16.mxu0 0
    %12349 = vmatpush2.bf16.msra.mxu0 %v11887
    %12350 = vmatprep.subr.bf16.mxu0 0
    %12351 = vmatpush2.bf16.msra.mxu0 %v11884
    %12352 = vmatprep.subr.bf16.mxu0 0
    %12353 = vmatpush2.bf16.msra.mxu0 %v11881
    %12354 = vmatprep.subr.bf16.mxu0 0
    %12355 = vmatpush2.bf16.msra.mxu0 %v11878
    %12356 = vmatprep.subr.bf16.mxu0 0
    %12357 = vmatpush2.bf16.msra.mxu0 %v11875
    %12358 = vmatprep.subr.bf16.mxu0 0
    %12359 = vmatpush2.bf16.msra.mxu0 %v11872
    %12360 = vmatprep.subr.bf16.mxu0 0
    %12361 = vmatpush2.bf16.msra.mxu0 %v11869
    %12362 = vmatprep.subr.bf16.mxu0 0
    %12363 = vmatpush2.bf16.msra.mxu0 %v11866
    %12364 = vmatprep.mubr.bf16.mxu0 %v9557
    %12365 = vmatmul.mubr.bf16.gmra.mxu0 %v9556
    %v12366 = vpop.f32.mrf.mxu0
    %v12367 = vadd.f32 %v12327, %v12366
    %v12368 = vpop.f32.mrf.mxu0
    %v12369 = vpop.f32.mrf.mxu0
    %v12370 = vpop.f32.mrf.mxu0
    %12371 = vdwg.mxu0
    %12372 = vmatprep.subr.bf16.mxu0 0
    %12373 = vmatpush1.bf16.msra.mxu0 %v11911
    %12374 = vmatprep.subr.bf16.mxu0 0
    %12375 = vmatpush1.bf16.msra.mxu0 %v11908
    %12376 = vmatprep.subr.bf16.mxu0 0
    %12377 = vmatpush1.bf16.msra.mxu0 %v11905
    %12378 = vmatprep.subr.bf16.mxu0 0
    %12379 = vmatpush1.bf16.msra.mxu0 %v11902
    %12380 = vmatprep.subr.bf16.mxu0 0
    %12381 = vmatpush1.bf16.msra.mxu0 %v11899
    %12382 = vmatprep.subr.bf16.mxu0 0
    %12383 = vmatpush1.bf16.msra.mxu0 %v11896
    %12384 = vmatprep.subr.bf16.mxu0 0
    %12385 = vmatpush1.bf16.msra.mxu0 %v11893
    %12386 = vmatprep.subr.bf16.mxu0 0
    %12387 = vmatpush1.bf16.msra.mxu0 %v11890
    %12388 = vmatprep.subr.bf16.mxu0 0
    %12389 = vmatpush2.bf16.msra.mxu0 %v11935
    %12390 = vmatprep.subr.bf16.mxu0 0
    %12391 = vmatpush2.bf16.msra.mxu0 %v11932
    %12392 = vmatprep.subr.bf16.mxu0 0
    %12393 = vmatpush2.bf16.msra.mxu0 %v11929
    %12394 = vmatprep.subr.bf16.mxu0 0
    %12395 = vmatpush2.bf16.msra.mxu0 %v11926
    %12396 = vmatprep.subr.bf16.mxu0 0
    %12397 = vmatpush2.bf16.msra.mxu0 %v11923
    %12398 = vmatprep.subr.bf16.mxu0 0
    %12399 = vmatpush2.bf16.msra.mxu0 %v11920
    %12400 = vmatprep.subr.bf16.mxu0 0
    %12401 = vmatpush2.bf16.msra.mxu0 %v11917
    %12402 = vmatprep.subr.bf16.mxu0 0
    %12403 = vmatpush2.bf16.msra.mxu0 %v11914
    %12404 = vmatprep.mubr.bf16.mxu0 %v9559
    %12405 = vmatmul.mubr.bf16.gmra.mxu0 %v9558
    %v12406 = vpop.f32.mrf.mxu0
    %v12407 = vadd.f32 %v12367, %v12406
    %v12408 = vpop.f32.mrf.mxu0
    %v12409 = vpop.f32.mrf.mxu0
    %v12410 = vpop.f32.mrf.mxu0
    %12411 = vdwg.mxu0
    %12412 = vmatprep.subr.bf16.mxu0 0
    %12413 = vmatpush1.bf16.msra.mxu0 %v11959
    %12414 = vmatprep.subr.bf16.mxu0 0
    %12415 = vmatpush1.bf16.msra.mxu0 %v11956
    %12416 = vmatprep.subr.bf16.mxu0 0
    %12417 = vmatpush1.bf16.msra.mxu0 %v11953
    %12418 = vmatprep.subr.bf16.mxu0 0
    %12419 = vmatpush1.bf16.msra.mxu0 %v11950
    %12420 = vmatprep.subr.bf16.mxu0 0
    %12421 = vmatpush1.bf16.msra.mxu0 %v11947
    %12422 = vmatprep.subr.bf16.mxu0 0
    %12423 = vmatpush1.bf16.msra.mxu0 %v11944
    %12424 = vmatprep.subr.bf16.mxu0 0
    %12425 = vmatpush1.bf16.msra.mxu0 %v11941
    %12426 = vmatprep.subr.bf16.mxu0 0
    %12427 = vmatpush1.bf16.msra.mxu0 %v11938
    %12428 = vmatprep.subr.bf16.mxu0 0
    %12429 = vmatpush2.bf16.msra.mxu0 0
    %12430 = vmatprep.subr.bf16.mxu0 0
    %12431 = vmatpush2.bf16.msra.mxu0 0
    %12432 = vmatprep.subr.bf16.mxu0 0
    %12433 = vmatpush2.bf16.msra.mxu0 0
    %12434 = vmatprep.subr.bf16.mxu0 0
    %12435 = vmatpush2.bf16.msra.mxu0 0
    %12436 = vmatprep.subr.bf16.mxu0 0
    %12437 = vmatpush2.bf16.msra.mxu0 0
    %12438 = vmatprep.subr.bf16.mxu0 0
    %12439 = vmatpush2.bf16.msra.mxu0 0
    %12440 = vmatprep.subr.bf16.mxu0 0
    %12441 = vmatpush2.bf16.msra.mxu0 0
    %12442 = vmatprep.subr.bf16.mxu0 0
    %12443 = vmatpush2.bf16.msra.mxu0 0
    %12444 = vmatprep.mubr.bf16.mxu0 0
    %12445 = vmatmul.mubr.bf16.gmra.mxu0 %v9560
    %v12446 = vpop.f32.mrf.mxu0
    %v12447 = vadd.f32 %v12407, %v12446
    %v12448 = vpop.f32.mrf.mxu0
    %v12449 = vpop.f32.mrf.mxu0
    %v12450 = vpop.f32.mrf.mxu0
    %12451 = vdwg.mxu0
    %v12452 = vadd.f32 %v11005, %v12286
    %v12453 = vadd.f32 %v11006, %v12288
    %v12454 = vadd.f32 %v11007, %v12447
    %12455 = vst [vmem:[#allocation11] sm:$0xff] %v12452
    %12456 = vst [vmem:[#allocation11 + $0x8] sm:$0xff] %v12453
    %12457 = vst [vmem:[#allocation11 + $0x10] sm:$0xff] %v12454
    // Predicated region
    $region42: #{tpu_custom_call.1} parent=1 // pred_check
      _
    $region43: #{tpu_custom_call.1} parent=1 // pred_check_branch
      %12459 = sbr.rel (0) target = $region45
    $region44: #{tpu_custom_call.1} parent=1 // pred_region
      %s12461 = ssub.s32 384, 384
      %12462 = vsyncadd [#allocation4], %s12461
      %s12464 = sshll.u32 [#allocation11], 4
      %s12465 = int_to_ptr.vmem [resolvable:$true] %s12464
      %12467 = dma.vmem_to_hbm [thread:$0]  %s12465, 384, %s5, [#allocation4]
    $region45: #{tpu_custom_call.1} parent=1 // pred_fallthru
      _
    // Predicated region
    $region46: #{tpu_custom_call.1} parent=1 // pred_check
      _
    $region47: #{tpu_custom_call.1} parent=1 // pred_check_branch
      %12469 = sbr.rel (0) target = $region49
    $region48: #{tpu_custom_call.1} parent=1 // pred_region
      %12470 = dma.done [#allocation4], 384
    $region49: #{tpu_custom_call.1} parent=1 // pred_fallthru
      _
    %12471 = vsyncpa [#allocation3], 1
    %12472 = vsyncpa [#allocation6], 1
    %12473 = vsyncpa [#allocation9], 1
    %12474 = vsyncpa [#allocation4], 1

</llo_original>
